<compile_context>
chip_gen: v7x
topology: tpu7x:2x2x1
jax: 0.10.0
libtpu: 0.0.40
codegen_flags: <defaults>
</compile_context>

<pallas_src>
import functools
import math

import jax
import jax.numpy as jnp
from jax.experimental import pallas as pl
from jax.experimental.pallas import tpu as pltpu


# ----------------------------- in-kernel helpers ------------------------------

def _layer_ln(x, g, b, eps):
    """LayerNorm over last dim, biased variance (PyTorch semantics). x:(L,D), g,b:(1,D)."""
    mu = jnp.mean(x, axis=-1, keepdims=True)
    xc = x - mu
    var = jnp.mean(xc * xc, axis=-1, keepdims=True)
    return xc * jax.lax.rsqrt(var + eps) * g + b


def _mha_block(q, k, v, wo, bo, nhead):
    """Multi-head attention on already-projected q,k,v (L,E)/(S,E); q pre-scaled by 1/sqrt(dh).

    Heads are static lane slices; the output projection is accumulated per head, which is
    mathematically identical to concat(heads) @ wo + bo but avoids any concatenate/transpose.
    """
    L, E = q.shape
    dh = E // nhead
    out = jnp.zeros((L, E), jnp.float32) + bo            # bo: (1, E) broadcast
    for h in range(nhead):
        sl = slice(h * dh, (h + 1) * dh)
        s = jax.lax.dot_general(q[:, sl], k[:, sl], (((1,), (1,)), ((), ())),
                                preferred_element_type=jnp.float32)       # (L, S)
        m = jnp.max(s, axis=-1, keepdims=True)
        p = jnp.exp(s - m)
        p = p * pl.reciprocal(jnp.sum(p, axis=-1, keepdims=True), approx=True)
        oh = jnp.dot(p, v[:, sl], preferred_element_type=jnp.float32)      # (L, dh)
        out = out + jnp.dot(oh, wo[sl, :], preferred_element_type=jnp.float32)
    return out


# ----------------------------- Pallas kernels ------------------------------

def _linear_kernel(x_ref, w_ref, b_ref, o_ref):
    # x: (1, L, K), w: (K, N), b: (1, N) -> o: (1, L, N)
    y = jnp.dot(x_ref[0].astype(jnp.float32), w_ref[...],
                preferred_element_type=jnp.float32) + b_ref[...]
    o_ref[0] = y.astype(o_ref.dtype)


def _ln_kernel(x_ref, g_ref, b_ref, o_ref, *, eps):
    # plain LayerNorm (no residual) for the final stack norms
    o_ref[0] = _layer_ln(x_ref[0].astype(jnp.float32), g_ref[...], b_ref[...],
                         eps).astype(o_ref.dtype)


def _ln_linear_kernel(x_ref, g_ref, b_ref, w_ref, bias_ref, o_ref, *, eps):
    # fused final decoder LayerNorm + output Linear(hidden -> output)
    y = _layer_ln(x_ref[0].astype(jnp.float32), g_ref[...], b_ref[...], eps)
    y = jnp.dot(y, w_ref[...], preferred_element_type=jnp.float32) + bias_ref[...]
    o_ref[0] = y.astype(o_ref.dtype)


def _encoder_layer_kernel(x_ref, wqkv_ref, bqkv_ref, wo_ref, bo_ref,
                          ln1_g_ref, ln1_b_ref, w1_ref, b1_ref, w2_ref, b2_ref,
                          ln2_g_ref, ln2_b_ref, o_ref, *, nhead, eps):
    # One full TransformerEncoderLayer (post-norm, relu, dropout=identity) per batch element.
    x = x_ref[0].astype(jnp.float32)                       # (L, E)
    E = x.shape[-1]
    scale = 1.0 / math.sqrt(E // nhead)

    qkv = jnp.dot(x, wqkv_ref[...], preferred_element_type=jnp.float32) + bqkv_ref[...]
    sa = _mha_block(qkv[:, :E] * scale, qkv[:, E:2 * E], qkv[:, 2 * E:],
                    wo_ref[...], bo_ref[...], nhead)
    x = _layer_ln(x + sa, ln1_g_ref[...], ln1_b_ref[...], eps)

    h1 = jnp.maximum(jnp.dot(x, w1_ref[...], preferred_element_type=jnp.float32)
                     + b1_ref[...], 0.0)
    ff = jnp.dot(h1, w2_ref[...], preferred_element_type=jnp.float32) + b2_ref[...]
    x = _layer_ln(x + ff, ln2_g_ref[...], ln2_b_ref[...], eps)
    o_ref[0] = x.astype(o_ref.dtype)


def _decoder_layer_kernel(x_ref, mem_ref,
                          sa_wqkv_ref, sa_bqkv_ref, sa_wo_ref, sa_bo_ref,
                          ln1_g_ref, ln1_b_ref,
                          ca_wqkv_ref, ca_bqkv_ref, ca_wo_ref, ca_bo_ref,
                          ln2_g_ref, ln2_b_ref,
                          w1_ref, b1_ref, w2_ref, b2_ref,
                          ln3_g_ref, ln3_b_ref,
                          o_ref, *, nhead, eps):
    # One full TransformerDecoderLayer (self-attn + cross-attn + FFN) per batch element.
    x = x_ref[0].astype(jnp.float32)                       # (L, E)
    mem = mem_ref[0].astype(jnp.float32)                   # (S, E)
    E = x.shape[-1]
    scale = 1.0 / math.sqrt(E // nhead)

    # --- self attention ---
    qkv = jnp.dot(x, sa_wqkv_ref[...], preferred_element_type=jnp.float32) + sa_bqkv_ref[...]
    sa = _mha_block(qkv[:, :E] * scale, qkv[:, E:2 * E], qkv[:, 2 * E:],
                    sa_wo_ref[...], sa_bo_ref[...], nhead)
    x = _layer_ln(x + sa, ln1_g_ref[...], ln1_b_ref[...], eps)

    # --- cross attention (q from tgt, k/v from memory) ---
    q = jnp.dot(x, ca_wqkv_ref[:, :E], preferred_element_type=jnp.float32) + ca_bqkv_ref[:, :E]
    kv = jnp.dot(mem, ca_wqkv_ref[:, E:], preferred_element_type=jnp.float32) + ca_bqkv_ref[:, E:]
    ca = _mha_block(q * scale, kv[:, :E], kv[:, E:],
                    ca_wo_ref[...], ca_bo_ref[...], nhead)
    x = _layer_ln(x + ca, ln2_g_ref[...], ln2_b_ref[...], eps)

    # --- feed-forward ---
    h1 = jnp.maximum(jnp.dot(x, w1_ref[...], preferred_element_type=jnp.float32)
                     + b1_ref[...], 0.0)
    ff = jnp.dot(h1, w2_ref[...], preferred_element_type=jnp.float32) + b2_ref[...]
    x = _layer_ln(x + ff, ln3_g_ref[...], ln3_b_ref[...], eps)
    o_ref[0] = x.astype(o_ref.dtype)


# ----------------------------- kernel wrappers ------------------------------

_PAR = pltpu.CompilerParams(dimension_semantics=("parallel",))


def _row_spec(L, D):
    return pl.BlockSpec((1, L, D), lambda b: (b, 0, 0))


def _full_spec(shape):
    return pl.BlockSpec(shape, lambda b: (0, 0))


def input_linear(x, w, b):
    B, L, Din = x.shape
    E = w.shape[1]
    return pl.pallas_call(
        _linear_kernel,
        out_shape=jax.ShapeDtypeStruct((B, L, E), x.dtype),
        grid=(B,),
        in_specs=[_row_spec(L, Din), _full_spec((Din, E)), _full_spec((1, E))],
        out_specs=_row_spec(L, E),
        compiler_params=_PAR,
    )(x, w, b)


def layer_norm(x, g, b, eps=1e-5):
    B, L, E = x.shape
    return pl.pallas_call(
        functools.partial(_ln_kernel, eps=eps),
        out_shape=jax.ShapeDtypeStruct((B, L, E), x.dtype),
        grid=(B,),
        in_specs=[_row_spec(L, E), _full_spec((1, E)), _full_spec((1, E))],
        out_specs=_row_spec(L, E),
        compiler_params=_PAR,
    )(x, g, b)


def final_norm_linear(x, g, b, w, bias, eps=1e-5):
    B, L, E = x.shape
    Dout = w.shape[1]
    return pl.pallas_call(
        functools.partial(_ln_linear_kernel, eps=eps),
        out_shape=jax.ShapeDtypeStruct((B, L, Dout), x.dtype),
        grid=(B,),
        in_specs=[_row_spec(L, E), _full_spec((1, E)), _full_spec((1, E)),
                  _full_spec((E, Dout)), _full_spec((1, Dout))],
        out_specs=_row_spec(L, Dout),
        compiler_params=_PAR,
    )(x, g, b, w, bias)


def encoder_layer(x, p, nhead, eps=1e-5):
    B, L, E = x.shape
    FF = p["w1"].shape[1]
    return pl.pallas_call(
        functools.partial(_encoder_layer_kernel, nhead=nhead, eps=eps),
        out_shape=jax.ShapeDtypeStruct((B, L, E), x.dtype),
        grid=(B,),
        in_specs=[
            _row_spec(L, E),
            _full_spec((E, 3 * E)), _full_spec((1, 3 * E)),
            _full_spec((E, E)), _full_spec((1, E)),
            _full_spec((1, E)), _full_spec((1, E)),
            _full_spec((E, FF)), _full_spec((1, FF)),
            _full_spec((FF, E)), _full_spec((1, E)),
            _full_spec((1, E)), _full_spec((1, E)),
        ],
        out_specs=_row_spec(L, E),
        compiler_params=_PAR,
    )(x, p["wqkv"], p["bqkv"], p["wo"], p["bo"],
      p["ln1_g"], p["ln1_b"], p["w1"], p["b1"], p["w2"], p["b2"],
      p["ln2_g"], p["ln2_b"])


def decoder_layer(x, mem, p, nhead, eps=1e-5):
    B, L, E = x.shape
    FF = p["w1"].shape[1]
    return pl.pallas_call(
        functools.partial(_decoder_layer_kernel, nhead=nhead, eps=eps),
        out_shape=jax.ShapeDtypeStruct((B, L, E), x.dtype),
        grid=(B,),
        in_specs=[
            _row_spec(L, E), _row_spec(L, E),
            _full_spec((E, 3 * E)), _full_spec((1, 3 * E)),
            _full_spec((E, E)), _full_spec((1, E)),
            _full_spec((1, E)), _full_spec((1, E)),
            _full_spec((E, 3 * E)), _full_spec((1, 3 * E)),
            _full_spec((E, E)), _full_spec((1, E)),
            _full_spec((1, E)), _full_spec((1, E)),
            _full_spec((E, FF)), _full_spec((1, FF)),
            _full_spec((FF, E)), _full_spec((1, E)),
            _full_spec((1, E)), _full_spec((1, E)),
        ],
        out_specs=_row_spec(L, E),
        compiler_params=_PAR,
    )(x, mem,
      p["sa_wqkv"], p["sa_bqkv"], p["sa_wo"], p["sa_bo"],
      p["ln1_g"], p["ln1_b"],
      p["ca_wqkv"], p["ca_bqkv"], p["ca_wo"], p["ca_bo"],
      p["ln2_g"], p["ln2_b"],
      p["w1"], p["b1"], p["w2"], p["b2"],
      p["ln3_g"], p["ln3_b"])


# ----------------------------- transformer glue ------------------------------

def transformer_model(x, params, *, nhead):
    """x: (L, B, input_size) — PyTorch nn.Transformer default layout (batch_first=False)."""
    L, B, Din = x.shape
    Dout = params["out_w"].shape[1]

    # Work batch-major internally so each grid step owns a contiguous (L, E) sequence.
    xb = jnp.transpose(x, (1, 0, 2))                        # (B, L, Din)

    # encoder Linear(input_size -> hidden_size)
    h = input_linear(xb, params["enc_w"], params["enc_b"])  # (B, L, E)

    # nn.Transformer encoder stack (6 fused layers) + final LayerNorm
    def enc_body(carry, lp):
        return encoder_layer(carry, lp, nhead), None
    mem, _ = jax.lax.scan(enc_body, h, params["encoder_layers"])
    mem = layer_norm(mem, params["enc_norm_g"], params["enc_norm_b"])

    # nn.Transformer decoder stack (6 fused layers, tgt = x) + final LayerNorm + output Linear
    def dec_body(carry, lp):
        return decoder_layer(carry, mem, lp, nhead), None
    out, _ = jax.lax.scan(dec_body, h, params["decoder_layers"])
    y = final_norm_linear(out, params["dec_norm_g"], params["dec_norm_b"],
                          params["out_w"], params["out_b"])  # (B, L, Dout)

    return jnp.transpose(y, (1, 0, 2))                       # back to (L, B, Dout)


# ----------------------------- parameter init ------------------------------

def init_params(key, input_size, hidden_size, output_size,
                num_encoder_layers=6, num_decoder_layers=6, dim_feedforward=2048):
    state = [key]

    def nxt():
        state[0], sub = jax.random.split(state[0])
        return sub

    def W(shape, scale=0.05):
        return scale * jax.random.normal(nxt(), shape, dtype=jnp.float32)

    E = hidden_size
    FF = dim_feedforward
    ones = lambda: jnp.ones((1, E), jnp.float32)
    zeros = lambda: jnp.zeros((1, E), jnp.float32)

    def attn_p(prefix=""):
        return {prefix + "wqkv": W((E, 3 * E)), prefix + "bqkv": W((1, 3 * E)),
                prefix + "wo": W((E, E)), prefix + "bo": W((1, E))}

    def enc_layer_p():
        d = attn_p()
        d.update(ln1_g=ones(), ln1_b=zeros(),
                 w1=W((E, FF)), b1=W((1, FF)),
                 w2=W((FF, E)), b2=W((1, E)),
                 ln2_g=ones(), ln2_b=zeros())
        return d

    def dec_layer_p():
        d = {}
        d.update(attn_p("sa_"))
        d.update(attn_p("ca_"))
        d.update(ln1_g=ones(), ln1_b=zeros(),
                 ln2_g=ones(), ln2_b=zeros(),
                 w1=W((E, FF)), b1=W((1, FF)),
                 w2=W((FF, E)), b2=W((1, E)),
                 ln3_g=ones(), ln3_b=zeros())
        return d

    enc_layers = [enc_layer_p() for _ in range(num_encoder_layers)]
    dec_layers = [dec_layer_p() for _ in range(num_decoder_layers)]
    stack = lambda layers: jax.tree_util.tree_map(lambda *xs: jnp.stack(xs), *layers)

    return dict(
        enc_w=W((input_size, E)), enc_b=W((1, E)),
        encoder_layers=stack(enc_layers),
        enc_norm_g=ones(), enc_norm_b=zeros(),
        decoder_layers=stack(dec_layers),
        dec_norm_g=ones(), dec_norm_b=zeros(),
        out_w=W((E, output_size)), out_b=W((1, output_size)),
    )


# ----------------------------- main ------------------------------

if __name__ == "__main__":
    SEQ, BATCH = 8, 2
    INPUT_SIZE, HIDDEN_SIZE, OUTPUT_SIZE = 16, 32, 8
    NUM_LAYERS = 4  # nn.Transformer(hidden_size, num_layers): this is actually nhead

    assert HIDDEN_SIZE % NUM_LAYERS == 0

    key = jax.random.PRNGKey(0)
    kx, kp = jax.random.split(key)
    x = jax.random.normal(kx, (SEQ, BATCH, INPUT_SIZE), dtype=jnp.float32)
    params = init_params(kp, INPUT_SIZE, HIDDEN_SIZE, OUTPUT_SIZE)

    fwd = jax.jit(functools.partial(transformer_model, nhead=NUM_LAYERS))
    y = fwd(x, params)
    jax.block_until_ready(y)

    assert y.shape == (SEQ, BATCH, OUTPUT_SIZE), y.shape
    assert bool(jnp.all(jnp.isfinite(y)))
    print("KERNEL_OK")
</pallas_src>

<mosaic_0001>
module attributes {stable_mosaic.version = 11 : i64} {
  func.func @_linear_kernel(%arg0: i32, %arg1: memref<1x8x16xf32, #tpu.memory_space<vmem>>, %arg2: memref<16x32xf32, #tpu.memory_space<vmem>>, %arg3: memref<1x32xf32, #tpu.memory_space<vmem>>, %arg4: memref<1x8x32xf32, #tpu.memory_space<vmem>>) attributes {dimension_semantics = [#tpu.dimension_semantics<parallel>], iteration_bounds = array<i64: 2>, scalar_prefetch = 0 : i64, scratch_operands = 0 : i64, tpu.core_type = #tpu.core_type<tc>, window_params = [{transform_indices = @transform_0, window_bounds = array<i64: 1, 8, 16>}, {pipeline_mode = #tpu.pipeline_mode<synchronous>, transform_indices = @transform_1, window_bounds = array<i64: 16, 32>}, {pipeline_mode = #tpu.pipeline_mode<synchronous>, transform_indices = @transform_2, window_bounds = array<i64: 1, 32>}, {transform_indices = @transform_3, window_bounds = array<i64: 1, 8, 32>}]} {
    %c0 = arith.constant 0 : index
    %c0_0 = arith.constant 0 : index
    %c0_1 = arith.constant 0 : index
    %0 = vector.load %arg1[%c0, %c0_0, %c0_1] : memref<1x8x16xf32, #tpu.memory_space<vmem>>, vector<1x8x16xf32>
    %1 = vector.shape_cast %0 : vector<1x8x16xf32> to vector<8x16xf32>
    %c0_2 = arith.constant 0 : index
    %c0_3 = arith.constant 0 : index
    %2 = vector.load %arg2[%c0_2, %c0_3] : memref<16x32xf32, #tpu.memory_space<vmem>>, vector<16x32xf32>
    %cst = arith.constant dense<0.000000e+00> : vector<8x32xf32>
    %3 = tpu.matmul %1, %2, %cst {dimension_numbers = #tpu.dot_dimension_numbers<[1], [0], [0], [1], [0, 0, 1, 1], [], []>} : vector<8x16xf32>, vector<16x32xf32>, vector<8x32xf32> -> vector<8x32xf32>
    %c0_4 = arith.constant 0 : index
    %c0_5 = arith.constant 0 : index
    %4 = vector.load %arg3[%c0_4, %c0_5] : memref<1x32xf32, #tpu.memory_space<vmem>>, vector<1x32xf32>
    %5 = vector.broadcast %4 : vector<1x32xf32> to vector<8x32xf32>
    %6 = arith.addf %3, %5 : vector<8x32xf32>
    %c0_6 = arith.constant 0 : index
    %c0_7 = arith.constant 0 : index
    %c0_8 = arith.constant 0 : index
    %7 = vector.load %arg4[%c0_6, %c0_7, %c0_8] : memref<1x8x32xf32, #tpu.memory_space<vmem>>, vector<1x8x32xf32>
    %8 = vector.shape_cast %7 : vector<1x8x32xf32> to vector<8x32xf32>
    %9 = vector.shape_cast %6 : vector<8x32xf32> to vector<1x8x32xf32>
    tpu.vector_store %arg4[%c0_6, %c0_7, %c0_8], %9 {strides = array<i32>} : memref<1x8x32xf32, #tpu.memory_space<vmem>>, vector<1x8x32xf32>,
    return
  }
  func.func @transform_0(%arg0: i32) -> (i32, i32, i32) {
    %c0_i32 = arith.constant 0 : i32
    %c0_i32_0 = arith.constant 0 : i32
    %c0_i32_1 = arith.constant 0 : i32
    return %arg0, %c0_i32, %c0_i32_0 : i32, i32, i32
  }
  func.func @transform_1(%arg0: i32) -> (i32, i32) {
    %c0_i32 = arith.constant 0 : i32
    %c0_i32_0 = arith.constant 0 : i32
    %c0_i32_1 = arith.constant 0 : i32
    return %c0_i32, %c0_i32_0 : i32, i32
  }
  func.func @transform_2(%arg0: i32) -> (i32, i32) {
    %c0_i32 = arith.constant 0 : i32
    %c0_i32_0 = arith.constant 0 : i32
    %c0_i32_1 = arith.constant 0 : i32
    return %c0_i32, %c0_i32_0 : i32, i32
  }
  func.func @transform_3(%arg0: i32) -> (i32, i32, i32) {
    %c0_i32 = arith.constant 0 : i32
    %c0_i32_0 = arith.constant 0 : i32
    %c0_i32_1 = arith.constant 0 : i32
    return %arg0, %c0_i32, %c0_i32_0 : i32, i32, i32
  }
}

module attributes {stable_mosaic.version = 11 : i64} {
  func.func @_encoder_layer_kernel(%arg0: i32, %arg1: memref<1x8x32xf32, #tpu.memory_space<vmem>>, %arg2: memref<32x96xf32, #tpu.memory_space<vmem>>, %arg3: memref<1x96xf32, #tpu.memory_space<vmem>>, %arg4: memref<32x32xf32, #tpu.memory_space<vmem>>, %arg5: memref<1x32xf32, #tpu.memory_space<vmem>>, %arg6: memref<1x32xf32, #tpu.memory_space<vmem>>, %arg7: memref<1x32xf32, #tpu.memory_space<vmem>>, %arg8: memref<32x2048xf32, #tpu.memory_space<vmem>>, %arg9: memref<1x2048xf32, #tpu.memory_space<vmem>>, %arg10: memref<2048x32xf32, #tpu.memory_space<vmem>>, %arg11: memref<1x32xf32, #tpu.memory_space<vmem>>, %arg12: memref<1x32xf32, #tpu.memory_space<vmem>>, %arg13: memref<1x32xf32, #tpu.memory_space<vmem>>, %arg14: memref<1x8x32xf32, #tpu.memory_space<vmem>>) attributes {dimension_semantics = [#tpu.dimension_semantics<parallel>], iteration_bounds = array<i64: 2>, scalar_prefetch = 0 : i64, scratch_operands = 0 : i64, tpu.core_type = #tpu.core_type<tc>, window_params = [{transform_indices = @transform_0, window_bounds = array<i64: 1, 8, 32>}, {pipeline_mode = #tpu.pipeline_mode<synchronous>, transform_indices = @transform_1, window_bounds = array<i64: 32, 96>}, {pipeline_mode = #tpu.pipeline_mode<synchronous>, transform_indices = @transform_2, window_bounds = array<i64: 1, 96>}, {pipeline_mode = #tpu.pipeline_mode<synchronous>, transform_indices = @transform_3, window_bounds = array<i64: 32, 32>}, {pipeline_mode = #tpu.pipeline_mode<synchronous>, transform_indices = @transform_4, window_bounds = array<i64: 1, 32>}, {pipeline_mode = #tpu.pipeline_mode<synchronous>, transform_indices = @transform_5, window_bounds = array<i64: 1, 32>}, {pipeline_mode = #tpu.pipeline_mode<synchronous>, transform_indices = @transform_6, window_bounds = array<i64: 1, 32>}, {pipeline_mode = #tpu.pipeline_mode<synchronous>, transform_indices = @transform_7, window_bounds = array<i64: 32, 2048>}, {pipeline_mode = #tpu.pipeline_mode<synchronous>, transform_indices = @transform_8, window_bounds = array<i64: 1, 2048>}, {pipeline_mode = #tpu.pipeline_mode<synchronous>, transform_indices = @transform_9, window_bounds = array<i64: 2048, 32>}, {pipeline_mode = #tpu.pipeline_mode<synchronous>, transform_indices = @transform_10, window_bounds = array<i64: 1, 32>}, {pipeline_mode = #tpu.pipeline_mode<synchronous>, transform_indices = @transform_11, window_bounds = array<i64: 1, 32>}, {pipeline_mode = #tpu.pipeline_mode<synchronous>, transform_indices = @transform_12, window_bounds = array<i64: 1, 32>}, {transform_indices = @transform_13, window_bounds = array<i64: 1, 8, 32>}]} {
    %c0 = arith.constant 0 : index
    %c0_0 = arith.constant 0 : index
    %c0_1 = arith.constant 0 : index
    %0 = vector.load %arg1[%c0, %c0_0, %c0_1] : memref<1x8x32xf32, #tpu.memory_space<vmem>>, vector<1x8x32xf32>
    %1 = vector.shape_cast %0 : vector<1x8x32xf32> to vector<8x32xf32>
    %c0_2 = arith.constant 0 : index
    %c0_3 = arith.constant 0 : index
    %2 = vector.load %arg2[%c0_2, %c0_3] : memref<32x96xf32, #tpu.memory_space<vmem>>, vector<32x96xf32>
    %cst = arith.constant dense<0.000000e+00> : vector<8x96xf32>
    %3 = tpu.matmul %1, %2, %cst {dimension_numbers = #tpu.dot_dimension_numbers<[1], [0], [0], [1], [0, 0, 1, 1], [], []>} : vector<8x32xf32>, vector<32x96xf32>, vector<8x96xf32> -> vector<8x96xf32>
    %c0_4 = arith.constant 0 : index
    %c0_5 = arith.constant 0 : index
    %4 = vector.load %arg3[%c0_4, %c0_5] : memref<1x96xf32, #tpu.memory_space<vmem>>, vector<1x96xf32>
    %5 = vector.broadcast %4 : vector<1x96xf32> to vector<8x96xf32>
    %6 = arith.addf %3, %5 : vector<8x96xf32>
    %7 = vector.extract_strided_slice %6 {offsets = [0, 0], sizes = [8, 32], strides = [1, 1]} : vector<8x96xf32> to vector<8x32xf32>
    %cst_6 = arith.constant 0.353553385 : f32
    %8 = vector.broadcast %cst_6 : f32 to vector<8x32xf32>
    %9 = arith.mulf %7, %8 : vector<8x32xf32>
    %10 = vector.extract_strided_slice %6 {offsets = [0, 32], sizes = [8, 32], strides = [1, 1]} : vector<8x96xf32> to vector<8x32xf32>
    %11 = vector.extract_strided_slice %6 {offsets = [0, 64], sizes = [8, 32], strides = [1, 1]} : vector<8x96xf32> to vector<8x32xf32>
    %c0_7 = arith.constant 0 : index
    %c0_8 = arith.constant 0 : index
    %12 = vector.load %arg4[%c0_7, %c0_8] : memref<32x32xf32, #tpu.memory_space<vmem>>, vector<32x32xf32>
    %c0_9 = arith.constant 0 : index
    %c0_10 = arith.constant 0 : index
    %13 = vector.load %arg5[%c0_9, %c0_10] : memref<1x32xf32, #tpu.memory_space<vmem>>, vector<1x32xf32>
    %cst_11 = arith.constant 0.000000e+00 : f32
    %14 = vector.broadcast %cst_11 : f32 to vector<8x32xf32>
    %15 = vector.broadcast %13 : vector<1x32xf32> to vector<8x32xf32>
    %16 = arith.addf %14, %15 : vector<8x32xf32>
    %17 = vector.extract_strided_slice %9 {offsets = [0, 0], sizes = [8, 8], strides = [1, 1]} : vector<8x32xf32> to vector<8x8xf32>
    %18 = vector.extract_strided_slice %10 {offsets = [0, 0], sizes = [8, 8], strides = [1, 1]} : vector<8x32xf32> to vector<8x8xf32>
    %cst_12 = arith.constant dense<0.000000e+00> : vector<8x8xf32>
    %19 = tpu.matmul %17, %18, %cst_12 {dimension_numbers = #tpu.dot_dimension_numbers<[1], [1], [0], [0], [0, 0, 1, 0], [], []>} : vector<8x8xf32>, vector<8x8xf32>, vector<8x8xf32> -> vector<8x8xf32>
    %cst_13 = arith.constant dense<0xFF800000> : vector<8xf32>
    %20 = vector.multi_reduction <maximumf>, %19, %cst_13 [1] : vector<8x8xf32> to vector<8xf32>
    %21 = vector.shape_cast %20 : vector<8xf32> to vector<8x1xf32>
    %22 = vector.broadcast %21 : vector<8x1xf32> to vector<8x8xf32>
    %23 = arith.subf %19, %22 : vector<8x8xf32>
    %24 = math.exp %23 : vector<8x8xf32>
    %cst_14 = arith.constant dense<0.000000e+00> : vector<8xf32>
    %25 = vector.multi_reduction <add>, %24, %cst_14 [1] : vector<8x8xf32> to vector<8xf32>
    %26 = vector.shape_cast %25 : vector<8xf32> to vector<8x1xf32>
    %27 = tpu.reciprocal %26 {approx = true} : vector<8x1xf32> -> vector<8x1xf32>
    %28 = vector.broadcast %27 : vector<8x1xf32> to vector<8x8xf32>
    %29 = arith.mulf %24, %28 : vector<8x8xf32>
    %30 = vector.extract_strided_slice %11 {offsets = [0, 0], sizes = [8, 8], strides = [1, 1]} : vector<8x32xf32> to vector<8x8xf32>
    %cst_15 = arith.constant dense<0.000000e+00> : vector<8x8xf32>
    %31 = tpu.matmul %29, %30, %cst_15 {dimension_numbers = #tpu.dot_dimension_numbers<[1], [0], [0], [1], [0, 0, 1, 1], [], []>} : vector<8x8xf32>, vector<8x8xf32>, vector<8x8xf32> -> vector<8x8xf32>
    %32 = vector.extract_strided_slice %12 {offsets = [0, 0], sizes = [8, 32], strides = [1, 1]} : vector<32x32xf32> to vector<8x32xf32>
    %cst_16 = arith.constant dense<0.000000e+00> : vector<8x32xf32>
    %33 = tpu.matmul %31, %32, %cst_16 {dimension_numbers = #tpu.dot_dimension_numbers<[1], [0], [0], [1], [0, 0, 1, 1], [], []>} : vector<8x8xf32>, vector<8x32xf32>, vector<8x32xf32> -> vector<8x32xf32>
    %34 = arith.addf %16, %33 : vector<8x32xf32>
    %35 = vector.extract_strided_slice %9 {offsets = [0, 8], sizes = [8, 8], strides = [1, 1]} : vector<8x32xf32> to vector<8x8xf32>
    %36 = vector.extract_strided_slice %10 {offsets = [0, 8], sizes = [8, 8], strides = [1, 1]} : vector<8x32xf32> to vector<8x8xf32>
    %cst_17 = arith.constant dense<0.000000e+00> : vector<8x8xf32>
    %37 = tpu.matmul %35, %36, %cst_17 {dimension_numbers = #tpu.dot_dimension_numbers<[1], [1], [0], [0], [0, 0, 1, 0], [], []>} : vector<8x8xf32>, vector<8x8xf32>, vector<8x8xf32> -> vector<8x8xf32>
    %cst_18 = arith.constant dense<0xFF800000> : vector<8xf32>
    %38 = vector.multi_reduction <maximumf>, %37, %cst_18 [1] : vector<8x8xf32> to vector<8xf32>
    %39 = vector.shape_cast %38 : vector<8xf32> to vector<8x1xf32>
    %40 = vector.broadcast %39 : vector<8x1xf32> to vector<8x8xf32>
    %41 = arith.subf %37, %40 : vector<8x8xf32>
    %42 = math.exp %41 : vector<8x8xf32>
    %cst_19 = arith.constant dense<0.000000e+00> : vector<8xf32>
    %43 = vector.multi_reduction <add>, %42, %cst_19 [1] : vector<8x8xf32> to vector<8xf32>
    %44 = vector.shape_cast %43 : vector<8xf32> to vector<8x1xf32>
    %45 = tpu.reciprocal %44 {approx = true} : vector<8x1xf32> -> vector<8x1xf32>
    %46 = vector.broadcast %45 : vector<8x1xf32> to vector<8x8xf32>
    %47 = arith.mulf %42, %46 : vector<8x8xf32>
    %48 = vector.extract_strided_slice %11 {offsets = [0, 8], sizes = [8, 8], strides = [1, 1]} : vector<8x32xf32> to vector<8x8xf32>
    %cst_20 = arith.constant dense<0.000000e+00> : vector<8x8xf32>
    %49 = tpu.matmul %47, %48, %cst_20 {dimension_numbers = #tpu.dot_dimension_numbers<[1], [0], [0], [1], [0, 0, 1, 1], [], []>} : vector<8x8xf32>, vector<8x8xf32>, vector<8x8xf32> -> vector<8x8xf32>
    %50 = vector.extract_strided_slice %12 {offsets = [8, 0], sizes = [8, 32], strides = [1, 1]} : vector<32x32xf32> to vector<8x32xf32>
    %cst_21 = arith.constant dense<0.000000e+00> : vector<8x32xf32>
    %51 = tpu.matmul %49, %50, %cst_21 {dimension_numbers = #tpu.dot_dimension_numbers<[1], [0], [0], [1], [0, 0, 1, 1], [], []>} : vector<8x8xf32>, vector<8x32xf32>, vector<8x32xf32> -> vector<8x32xf32>
    %52 = arith.addf %34, %51 : vector<8x32xf32>
    %53 = vector.extract_strided_slice %9 {offsets = [0, 16], sizes = [8, 8], strides = [1, 1]} : vector<8x32xf32> to vector<8x8xf32>
    %54 = vector.extract_strided_slice %10 {offsets = [0, 16], sizes = [8, 8], strides = [1, 1]} : vector<8x32xf32> to vector<8x8xf32>
    %cst_22 = arith.constant dense<0.000000e+00> : vector<8x8xf32>
    %55 = tpu.matmul %53, %54, %cst_22 {dimension_numbers = #tpu.dot_dimension_numbers<[1], [1], [0], [0], [0, 0, 1, 0], [], []>} : vector<8x8xf32>, vector<8x8xf32>, vector<8x8xf32> -> vector<8x8xf32>
    %cst_23 = arith.constant dense<0xFF800000> : vector<8xf32>
    %56 = vector.multi_reduction <maximumf>, %55, %cst_23 [1] : vector<8x8xf32> to vector<8xf32>
    %57 = vector.shape_cast %56 : vector<8xf32> to vector<8x1xf32>
    %58 = vector.broadcast %57 : vector<8x1xf32> to vector<8x8xf32>
    %59 = arith.subf %55, %58 : vector<8x8xf32>
    %60 = math.exp %59 : vector<8x8xf32>
    %cst_24 = arith.constant dense<0.000000e+00> : vector<8xf32>
    %61 = vector.multi_reduction <add>, %60, %cst_24 [1] : vector<8x8xf32> to vector<8xf32>
    %62 = vector.shape_cast %61 : vector<8xf32> to vector<8x1xf32>
    %63 = tpu.reciprocal %62 {approx = true} : vector<8x1xf32> -> vector<8x1xf32>
    %64 = vector.broadcast %63 : vector<8x1xf32> to vector<8x8xf32>
    %65 = arith.mulf %60, %64 : vector<8x8xf32>
    %66 = vector.extract_strided_slice %11 {offsets = [0, 16], sizes = [8, 8], strides = [1, 1]} : vector<8x32xf32> to vector<8x8xf32>
    %cst_25 = arith.constant dense<0.000000e+00> : vector<8x8xf32>
    %67 = tpu.matmul %65, %66, %cst_25 {dimension_numbers = #tpu.dot_dimension_numbers<[1], [0], [0], [1], [0, 0, 1, 1], [], []>} : vector<8x8xf32>, vector<8x8xf32>, vector<8x8xf32> -> vector<8x8xf32>
    %68 = vector.extract_strided_slice %12 {offsets = [16, 0], sizes = [8, 32], strides = [1, 1]} : vector<32x32xf32> to vector<8x32xf32>
    %cst_26 = arith.constant dense<0.000000e+00> : vector<8x32xf32>
    %69 = tpu.matmul %67, %68, %cst_26 {dimension_numbers = #tpu.dot_dimension_numbers<[1], [0], [0], [1], [0, 0, 1, 1], [], []>} : vector<8x8xf32>, vector<8x32xf32>, vector<8x32xf32> -> vector<8x32xf32>
    %70 = arith.addf %52, %69 : vector<8x32xf32>
    %71 = vector.extract_strided_slice %9 {offsets = [0, 24], sizes = [8, 8], strides = [1, 1]} : vector<8x32xf32> to vector<8x8xf32>
    %72 = vector.extract_strided_slice %10 {offsets = [0, 24], sizes = [8, 8], strides = [1, 1]} : vector<8x32xf32> to vector<8x8xf32>
    %cst_27 = arith.constant dense<0.000000e+00> : vector<8x8xf32>
    %73 = tpu.matmul %71, %72, %cst_27 {dimension_numbers = #tpu.dot_dimension_numbers<[1], [1], [0], [0], [0, 0, 1, 0], [], []>} : vector<8x8xf32>, vector<8x8xf32>, vector<8x8xf32> -> vector<8x8xf32>
    %cst_28 = arith.constant dense<0xFF800000> : vector<8xf32>
    %74 = vector.multi_reduction <maximumf>, %73, %cst_28 [1] : vector<8x8xf32> to vector<8xf32>
    %75 = vector.shape_cast %74 : vector<8xf32> to vector<8x1xf32>
    %76 = vector.broadcast %75 : vector<8x1xf32> to vector<8x8xf32>
    %77 = arith.subf %73, %76 : vector<8x8xf32>
    %78 = math.exp %77 : vector<8x8xf32>
    %cst_29 = arith.constant dense<0.000000e+00> : vector<8xf32>
    %79 = vector.multi_reduction <add>, %78, %cst_29 [1] : vector<8x8xf32> to vector<8xf32>
    %80 = vector.shape_cast %79 : vector<8xf32> to vector<8x1xf32>
    %81 = tpu.reciprocal %80 {approx = true} : vector<8x1xf32> -> vector<8x1xf32>
    %82 = vector.broadcast %81 : vector<8x1xf32> to vector<8x8xf32>
    %83 = arith.mulf %78, %82 : vector<8x8xf32>
    %84 = vector.extract_strided_slice %11 {offsets = [0, 24], sizes = [8, 8], strides = [1, 1]} : vector<8x32xf32> to vector<8x8xf32>
    %cst_30 = arith.constant dense<0.000000e+00> : vector<8x8xf32>
    %85 = tpu.matmul %83, %84, %cst_30 {dimension_numbers = #tpu.dot_dimension_numbers<[1], [0], [0], [1], [0, 0, 1, 1], [], []>} : vector<8x8xf32>, vector<8x8xf32>, vector<8x8xf32> -> vector<8x8xf32>
    %86 = vector.extract_strided_slice %12 {offsets = [24, 0], sizes = [8, 32], strides = [1, 1]} : vector<32x32xf32> to vector<8x32xf32>
    %cst_31 = arith.constant dense<0.000000e+00> : vector<8x32xf32>
    %87 = tpu.matmul %85, %86, %cst_31 {dimension_numbers = #tpu.dot_dimension_numbers<[1], [0], [0], [1], [0, 0, 1, 1], [], []>} : vector<8x8xf32>, vector<8x32xf32>, vector<8x32xf32> -> vector<8x32xf32>
    %88 = arith.addf %70, %87 : vector<8x32xf32>
    %89 = arith.addf %1, %88 : vector<8x32xf32>
    %c0_32 = arith.constant 0 : index
    %c0_33 = arith.constant 0 : index
    %90 = vector.load %arg6[%c0_32, %c0_33] : memref<1x32xf32, #tpu.memory_space<vmem>>, vector<1x32xf32>
    %c0_34 = arith.constant 0 : index
    %c0_35 = arith.constant 0 : index
    %91 = vector.load %arg7[%c0_34, %c0_35] : memref<1x32xf32, #tpu.memory_space<vmem>>, vector<1x32xf32>
    %cst_36 = arith.constant dense<0.000000e+00> : vector<8xf32>
    %92 = vector.multi_reduction <add>, %89, %cst_36 [1] : vector<8x32xf32> to vector<8xf32>
    %93 = vector.shape_cast %92 : vector<8xf32> to vector<8x1xf32>
    %cst_37 = arith.constant 3.200000e+01 : f32
    %94 = vector.broadcast %cst_37 : f32 to vector<8x1xf32>
    %95 = arith.divf %93, %94 : vector<8x1xf32>
    %96 = vector.broadcast %95 : vector<8x1xf32> to vector<8x32xf32>
    %97 = arith.subf %89, %96 : vector<8x32xf32>
    %98 = arith.mulf %97, %97 : vector<8x32xf32>
    %cst_38 = arith.constant dense<0.000000e+00> : vector<8xf32>
    %99 = vector.multi_reduction <add>, %98, %cst_38 [1] : vector<8x32xf32> to vector<8xf32>
    %100 = vector.shape_cast %99 : vector<8xf32> to vector<8x1xf32>
    %cst_39 = arith.constant 3.200000e+01 : f32
    %101 = vector.broadcast %cst_39 : f32 to vector<8x1xf32>
    %102 = arith.divf %100, %101 : vector<8x1xf32>
    %cst_40 = arith.constant 9.99999974E-6 : f32
    %103 = vector.broadcast %cst_40 : f32 to vector<8x1xf32>
    %104 = arith.addf %102, %103 : vector<8x1xf32>
    %105 = math.rsqrt %104 : vector<8x1xf32>
    %106 = vector.broadcast %105 : vector<8x1xf32> to vector<8x32xf32>
    %107 = arith.mulf %97, %106 : vector<8x32xf32>
    %108 = vector.broadcast %90 : vector<1x32xf32> to vector<8x32xf32>
    %109 = arith.mulf %107, %108 : vector<8x32xf32>
    %110 = vector.broadcast %91 : vector<1x32xf32> to vector<8x32xf32>
    %111 = arith.addf %109, %110 : vector<8x32xf32>
    %c0_41 = arith.constant 0 : index
    %c0_42 = arith.constant 0 : index
    %112 = vector.load %arg8[%c0_41, %c0_42] : memref<32x2048xf32, #tpu.memory_space<vmem>>, vector<32x2048xf32>
    %cst_43 = arith.constant dense<0.000000e+00> : vector<8x2048xf32>
    %113 = tpu.matmul %111, %112, %cst_43 {dimension_numbers = #tpu.dot_dimension_numbers<[1], [0], [0], [1], [0, 0, 1, 1], [], []>} : vector<8x32xf32>, vector<32x2048xf32>, vector<8x2048xf32> -> vector<8x2048xf32>
    %c0_44 = arith.constant 0 : index
    %c0_45 = arith.constant 0 : index
    %114 = vector.load %arg9[%c0_44, %c0_45] : memref<1x2048xf32, #tpu.memory_space<vmem>>, vector<1x2048xf32>
    %115 = vector.broadcast %114 : vector<1x2048xf32> to vector<8x2048xf32>
    %116 = arith.addf %113, %115 : vector<8x2048xf32>
    %cst_46 = arith.constant 0.000000e+00 : f32
    %117 = vector.broadcast %cst_46 : f32 to vector<8x2048xf32>
    %118 = arith.maximumf %116, %117 : vector<8x2048xf32>
    %c0_47 = arith.constant 0 : index
    %c0_48 = arith.constant 0 : index
    %119 = vector.load %arg10[%c0_47, %c0_48] : memref<2048x32xf32, #tpu.memory_space<vmem>>, vector<2048x32xf32>
    %cst_49 = arith.constant dense<0.000000e+00> : vector<8x32xf32>
    %120 = tpu.matmul %118, %119, %cst_49 {dimension_numbers = #tpu.dot_dimension_numbers<[1], [0], [0], [1], [0, 0, 1, 1], [], []>} : vector<8x2048xf32>, vector<2048x32xf32>, vector<8x32xf32> -> vector<8x32xf32>
    %c0_50 = arith.constant 0 : index
    %c0_51 = arith.constant 0 : index
    %121 = vector.load %arg11[%c0_50, %c0_51] : memref<1x32xf32, #tpu.memory_space<vmem>>, vector<1x32xf32>
    %122 = vector.broadcast %121 : vector<1x32xf32> to vector<8x32xf32>
    %123 = arith.addf %120, %122 : vector<8x32xf32>
    %124 = arith.addf %111, %123 : vector<8x32xf32>
    %c0_52 = arith.constant 0 : index
    %c0_53 = arith.constant 0 : index
    %125 = vector.load %arg12[%c0_52, %c0_53] : memref<1x32xf32, #tpu.memory_space<vmem>>, vector<1x32xf32>
    %c0_54 = arith.constant 0 : index
    %c0_55 = arith.constant 0 : index
    %126 = vector.load %arg13[%c0_54, %c0_55] : memref<1x32xf32, #tpu.memory_space<vmem>>, vector<1x32xf32>
    %cst_56 = arith.constant dense<0.000000e+00> : vector<8xf32>
    %127 = vector.multi_reduction <add>, %124, %cst_56 [1] : vector<8x32xf32> to vector<8xf32>
    %128 = vector.shape_cast %127 : vector<8xf32> to vector<8x1xf32>
    %cst_57 = arith.constant 3.200000e+01 : f32
    %129 = vector.broadcast %cst_57 : f32 to vector<8x1xf32>
    %130 = arith.divf %128, %129 : vector<8x1xf32>
    %131 = vector.broadcast %130 : vector<8x1xf32> to vector<8x32xf32>
    %132 = arith.subf %124, %131 : vector<8x32xf32>
    %133 = arith.mulf %132, %132 : vector<8x32xf32>
    %cst_58 = arith.constant dense<0.000000e+00> : vector<8xf32>
    %134 = vector.multi_reduction <add>, %133, %cst_58 [1] : vector<8x32xf32> to vector<8xf32>
    %135 = vector.shape_cast %134 : vector<8xf32> to vector<8x1xf32>
    %cst_59 = arith.constant 3.200000e+01 : f32
    %136 = vector.broadcast %cst_59 : f32 to vector<8x1xf32>
    %137 = arith.divf %135, %136 : vector<8x1xf32>
    %cst_60 = arith.constant 9.99999974E-6 : f32
    %138 = vector.broadcast %cst_60 : f32 to vector<8x1xf32>
    %139 = arith.addf %137, %138 : vector<8x1xf32>
    %140 = math.rsqrt %139 : vector<8x1xf32>
    %141 = vector.broadcast %140 : vector<8x1xf32> to vector<8x32xf32>
    %142 = arith.mulf %132, %141 : vector<8x32xf32>
    %143 = vector.broadcast %125 : vector<1x32xf32> to vector<8x32xf32>
    %144 = arith.mulf %142, %143 : vector<8x32xf32>
    %145 = vector.broadcast %126 : vector<1x32xf32> to vector<8x32xf32>
    %146 = arith.addf %144, %145 : vector<8x32xf32>
    %c0_61 = arith.constant 0 : index
    %c0_62 = arith.constant 0 : index
    %c0_63 = arith.constant 0 : index
    %147 = vector.load %arg14[%c0_61, %c0_62, %c0_63] : memref<1x8x32xf32, #tpu.memory_space<vmem>>, vector<1x8x32xf32>
    %148 = vector.shape_cast %147 : vector<1x8x32xf32> to vector<8x32xf32>
    %149 = vector.shape_cast %146 : vector<8x32xf32> to vector<1x8x32xf32>
    tpu.vector_store %arg14[%c0_61, %c0_62, %c0_63], %149 {strides = array<i32>} : memref<1x8x32xf32, #tpu.memory_space<vmem>>, vector<1x8x32xf32>,
    return
  }
  func.func @transform_0(%arg0: i32) -> (i32, i32, i32) {
    %c0_i32 = arith.constant 0 : i32
    %c0_i32_0 = arith.constant 0 : i32
    %c0_i32_1 = arith.constant 0 : i32
    return %arg0, %c0_i32, %c0_i32_0 : i32, i32, i32
  }
  func.func @transform_1(%arg0: i32) -> (i32, i32) {
    %c0_i32 = arith.constant 0 : i32
    %c0_i32_0 = arith.constant 0 : i32
    %c0_i32_1 = arith.constant 0 : i32
    return %c0_i32, %c0_i32_0 : i32, i32
  }
  func.func @transform_2(%arg0: i32) -> (i32, i32) {
    %c0_i32 = arith.constant 0 : i32
    %c0_i32_0 = arith.constant 0 : i32
    %c0_i32_1 = arith.constant 0 : i32
    return %c0_i32, %c0_i32_0 : i32, i32
  }
  func.func @transform_3(%arg0: i32) -> (i32, i32) {
    %c0_i32 = arith.constant 0 : i32
    %c0_i32_0 = arith.constant 0 : i32
    %c0_i32_1 = arith.constant 0 : i32
    return %c0_i32, %c0_i32_0 : i32, i32
  }
  func.func @transform_4(%arg0: i32) -> (i32, i32) {
    %c0_i32 = arith.constant 0 : i32
    %c0_i32_0 = arith.constant 0 : i32
    %c0_i32_1 = arith.constant 0 : i32
    return %c0_i32, %c0_i32_0 : i32, i32
  }
  func.func @transform_5(%arg0: i32) -> (i32, i32) {
    %c0_i32 = arith.constant 0 : i32
    %c0_i32_0 = arith.constant 0 : i32
    %c0_i32_1 = arith.constant 0 : i32
    return %c0_i32, %c0_i32_0 : i32, i32
  }
  func.func @transform_6(%arg0: i32) -> (i32, i32) {
    %c0_i32 = arith.constant 0 : i32
    %c0_i32_0 = arith.constant 0 : i32
    %c0_i32_1 = arith.constant 0 : i32
    return %c0_i32, %c0_i32_0 : i32, i32
  }
  func.func @transform_7(%arg0: i32) -> (i32, i32) {
    %c0_i32 = arith.constant 0 : i32
    %c0_i32_0 = arith.constant 0 : i32
    %c0_i32_1 = arith.constant 0 : i32
    return %c0_i32, %c0_i32_0 : i32, i32
  }
  func.func @transform_8(%arg0: i32) -> (i32, i32) {
    %c0_i32 = arith.constant 0 : i32
    %c0_i32_0 = arith.constant 0 : i32
    %c0_i32_1 = arith.constant 0 : i32
    return %c0_i32, %c0_i32_0 : i32, i32
  }
  func.func @transform_9(%arg0: i32) -> (i32, i32) {
    %c0_i32 = arith.constant 0 : i32
    %c0_i32_0 = arith.constant 0 : i32
    %c0_i32_1 = arith.constant 0 : i32
    return %c0_i32, %c0_i32_0 : i32, i32
  }
  func.func @transform_10(%arg0: i32) -> (i32, i32) {
    %c0_i32 = arith.constant 0 : i32
    %c0_i32_0 = arith.constant 0 : i32
    %c0_i32_1 = arith.constant 0 : i32
    return %c0_i32, %c0_i32_0 : i32, i32
  }
  func.func @transform_11(%arg0: i32) -> (i32, i32) {
    %c0_i32 = arith.constant 0 : i32
    %c0_i32_0 = arith.constant 0 : i32
    %c0_i32_1 = arith.constant 0 : i32
    return %c0_i32, %c0_i32_0 : i32, i32
  }
  func.func @transform_12(%arg0: i32) -> (i32, i32) {
    %c0_i32 = arith.constant 0 : i32
    %c0_i32_0 = arith.constant 0 : i32
    %c0_i32_1 = arith.constant 0 : i32
    return %c0_i32, %c0_i32_0 : i32, i32
  }
  func.func @transform_13(%arg0: i32) -> (i32, i32, i32) {
    %c0_i32 = arith.constant 0 : i32
    %c0_i32_0 = arith.constant 0 : i32
    %c0_i32_1 = arith.constant 0 : i32
    return %arg0, %c0_i32, %c0_i32_0 : i32, i32, i32
  }
}

module attributes {stable_mosaic.version = 11 : i64} {
  func.func @_ln_kernel(%arg0: i32, %arg1: memref<1x8x32xf32, #tpu.memory_space<vmem>>, %arg2: memref<1x32xf32, #tpu.memory_space<vmem>>, %arg3: memref<1x32xf32, #tpu.memory_space<vmem>>, %arg4: memref<1x8x32xf32, #tpu.memory_space<vmem>>) attributes {dimension_semantics = [#tpu.dimension_semantics<parallel>], iteration_bounds = array<i64: 2>, scalar_prefetch = 0 : i64, scratch_operands = 0 : i64, tpu.core_type = #tpu.core_type<tc>, window_params = [{transform_indices = @transform_0, window_bounds = array<i64: 1, 8, 32>}, {pipeline_mode = #tpu.pipeline_mode<synchronous>, transform_indices = @transform_1, window_bounds = array<i64: 1, 32>}, {pipeline_mode = #tpu.pipeline_mode<synchronous>, transform_indices = @transform_2, window_bounds = array<i64: 1, 32>}, {transform_indices = @transform_3, window_bounds = array<i64: 1, 8, 32>}]} {
    %c0 = arith.constant 0 : index
    %c0_0 = arith.constant 0 : index
    %c0_1 = arith.constant 0 : index
    %0 = vector.load %arg1[%c0, %c0_0, %c0_1] : memref<1x8x32xf32, #tpu.memory_space<vmem>>, vector<1x8x32xf32>
    %1 = vector.shape_cast %0 : vector<1x8x32xf32> to vector<8x32xf32>
    %c0_2 = arith.constant 0 : index
    %c0_3 = arith.constant 0 : index
    %2 = vector.load %arg2[%c0_2, %c0_3] : memref<1x32xf32, #tpu.memory_space<vmem>>, vector<1x32xf32>
    %c0_4 = arith.constant 0 : index
    %c0_5 = arith.constant 0 : index
    %3 = vector.load %arg3[%c0_4, %c0_5] : memref<1x32xf32, #tpu.memory_space<vmem>>, vector<1x32xf32>
    %cst = arith.constant dense<0.000000e+00> : vector<8xf32>
    %4 = vector.multi_reduction <add>, %1, %cst [1] : vector<8x32xf32> to vector<8xf32>
    %5 = vector.shape_cast %4 : vector<8xf32> to vector<8x1xf32>
    %cst_6 = arith.constant 3.200000e+01 : f32
    %6 = vector.broadcast %cst_6 : f32 to vector<8x1xf32>
    %7 = arith.divf %5, %6 : vector<8x1xf32>
    %8 = vector.broadcast %7 : vector<8x1xf32> to vector<8x32xf32>
    %9 = arith.subf %1, %8 : vector<8x32xf32>
    %10 = arith.mulf %9, %9 : vector<8x32xf32>
    %cst_7 = arith.constant dense<0.000000e+00> : vector<8xf32>
    %11 = vector.multi_reduction <add>, %10, %cst_7 [1] : vector<8x32xf32> to vector<8xf32>
    %12 = vector.shape_cast %11 : vector<8xf32> to vector<8x1xf32>
    %cst_8 = arith.constant 3.200000e+01 : f32
    %13 = vector.broadcast %cst_8 : f32 to vector<8x1xf32>
    %14 = arith.divf %12, %13 : vector<8x1xf32>
    %cst_9 = arith.constant 9.99999974E-6 : f32
    %15 = vector.broadcast %cst_9 : f32 to vector<8x1xf32>
    %16 = arith.addf %14, %15 : vector<8x1xf32>
    %17 = math.rsqrt %16 : vector<8x1xf32>
    %18 = vector.broadcast %17 : vector<8x1xf32> to vector<8x32xf32>
    %19 = arith.mulf %9, %18 : vector<8x32xf32>
    %20 = vector.broadcast %2 : vector<1x32xf32> to vector<8x32xf32>
    %21 = arith.mulf %19, %20 : vector<8x32xf32>
    %22 = vector.broadcast %3 : vector<1x32xf32> to vector<8x32xf32>
    %23 = arith.addf %21, %22 : vector<8x32xf32>
    %c0_10 = arith.constant 0 : index
    %c0_11 = arith.constant 0 : index
    %c0_12 = arith.constant 0 : index
    %24 = vector.load %arg4[%c0_10, %c0_11, %c0_12] : memref<1x8x32xf32, #tpu.memory_space<vmem>>, vector<1x8x32xf32>
    %25 = vector.shape_cast %24 : vector<1x8x32xf32> to vector<8x32xf32>
    %26 = vector.shape_cast %23 : vector<8x32xf32> to vector<1x8x32xf32>
    tpu.vector_store %arg4[%c0_10, %c0_11, %c0_12], %26 {strides = array<i32>} : memref<1x8x32xf32, #tpu.memory_space<vmem>>, vector<1x8x32xf32>,
    return
  }
  func.func @transform_0(%arg0: i32) -> (i32, i32, i32) {
    %c0_i32 = arith.constant 0 : i32
    %c0_i32_0 = arith.constant 0 : i32
    %c0_i32_1 = arith.constant 0 : i32
    return %arg0, %c0_i32, %c0_i32_0 : i32, i32, i32
  }
  func.func @transform_1(%arg0: i32) -> (i32, i32) {
    %c0_i32 = arith.constant 0 : i32
    %c0_i32_0 = arith.constant 0 : i32
    %c0_i32_1 = arith.constant 0 : i32
    return %c0_i32, %c0_i32_0 : i32, i32
  }
  func.func @transform_2(%arg0: i32) -> (i32, i32) {
    %c0_i32 = arith.constant 0 : i32
    %c0_i32_0 = arith.constant 0 : i32
    %c0_i32_1 = arith.constant 0 : i32
    return %c0_i32, %c0_i32_0 : i32, i32
  }
  func.func @transform_3(%arg0: i32) -> (i32, i32, i32) {
    %c0_i32 = arith.constant 0 : i32
    %c0_i32_0 = arith.constant 0 : i32
    %c0_i32_1 = arith.constant 0 : i32
    return %arg0, %c0_i32, %c0_i32_0 : i32, i32, i32
  }
}

module attributes {stable_mosaic.version = 11 : i64} {
  func.func @_ln_linear_kernel(%arg0: i32, %arg1: memref<1x8x32xf32, #tpu.memory_space<vmem>>, %arg2: memref<1x32xf32, #tpu.memory_space<vmem>>, %arg3: memref<1x32xf32, #tpu.memory_space<vmem>>, %arg4: memref<32x8xf32, #tpu.memory_space<vmem>>, %arg5: memref<1x8xf32, #tpu.memory_space<vmem>>, %arg6: memref<1x8x8xf32, #tpu.memory_space<vmem>>) attributes {dimension_semantics = [#tpu.dimension_semantics<parallel>], iteration_bounds = array<i64: 2>, scalar_prefetch = 0 : i64, scratch_operands = 0 : i64, tpu.core_type = #tpu.core_type<tc>, window_params = [{transform_indices = @transform_0, window_bounds = array<i64: 1, 8, 32>}, {pipeline_mode = #tpu.pipeline_mode<synchronous>, transform_indices = @transform_1, window_bounds = array<i64: 1, 32>}, {pipeline_mode = #tpu.pipeline_mode<synchronous>, transform_indices = @transform_2, window_bounds = array<i64: 1, 32>}, {pipeline_mode = #tpu.pipeline_mode<synchronous>, transform_indices = @transform_3, window_bounds = array<i64: 32, 8>}, {pipeline_mode = #tpu.pipeline_mode<synchronous>, transform_indices = @transform_4, window_bounds = array<i64: 1, 8>}, {transform_indices = @transform_5, window_bounds = array<i64: 1, 8, 8>}]} {
    %c0 = arith.constant 0 : index
    %c0_0 = arith.constant 0 : index
    %c0_1 = arith.constant 0 : index
    %0 = vector.load %arg1[%c0, %c0_0, %c0_1] : memref<1x8x32xf32, #tpu.memory_space<vmem>>, vector<1x8x32xf32>
    %1 = vector.shape_cast %0 : vector<1x8x32xf32> to vector<8x32xf32>
    %c0_2 = arith.constant 0 : index
    %c0_3 = arith.constant 0 : index
    %2 = vector.load %arg2[%c0_2, %c0_3] : memref<1x32xf32, #tpu.memory_space<vmem>>, vector<1x32xf32>
    %c0_4 = arith.constant 0 : index
    %c0_5 = arith.constant 0 : index
    %3 = vector.load %arg3[%c0_4, %c0_5] : memref<1x32xf32, #tpu.memory_space<vmem>>, vector<1x32xf32>
    %cst = arith.constant dense<0.000000e+00> : vector<8xf32>
    %4 = vector.multi_reduction <add>, %1, %cst [1] : vector<8x32xf32> to vector<8xf32>
    %5 = vector.shape_cast %4 : vector<8xf32> to vector<8x1xf32>
    %cst_6 = arith.constant 3.200000e+01 : f32
    %6 = vector.broadcast %cst_6 : f32 to vector<8x1xf32>
    %7 = arith.divf %5, %6 : vector<8x1xf32>
    %8 = vector.broadcast %7 : vector<8x1xf32> to vector<8x32xf32>
    %9 = arith.subf %1, %8 : vector<8x32xf32>
    %10 = arith.mulf %9, %9 : vector<8x32xf32>
    %cst_7 = arith.constant dense<0.000000e+00> : vector<8xf32>
    %11 = vector.multi_reduction <add>, %10, %cst_7 [1] : vector<8x32xf32> to vector<8xf32>
    %12 = vector.shape_cast %11 : vector<8xf32> to vector<8x1xf32>
    %cst_8 = arith.constant 3.200000e+01 : f32
    %13 = vector.broadcast %cst_8 : f32 to vector<8x1xf32>
    %14 = arith.divf %12, %13 : vector<8x1xf32>
    %cst_9 = arith.constant 9.99999974E-6 : f32
    %15 = vector.broadcast %cst_9 : f32 to vector<8x1xf32>
    %16 = arith.addf %14, %15 : vector<8x1xf32>
    %17 = math.rsqrt %16 : vector<8x1xf32>
    %18 = vector.broadcast %17 : vector<8x1xf32> to vector<8x32xf32>
    %19 = arith.mulf %9, %18 : vector<8x32xf32>
    %20 = vector.broadcast %2 : vector<1x32xf32> to vector<8x32xf32>
    %21 = arith.mulf %19, %20 : vector<8x32xf32>
    %22 = vector.broadcast %3 : vector<1x32xf32> to vector<8x32xf32>
    %23 = arith.addf %21, %22 : vector<8x32xf32>
    %c0_10 = arith.constant 0 : index
    %c0_11 = arith.constant 0 : index
    %24 = vector.load %arg4[%c0_10, %c0_11] : memref<32x8xf32, #tpu.memory_space<vmem>>, vector<32x8xf32>
    %cst_12 = arith.constant dense<0.000000e+00> : vector<8x8xf32>
    %25 = tpu.matmul %23, %24, %cst_12 {dimension_numbers = #tpu.dot_dimension_numbers<[1], [0], [0], [1], [0, 0, 1, 1], [], []>} : vector<8x32xf32>, vector<32x8xf32>, vector<8x8xf32> -> vector<8x8xf32>
    %c0_13 = arith.constant 0 : index
    %c0_14 = arith.constant 0 : index
    %26 = vector.load %arg5[%c0_13, %c0_14] : memref<1x8xf32, #tpu.memory_space<vmem>>, vector<1x8xf32>
    %27 = vector.broadcast %26 : vector<1x8xf32> to vector<8x8xf32>
    %28 = arith.addf %25, %27 : vector<8x8xf32>
    %c0_15 = arith.constant 0 : index
    %c0_16 = arith.constant 0 : index
    %c0_17 = arith.constant 0 : index
    %29 = vector.load %arg6[%c0_15, %c0_16, %c0_17] : memref<1x8x8xf32, #tpu.memory_space<vmem>>, vector<1x8x8xf32>
    %30 = vector.shape_cast %29 : vector<1x8x8xf32> to vector<8x8xf32>
    %31 = vector.shape_cast %28 : vector<8x8xf32> to vector<1x8x8xf32>
    tpu.vector_store %arg6[%c0_15, %c0_16, %c0_17], %31 {strides = array<i32>} : memref<1x8x8xf32, #tpu.memory_space<vmem>>, vector<1x8x8xf32>,
    return
  }
  func.func @transform_0(%arg0: i32) -> (i32, i32, i32) {
    %c0_i32 = arith.constant 0 : i32
    %c0_i32_0 = arith.constant 0 : i32
    %c0_i32_1 = arith.constant 0 : i32
    return %arg0, %c0_i32, %c0_i32_0 : i32, i32, i32
  }
  func.func @transform_1(%arg0: i32) -> (i32, i32) {
    %c0_i32 = arith.constant 0 : i32
    %c0_i32_0 = arith.constant 0 : i32
    %c0_i32_1 = arith.constant 0 : i32
    return %c0_i32, %c0_i32_0 : i32, i32
  }
  func.func @transform_2(%arg0: i32) -> (i32, i32) {
    %c0_i32 = arith.constant 0 : i32
    %c0_i32_0 = arith.constant 0 : i32
    %c0_i32_1 = arith.constant 0 : i32
    return %c0_i32, %c0_i32_0 : i32, i32
  }
  func.func @transform_3(%arg0: i32) -> (i32, i32) {
    %c0_i32 = arith.constant 0 : i32
    %c0_i32_0 = arith.constant 0 : i32
    %c0_i32_1 = arith.constant 0 : i32
    return %c0_i32, %c0_i32_0 : i32, i32
  }
  func.func @transform_4(%arg0: i32) -> (i32, i32) {
    %c0_i32 = arith.constant 0 : i32
    %c0_i32_0 = arith.constant 0 : i32
    %c0_i32_1 = arith.constant 0 : i32
    return %c0_i32, %c0_i32_0 : i32, i32
  }
  func.func @transform_5(%arg0: i32) -> (i32, i32, i32) {
    %c0_i32 = arith.constant 0 : i32
    %c0_i32_0 = arith.constant 0 : i32
    %c0_i32_1 = arith.constant 0 : i32
    return %arg0, %c0_i32, %c0_i32_0 : i32, i32, i32
  }
}

module attributes {stable_mosaic.version = 11 : i64} {
  func.func @_decoder_layer_kernel(%arg0: i32, %arg1: memref<1x8x32xf32, #tpu.memory_space<vmem>>, %arg2: memref<1x8x32xf32, #tpu.memory_space<vmem>>, %arg3: memref<32x96xf32, #tpu.memory_space<vmem>>, %arg4: memref<1x96xf32, #tpu.memory_space<vmem>>, %arg5: memref<32x32xf32, #tpu.memory_space<vmem>>, %arg6: memref<1x32xf32, #tpu.memory_space<vmem>>, %arg7: memref<1x32xf32, #tpu.memory_space<vmem>>, %arg8: memref<1x32xf32, #tpu.memory_space<vmem>>, %arg9: memref<32x96xf32, #tpu.memory_space<vmem>>, %arg10: memref<1x96xf32, #tpu.memory_space<vmem>>, %arg11: memref<32x32xf32, #tpu.memory_space<vmem>>, %arg12: memref<1x32xf32, #tpu.memory_space<vmem>>, %arg13: memref<1x32xf32, #tpu.memory_space<vmem>>, %arg14: memref<1x32xf32, #tpu.memory_space<vmem>>, %arg15: memref<32x2048xf32, #tpu.memory_space<vmem>>, %arg16: memref<1x2048xf32, #tpu.memory_space<vmem>>, %arg17: memref<2048x32xf32, #tpu.memory_space<vmem>>, %arg18: memref<1x32xf32, #tpu.memory_space<vmem>>, %arg19: memref<1x32xf32, #tpu.memory_space<vmem>>, %arg20: memref<1x32xf32, #tpu.memory_space<vmem>>, %arg21: memref<1x8x32xf32, #tpu.memory_space<vmem>>) attributes {dimension_semantics = [#tpu.dimension_semantics<parallel>], iteration_bounds = array<i64: 2>, scalar_prefetch = 0 : i64, scratch_operands = 0 : i64, tpu.core_type = #tpu.core_type<tc>, window_params = [{transform_indices = @transform_0, window_bounds = array<i64: 1, 8, 32>}, {transform_indices = @transform_1, window_bounds = array<i64: 1, 8, 32>}, {pipeline_mode = #tpu.pipeline_mode<synchronous>, transform_indices = @transform_2, window_bounds = array<i64: 32, 96>}, {pipeline_mode = #tpu.pipeline_mode<synchronous>, transform_indices = @transform_3, window_bounds = array<i64: 1, 96>}, {pipeline_mode = #tpu.pipeline_mode<synchronous>, transform_indices = @transform_4, window_bounds = array<i64: 32, 32>}, {pipeline_mode = #tpu.pipeline_mode<synchronous>, transform_indices = @transform_5, window_bounds = array<i64: 1, 32>}, {pipeline_mode = #tpu.pipeline_mode<synchronous>, transform_indices = @transform_6, window_bounds = array<i64: 1, 32>}, {pipeline_mode = #tpu.pipeline_mode<synchronous>, transform_indices = @transform_7, window_bounds = array<i64: 1, 32>}, {pipeline_mode = #tpu.pipeline_mode<synchronous>, transform_indices = @transform_8, window_bounds = array<i64: 32, 96>}, {pipeline_mode = #tpu.pipeline_mode<synchronous>, transform_indices = @transform_9, window_bounds = array<i64: 1, 96>}, {pipeline_mode = #tpu.pipeline_mode<synchronous>, transform_indices = @transform_10, window_bounds = array<i64: 32, 32>}, {pipeline_mode = #tpu.pipeline_mode<synchronous>, transform_indices = @transform_11, window_bounds = array<i64: 1, 32>}, {pipeline_mode = #tpu.pipeline_mode<synchronous>, transform_indices = @transform_12, window_bounds = array<i64: 1, 32>}, {pipeline_mode = #tpu.pipeline_mode<synchronous>, transform_indices = @transform_13, window_bounds = array<i64: 1, 32>}, {pipeline_mode = #tpu.pipeline_mode<synchronous>, transform_indices = @transform_14, window_bounds = array<i64: 32, 2048>}, {pipeline_mode = #tpu.pipeline_mode<synchronous>, transform_indices = @transform_15, window_bounds = array<i64: 1, 2048>}, {pipeline_mode = #tpu.pipeline_mode<synchronous>, transform_indices = @transform_16, window_bounds = array<i64: 2048, 32>}, {pipeline_mode = #tpu.pipeline_mode<synchronous>, transform_indices = @transform_17, window_bounds = array<i64: 1, 32>}, {pipeline_mode = #tpu.pipeline_mode<synchronous>, transform_indices = @transform_18, window_bounds = array<i64: 1, 32>}, {pipeline_mode = #tpu.pipeline_mode<synchronous>, transform_indices = @transform_19, window_bounds = array<i64: 1, 32>}, {transform_indices = @transform_20, window_bounds = array<i64: 1, 8, 32>}]} {
    %c0 = arith.constant 0 : index
    %c0_0 = arith.constant 0 : index
    %c0_1 = arith.constant 0 : index
    %0 = vector.load %arg1[%c0, %c0_0, %c0_1] : memref<1x8x32xf32, #tpu.memory_space<vmem>>, vector<1x8x32xf32>
    %1 = vector.shape_cast %0 : vector<1x8x32xf32> to vector<8x32xf32>
    %c0_2 = arith.constant 0 : index
    %c0_3 = arith.constant 0 : index
    %c0_4 = arith.constant 0 : index
    %2 = vector.load %arg2[%c0_2, %c0_3, %c0_4] : memref<1x8x32xf32, #tpu.memory_space<vmem>>, vector<1x8x32xf32>
    %3 = vector.shape_cast %2 : vector<1x8x32xf32> to vector<8x32xf32>
    %c0_5 = arith.constant 0 : index
    %c0_6 = arith.constant 0 : index
    %4 = vector.load %arg3[%c0_5, %c0_6] : memref<32x96xf32, #tpu.memory_space<vmem>>, vector<32x96xf32>
    %cst = arith.constant dense<0.000000e+00> : vector<8x96xf32>
    %5 = tpu.matmul %1, %4, %cst {dimension_numbers = #tpu.dot_dimension_numbers<[1], [0], [0], [1], [0, 0, 1, 1], [], []>} : vector<8x32xf32>, vector<32x96xf32>, vector<8x96xf32> -> vector<8x96xf32>
    %c0_7 = arith.constant 0 : index
    %c0_8 = arith.constant 0 : index
    %6 = vector.load %arg4[%c0_7, %c0_8] : memref<1x96xf32, #tpu.memory_space<vmem>>, vector<1x96xf32>
    %7 = vector.broadcast %6 : vector<1x96xf32> to vector<8x96xf32>
    %8 = arith.addf %5, %7 : vector<8x96xf32>
    %9 = vector.extract_strided_slice %8 {offsets = [0, 0], sizes = [8, 32], strides = [1, 1]} : vector<8x96xf32> to vector<8x32xf32>
    %cst_9 = arith.constant 0.353553385 : f32
    %10 = vector.broadcast %cst_9 : f32 to vector<8x32xf32>
    %11 = arith.mulf %9, %10 : vector<8x32xf32>
    %12 = vector.extract_strided_slice %8 {offsets = [0, 32], sizes = [8, 32], strides = [1, 1]} : vector<8x96xf32> to vector<8x32xf32>
    %13 = vector.extract_strided_slice %8 {offsets = [0, 64], sizes = [8, 32], strides = [1, 1]} : vector<8x96xf32> to vector<8x32xf32>
    %c0_10 = arith.constant 0 : index
    %c0_11 = arith.constant 0 : index
    %14 = vector.load %arg5[%c0_10, %c0_11] : memref<32x32xf32, #tpu.memory_space<vmem>>, vector<32x32xf32>
    %c0_12 = arith.constant 0 : index
    %c0_13 = arith.constant 0 : index
    %15 = vector.load %arg6[%c0_12, %c0_13] : memref<1x32xf32, #tpu.memory_space<vmem>>, vector<1x32xf32>
    %cst_14 = arith.constant 0.000000e+00 : f32
    %16 = vector.broadcast %cst_14 : f32 to vector<8x32xf32>
    %17 = vector.broadcast %15 : vector<1x32xf32> to vector<8x32xf32>
    %18 = arith.addf %16, %17 : vector<8x32xf32>
    %19 = vector.extract_strided_slice %11 {offsets = [0, 0], sizes = [8, 8], strides = [1, 1]} : vector<8x32xf32> to vector<8x8xf32>
    %20 = vector.extract_strided_slice %12 {offsets = [0, 0], sizes = [8, 8], strides = [1, 1]} : vector<8x32xf32> to vector<8x8xf32>
    %cst_15 = arith.constant dense<0.000000e+00> : vector<8x8xf32>
    %21 = tpu.matmul %19, %20, %cst_15 {dimension_numbers = #tpu.dot_dimension_numbers<[1], [1], [0], [0], [0, 0, 1, 0], [], []>} : vector<8x8xf32>, vector<8x8xf32>, vector<8x8xf32> -> vector<8x8xf32>
    %cst_16 = arith.constant dense<0xFF800000> : vector<8xf32>
    %22 = vector.multi_reduction <maximumf>, %21, %cst_16 [1] : vector<8x8xf32> to vector<8xf32>
    %23 = vector.shape_cast %22 : vector<8xf32> to vector<8x1xf32>
    %24 = vector.broadcast %23 : vector<8x1xf32> to vector<8x8xf32>
    %25 = arith.subf %21, %24 : vector<8x8xf32>
    %26 = math.exp %25 : vector<8x8xf32>
    %cst_17 = arith.constant dense<0.000000e+00> : vector<8xf32>
    %27 = vector.multi_reduction <add>, %26, %cst_17 [1] : vector<8x8xf32> to vector<8xf32>
    %28 = vector.shape_cast %27 : vector<8xf32> to vector<8x1xf32>
    %29 = tpu.reciprocal %28 {approx = true} : vector<8x1xf32> -> vector<8x1xf32>
    %30 = vector.broadcast %29 : vector<8x1xf32> to vector<8x8xf32>
    %31 = arith.mulf %26, %30 : vector<8x8xf32>
    %32 = vector.extract_strided_slice %13 {offsets = [0, 0], sizes = [8, 8], strides = [1, 1]} : vector<8x32xf32> to vector<8x8xf32>
    %cst_18 = arith.constant dense<0.000000e+00> : vector<8x8xf32>
    %33 = tpu.matmul %31, %32, %cst_18 {dimension_numbers = #tpu.dot_dimension_numbers<[1], [0], [0], [1], [0, 0, 1, 1], [], []>} : vector<8x8xf32>, vector<8x8xf32>, vector<8x8xf32> -> vector<8x8xf32>
    %34 = vector.extract_strided_slice %14 {offsets = [0, 0], sizes = [8, 32], strides = [1, 1]} : vector<32x32xf32> to vector<8x32xf32>
    %cst_19 = arith.constant dense<0.000000e+00> : vector<8x32xf32>
    %35 = tpu.matmul %33, %34, %cst_19 {dimension_numbers = #tpu.dot_dimension_numbers<[1], [0], [0], [1], [0, 0, 1, 1], [], []>} : vector<8x8xf32>, vector<8x32xf32>, vector<8x32xf32> -> vector<8x32xf32>
    %36 = arith.addf %18, %35 : vector<8x32xf32>
    %37 = vector.extract_strided_slice %11 {offsets = [0, 8], sizes = [8, 8], strides = [1, 1]} : vector<8x32xf32> to vector<8x8xf32>
    %38 = vector.extract_strided_slice %12 {offsets = [0, 8], sizes = [8, 8], strides = [1, 1]} : vector<8x32xf32> to vector<8x8xf32>
    %cst_20 = arith.constant dense<0.000000e+00> : vector<8x8xf32>
    %39 = tpu.matmul %37, %38, %cst_20 {dimension_numbers = #tpu.dot_dimension_numbers<[1], [1], [0], [0], [0, 0, 1, 0], [], []>} : vector<8x8xf32>, vector<8x8xf32>, vector<8x8xf32> -> vector<8x8xf32>
    %cst_21 = arith.constant dense<0xFF800000> : vector<8xf32>
    %40 = vector.multi_reduction <maximumf>, %39, %cst_21 [1] : vector<8x8xf32> to vector<8xf32>
    %41 = vector.shape_cast %40 : vector<8xf32> to vector<8x1xf32>
    %42 = vector.broadcast %41 : vector<8x1xf32> to vector<8x8xf32>
    %43 = arith.subf %39, %42 : vector<8x8xf32>
    %44 = math.exp %43 : vector<8x8xf32>
    %cst_22 = arith.constant dense<0.000000e+00> : vector<8xf32>
    %45 = vector.multi_reduction <add>, %44, %cst_22 [1] : vector<8x8xf32> to vector<8xf32>
    %46 = vector.shape_cast %45 : vector<8xf32> to vector<8x1xf32>
    %47 = tpu.reciprocal %46 {approx = true} : vector<8x1xf32> -> vector<8x1xf32>
    %48 = vector.broadcast %47 : vector<8x1xf32> to vector<8x8xf32>
    %49 = arith.mulf %44, %48 : vector<8x8xf32>
    %50 = vector.extract_strided_slice %13 {offsets = [0, 8], sizes = [8, 8], strides = [1, 1]} : vector<8x32xf32> to vector<8x8xf32>
    %cst_23 = arith.constant dense<0.000000e+00> : vector<8x8xf32>
    %51 = tpu.matmul %49, %50, %cst_23 {dimension_numbers = #tpu.dot_dimension_numbers<[1], [0], [0], [1], [0, 0, 1, 1], [], []>} : vector<8x8xf32>, vector<8x8xf32>, vector<8x8xf32> -> vector<8x8xf32>
    %52 = vector.extract_strided_slice %14 {offsets = [8, 0], sizes = [8, 32], strides = [1, 1]} : vector<32x32xf32> to vector<8x32xf32>
    %cst_24 = arith.constant dense<0.000000e+00> : vector<8x32xf32>
    %53 = tpu.matmul %51, %52, %cst_24 {dimension_numbers = #tpu.dot_dimension_numbers<[1], [0], [0], [1], [0, 0, 1, 1], [], []>} : vector<8x8xf32>, vector<8x32xf32>, vector<8x32xf32> -> vector<8x32xf32>
    %54 = arith.addf %36, %53 : vector<8x32xf32>
    %55 = vector.extract_strided_slice %11 {offsets = [0, 16], sizes = [8, 8], strides = [1, 1]} : vector<8x32xf32> to vector<8x8xf32>
    %56 = vector.extract_strided_slice %12 {offsets = [0, 16], sizes = [8, 8], strides = [1, 1]} : vector<8x32xf32> to vector<8x8xf32>
    %cst_25 = arith.constant dense<0.000000e+00> : vector<8x8xf32>
    %57 = tpu.matmul %55, %56, %cst_25 {dimension_numbers = #tpu.dot_dimension_numbers<[1], [1], [0], [0], [0, 0, 1, 0], [], []>} : vector<8x8xf32>, vector<8x8xf32>, vector<8x8xf32> -> vector<8x8xf32>
    %cst_26 = arith.constant dense<0xFF800000> : vector<8xf32>
    %58 = vector.multi_reduction <maximumf>, %57, %cst_26 [1] : vector<8x8xf32> to vector<8xf32>
    %59 = vector.shape_cast %58 : vector<8xf32> to vector<8x1xf32>
    %60 = vector.broadcast %59 : vector<8x1xf32> to vector<8x8xf32>
    %61 = arith.subf %57, %60 : vector<8x8xf32>
    %62 = math.exp %61 : vector<8x8xf32>
    %cst_27 = arith.constant dense<0.000000e+00> : vector<8xf32>
    %63 = vector.multi_reduction <add>, %62, %cst_27 [1] : vector<8x8xf32> to vector<8xf32>
    %64 = vector.shape_cast %63 : vector<8xf32> to vector<8x1xf32>
    %65 = tpu.reciprocal %64 {approx = true} : vector<8x1xf32> -> vector<8x1xf32>
    %66 = vector.broadcast %65 : vector<8x1xf32> to vector<8x8xf32>
    %67 = arith.mulf %62, %66 : vector<8x8xf32>
    %68 = vector.extract_strided_slice %13 {offsets = [0, 16], sizes = [8, 8], strides = [1, 1]} : vector<8x32xf32> to vector<8x8xf32>
    %cst_28 = arith.constant dense<0.000000e+00> : vector<8x8xf32>
    %69 = tpu.matmul %67, %68, %cst_28 {dimension_numbers = #tpu.dot_dimension_numbers<[1], [0], [0], [1], [0, 0, 1, 1], [], []>} : vector<8x8xf32>, vector<8x8xf32>, vector<8x8xf32> -> vector<8x8xf32>
    %70 = vector.extract_strided_slice %14 {offsets = [16, 0], sizes = [8, 32], strides = [1, 1]} : vector<32x32xf32> to vector<8x32xf32>
    %cst_29 = arith.constant dense<0.000000e+00> : vector<8x32xf32>
    %71 = tpu.matmul %69, %70, %cst_29 {dimension_numbers = #tpu.dot_dimension_numbers<[1], [0], [0], [1], [0, 0, 1, 1], [], []>} : vector<8x8xf32>, vector<8x32xf32>, vector<8x32xf32> -> vector<8x32xf32>
    %72 = arith.addf %54, %71 : vector<8x32xf32>
    %73 = vector.extract_strided_slice %11 {offsets = [0, 24], sizes = [8, 8], strides = [1, 1]} : vector<8x32xf32> to vector<8x8xf32>
    %74 = vector.extract_strided_slice %12 {offsets = [0, 24], sizes = [8, 8], strides = [1, 1]} : vector<8x32xf32> to vector<8x8xf32>
    %cst_30 = arith.constant dense<0.000000e+00> : vector<8x8xf32>
    %75 = tpu.matmul %73, %74, %cst_30 {dimension_numbers = #tpu.dot_dimension_numbers<[1], [1], [0], [0], [0, 0, 1, 0], [], []>} : vector<8x8xf32>, vector<8x8xf32>, vector<8x8xf32> -> vector<8x8xf32>
    %cst_31 = arith.constant dense<0xFF800000> : vector<8xf32>
    %76 = vector.multi_reduction <maximumf>, %75, %cst_31 [1] : vector<8x8xf32> to vector<8xf32>
    %77 = vector.shape_cast %76 : vector<8xf32> to vector<8x1xf32>
    %78 = vector.broadcast %77 : vector<8x1xf32> to vector<8x8xf32>
    %79 = arith.subf %75, %78 : vector<8x8xf32>
    %80 = math.exp %79 : vector<8x8xf32>
    %cst_32 = arith.constant dense<0.000000e+00> : vector<8xf32>
    %81 = vector.multi_reduction <add>, %80, %cst_32 [1] : vector<8x8xf32> to vector<8xf32>
    %82 = vector.shape_cast %81 : vector<8xf32> to vector<8x1xf32>
    %83 = tpu.reciprocal %82 {approx = true} : vector<8x1xf32> -> vector<8x1xf32>
    %84 = vector.broadcast %83 : vector<8x1xf32> to vector<8x8xf32>
    %85 = arith.mulf %80, %84 : vector<8x8xf32>
    %86 = vector.extract_strided_slice %13 {offsets = [0, 24], sizes = [8, 8], strides = [1, 1]} : vector<8x32xf32> to vector<8x8xf32>
    %cst_33 = arith.constant dense<0.000000e+00> : vector<8x8xf32>
    %87 = tpu.matmul %85, %86, %cst_33 {dimension_numbers = #tpu.dot_dimension_numbers<[1], [0], [0], [1], [0, 0, 1, 1], [], []>} : vector<8x8xf32>, vector<8x8xf32>, vector<8x8xf32> -> vector<8x8xf32>
    %88 = vector.extract_strided_slice %14 {offsets = [24, 0], sizes = [8, 32], strides = [1, 1]} : vector<32x32xf32> to vector<8x32xf32>
    %cst_34 = arith.constant dense<0.000000e+00> : vector<8x32xf32>
    %89 = tpu.matmul %87, %88, %cst_34 {dimension_numbers = #tpu.dot_dimension_numbers<[1], [0], [0], [1], [0, 0, 1, 1], [], []>} : vector<8x8xf32>, vector<8x32xf32>, vector<8x32xf32> -> vector<8x32xf32>
    %90 = arith.addf %72, %89 : vector<8x32xf32>
    %91 = arith.addf %1, %90 : vector<8x32xf32>
    %c0_35 = arith.constant 0 : index
    %c0_36 = arith.constant 0 : index
    %92 = vector.load %arg7[%c0_35, %c0_36] : memref<1x32xf32, #tpu.memory_space<vmem>>, vector<1x32xf32>
    %c0_37 = arith.constant 0 : index
    %c0_38 = arith.constant 0 : index
    %93 = vector.load %arg8[%c0_37, %c0_38] : memref<1x32xf32, #tpu.memory_space<vmem>>, vector<1x32xf32>
    %cst_39 = arith.constant dense<0.000000e+00> : vector<8xf32>
    %94 = vector.multi_reduction <add>, %91, %cst_39 [1] : vector<8x32xf32> to vector<8xf32>
    %95 = vector.shape_cast %94 : vector<8xf32> to vector<8x1xf32>
    %cst_40 = arith.constant 3.200000e+01 : f32
    %96 = vector.broadcast %cst_40 : f32 to vector<8x1xf32>
    %97 = arith.divf %95, %96 : vector<8x1xf32>
    %98 = vector.broadcast %97 : vector<8x1xf32> to vector<8x32xf32>
    %99 = arith.subf %91, %98 : vector<8x32xf32>
    %100 = arith.mulf %99, %99 : vector<8x32xf32>
    %cst_41 = arith.constant dense<0.000000e+00> : vector<8xf32>
    %101 = vector.multi_reduction <add>, %100, %cst_41 [1] : vector<8x32xf32> to vector<8xf32>
    %102 = vector.shape_cast %101 : vector<8xf32> to vector<8x1xf32>
    %cst_42 = arith.constant 3.200000e+01 : f32
    %103 = vector.broadcast %cst_42 : f32 to vector<8x1xf32>
    %104 = arith.divf %102, %103 : vector<8x1xf32>
    %cst_43 = arith.constant 9.99999974E-6 : f32
    %105 = vector.broadcast %cst_43 : f32 to vector<8x1xf32>
    %106 = arith.addf %104, %105 : vector<8x1xf32>
    %107 = math.rsqrt %106 : vector<8x1xf32>
    %108 = vector.broadcast %107 : vector<8x1xf32> to vector<8x32xf32>
    %109 = arith.mulf %99, %108 : vector<8x32xf32>
    %110 = vector.broadcast %92 : vector<1x32xf32> to vector<8x32xf32>
    %111 = arith.mulf %109, %110 : vector<8x32xf32>
    %112 = vector.broadcast %93 : vector<1x32xf32> to vector<8x32xf32>
    %113 = arith.addf %111, %112 : vector<8x32xf32>
    %c0_44 = arith.constant 0 : index
    %c0_45 = arith.constant 0 : index
    %114 = vector.load %arg9[%c0_44, %c0_45] : memref<32x96xf32, #tpu.memory_space<vmem>>, vector<32x32xf32>
    %cst_46 = arith.constant dense<0.000000e+00> : vector<8x32xf32>
    %115 = tpu.matmul %113, %114, %cst_46 {dimension_numbers = #tpu.dot_dimension_numbers<[1], [0], [0], [1], [0, 0, 1, 1], [], []>} : vector<8x32xf32>, vector<32x32xf32>, vector<8x32xf32> -> vector<8x32xf32>
    %c0_47 = arith.constant 0 : index
    %c0_48 = arith.constant 0 : index
    %116 = vector.load %arg10[%c0_47, %c0_48] : memref<1x96xf32, #tpu.memory_space<vmem>>, vector<1x32xf32>
    %117 = vector.broadcast %116 : vector<1x32xf32> to vector<8x32xf32>
    %118 = arith.addf %115, %117 : vector<8x32xf32>
    %c0_49 = arith.constant 0 : index
    %c32 = arith.constant 32 : index
    %119 = vector.load %arg9[%c0_49, %c32] : memref<32x96xf32, #tpu.memory_space<vmem>>, vector<32x64xf32>
    %cst_50 = arith.constant dense<0.000000e+00> : vector<8x64xf32>
    %120 = tpu.matmul %3, %119, %cst_50 {dimension_numbers = #tpu.dot_dimension_numbers<[1], [0], [0], [1], [0, 0, 1, 1], [], []>} : vector<8x32xf32>, vector<32x64xf32>, vector<8x64xf32> -> vector<8x64xf32>
    %c0_51 = arith.constant 0 : index
    %c32_52 = arith.constant 32 : index
    %121 = vector.load %arg10[%c0_51, %c32_52] : memref<1x96xf32, #tpu.memory_space<vmem>>, vector<1x64xf32>
    %122 = vector.broadcast %121 : vector<1x64xf32> to vector<8x64xf32>
    %123 = arith.addf %120, %122 : vector<8x64xf32>
    %cst_53 = arith.constant 0.353553385 : f32
    %124 = vector.broadcast %cst_53 : f32 to vector<8x32xf32>
    %125 = arith.mulf %118, %124 : vector<8x32xf32>
    %126 = vector.extract_strided_slice %123 {offsets = [0, 0], sizes = [8, 32], strides = [1, 1]} : vector<8x64xf32> to vector<8x32xf32>
    %127 = vector.extract_strided_slice %123 {offsets = [0, 32], sizes = [8, 32], strides = [1, 1]} : vector<8x64xf32> to vector<8x32xf32>
    %c0_54 = arith.constant 0 : index
    %c0_55 = arith.constant 0 : index
    %128 = vector.load %arg11[%c0_54, %c0_55] : memref<32x32xf32, #tpu.memory_space<vmem>>, vector<32x32xf32>
    %c0_56 = arith.constant 0 : index
    %c0_57 = arith.constant 0 : index
    %129 = vector.load %arg12[%c0_56, %c0_57] : memref<1x32xf32, #tpu.memory_space<vmem>>, vector<1x32xf32>
    %cst_58 = arith.constant 0.000000e+00 : f32
    %130 = vector.broadcast %cst_58 : f32 to vector<8x32xf32>
    %131 = vector.broadcast %129 : vector<1x32xf32> to vector<8x32xf32>
    %132 = arith.addf %130, %131 : vector<8x32xf32>
    %133 = vector.extract_strided_slice %125 {offsets = [0, 0], sizes = [8, 8], strides = [1, 1]} : vector<8x32xf32> to vector<8x8xf32>
    %134 = vector.extract_strided_slice %126 {offsets = [0, 0], sizes = [8, 8], strides = [1, 1]} : vector<8x32xf32> to vector<8x8xf32>
    %cst_59 = arith.constant dense<0.000000e+00> : vector<8x8xf32>
    %135 = tpu.matmul %133, %134, %cst_59 {dimension_numbers = #tpu.dot_dimension_numbers<[1], [1], [0], [0], [0, 0, 1, 0], [], []>} : vector<8x8xf32>, vector<8x8xf32>, vector<8x8xf32> -> vector<8x8xf32>
    %cst_60 = arith.constant dense<0xFF800000> : vector<8xf32>
    %136 = vector.multi_reduction <maximumf>, %135, %cst_60 [1] : vector<8x8xf32> to vector<8xf32>
    %137 = vector.shape_cast %136 : vector<8xf32> to vector<8x1xf32>
    %138 = vector.broadcast %137 : vector<8x1xf32> to vector<8x8xf32>
    %139 = arith.subf %135, %138 : vector<8x8xf32>
    %140 = math.exp %139 : vector<8x8xf32>
    %cst_61 = arith.constant dense<0.000000e+00> : vector<8xf32>
    %141 = vector.multi_reduction <add>, %140, %cst_61 [1] : vector<8x8xf32> to vector<8xf32>
    %142 = vector.shape_cast %141 : vector<8xf32> to vector<8x1xf32>
    %143 = tpu.reciprocal %142 {approx = true} : vector<8x1xf32> -> vector<8x1xf32>
    %144 = vector.broadcast %143 : vector<8x1xf32> to vector<8x8xf32>
    %145 = arith.mulf %140, %144 : vector<8x8xf32>
    %146 = vector.extract_strided_slice %127 {offsets = [0, 0], sizes = [8, 8], strides = [1, 1]} : vector<8x32xf32> to vector<8x8xf32>
    %cst_62 = arith.constant dense<0.000000e+00> : vector<8x8xf32>
    %147 = tpu.matmul %145, %146, %cst_62 {dimension_numbers = #tpu.dot_dimension_numbers<[1], [0], [0], [1], [0, 0, 1, 1], [], []>} : vector<8x8xf32>, vector<8x8xf32>, vector<8x8xf32> -> vector<8x8xf32>
    %148 = vector.extract_strided_slice %128 {offsets = [0, 0], sizes = [8, 32], strides = [1, 1]} : vector<32x32xf32> to vector<8x32xf32>
    %cst_63 = arith.constant dense<0.000000e+00> : vector<8x32xf32>
    %149 = tpu.matmul %147, %148, %cst_63 {dimension_numbers = #tpu.dot_dimension_numbers<[1], [0], [0], [1], [0, 0, 1, 1], [], []>} : vector<8x8xf32>, vector<8x32xf32>, vector<8x32xf32> -> vector<8x32xf32>
    %150 = arith.addf %132, %149 : vector<8x32xf32>
    %151 = vector.extract_strided_slice %125 {offsets = [0, 8], sizes = [8, 8], strides = [1, 1]} : vector<8x32xf32> to vector<8x8xf32>
    %152 = vector.extract_strided_slice %126 {offsets = [0, 8], sizes = [8, 8], strides = [1, 1]} : vector<8x32xf32> to vector<8x8xf32>
    %cst_64 = arith.constant dense<0.000000e+00> : vector<8x8xf32>
    %153 = tpu.matmul %151, %152, %cst_64 {dimension_numbers = #tpu.dot_dimension_numbers<[1], [1], [0], [0], [0, 0, 1, 0], [], []>} : vector<8x8xf32>, vector<8x8xf32>, vector<8x8xf32> -> vector<8x8xf32>
    %cst_65 = arith.constant dense<0xFF800000> : vector<8xf32>
    %154 = vector.multi_reduction <maximumf>, %153, %cst_65 [1] : vector<8x8xf32> to vector<8xf32>
    %155 = vector.shape_cast %154 : vector<8xf32> to vector<8x1xf32>
    %156 = vector.broadcast %155 : vector<8x1xf32> to vector<8x8xf32>
    %157 = arith.subf %153, %156 : vector<8x8xf32>
    %158 = math.exp %157 : vector<8x8xf32>
    %cst_66 = arith.constant dense<0.000000e+00> : vector<8xf32>
    %159 = vector.multi_reduction <add>, %158, %cst_66 [1] : vector<8x8xf32> to vector<8xf32>
    %160 = vector.shape_cast %159 : vector<8xf32> to vector<8x1xf32>
    %161 = tpu.reciprocal %160 {approx = true} : vector<8x1xf32> -> vector<8x1xf32>
    %162 = vector.broadcast %161 : vector<8x1xf32> to vector<8x8xf32>
    %163 = arith.mulf %158, %162 : vector<8x8xf32>
    %164 = vector.extract_strided_slice %127 {offsets = [0, 8], sizes = [8, 8], strides = [1, 1]} : vector<8x32xf32> to vector<8x8xf32>
    %cst_67 = arith.constant dense<0.000000e+00> : vector<8x8xf32>
    %165 = tpu.matmul %163, %164, %cst_67 {dimension_numbers = #tpu.dot_dimension_numbers<[1], [0], [0], [1], [0, 0, 1, 1], [], []>} : vector<8x8xf32>, vector<8x8xf32>, vector<8x8xf32> -> vector<8x8xf32>
    %166 = vector.extract_strided_slice %128 {offsets = [8, 0], sizes = [8, 32], strides = [1, 1]} : vector<32x32xf32> to vector<8x32xf32>
    %cst_68 = arith.constant dense<0.000000e+00> : vector<8x32xf32>
    %167 = tpu.matmul %165, %166, %cst_68 {dimension_numbers = #tpu.dot_dimension_numbers<[1], [0], [0], [1], [0, 0, 1, 1], [], []>} : vector<8x8xf32>, vector<8x32xf32>, vector<8x32xf32> -> vector<8x32xf32>
    %168 = arith.addf %150, %167 : vector<8x32xf32>
    %169 = vector.extract_strided_slice %125 {offsets = [0, 16], sizes = [8, 8], strides = [1, 1]} : vector<8x32xf32> to vector<8x8xf32>
    %170 = vector.extract_strided_slice %126 {offsets = [0, 16], sizes = [8, 8], strides = [1, 1]} : vector<8x32xf32> to vector<8x8xf32>
    %cst_69 = arith.constant dense<0.000000e+00> : vector<8x8xf32>
    %171 = tpu.matmul %169, %170, %cst_69 {dimension_numbers = #tpu.dot_dimension_numbers<[1], [1], [0], [0], [0, 0, 1, 0], [], []>} : vector<8x8xf32>, vector<8x8xf32>, vector<8x8xf32> -> vector<8x8xf32>
    %cst_70 = arith.constant dense<0xFF800000> : vector<8xf32>
    %172 = vector.multi_reduction <maximumf>, %171, %cst_70 [1] : vector<8x8xf32> to vector<8xf32>
    %173 = vector.shape_cast %172 : vector<8xf32> to vector<8x1xf32>
    %174 = vector.broadcast %173 : vector<8x1xf32> to vector<8x8xf32>
    %175 = arith.subf %171, %174 : vector<8x8xf32>
    %176 = math.exp %175 : vector<8x8xf32>
    %cst_71 = arith.constant dense<0.000000e+00> : vector<8xf32>
    %177 = vector.multi_reduction <add>, %176, %cst_71 [1] : vector<8x8xf32> to vector<8xf32>
    %178 = vector.shape_cast %177 : vector<8xf32> to vector<8x1xf32>
    %179 = tpu.reciprocal %178 {approx = true} : vector<8x1xf32> -> vector<8x1xf32>
    %180 = vector.broadcast %179 : vector<8x1xf32> to vector<8x8xf32>
    %181 = arith.mulf %176, %180 : vector<8x8xf32>
    %182 = vector.extract_strided_slice %127 {offsets = [0, 16], sizes = [8, 8], strides = [1, 1]} : vector<8x32xf32> to vector<8x8xf32>
    %cst_72 = arith.constant dense<0.000000e+00> : vector<8x8xf32>
    %183 = tpu.matmul %181, %182, %cst_72 {dimension_numbers = #tpu.dot_dimension_numbers<[1], [0], [0], [1], [0, 0, 1, 1], [], []>} : vector<8x8xf32>, vector<8x8xf32>, vector<8x8xf32> -> vector<8x8xf32>
    %184 = vector.extract_strided_slice %128 {offsets = [16, 0], sizes = [8, 32], strides = [1, 1]} : vector<32x32xf32> to vector<8x32xf32>
    %cst_73 = arith.constant dense<0.000000e+00> : vector<8x32xf32>
    %185 = tpu.matmul %183, %184, %cst_73 {dimension_numbers = #tpu.dot_dimension_numbers<[1], [0], [0], [1], [0, 0, 1, 1], [], []>} : vector<8x8xf32>, vector<8x32xf32>, vector<8x32xf32> -> vector<8x32xf32>
    %186 = arith.addf %168, %185 : vector<8x32xf32>
    %187 = vector.extract_strided_slice %125 {offsets = [0, 24], sizes = [8, 8], strides = [1, 1]} : vector<8x32xf32> to vector<8x8xf32>
    %188 = vector.extract_strided_slice %126 {offsets = [0, 24], sizes = [8, 8], strides = [1, 1]} : vector<8x32xf32> to vector<8x8xf32>
    %cst_74 = arith.constant dense<0.000000e+00> : vector<8x8xf32>
    %189 = tpu.matmul %187, %188, %cst_74 {dimension_numbers = #tpu.dot_dimension_numbers<[1], [1], [0], [0], [0, 0, 1, 0], [], []>} : vector<8x8xf32>, vector<8x8xf32>, vector<8x8xf32> -> vector<8x8xf32>
    %cst_75 = arith.constant dense<0xFF800000> : vector<8xf32>
    %190 = vector.multi_reduction <maximumf>, %189, %cst_75 [1] : vector<8x8xf32> to vector<8xf32>
    %191 = vector.shape_cast %190 : vector<8xf32> to vector<8x1xf32>
    %192 = vector.broadcast %191 : vector<8x1xf32> to vector<8x8xf32>
    %193 = arith.subf %189, %192 : vector<8x8xf32>
    %194 = math.exp %193 : vector<8x8xf32>
    %cst_76 = arith.constant dense<0.000000e+00> : vector<8xf32>
    %195 = vector.multi_reduction <add>, %194, %cst_76 [1] : vector<8x8xf32> to vector<8xf32>
    %196 = vector.shape_cast %195 : vector<8xf32> to vector<8x1xf32>
    %197 = tpu.reciprocal %196 {approx = true} : vector<8x1xf32> -> vector<8x1xf32>
    %198 = vector.broadcast %197 : vector<8x1xf32> to vector<8x8xf32>
    %199 = arith.mulf %194, %198 : vector<8x8xf32>
    %200 = vector.extract_strided_slice %127 {offsets = [0, 24], sizes = [8, 8], strides = [1, 1]} : vector<8x32xf32> to vector<8x8xf32>
    %cst_77 = arith.constant dense<0.000000e+00> : vector<8x8xf32>
    %201 = tpu.matmul %199, %200, %cst_77 {dimension_numbers = #tpu.dot_dimension_numbers<[1], [0], [0], [1], [0, 0, 1, 1], [], []>} : vector<8x8xf32>, vector<8x8xf32>, vector<8x8xf32> -> vector<8x8xf32>
    %202 = vector.extract_strided_slice %128 {offsets = [24, 0], sizes = [8, 32], strides = [1, 1]} : vector<32x32xf32> to vector<8x32xf32>
    %cst_78 = arith.constant dense<0.000000e+00> : vector<8x32xf32>
    %203 = tpu.matmul %201, %202, %cst_78 {dimension_numbers = #tpu.dot_dimension_numbers<[1], [0], [0], [1], [0, 0, 1, 1], [], []>} : vector<8x8xf32>, vector<8x32xf32>, vector<8x32xf32> -> vector<8x32xf32>
    %204 = arith.addf %186, %203 : vector<8x32xf32>
    %205 = arith.addf %113, %204 : vector<8x32xf32>
    %c0_79 = arith.constant 0 : index
    %c0_80 = arith.constant 0 : index
    %206 = vector.load %arg13[%c0_79, %c0_80] : memref<1x32xf32, #tpu.memory_space<vmem>>, vector<1x32xf32>
    %c0_81 = arith.constant 0 : index
    %c0_82 = arith.constant 0 : index
    %207 = vector.load %arg14[%c0_81, %c0_82] : memref<1x32xf32, #tpu.memory_space<vmem>>, vector<1x32xf32>
    %cst_83 = arith.constant dense<0.000000e+00> : vector<8xf32>
    %208 = vector.multi_reduction <add>, %205, %cst_83 [1] : vector<8x32xf32> to vector<8xf32>
    %209 = vector.shape_cast %208 : vector<8xf32> to vector<8x1xf32>
    %cst_84 = arith.constant 3.200000e+01 : f32
    %210 = vector.broadcast %cst_84 : f32 to vector<8x1xf32>
    %211 = arith.divf %209, %210 : vector<8x1xf32>
    %212 = vector.broadcast %211 : vector<8x1xf32> to vector<8x32xf32>
    %213 = arith.subf %205, %212 : vector<8x32xf32>
    %214 = arith.mulf %213, %213 : vector<8x32xf32>
    %cst_85 = arith.constant dense<0.000000e+00> : vector<8xf32>
    %215 = vector.multi_reduction <add>, %214, %cst_85 [1] : vector<8x32xf32> to vector<8xf32>
    %216 = vector.shape_cast %215 : vector<8xf32> to vector<8x1xf32>
    %cst_86 = arith.constant 3.200000e+01 : f32
    %217 = vector.broadcast %cst_86 : f32 to vector<8x1xf32>
    %218 = arith.divf %216, %217 : vector<8x1xf32>
    %cst_87 = arith.constant 9.99999974E-6 : f32
    %219 = vector.broadcast %cst_87 : f32 to vector<8x1xf32>
    %220 = arith.addf %218, %219 : vector<8x1xf32>
    %221 = math.rsqrt %220 : vector<8x1xf32>
    %222 = vector.broadcast %221 : vector<8x1xf32> to vector<8x32xf32>
    %223 = arith.mulf %213, %222 : vector<8x32xf32>
    %224 = vector.broadcast %206 : vector<1x32xf32> to vector<8x32xf32>
    %225 = arith.mulf %223, %224 : vector<8x32xf32>
    %226 = vector.broadcast %207 : vector<1x32xf32> to vector<8x32xf32>
    %227 = arith.addf %225, %226 : vector<8x32xf32>
    %c0_88 = arith.constant 0 : index
    %c0_89 = arith.constant 0 : index
    %228 = vector.load %arg15[%c0_88, %c0_89] : memref<32x2048xf32, #tpu.memory_space<vmem>>, vector<32x2048xf32>
    %cst_90 = arith.constant dense<0.000000e+00> : vector<8x2048xf32>
    %229 = tpu.matmul %227, %228, %cst_90 {dimension_numbers = #tpu.dot_dimension_numbers<[1], [0], [0], [1], [0, 0, 1, 1], [], []>} : vector<8x32xf32>, vector<32x2048xf32>, vector<8x2048xf32> -> vector<8x2048xf32>
    %c0_91 = arith.constant 0 : index
    %c0_92 = arith.constant 0 : index
    %230 = vector.load %arg16[%c0_91, %c0_92] : memref<1x2048xf32, #tpu.memory_space<vmem>>, vector<1x2048xf32>
    %231 = vector.broadcast %230 : vector<1x2048xf32> to vector<8x2048xf32>
    %232 = arith.addf %229, %231 : vector<8x2048xf32>
    %cst_93 = arith.constant 0.000000e+00 : f32
    %233 = vector.broadcast %cst_93 : f32 to vector<8x2048xf32>
    %234 = arith.maximumf %232, %233 : vector<8x2048xf32>
    %c0_94 = arith.constant 0 : index
    %c0_95 = arith.constant 0 : index
    %235 = vector.load %arg17[%c0_94, %c0_95] : memref<2048x32xf32, #tpu.memory_space<vmem>>, vector<2048x32xf32>
    %cst_96 = arith.constant dense<0.000000e+00> : vector<8x32xf32>
    %236 = tpu.matmul %234, %235, %cst_96 {dimension_numbers = #tpu.dot_dimension_numbers<[1], [0], [0], [1], [0, 0, 1, 1], [], []>} : vector<8x2048xf32>, vector<2048x32xf32>, vector<8x32xf32> -> vector<8x32xf32>
    %c0_97 = arith.constant 0 : index
    %c0_98 = arith.constant 0 : index
    %237 = vector.load %arg18[%c0_97, %c0_98] : memref<1x32xf32, #tpu.memory_space<vmem>>, vector<1x32xf32>
    %238 = vector.broadcast %237 : vector<1x32xf32> to vector<8x32xf32>
    %239 = arith.addf %236, %238 : vector<8x32xf32>
    %240 = arith.addf %227, %239 : vector<8x32xf32>
    %c0_99 = arith.constant 0 : index
    %c0_100 = arith.constant 0 : index
    %241 = vector.load %arg19[%c0_99, %c0_100] : memref<1x32xf32, #tpu.memory_space<vmem>>, vector<1x32xf32>
    %c0_101 = arith.constant 0 : index
    %c0_102 = arith.constant 0 : index
    %242 = vector.load %arg20[%c0_101, %c0_102] : memref<1x32xf32, #tpu.memory_space<vmem>>, vector<1x32xf32>
    %cst_103 = arith.constant dense<0.000000e+00> : vector<8xf32>
    %243 = vector.multi_reduction <add>, %240, %cst_103 [1] : vector<8x32xf32> to vector<8xf32>
    %244 = vector.shape_cast %243 : vector<8xf32> to vector<8x1xf32>
    %cst_104 = arith.constant 3.200000e+01 : f32
    %245 = vector.broadcast %cst_104 : f32 to vector<8x1xf32>
    %246 = arith.divf %244, %245 : vector<8x1xf32>
    %247 = vector.broadcast %246 : vector<8x1xf32> to vector<8x32xf32>
    %248 = arith.subf %240, %247 : vector<8x32xf32>
    %249 = arith.mulf %248, %248 : vector<8x32xf32>
    %cst_105 = arith.constant dense<0.000000e+00> : vector<8xf32>
    %250 = vector.multi_reduction <add>, %249, %cst_105 [1] : vector<8x32xf32> to vector<8xf32>
    %251 = vector.shape_cast %250 : vector<8xf32> to vector<8x1xf32>
    %cst_106 = arith.constant 3.200000e+01 : f32
    %252 = vector.broadcast %cst_106 : f32 to vector<8x1xf32>
    %253 = arith.divf %251, %252 : vector<8x1xf32>
    %cst_107 = arith.constant 9.99999974E-6 : f32
    %254 = vector.broadcast %cst_107 : f32 to vector<8x1xf32>
    %255 = arith.addf %253, %254 : vector<8x1xf32>
    %256 = math.rsqrt %255 : vector<8x1xf32>
    %257 = vector.broadcast %256 : vector<8x1xf32> to vector<8x32xf32>
    %258 = arith.mulf %248, %257 : vector<8x32xf32>
    %259 = vector.broadcast %241 : vector<1x32xf32> to vector<8x32xf32>
    %260 = arith.mulf %258, %259 : vector<8x32xf32>
    %261 = vector.broadcast %242 : vector<1x32xf32> to vector<8x32xf32>
    %262 = arith.addf %260, %261 : vector<8x32xf32>
    %c0_108 = arith.constant 0 : index
    %c0_109 = arith.constant 0 : index
    %c0_110 = arith.constant 0 : index
    %263 = vector.load %arg21[%c0_108, %c0_109, %c0_110] : memref<1x8x32xf32, #tpu.memory_space<vmem>>, vector<1x8x32xf32>
    %264 = vector.shape_cast %263 : vector<1x8x32xf32> to vector<8x32xf32>
    %265 = vector.shape_cast %262 : vector<8x32xf32> to vector<1x8x32xf32>
    tpu.vector_store %arg21[%c0_108, %c0_109, %c0_110], %265 {strides = array<i32>} : memref<1x8x32xf32, #tpu.memory_space<vmem>>, vector<1x8x32xf32>,
    return
  }
  func.func @transform_0(%arg0: i32) -> (i32, i32, i32) {
    %c0_i32 = arith.constant 0 : i32
    %c0_i32_0 = arith.constant 0 : i32
    %c0_i32_1 = arith.constant 0 : i32
    return %arg0, %c0_i32, %c0_i32_0 : i32, i32, i32
  }
  func.func @transform_1(%arg0: i32) -> (i32, i32, i32) {
    %c0_i32 = arith.constant 0 : i32
    %c0_i32_0 = arith.constant 0 : i32
    %c0_i32_1 = arith.constant 0 : i32
    return %arg0, %c0_i32, %c0_i32_0 : i32, i32, i32
  }
  func.func @transform_2(%arg0: i32) -> (i32, i32) {
    %c0_i32 = arith.constant 0 : i32
    %c0_i32_0 = arith.constant 0 : i32
    %c0_i32_1 = arith.constant 0 : i32
    return %c0_i32, %c0_i32_0 : i32, i32
  }
  func.func @transform_3(%arg0: i32) -> (i32, i32) {
    %c0_i32 = arith.constant 0 : i32
    %c0_i32_0 = arith.constant 0 : i32
    %c0_i32_1 = arith.constant 0 : i32
    return %c0_i32, %c0_i32_0 : i32, i32
  }
  func.func @transform_4(%arg0: i32) -> (i32, i32) {
    %c0_i32 = arith.constant 0 : i32
    %c0_i32_0 = arith.constant 0 : i32
    %c0_i32_1 = arith.constant 0 : i32
    return %c0_i32, %c0_i32_0 : i32, i32
  }
  func.func @transform_5(%arg0: i32) -> (i32, i32) {
    %c0_i32 = arith.constant 0 : i32
    %c0_i32_0 = arith.constant 0 : i32
    %c0_i32_1 = arith.constant 0 : i32
    return %c0_i32, %c0_i32_0 : i32, i32
  }
  func.func @transform_6(%arg0: i32) -> (i32, i32) {
    %c0_i32 = arith.constant 0 : i32
    %c0_i32_0 = arith.constant 0 : i32
    %c0_i32_1 = arith.constant 0 : i32
    return %c0_i32, %c0_i32_0 : i32, i32
  }
  func.func @transform_7(%arg0: i32) -> (i32, i32) {
    %c0_i32 = arith.constant 0 : i32
    %c0_i32_0 = arith.constant 0 : i32
    %c0_i32_1 = arith.constant 0 : i32
    return %c0_i32, %c0_i32_0 : i32, i32
  }
  func.func @transform_8(%arg0: i32) -> (i32, i32) {
    %c0_i32 = arith.constant 0 : i32
    %c0_i32_0 = arith.constant 0 : i32
    %c0_i32_1 = arith.constant 0 : i32
    return %c0_i32, %c0_i32_0 : i32, i32
  }
  func.func @transform_9(%arg0: i32) -> (i32, i32) {
    %c0_i32 = arith.constant 0 : i32
    %c0_i32_0 = arith.constant 0 : i32
    %c0_i32_1 = arith.constant 0 : i32
    return %c0_i32, %c0_i32_0 : i32, i32
  }
  func.func @transform_10(%arg0: i32) -> (i32, i32) {
    %c0_i32 = arith.constant 0 : i32
    %c0_i32_0 = arith.constant 0 : i32
    %c0_i32_1 = arith.constant 0 : i32
    return %c0_i32, %c0_i32_0 : i32, i32
  }
  func.func @transform_11(%arg0: i32) -> (i32, i32) {
    %c0_i32 = arith.constant 0 : i32
    %c0_i32_0 = arith.constant 0 : i32
    %c0_i32_1 = arith.constant 0 : i32
    return %c0_i32, %c0_i32_0 : i32, i32
  }
  func.func @transform_12(%arg0: i32) -> (i32, i32) {
    %c0_i32 = arith.constant 0 : i32
    %c0_i32_0 = arith.constant 0 : i32
    %c0_i32_1 = arith.constant 0 : i32
    return %c0_i32, %c0_i32_0 : i32, i32
  }
  func.func @transform_13(%arg0: i32) -> (i32, i32) {
    %c0_i32 = arith.constant 0 : i32
    %c0_i32_0 = arith.constant 0 : i32
    %c0_i32_1 = arith.constant 0 : i32
    return %c0_i32, %c0_i32_0 : i32, i32
  }
  func.func @transform_14(%arg0: i32) -> (i32, i32) {
    %c0_i32 = arith.constant 0 : i32
    %c0_i32_0 = arith.constant 0 : i32
    %c0_i32_1 = arith.constant 0 : i32
    return %c0_i32, %c0_i32_0 : i32, i32
  }
  func.func @transform_15(%arg0: i32) -> (i32, i32) {
    %c0_i32 = arith.constant 0 : i32
    %c0_i32_0 = arith.constant 0 : i32
    %c0_i32_1 = arith.constant 0 : i32
    return %c0_i32, %c0_i32_0 : i32, i32
  }
  func.func @transform_16(%arg0: i32) -> (i32, i32) {
    %c0_i32 = arith.constant 0 : i32
    %c0_i32_0 = arith.constant 0 : i32
    %c0_i32_1 = arith.constant 0 : i32
    return %c0_i32, %c0_i32_0 : i32, i32
  }
  func.func @transform_17(%arg0: i32) -> (i32, i32) {
    %c0_i32 = arith.constant 0 : i32
    %c0_i32_0 = arith.constant 0 : i32
    %c0_i32_1 = arith.constant 0 : i32
    return %c0_i32, %c0_i32_0 : i32, i32
  }
  func.func @transform_18(%arg0: i32) -> (i32, i32) {
    %c0_i32 = arith.constant 0 : i32
    %c0_i32_0 = arith.constant 0 : i32
    %c0_i32_1 = arith.constant 0 : i32
    return %c0_i32, %c0_i32_0 : i32, i32
  }
  func.func @transform_19(%arg0: i32) -> (i32, i32) {
    %c0_i32 = arith.constant 0 : i32
    %c0_i32_0 = arith.constant 0 : i32
    %c0_i32_1 = arith.constant 0 : i32
    return %c0_i32, %c0_i32_0 : i32, i32
  }
  func.func @transform_20(%arg0: i32) -> (i32, i32, i32) {
    %c0_i32 = arith.constant 0 : i32
    %c0_i32_0 = arith.constant 0 : i32
    %c0_i32_1 = arith.constant 0 : i32
    return %arg0, %c0_i32, %c0_i32_0 : i32, i32, i32
  }
}

</mosaic_0001>

<llo_original>
// kernel: transformer_model.3
$region0: #{transformer_model.3}
  #allocation0 [shape = 'u32[]', space=smem, size = 0x4, offset = 0x4, fixed_abs, tag = 'smem constant byte address 0x4 - core index']
  #allocation1 [shape = 'u32[144,128]{1,0:T(1,128)}', space=vmem, size = 0x12000, scoped, tag = 'internal scratch']
  %s0 = inlined_call_operand.vmem [shape: f32[2,8,16], index: 0, kind: input, shape index: {}]
  %s1 = inlined_call_operand.hbm [shape: f32[16,32], index: 1, kind: input, shape index: {}]
  %s2 = inlined_call_operand.hbm [shape: f32[1,32], index: 2, kind: input, shape index: {}]
  %s3 = inlined_call_operand.vmem [shape: f32[2,8,32], index: 3, kind: output, shape index: {}]
  %s4 = sld [smem:[#allocation0]]
  $region53: #{transformer_model.3} parent=0
    _
  %s6 = ssub.s32 1, %s4
  %s7 = scalar_select 0, %s6, %s4
  $region1: #{transformer_model.3} parent=0
    #allocation2 [shape = 'u8[8192]{0}', space=vmem, size = 0x2000, scoped, tag = 'input window, operand 1, single buffered']
    #allocation3 [shape = 's32[2]{0}', space=sflag, size = 0x8, scoped, tag = 'scoped memory for transformer_model.3']
    #allocation4 [shape = 'u8[512]{0}', space=vmem, size = 0x400, scoped, tag = 'input window, operand 2, single buffered']
    #allocation5 [shape = 's32[1]{0}', space=sflag, size = 0x4, scoped, tag = 'scoped memory for transformer_model.3']
    %8 = vsyncpa [#allocation3], 0
    %9 = vsyncpa [#allocation5], 0
    loop: start=0, step=1, limit=4
    $region2: #{transformer_model.3} parent=1 // loop_pre_header
      _
    $region3: #{transformer_model.3} parent=1 // loop_header
      %s11 = sphi 0, %s15
      %p12 = scmp.ge.s32.totalorder %s11, 4
      %s21 = sphi 0, %s23
      %s24 = sphi 0, %s21
      %s25 = sphi 0, %s24
      %s41 = sphi 0, %s25
      %s45 = sphi 0, %s45
      %s47 = sphi 0, %s45
      %s48 = sphi 0, %s47
      %s62 = sphi 0, %s48
      %s66 = sphi 0, %s66
      %s68 = sphi 0, %s66
      %s69 = sphi 0, %s68
      %s83 = sphi 0, %s69
      %s89 = sphi 0, %s91
      %s92 = sphi 0, %s89
      %s93 = sphi 0, %s92
      %s109 = sphi 0, %s93
    $region4: #{transformer_model.3} parent=1 // loop_header_branch
      %14 = sbr.rel (%p12) target = $region8
    $region5: #{transformer_model.3} parent=1 // loop_body
      %s16 = ssub.s32 %s11, 1
      %s17 = ssub.s32 %s11, 2
      %s18 = sadd.s32 %s11, 1
      %s19 = ssub.s32 %s11, %s18
      %p20 = scmp.eq.s32.totalorder %s19, 0
      %s22 = sadd.s32 %s21, 1
      %s23 = scalar_select %p20, %s21, %s22
      %p26 = pneg %p20
      %p27 = scmp.eq.s32.totalorder %s11, 1
      %p28 = por %p26, %p27
      %p29 = scmp.ne.s32.totalorder %s21, %s24
      %p30 = scmp.eq.s32.totalorder %s11, 0
      %p31 = por %p29, %p30
      %p32 = scmp.ne.s32.totalorder %s21, %s24
      %p33 = scmp.eq.s32.totalorder %s16, 1
      %p34 = por %p32, %p33
      %p35 = scmp.ne.s32.totalorder %s24, %s25
      %p36 = scmp.eq.s32.totalorder %s16, 0
      %p37 = por %p35, %p36
      %p38 = scmp.ne.s32.totalorder %s24, %s25
      %p39 = scmp.eq.s32.totalorder %s17, 1
      %p40 = por %p38, %p39
      %p42 = scmp.ne.s32.totalorder %s25, %s41
      %p43 = scmp.eq.s32.totalorder %s17, 0
      %p44 = por %p42, %p43
      %s46 = sadd.s32 %s45, 1
      %p49 = scmp.eq.s32.totalorder %s11, 1
      %p50 = scmp.ne.s32.totalorder %s45, %s47
      %p51 = scmp.eq.s32.totalorder %s11, 0
      %p52 = por %p50, %p51
      %p53 = scmp.ne.s32.totalorder %s45, %s47
      %p54 = scmp.eq.s32.totalorder %s16, 1
      %p55 = por %p53, %p54
      %p56 = scmp.ne.s32.totalorder %s47, %s48
      %p57 = scmp.eq.s32.totalorder %s16, 0
      %p58 = por %p56, %p57
      %p59 = scmp.ne.s32.totalorder %s47, %s48
      %p60 = scmp.eq.s32.totalorder %s17, 1
      %p61 = por %p59, %p60
      %p63 = scmp.ne.s32.totalorder %s48, %s62
      %p64 = scmp.eq.s32.totalorder %s17, 0
      %p65 = por %p63, %p64
      %s67 = sadd.s32 %s66, 1
      %p70 = scmp.eq.s32.totalorder %s11, 1
      %p71 = scmp.ne.s32.totalorder %s66, %s68
      %p72 = scmp.eq.s32.totalorder %s11, 0
      %p73 = por %p71, %p72
      %p74 = scmp.ne.s32.totalorder %s66, %s68
      %p75 = scmp.eq.s32.totalorder %s16, 1
      %p76 = por %p74, %p75
      %p77 = scmp.ne.s32.totalorder %s68, %s69
      %p78 = scmp.eq.s32.totalorder %s16, 0
      %p79 = por %p77, %p78
      %p80 = scmp.ne.s32.totalorder %s68, %s69
      %p81 = scmp.eq.s32.totalorder %s17, 1
      %p82 = por %p80, %p81
      %p84 = scmp.ne.s32.totalorder %s69, %s83
      %p85 = scmp.eq.s32.totalorder %s17, 0
      %p86 = por %p84, %p85
      %s87 = ssub.s32 %s11, %s18
      %p88 = scmp.eq.s32.totalorder %s87, 0
      %s90 = sadd.s32 %s89, 1
      %s91 = scalar_select %p88, %s89, %s90
      %p94 = pneg %p88
      %p95 = scmp.eq.s32.totalorder %s11, 1
      %p96 = por %p94, %p95
      %p97 = scmp.ne.s32.totalorder %s89, %s92
      %p98 = scmp.eq.s32.totalorder %s11, 0
      %p99 = por %p97, %p98
      %p100 = scmp.ne.s32.totalorder %s89, %s92
      %p101 = scmp.eq.s32.totalorder %s16, 1
      %p102 = por %p100, %p101
      %p103 = scmp.ne.s32.totalorder %s92, %s93
      %p104 = scmp.eq.s32.totalorder %s16, 0
      %p105 = por %p103, %p104
      %p106 = scmp.ne.s32.totalorder %s92, %s93
      %p107 = scmp.eq.s32.totalorder %s17, 1
      %p108 = por %p106, %p107
      %p110 = scmp.ne.s32.totalorder %s93, %s109
      %p111 = scmp.eq.s32.totalorder %s17, 0
      %p112 = por %p110, %p111
      %p113 = scmp.le.s32.totalorder 1, %s11
      %p114 = scmp.lt.s32.totalorder %s11, 3
      %p115 = pnand %p113, %p114
      %p116 = pneg %p115
      // Predicated region
      $region9: #{transformer_model.3} parent=5 // pred_check
        _
      $region10: #{transformer_model.3} parent=5 // pred_check_branch
        %118 = sbr.rel (%p115) target = $region12
      $region11: #{transformer_model.3} parent=5 // pred_region
        %s119 = ssub.s32 %s11, 1
        // Predicated region
        $region13: #{transformer_model.3} parent=11 // pred_check
          %p120 = pneg %p58
        $region14: #{transformer_model.3} parent=11 // pred_check_branch
          %122 = sbr.rel (%p120) target = $region16
        $region15: #{transformer_model.3} parent=11 // pred_region
          %s124 = ssub.s32 256, 256
          %125 = vsyncadd [#allocation3], %s124
          %s126 = sshll.u32 [#allocation2], 4
          %s127 = int_to_ptr.vmem [resolvable:$true] %s126
          %132 = dma.hbm_to_vmem [thread:$0]  %s1, 256, %s127, [#allocation3], 128, 128, 8
        $region16: #{transformer_model.3} parent=11 // pred_fallthru
          _
        // Predicated region
        $region17: #{transformer_model.3} parent=11 // pred_check
          %p133 = pneg %p79
        $region18: #{transformer_model.3} parent=11 // pred_check_branch
          %135 = sbr.rel (%p133) target = $region20
        $region19: #{transformer_model.3} parent=11 // pred_region
          %s137 = ssub.s32 16, 16
          %138 = vsyncadd [#allocation5], %s137
          %s140 = sshll.u32 [#allocation4], 4
          %s141 = int_to_ptr.vmem [resolvable:$true] %s140
          %143 = dma.hbm_to_vmem [thread:$0]  %s2, 16, %s141, [#allocation5]
        $region20: #{transformer_model.3} parent=11 // pred_fallthru
          _
      $region12: #{transformer_model.3} parent=5 // pred_fallthru
        _
      %p144 = scmp.lt.s32.totalorder %s11, 2
      // Predicated region
      $region21: #{transformer_model.3} parent=5 // pred_check
        %p145 = pneg %p144
      $region22: #{transformer_model.3} parent=5 // pred_check_branch
        %147 = sbr.rel (%p145) target = $region24
      $region23: #{transformer_model.3} parent=5 // pred_region
        // Predicated region
        $region25: #{transformer_model.3} parent=23 // pred_check
          %p148 = pneg %p31
        $region26: #{transformer_model.3} parent=23 // pred_check_branch
          %150 = sbr.rel (%p148) target = $region28
        $region27: #{transformer_model.3} parent=23 // pred_region
          %p151 = scmp.lt.s32.totalorder %s11, 1
          %s152 = scalar_select %p151, %s11, 1
          %s153 = smul.addr %s152, 8
          %s154 = scalar_lea.vmem %s0, %s153
        $region28: #{transformer_model.3} parent=23 // pred_fallthru
          _
      $region24: #{transformer_model.3} parent=5 // pred_fallthru
        _
      %p155 = scmp.le.s32.totalorder 1, %s11
      %p156 = scmp.lt.s32.totalorder %s11, 3
      %p157 = pnand %p155, %p156
      %p158 = pneg %p157
      // Predicated region
      $region29: #{transformer_model.3} parent=5 // pred_check
        _
      $region30: #{transformer_model.3} parent=5 // pred_check_branch
        %160 = sbr.rel (%p157) target = $region32
      $region31: #{transformer_model.3} parent=5 // pred_region
        %s161 = ssub.s32 %s11, 1
        // Predicated region
        $region33: #{transformer_model.3} parent=31 // pred_check
          %p162 = pneg %p58
        $region34: #{transformer_model.3} parent=31 // pred_check_branch
          %164 = sbr.rel (%p162) target = $region36
        $region35: #{transformer_model.3} parent=31 // pred_region
          %165 = dma.done [#allocation3], 256
        $region36: #{transformer_model.3} parent=31 // pred_fallthru
          _
        // Predicated region
        $region37: #{transformer_model.3} parent=31 // pred_check
          %p166 = pneg %p79
        $region38: #{transformer_model.3} parent=31 // pred_check_branch
          %168 = sbr.rel (%p166) target = $region40
        $region39: #{transformer_model.3} parent=31 // pred_region
          %169 = dma.done [#allocation5], 16
        $region40: #{transformer_model.3} parent=31 // pred_fallthru
          _
        %p170 = scmp.lt.s32.totalorder %s16, 1
        %s171 = scalar_select %p170, %s16, 1
        %s172 = smul.addr %s171, 8
        %s173 = scalar_lea.vmem %s0, %s172
        %p174 = pneg %p37
        %p175 = pneg %p34
        %p176 = pneg %p58
        %p177 = pneg %p55
        %p178 = pneg %p79
        %p179 = pneg %p76
        %p180 = pneg %p105
        %p181 = pneg %p102
        %p182 = scmp.lt.s32.totalorder %s16, 1
        %s183 = scalar_select %p182, %s16, 1
        %s184 = smul.addr %s183, 8
        %s185 = scalar_lea.vmem %s3, %s184
        %p186 = scmp.lt.s32.totalorder %s16, 1
        %s187 = scalar_select %p186, %s16, 1
        %s188 = smul.addr %s187, 8
        %s189 = scalar_lea.vmem %s0, %s188
        %p190 = scmp.lt.s32.totalorder %s16, 1
        %s191 = scalar_select %p190, %s16, 1
        %s192 = smul.addr %s191, 8
        %s193 = scalar_lea.vmem %s3, %s192
        %v194 = vld [vmem:[%s189] sm:$0xff]
        %v195 = vld [vmem:[#allocation2] sm:$0xff]
        %v196 = vld [vmem:[#allocation2 + $0x8] sm:$0xff]
        %v197 = vld [vmem:[#allocation4] sm:$0x1]
        %v199 = vlaneseq
        %v200 = vshrl.u32 %v199, 7
        %v201 = vsub.s32 0, %v200
        %v202 = vrot.slane %v197, %v201
        %vm204 = vcmask 130048
        %v206 = vsel %vm204, %v194, 0
        %208 = vmatprep.subr.mxu0 0.0
        %209 = vmatpush1.msra.mxu0 %v195
        %210 = vmatprep.subr.mxu0 0.0
        %211 = vmatpush1.msra.mxu0 %v196
        %212 = vmatprep.subr.mxu0 0.0
        %213 = vmatpush1.msra.mxu0 0.0
        %214 = vmatprep.subr.mxu0 0.0
        %215 = vmatpush1.msra.mxu0 0.0
        %216 = vmatprep.subr.mxu0 0.0
        %217 = vmatpush1.msra.mxu0 0.0
        %218 = vmatprep.subr.mxu0 0.0
        %219 = vmatpush1.msra.mxu0 0.0
        %220 = vmatprep.subr.mxu0 0.0
        %221 = vmatpush1.msra.mxu0 0.0
        %222 = vmatprep.subr.mxu0 0.0
        %223 = vmatpush1.msra.mxu0 0.0
        %224 = vmatprep.subr.mxu0 0.0
        %225 = vmatpush1.msra.mxu0 0.0
        %226 = vmatprep.subr.mxu0 0.0
        %227 = vmatpush1.msra.mxu0 0.0
        %228 = vmatprep.subr.mxu0 0.0
        %229 = vmatpush1.msra.mxu0 0.0
        %230 = vmatprep.subr.mxu0 0.0
        %231 = vmatpush1.msra.mxu0 0.0
        %232 = vmatprep.subr.mxu0 0.0
        %233 = vmatpush1.msra.mxu0 0.0
        %234 = vmatprep.subr.mxu0 0.0
        %235 = vmatpush1.msra.mxu0 0.0
        %236 = vmatprep.subr.mxu0 0.0
        %237 = vmatpush1.msra.mxu0 0.0
        %238 = vmatprep.subr.mxu0 0.0
        %239 = vmatpush1.msra.mxu0 0.0
        %240 = vmatprep.subr.mxu0 0.0
        %241 = vmatpush1.msra.mxu0 0.0
        %242 = vmatprep.subr.mxu0 0.0
        %243 = vmatpush1.msra.mxu0 0.0
        %244 = vmatprep.subr.mxu0 0.0
        %245 = vmatpush1.msra.mxu0 0.0
        %246 = vmatprep.subr.mxu0 0.0
        %247 = vmatpush1.msra.mxu0 0.0
        %248 = vmatprep.subr.mxu0 0.0
        %249 = vmatpush1.msra.mxu0 0.0
        %250 = vmatprep.subr.mxu0 0.0
        %251 = vmatpush1.msra.mxu0 0.0
        %252 = vmatprep.subr.mxu0 0.0
        %253 = vmatpush1.msra.mxu0 0.0
        %254 = vmatprep.subr.mxu0 0.0
        %255 = vmatpush1.msra.mxu0 0.0
        %256 = vmatprep.subr.mxu0 0.0
        %257 = vmatpush1.msra.mxu0 0.0
        %258 = vmatprep.subr.mxu0 0.0
        %259 = vmatpush1.msra.mxu0 0.0
        %260 = vmatprep.subr.mxu0 0.0
        %261 = vmatpush1.msra.mxu0 0.0
        %262 = vmatprep.subr.mxu0 0.0
        %263 = vmatpush1.msra.mxu0 0.0
        %264 = vmatprep.subr.mxu0 0.0
        %265 = vmatpush1.msra.mxu0 0.0
        %266 = vmatprep.subr.mxu0 0.0
        %267 = vmatpush1.msra.mxu0 0.0
        %268 = vmatprep.subr.mxu0 0.0
        %269 = vmatpush1.msra.mxu0 0.0
        %270 = vmatprep.subr.mxu0 0.0
        %271 = vmatpush1.msra.mxu0 0.0
        %272 = vmatprep.mubr.f32.mxu0 0.0
        %273 = vmatmul.mubr.f32.gmra.mrb[0].mxu0 %v206
        %v274 = vpop.f32.mrb[0].mxu0
        %v275 = vadd.f32 %v202, %v274
        %v276 = vpop.f32.mrb[0].mxu0
        %277 = vdwg.mxu0
        %vm278 = vcmask 261120
        %279 = vst.msk [vmem:[%s193] sm:$0xff] %vm278, %v275
        %p280 = scmp.lt.s32.totalorder %s16, 1
        %s281 = scalar_select %p280, %s16, 1
        %s282 = smul.addr %s281, 8
        %s283 = scalar_lea.vmem %s3, %s282
        // Predicated region
        $region41: #{transformer_model.3} parent=31 // pred_check
          %p284 = pneg %p102
        $region42: #{transformer_model.3} parent=31 // pred_check_branch
          %286 = sbr.rel (%p284) target = $region44
        $region43: #{transformer_model.3} parent=31 // pred_region
          _
        $region44: #{transformer_model.3} parent=31 // pred_fallthru
          _
      $region32: #{transformer_model.3} parent=5 // pred_fallthru
        _
      %p287 = scmp.le.s32.totalorder 2, %s11
      // Predicated region
      $region45: #{transformer_model.3} parent=5 // pred_check
        %p288 = pneg %p287
      $region46: #{transformer_model.3} parent=5 // pred_check_branch
        %290 = sbr.rel (%p288) target = $region48
      $region47: #{transformer_model.3} parent=5 // pred_region
        %s291 = ssub.s32 %s11, 2
        // Predicated region
        $region49: #{transformer_model.3} parent=47 // pred_check
          %p292 = pneg %p108
        $region50: #{transformer_model.3} parent=47 // pred_check_branch
          %294 = sbr.rel (%p292) target = $region52
        $region51: #{transformer_model.3} parent=47 // pred_region
          %p295 = scmp.lt.s32.totalorder %s17, 1
          %s296 = scalar_select %p295, %s17, 1
          %s297 = smul.addr %s296, 8
          %s298 = scalar_lea.vmem %s3, %s297
        $region52: #{transformer_model.3} parent=47 // pred_fallthru
          _
      $region48: #{transformer_model.3} parent=5 // pred_fallthru
        _
    $region6: #{transformer_model.3} parent=1 // loop_footer
      %s15 = sadd.s32 1, %s11
    $region7: #{transformer_model.3} parent=1 // loop_footer_branch
      %10 = sbr.rel target = $region3
    $region8: #{transformer_model.3} parent=1 // loop_exit
      _
    %299 = vsyncpa [#allocation3], 1
    %s300 = scalar_lea.sflag [#allocation3], 1
    %301 = vsyncpa %s300, 1
    %302 = vsyncpa [#allocation5], 1

// kernel: transformer_model.4
$region0: #{transformer_model.4}
  #allocation0 [shape = 'u32[]', space=smem, size = 0x4, offset = 0x4, fixed_abs, tag = 'smem constant byte address 0x4 - core index']
  #allocation1 [shape = 'u32[144,128]{1,0:T(1,128)}', space=vmem, size = 0x12000, scoped, tag = 'internal scratch']
  %s0 = inlined_call_operand.vmem [shape: f32[2,8,32], index: 0, kind: input, shape index: {}]
  %s1 = inlined_call_operand.vmem [shape: f32[1,32], index: 1, kind: input, shape index: {}]
  %s2 = inlined_call_operand.vmem [shape: f32[1,32], index: 2, kind: input, shape index: {}]
  %s3 = inlined_call_operand.vmem [shape: f32[2,8,32], index: 3, kind: output, shape index: {}]
  %s4 = sld [smem:[#allocation0]]
  $region45: #{transformer_model.4} parent=0
    _
  %s6 = ssub.s32 1, %s4
  %s7 = scalar_select 0, %s6, %s4
  loop: start=0, step=1, limit=4
  $region2: #{transformer_model.4} parent=0 // loop_pre_header
    _
  $region3: #{transformer_model.4} parent=0 // loop_header
    %s9 = sphi 0, %s13
    %p10 = scmp.ge.s32.totalorder %s9, 4
    %s19 = sphi 0, %s21
    %s22 = sphi 0, %s19
    %s23 = sphi 0, %s22
    %s39 = sphi 0, %s23
    %s43 = sphi 0, %s43
    %s45 = sphi 0, %s43
    %s46 = sphi 0, %s45
    %s60 = sphi 0, %s46
    %s64 = sphi 0, %s64
    %s66 = sphi 0, %s64
    %s67 = sphi 0, %s66
    %s81 = sphi 0, %s67
    %s87 = sphi 0, %s89
    %s90 = sphi 0, %s87
    %s91 = sphi 0, %s90
    %s107 = sphi 0, %s91
  $region4: #{transformer_model.4} parent=0 // loop_header_branch
    %12 = sbr.rel (%p10) target = $region8
  $region5: #{transformer_model.4} parent=0 // loop_body
    %s14 = ssub.s32 %s9, 1
    %s15 = ssub.s32 %s9, 2
    %s16 = sadd.s32 %s9, 1
    %s17 = ssub.s32 %s9, %s16
    %p18 = scmp.eq.s32.totalorder %s17, 0
    %s20 = sadd.s32 %s19, 1
    %s21 = scalar_select %p18, %s19, %s20
    %p24 = pneg %p18
    %p25 = scmp.eq.s32.totalorder %s9, 1
    %p26 = por %p24, %p25
    %p27 = scmp.ne.s32.totalorder %s19, %s22
    %p28 = scmp.eq.s32.totalorder %s9, 0
    %p29 = por %p27, %p28
    %p30 = scmp.ne.s32.totalorder %s19, %s22
    %p31 = scmp.eq.s32.totalorder %s14, 1
    %p32 = por %p30, %p31
    %p33 = scmp.ne.s32.totalorder %s22, %s23
    %p34 = scmp.eq.s32.totalorder %s14, 0
    %p35 = por %p33, %p34
    %p36 = scmp.ne.s32.totalorder %s22, %s23
    %p37 = scmp.eq.s32.totalorder %s15, 1
    %p38 = por %p36, %p37
    %p40 = scmp.ne.s32.totalorder %s23, %s39
    %p41 = scmp.eq.s32.totalorder %s15, 0
    %p42 = por %p40, %p41
    %s44 = sadd.s32 %s43, 1
    %p47 = scmp.eq.s32.totalorder %s9, 1
    %p48 = scmp.ne.s32.totalorder %s43, %s45
    %p49 = scmp.eq.s32.totalorder %s9, 0
    %p50 = por %p48, %p49
    %p51 = scmp.ne.s32.totalorder %s43, %s45
    %p52 = scmp.eq.s32.totalorder %s14, 1
    %p53 = por %p51, %p52
    %p54 = scmp.ne.s32.totalorder %s45, %s46
    %p55 = scmp.eq.s32.totalorder %s14, 0
    %p56 = por %p54, %p55
    %p57 = scmp.ne.s32.totalorder %s45, %s46
    %p58 = scmp.eq.s32.totalorder %s15, 1
    %p59 = por %p57, %p58
    %p61 = scmp.ne.s32.totalorder %s46, %s60
    %p62 = scmp.eq.s32.totalorder %s15, 0
    %p63 = por %p61, %p62
    %s65 = sadd.s32 %s64, 1
    %p68 = scmp.eq.s32.totalorder %s9, 1
    %p69 = scmp.ne.s32.totalorder %s64, %s66
    %p70 = scmp.eq.s32.totalorder %s9, 0
    %p71 = por %p69, %p70
    %p72 = scmp.ne.s32.totalorder %s64, %s66
    %p73 = scmp.eq.s32.totalorder %s14, 1
    %p74 = por %p72, %p73
    %p75 = scmp.ne.s32.totalorder %s66, %s67
    %p76 = scmp.eq.s32.totalorder %s14, 0
    %p77 = por %p75, %p76
    %p78 = scmp.ne.s32.totalorder %s66, %s67
    %p79 = scmp.eq.s32.totalorder %s15, 1
    %p80 = por %p78, %p79
    %p82 = scmp.ne.s32.totalorder %s67, %s81
    %p83 = scmp.eq.s32.totalorder %s15, 0
    %p84 = por %p82, %p83
    %s85 = ssub.s32 %s9, %s16
    %p86 = scmp.eq.s32.totalorder %s85, 0
    %s88 = sadd.s32 %s87, 1
    %s89 = scalar_select %p86, %s87, %s88
    %p92 = pneg %p86
    %p93 = scmp.eq.s32.totalorder %s9, 1
    %p94 = por %p92, %p93
    %p95 = scmp.ne.s32.totalorder %s87, %s90
    %p96 = scmp.eq.s32.totalorder %s9, 0
    %p97 = por %p95, %p96
    %p98 = scmp.ne.s32.totalorder %s87, %s90
    %p99 = scmp.eq.s32.totalorder %s14, 1
    %p100 = por %p98, %p99
    %p101 = scmp.ne.s32.totalorder %s90, %s91
    %p102 = scmp.eq.s32.totalorder %s14, 0
    %p103 = por %p101, %p102
    %p104 = scmp.ne.s32.totalorder %s90, %s91
    %p105 = scmp.eq.s32.totalorder %s15, 1
    %p106 = por %p104, %p105
    %p108 = scmp.ne.s32.totalorder %s91, %s107
    %p109 = scmp.eq.s32.totalorder %s15, 0
    %p110 = por %p108, %p109
    %p111 = scmp.le.s32.totalorder 1, %s9
    %p112 = scmp.lt.s32.totalorder %s9, 3
    %p113 = pnand %p111, %p112
    %p114 = pneg %p113
    // Predicated region
    $region9: #{transformer_model.4} parent=5 // pred_check
      _
    $region10: #{transformer_model.4} parent=5 // pred_check_branch
      %116 = sbr.rel (%p113) target = $region12
    $region11: #{transformer_model.4} parent=5 // pred_region
      %s117 = ssub.s32 %s9, 1
      // Predicated region
      $region13: #{transformer_model.4} parent=11 // pred_check
        %p118 = pneg %p56
      $region14: #{transformer_model.4} parent=11 // pred_check_branch
        %120 = sbr.rel (%p118) target = $region16
      $region15: #{transformer_model.4} parent=11 // pred_region
        _
      $region16: #{transformer_model.4} parent=11 // pred_fallthru
        _
      // Predicated region
      $region17: #{transformer_model.4} parent=11 // pred_check
        %p121 = pneg %p77
      $region18: #{transformer_model.4} parent=11 // pred_check_branch
        %123 = sbr.rel (%p121) target = $region20
      $region19: #{transformer_model.4} parent=11 // pred_region
        _
      $region20: #{transformer_model.4} parent=11 // pred_fallthru
        _
    $region12: #{transformer_model.4} parent=5 // pred_fallthru
      _
    %p124 = scmp.lt.s32.totalorder %s9, 2
    // Predicated region
    $region21: #{transformer_model.4} parent=5 // pred_check
      %p125 = pneg %p124
    $region22: #{transformer_model.4} parent=5 // pred_check_branch
      %127 = sbr.rel (%p125) target = $region24
    $region23: #{transformer_model.4} parent=5 // pred_region
      // Predicated region
      $region25: #{transformer_model.4} parent=23 // pred_check
        %p128 = pneg %p29
      $region26: #{transformer_model.4} parent=23 // pred_check_branch
        %130 = sbr.rel (%p128) target = $region28
      $region27: #{transformer_model.4} parent=23 // pred_region
        %p131 = scmp.lt.s32.totalorder %s9, 1
        %s132 = scalar_select %p131, %s9, 1
        %s133 = smul.addr %s132, 8
        %s134 = scalar_lea.vmem %s0, %s133
      $region28: #{transformer_model.4} parent=23 // pred_fallthru
        _
    $region24: #{transformer_model.4} parent=5 // pred_fallthru
      _
    %p135 = scmp.le.s32.totalorder 1, %s9
    %p136 = scmp.lt.s32.totalorder %s9, 3
    %p137 = pnand %p135, %p136
    %p138 = pneg %p137
    // Predicated region
    $region29: #{transformer_model.4} parent=5 // pred_check
      _
    $region30: #{transformer_model.4} parent=5 // pred_check_branch
      %140 = sbr.rel (%p137) target = $region32
    $region31: #{transformer_model.4} parent=5 // pred_region
      %s141 = ssub.s32 %s9, 1
      %p142 = scmp.lt.s32.totalorder %s14, 1
      %s143 = scalar_select %p142, %s14, 1
      %s144 = smul.addr %s143, 8
      %s145 = scalar_lea.vmem %s0, %s144
      %p146 = pneg %p35
      %p147 = pneg %p32
      %p148 = pneg %p56
      %p149 = pneg %p53
      %p150 = pneg %p77
      %p151 = pneg %p74
      %p152 = pneg %p103
      %p153 = pneg %p100
      %p154 = scmp.lt.s32.totalorder %s14, 1
      %s155 = scalar_select %p154, %s14, 1
      %s156 = smul.addr %s155, 8
      %s157 = scalar_lea.vmem %s3, %s156
      %p158 = scmp.lt.s32.totalorder %s14, 1
      %s159 = scalar_select %p158, %s14, 1
      %s160 = smul.addr %s159, 8
      %s161 = scalar_lea.vmem %s0, %s160
      %p162 = scmp.lt.s32.totalorder %s14, 1
      %s163 = scalar_select %p162, %s14, 1
      %s164 = smul.addr %s163, 8
      %s165 = scalar_lea.vmem %s3, %s164
      %v166 = vld [vmem:[%s161] sm:$0xff]
      %v167 = vld [vmem:[%s1] sm:$0x1]
      %v168 = vld [vmem:[%s2] sm:$0x1]
      %vm169 = vcmask 261120
      %v170 = vsel %vm169, %v166, 0.0
      %171 = vadd.xlane.f32.xlu0 %v170
      %v172 = vpop.xlane.xlu0 %171
      %v173 = vrcp.pop 32.0
      %v174 = vmul.f32 %v172, %v173
      %v175 = vsub.f32 %v166, %v174
      %v176 = vmul.f32 %v175, %v175
      %v177 = vsel %vm169, %v176, 0.0
      %178 = vadd.xlane.f32.xlu0 %v177
      %v179 = vpop.xlane.xlu0 %178
      %v180 = vmul.f32 %v179, %v173
      %v181 = vadd.f32 %v180, 1e-05
      %v182 = vrsqrt.pop %v181
      %v183 = vmul.f32 %v175, %v182
      %v185 = vlaneseq
      %v186 = vshrl.u32 %v185, 7
      %v187 = vsub.s32 0, %v186
      %v188 = vrot.slane %v167, %v187
      %v190 = vmul.f32 %v183, %v188
      %v192 = vlaneseq
      %v193 = vshrl.u32 %v192, 7
      %v194 = vsub.s32 0, %v193
      %v195 = vrot.slane %v168, %v194
      %v197 = vadd.f32 %v190, %v195
      %198 = vst.msk [vmem:[%s165] sm:$0xff] %vm169, %v197
      %p199 = scmp.lt.s32.totalorder %s14, 1
      %s200 = scalar_select %p199, %s14, 1
      %s201 = smul.addr %s200, 8
      %s202 = scalar_lea.vmem %s3, %s201
      // Predicated region
      $region33: #{transformer_model.4} parent=31 // pred_check
        %p203 = pneg %p100
      $region34: #{transformer_model.4} parent=31 // pred_check_branch
        %205 = sbr.rel (%p203) target = $region36
      $region35: #{transformer_model.4} parent=31 // pred_region
        _
      $region36: #{transformer_model.4} parent=31 // pred_fallthru
        _
    $region32: #{transformer_model.4} parent=5 // pred_fallthru
      _
    %p206 = scmp.le.s32.totalorder 2, %s9
    // Predicated region
    $region37: #{transformer_model.4} parent=5 // pred_check
      %p207 = pneg %p206
    $region38: #{transformer_model.4} parent=5 // pred_check_branch
      %209 = sbr.rel (%p207) target = $region40
    $region39: #{transformer_model.4} parent=5 // pred_region
      %s210 = ssub.s32 %s9, 2
      // Predicated region
      $region41: #{transformer_model.4} parent=39 // pred_check
        %p211 = pneg %p106
      $region42: #{transformer_model.4} parent=39 // pred_check_branch
        %213 = sbr.rel (%p211) target = $region44
      $region43: #{transformer_model.4} parent=39 // pred_region
        %p214 = scmp.lt.s32.totalorder %s15, 1
        %s215 = scalar_select %p214, %s15, 1
        %s216 = smul.addr %s215, 8
        %s217 = scalar_lea.vmem %s3, %s216
      $region44: #{transformer_model.4} parent=39 // pred_fallthru
        _
    $region40: #{transformer_model.4} parent=5 // pred_fallthru
      _
  $region6: #{transformer_model.4} parent=0 // loop_footer
    %s13 = sadd.s32 1, %s9
  $region7: #{transformer_model.4} parent=0 // loop_footer_branch
    %8 = sbr.rel target = $region3
  $region8: #{transformer_model.4} parent=0 // loop_exit
    _

// kernel: transformer_model.5
$region0: #{transformer_model.5}
  #allocation0 [shape = 'u32[]', space=smem, size = 0x4, offset = 0x4, fixed_abs, tag = 'smem constant byte address 0x4 - core index']
  #allocation1 [shape = 'u32[144,128]{1,0:T(1,128)}', space=vmem, size = 0x12000, scoped, tag = 'internal scratch']
  %s0 = inlined_call_operand.vmem [shape: f32[2,8,32], index: 0, kind: input, shape index: {}]
  %s1 = inlined_call_operand.vmem [shape: f32[1,32], index: 1, kind: input, shape index: {}]
  %s2 = inlined_call_operand.vmem [shape: f32[1,32], index: 2, kind: input, shape index: {}]
  %s3 = inlined_call_operand.vmem [shape: f32[32,8], index: 3, kind: input, shape index: {}]
  %s4 = inlined_call_operand.vmem [shape: f32[1,8], index: 4, kind: input, shape index: {}]
  %s5 = inlined_call_operand.vmem [shape: f32[2,8,8], index: 5, kind: output, shape index: {}]
  %s6 = sld [smem:[#allocation0]]
  $region53: #{transformer_model.5} parent=0
    _
  %s8 = ssub.s32 1, %s6
  %s9 = scalar_select 0, %s8, %s6
  loop: start=0, step=1, limit=4
  $region2: #{transformer_model.5} parent=0 // loop_pre_header
    _
  $region3: #{transformer_model.5} parent=0 // loop_header
    %s11 = sphi 0, %s15
    %p12 = scmp.ge.s32.totalorder %s11, 4
    %s21 = sphi 0, %s23
    %s24 = sphi 0, %s21
    %s25 = sphi 0, %s24
    %s41 = sphi 0, %s25
    %s45 = sphi 0, %s45
    %s47 = sphi 0, %s45
    %s48 = sphi 0, %s47
    %s62 = sphi 0, %s48
    %s66 = sphi 0, %s66
    %s68 = sphi 0, %s66
    %s69 = sphi 0, %s68
    %s83 = sphi 0, %s69
    %s87 = sphi 0, %s87
    %s89 = sphi 0, %s87
    %s90 = sphi 0, %s89
    %s104 = sphi 0, %s90
    %s108 = sphi 0, %s108
    %s110 = sphi 0, %s108
    %s111 = sphi 0, %s110
    %s125 = sphi 0, %s111
    %s131 = sphi 0, %s133
    %s134 = sphi 0, %s131
    %s135 = sphi 0, %s134
    %s151 = sphi 0, %s135
  $region4: #{transformer_model.5} parent=0 // loop_header_branch
    %14 = sbr.rel (%p12) target = $region8
  $region5: #{transformer_model.5} parent=0 // loop_body
    %s16 = ssub.s32 %s11, 1
    %s17 = ssub.s32 %s11, 2
    %s18 = sadd.s32 %s11, 1
    %s19 = ssub.s32 %s11, %s18
    %p20 = scmp.eq.s32.totalorder %s19, 0
    %s22 = sadd.s32 %s21, 1
    %s23 = scalar_select %p20, %s21, %s22
    %p26 = pneg %p20
    %p27 = scmp.eq.s32.totalorder %s11, 1
    %p28 = por %p26, %p27
    %p29 = scmp.ne.s32.totalorder %s21, %s24
    %p30 = scmp.eq.s32.totalorder %s11, 0
    %p31 = por %p29, %p30
    %p32 = scmp.ne.s32.totalorder %s21, %s24
    %p33 = scmp.eq.s32.totalorder %s16, 1
    %p34 = por %p32, %p33
    %p35 = scmp.ne.s32.totalorder %s24, %s25
    %p36 = scmp.eq.s32.totalorder %s16, 0
    %p37 = por %p35, %p36
    %p38 = scmp.ne.s32.totalorder %s24, %s25
    %p39 = scmp.eq.s32.totalorder %s17, 1
    %p40 = por %p38, %p39
    %p42 = scmp.ne.s32.totalorder %s25, %s41
    %p43 = scmp.eq.s32.totalorder %s17, 0
    %p44 = por %p42, %p43
    %s46 = sadd.s32 %s45, 1
    %p49 = scmp.eq.s32.totalorder %s11, 1
    %p50 = scmp.ne.s32.totalorder %s45, %s47
    %p51 = scmp.eq.s32.totalorder %s11, 0
    %p52 = por %p50, %p51
    %p53 = scmp.ne.s32.totalorder %s45, %s47
    %p54 = scmp.eq.s32.totalorder %s16, 1
    %p55 = por %p53, %p54
    %p56 = scmp.ne.s32.totalorder %s47, %s48
    %p57 = scmp.eq.s32.totalorder %s16, 0
    %p58 = por %p56, %p57
    %p59 = scmp.ne.s32.totalorder %s47, %s48
    %p60 = scmp.eq.s32.totalorder %s17, 1
    %p61 = por %p59, %p60
    %p63 = scmp.ne.s32.totalorder %s48, %s62
    %p64 = scmp.eq.s32.totalorder %s17, 0
    %p65 = por %p63, %p64
    %s67 = sadd.s32 %s66, 1
    %p70 = scmp.eq.s32.totalorder %s11, 1
    %p71 = scmp.ne.s32.totalorder %s66, %s68
    %p72 = scmp.eq.s32.totalorder %s11, 0
    %p73 = por %p71, %p72
    %p74 = scmp.ne.s32.totalorder %s66, %s68
    %p75 = scmp.eq.s32.totalorder %s16, 1
    %p76 = por %p74, %p75
    %p77 = scmp.ne.s32.totalorder %s68, %s69
    %p78 = scmp.eq.s32.totalorder %s16, 0
    %p79 = por %p77, %p78
    %p80 = scmp.ne.s32.totalorder %s68, %s69
    %p81 = scmp.eq.s32.totalorder %s17, 1
    %p82 = por %p80, %p81
    %p84 = scmp.ne.s32.totalorder %s69, %s83
    %p85 = scmp.eq.s32.totalorder %s17, 0
    %p86 = por %p84, %p85
    %s88 = sadd.s32 %s87, 1
    %p91 = scmp.eq.s32.totalorder %s11, 1
    %p92 = scmp.ne.s32.totalorder %s87, %s89
    %p93 = scmp.eq.s32.totalorder %s11, 0
    %p94 = por %p92, %p93
    %p95 = scmp.ne.s32.totalorder %s87, %s89
    %p96 = scmp.eq.s32.totalorder %s16, 1
    %p97 = por %p95, %p96
    %p98 = scmp.ne.s32.totalorder %s89, %s90
    %p99 = scmp.eq.s32.totalorder %s16, 0
    %p100 = por %p98, %p99
    %p101 = scmp.ne.s32.totalorder %s89, %s90
    %p102 = scmp.eq.s32.totalorder %s17, 1
    %p103 = por %p101, %p102
    %p105 = scmp.ne.s32.totalorder %s90, %s104
    %p106 = scmp.eq.s32.totalorder %s17, 0
    %p107 = por %p105, %p106
    %s109 = sadd.s32 %s108, 1
    %p112 = scmp.eq.s32.totalorder %s11, 1
    %p113 = scmp.ne.s32.totalorder %s108, %s110
    %p114 = scmp.eq.s32.totalorder %s11, 0
    %p115 = por %p113, %p114
    %p116 = scmp.ne.s32.totalorder %s108, %s110
    %p117 = scmp.eq.s32.totalorder %s16, 1
    %p118 = por %p116, %p117
    %p119 = scmp.ne.s32.totalorder %s110, %s111
    %p120 = scmp.eq.s32.totalorder %s16, 0
    %p121 = por %p119, %p120
    %p122 = scmp.ne.s32.totalorder %s110, %s111
    %p123 = scmp.eq.s32.totalorder %s17, 1
    %p124 = por %p122, %p123
    %p126 = scmp.ne.s32.totalorder %s111, %s125
    %p127 = scmp.eq.s32.totalorder %s17, 0
    %p128 = por %p126, %p127
    %s129 = ssub.s32 %s11, %s18
    %p130 = scmp.eq.s32.totalorder %s129, 0
    %s132 = sadd.s32 %s131, 1
    %s133 = scalar_select %p130, %s131, %s132
    %p136 = pneg %p130
    %p137 = scmp.eq.s32.totalorder %s11, 1
    %p138 = por %p136, %p137
    %p139 = scmp.ne.s32.totalorder %s131, %s134
    %p140 = scmp.eq.s32.totalorder %s11, 0
    %p141 = por %p139, %p140
    %p142 = scmp.ne.s32.totalorder %s131, %s134
    %p143 = scmp.eq.s32.totalorder %s16, 1
    %p144 = por %p142, %p143
    %p145 = scmp.ne.s32.totalorder %s134, %s135
    %p146 = scmp.eq.s32.totalorder %s16, 0
    %p147 = por %p145, %p146
    %p148 = scmp.ne.s32.totalorder %s134, %s135
    %p149 = scmp.eq.s32.totalorder %s17, 1
    %p150 = por %p148, %p149
    %p152 = scmp.ne.s32.totalorder %s135, %s151
    %p153 = scmp.eq.s32.totalorder %s17, 0
    %p154 = por %p152, %p153
    %p155 = scmp.le.s32.totalorder 1, %s11
    %p156 = scmp.lt.s32.totalorder %s11, 3
    %p157 = pnand %p155, %p156
    %p158 = pneg %p157
    // Predicated region
    $region9: #{transformer_model.5} parent=5 // pred_check
      _
    $region10: #{transformer_model.5} parent=5 // pred_check_branch
      %160 = sbr.rel (%p157) target = $region12
    $region11: #{transformer_model.5} parent=5 // pred_region
      %s161 = ssub.s32 %s11, 1
      // Predicated region
      $region13: #{transformer_model.5} parent=11 // pred_check
        %p162 = pneg %p58
      $region14: #{transformer_model.5} parent=11 // pred_check_branch
        %164 = sbr.rel (%p162) target = $region16
      $region15: #{transformer_model.5} parent=11 // pred_region
        _
      $region16: #{transformer_model.5} parent=11 // pred_fallthru
        _
      // Predicated region
      $region17: #{transformer_model.5} parent=11 // pred_check
        %p165 = pneg %p79
      $region18: #{transformer_model.5} parent=11 // pred_check_branch
        %167 = sbr.rel (%p165) target = $region20
      $region19: #{transformer_model.5} parent=11 // pred_region
        _
      $region20: #{transformer_model.5} parent=11 // pred_fallthru
        _
      // Predicated region
      $region21: #{transformer_model.5} parent=11 // pred_check
        %p168 = pneg %p100
      $region22: #{transformer_model.5} parent=11 // pred_check_branch
        %170 = sbr.rel (%p168) target = $region24
      $region23: #{transformer_model.5} parent=11 // pred_region
        _
      $region24: #{transformer_model.5} parent=11 // pred_fallthru
        _
      // Predicated region
      $region25: #{transformer_model.5} parent=11 // pred_check
        %p171 = pneg %p121
      $region26: #{transformer_model.5} parent=11 // pred_check_branch
        %173 = sbr.rel (%p171) target = $region28
      $region27: #{transformer_model.5} parent=11 // pred_region
        _
      $region28: #{transformer_model.5} parent=11 // pred_fallthru
        _
    $region12: #{transformer_model.5} parent=5 // pred_fallthru
      _
    %p174 = scmp.lt.s32.totalorder %s11, 2
    // Predicated region
    $region29: #{transformer_model.5} parent=5 // pred_check
      %p175 = pneg %p174
    $region30: #{transformer_model.5} parent=5 // pred_check_branch
      %177 = sbr.rel (%p175) target = $region32
    $region31: #{transformer_model.5} parent=5 // pred_region
      // Predicated region
      $region33: #{transformer_model.5} parent=31 // pred_check
        %p178 = pneg %p31
      $region34: #{transformer_model.5} parent=31 // pred_check_branch
        %180 = sbr.rel (%p178) target = $region36
      $region35: #{transformer_model.5} parent=31 // pred_region
        %p181 = scmp.lt.s32.totalorder %s11, 1
        %s182 = scalar_select %p181, %s11, 1
        %s183 = smul.addr %s182, 8
        %s184 = scalar_lea.vmem %s0, %s183
      $region36: #{transformer_model.5} parent=31 // pred_fallthru
        _
    $region32: #{transformer_model.5} parent=5 // pred_fallthru
      _
    %p185 = scmp.le.s32.totalorder 1, %s11
    %p186 = scmp.lt.s32.totalorder %s11, 3
    %p187 = pnand %p185, %p186
    %p188 = pneg %p187
    // Predicated region
    $region37: #{transformer_model.5} parent=5 // pred_check
      _
    $region38: #{transformer_model.5} parent=5 // pred_check_branch
      %190 = sbr.rel (%p187) target = $region40
    $region39: #{transformer_model.5} parent=5 // pred_region
      %s191 = ssub.s32 %s11, 1
      %p192 = scmp.lt.s32.totalorder %s16, 1
      %s193 = scalar_select %p192, %s16, 1
      %s194 = smul.addr %s193, 8
      %s195 = scalar_lea.vmem %s0, %s194
      %p196 = pneg %p37
      %p197 = pneg %p34
      %p198 = pneg %p58
      %p199 = pneg %p55
      %p200 = pneg %p79
      %p201 = pneg %p76
      %p202 = pneg %p100
      %p203 = pneg %p97
      %p204 = pneg %p121
      %p205 = pneg %p118
      %p206 = pneg %p147
      %p207 = pneg %p144
      %p208 = scmp.lt.s32.totalorder %s16, 1
      %s209 = scalar_select %p208, %s16, 1
      %s210 = smul.addr %s209, 8
      %s211 = scalar_lea.vmem %s5, %s210
      %p212 = scmp.lt.s32.totalorder %s16, 1
      %s213 = scalar_select %p212, %s16, 1
      %s214 = smul.addr %s213, 8
      %s215 = scalar_lea.vmem %s0, %s214
      %p216 = scmp.lt.s32.totalorder %s16, 1
      %s217 = scalar_select %p216, %s16, 1
      %s218 = smul.addr %s217, 8
      %s219 = scalar_lea.vmem %s5, %s218
      %v220 = vld [vmem:[%s215] sm:$0xff]
      %v221 = vld [vmem:[%s1] sm:$0x1]
      %v222 = vld [vmem:[%s2] sm:$0x1]
      %vm223 = vcmask 261120
      %v224 = vsel %vm223, %v220, 0.0
      %225 = vadd.xlane.f32.xlu0 %v224
      %v226 = vpop.xlane.xlu0 %225
      %v227 = vrcp.pop 32.0
      %v228 = vmul.f32 %v226, %v227
      %v229 = vsub.f32 %v220, %v228
      %v230 = vmul.f32 %v229, %v229
      %v231 = vsel %vm223, %v230, 0.0
      %232 = vadd.xlane.f32.xlu0 %v231
      %v233 = vpop.xlane.xlu0 %232
      %v234 = vmul.f32 %v233, %v227
      %v235 = vadd.f32 %v234, 1e-05
      %v236 = vrsqrt.pop %v235
      %v237 = vmul.f32 %v229, %v236
      %v239 = vlaneseq
      %v240 = vshrl.u32 %v239, 7
      %v241 = vsub.s32 0, %v240
      %v242 = vrot.slane %v221, %v241
      %v244 = vmul.f32 %v237, %v242
      %v246 = vlaneseq
      %v247 = vshrl.u32 %v246, 7
      %v248 = vsub.s32 0, %v247
      %v249 = vrot.slane %v222, %v248
      %v251 = vadd.f32 %v244, %v249
      %v252 = vld [vmem:[%s3] sm:$0xff]
      %v253 = vld [vmem:[%s3 + $0x8] sm:$0xff]
      %v254 = vld [vmem:[%s3 + $0x10] sm:$0xff]
      %v255 = vld [vmem:[%s3 + $0x18] sm:$0xff]
      %v256 = vld [vmem:[%s4] sm:$0x1]
      %v258 = vlaneseq
      %v259 = vshrl.u32 %v258, 7
      %v260 = vsub.s32 0, %v259
      %v261 = vrot.slane %v256, %v260
      %v264 = vsel %vm223, %v251, 0
      %266 = vmatprep.subr.mxu0 0.0
      %267 = vmatpush1.msra.mxu0 %v252
      %268 = vmatprep.subr.mxu0 0.0
      %269 = vmatpush1.msra.mxu0 %v253
      %270 = vmatprep.subr.mxu0 0.0
      %271 = vmatpush1.msra.mxu0 %v254
      %272 = vmatprep.subr.mxu0 0.0
      %273 = vmatpush1.msra.mxu0 %v255
      %274 = vmatprep.subr.mxu0 0.0
      %275 = vmatpush1.msra.mxu0 0.0
      %276 = vmatprep.subr.mxu0 0.0
      %277 = vmatpush1.msra.mxu0 0.0
      %278 = vmatprep.subr.mxu0 0.0
      %279 = vmatpush1.msra.mxu0 0.0
      %280 = vmatprep.subr.mxu0 0.0
      %281 = vmatpush1.msra.mxu0 0.0
      %282 = vmatprep.subr.mxu0 0.0
      %283 = vmatpush1.msra.mxu0 0.0
      %284 = vmatprep.subr.mxu0 0.0
      %285 = vmatpush1.msra.mxu0 0.0
      %286 = vmatprep.subr.mxu0 0.0
      %287 = vmatpush1.msra.mxu0 0.0
      %288 = vmatprep.subr.mxu0 0.0
      %289 = vmatpush1.msra.mxu0 0.0
      %290 = vmatprep.subr.mxu0 0.0
      %291 = vmatpush1.msra.mxu0 0.0
      %292 = vmatprep.subr.mxu0 0.0
      %293 = vmatpush1.msra.mxu0 0.0
      %294 = vmatprep.subr.mxu0 0.0
      %295 = vmatpush1.msra.mxu0 0.0
      %296 = vmatprep.subr.mxu0 0.0
      %297 = vmatpush1.msra.mxu0 0.0
      %298 = vmatprep.subr.mxu0 0.0
      %299 = vmatpush1.msra.mxu0 0.0
      %300 = vmatprep.subr.mxu0 0.0
      %301 = vmatpush1.msra.mxu0 0.0
      %302 = vmatprep.subr.mxu0 0.0
      %303 = vmatpush1.msra.mxu0 0.0
      %304 = vmatprep.subr.mxu0 0.0
      %305 = vmatpush1.msra.mxu0 0.0
      %306 = vmatprep.subr.mxu0 0.0
      %307 = vmatpush1.msra.mxu0 0.0
      %308 = vmatprep.subr.mxu0 0.0
      %309 = vmatpush1.msra.mxu0 0.0
      %310 = vmatprep.subr.mxu0 0.0
      %311 = vmatpush1.msra.mxu0 0.0
      %312 = vmatprep.subr.mxu0 0.0
      %313 = vmatpush1.msra.mxu0 0.0
      %314 = vmatprep.subr.mxu0 0.0
      %315 = vmatpush1.msra.mxu0 0.0
      %316 = vmatprep.subr.mxu0 0.0
      %317 = vmatpush1.msra.mxu0 0.0
      %318 = vmatprep.subr.mxu0 0.0
      %319 = vmatpush1.msra.mxu0 0.0
      %320 = vmatprep.subr.mxu0 0.0
      %321 = vmatpush1.msra.mxu0 0.0
      %322 = vmatprep.subr.mxu0 0.0
      %323 = vmatpush1.msra.mxu0 0.0
      %324 = vmatprep.subr.mxu0 0.0
      %325 = vmatpush1.msra.mxu0 0.0
      %326 = vmatprep.subr.mxu0 0.0
      %327 = vmatpush1.msra.mxu0 0.0
      %328 = vmatprep.subr.mxu0 0.0
      %329 = vmatpush1.msra.mxu0 0.0
      %330 = vmatprep.mubr.f32.mxu0 0.0
      %331 = vmatmul.mubr.f32.gmra.mrb[0].mxu0 %v264
      %v332 = vpop.f32.mrb[0].mxu0
      %v333 = vadd.f32 %v261, %v332
      %v334 = vpop.f32.mrb[0].mxu0
      %335 = vdwg.mxu0
      %vm336 = vcmask 64512
      %337 = vst.msk [vmem:[%s219] sm:$0xff] %vm336, %v333
      %p338 = scmp.lt.s32.totalorder %s16, 1
      %s339 = scalar_select %p338, %s16, 1
      %s340 = smul.addr %s339, 8
      %s341 = scalar_lea.vmem %s5, %s340
      // Predicated region
      $region41: #{transformer_model.5} parent=39 // pred_check
        %p342 = pneg %p144
      $region42: #{transformer_model.5} parent=39 // pred_check_branch
        %344 = sbr.rel (%p342) target = $region44
      $region43: #{transformer_model.5} parent=39 // pred_region
        _
      $region44: #{transformer_model.5} parent=39 // pred_fallthru
        _
    $region40: #{transformer_model.5} parent=5 // pred_fallthru
      _
    %p345 = scmp.le.s32.totalorder 2, %s11
    // Predicated region
    $region45: #{transformer_model.5} parent=5 // pred_check
      %p346 = pneg %p345
    $region46: #{transformer_model.5} parent=5 // pred_check_branch
      %348 = sbr.rel (%p346) target = $region48
    $region47: #{transformer_model.5} parent=5 // pred_region
      %s349 = ssub.s32 %s11, 2
      // Predicated region
      $region49: #{transformer_model.5} parent=47 // pred_check
        %p350 = pneg %p150
      $region50: #{transformer_model.5} parent=47 // pred_check_branch
        %352 = sbr.rel (%p350) target = $region52
      $region51: #{transformer_model.5} parent=47 // pred_region
        %p353 = scmp.lt.s32.totalorder %s17, 1
        %s354 = scalar_select %p353, %s17, 1
        %s355 = smul.addr %s354, 8
        %s356 = scalar_lea.vmem %s5, %s355
      $region52: #{transformer_model.5} parent=47 // pred_fallthru
        _
    $region48: #{transformer_model.5} parent=5 // pred_fallthru
      _
  $region6: #{transformer_model.5} parent=0 // loop_footer
    %s15 = sadd.s32 1, %s11
  $region7: #{transformer_model.5} parent=0 // loop_footer_branch
    %10 = sbr.rel target = $region3
  $region8: #{transformer_model.5} parent=0 // loop_exit
    _

// kernel: closed_call.8
$region0: #{closed_call.8}
  #allocation0 [shape = 'u32[]', space=smem, size = 0x4, offset = 0x4, fixed_abs, tag = 'smem constant byte address 0x4 - core index']
  #allocation1 [shape = 'u32[144,128]{1,0:T(1,128)}', space=vmem, size = 0x12000, scoped, tag = 'internal scratch']
  %s0 = inlined_call_operand.vmem [shape: f32[2,8,32], index: 0, kind: input, shape index: {}]
  %s1 = inlined_call_operand.vmem [shape: f32[32,96], index: 1, kind: input, shape index: {}]
  %s2 = inlined_call_operand.vmem [shape: f32[1,96], index: 2, kind: input, shape index: {}]
  %s3 = inlined_call_operand.vmem [shape: f32[32,32], index: 3, kind: input, shape index: {}]
  %s4 = inlined_call_operand.vmem [shape: f32[1,32], index: 4, kind: input, shape index: {}]
  %s5 = inlined_call_operand.vmem [shape: f32[1,32], index: 5, kind: input, shape index: {}]
  %s6 = inlined_call_operand.vmem [shape: f32[1,32], index: 6, kind: input, shape index: {}]
  %s7 = inlined_call_operand.vmem [shape: f32[32,2048], index: 7, kind: input, shape index: {}]
  %s8 = inlined_call_operand.vmem [shape: f32[1,2048], index: 8, kind: input, shape index: {}]
  %s9 = inlined_call_operand.vmem [shape: f32[2048,32], index: 9, kind: input, shape index: {}]
  %s10 = inlined_call_operand.vmem [shape: f32[1,32], index: 10, kind: input, shape index: {}]
  %s11 = inlined_call_operand.vmem [shape: f32[1,32], index: 11, kind: input, shape index: {}]
  %s12 = inlined_call_operand.vmem [shape: f32[1,32], index: 12, kind: input, shape index: {}]
  %s13 = inlined_call_operand.vmem [shape: f32[2,8,32], index: 13, kind: output, shape index: {}]
  %s14 = sld [smem:[#allocation0]]
  $region85: #{closed_call.8} parent=0
    _
  %s16 = ssub.s32 1, %s14
  %s17 = scalar_select 0, %s16, %s14
  loop: start=0, step=1, limit=4
  $region2: #{closed_call.8} parent=0 // loop_pre_header
    _
  $region3: #{closed_call.8} parent=0 // loop_header
    %s19 = sphi 0, %s23
    %p20 = scmp.ge.s32.totalorder %s19, 4
    %s29 = sphi 0, %s31
    %s32 = sphi 0, %s29
    %s33 = sphi 0, %s32
    %s49 = sphi 0, %s33
    %s53 = sphi 0, %s53
    %s55 = sphi 0, %s53
    %s56 = sphi 0, %s55
    %s70 = sphi 0, %s56
    %s74 = sphi 0, %s74
    %s76 = sphi 0, %s74
    %s77 = sphi 0, %s76
    %s91 = sphi 0, %s77
    %s95 = sphi 0, %s95
    %s97 = sphi 0, %s95
    %s98 = sphi 0, %s97
    %s112 = sphi 0, %s98
    %s116 = sphi 0, %s116
    %s118 = sphi 0, %s116
    %s119 = sphi 0, %s118
    %s133 = sphi 0, %s119
    %s137 = sphi 0, %s137
    %s139 = sphi 0, %s137
    %s140 = sphi 0, %s139
    %s154 = sphi 0, %s140
    %s158 = sphi 0, %s158
    %s160 = sphi 0, %s158
    %s161 = sphi 0, %s160
    %s175 = sphi 0, %s161
    %s179 = sphi 0, %s179
    %s181 = sphi 0, %s179
    %s182 = sphi 0, %s181
    %s196 = sphi 0, %s182
    %s200 = sphi 0, %s200
    %s202 = sphi 0, %s200
    %s203 = sphi 0, %s202
    %s217 = sphi 0, %s203
    %s221 = sphi 0, %s221
    %s223 = sphi 0, %s221
    %s224 = sphi 0, %s223
    %s238 = sphi 0, %s224
    %s242 = sphi 0, %s242
    %s244 = sphi 0, %s242
    %s245 = sphi 0, %s244
    %s259 = sphi 0, %s245
    %s263 = sphi 0, %s263
    %s265 = sphi 0, %s263
    %s266 = sphi 0, %s265
    %s280 = sphi 0, %s266
    %s284 = sphi 0, %s284
    %s286 = sphi 0, %s284
    %s287 = sphi 0, %s286
    %s301 = sphi 0, %s287
    %s307 = sphi 0, %s309
    %s310 = sphi 0, %s307
    %s311 = sphi 0, %s310
    %s327 = sphi 0, %s311
  $region4: #{closed_call.8} parent=0 // loop_header_branch
    %22 = sbr.rel (%p20) target = $region8
  $region5: #{closed_call.8} parent=0 // loop_body
    %s24 = ssub.s32 %s19, 1
    %s25 = ssub.s32 %s19, 2
    %s26 = sadd.s32 %s19, 1
    %s27 = ssub.s32 %s19, %s26
    %p28 = scmp.eq.s32.totalorder %s27, 0
    %s30 = sadd.s32 %s29, 1
    %s31 = scalar_select %p28, %s29, %s30
    %p34 = pneg %p28
    %p35 = scmp.eq.s32.totalorder %s19, 1
    %p36 = por %p34, %p35
    %p37 = scmp.ne.s32.totalorder %s29, %s32
    %p38 = scmp.eq.s32.totalorder %s19, 0
    %p39 = por %p37, %p38
    %p40 = scmp.ne.s32.totalorder %s29, %s32
    %p41 = scmp.eq.s32.totalorder %s24, 1
    %p42 = por %p40, %p41
    %p43 = scmp.ne.s32.totalorder %s32, %s33
    %p44 = scmp.eq.s32.totalorder %s24, 0
    %p45 = por %p43, %p44
    %p46 = scmp.ne.s32.totalorder %s32, %s33
    %p47 = scmp.eq.s32.totalorder %s25, 1
    %p48 = por %p46, %p47
    %p50 = scmp.ne.s32.totalorder %s33, %s49
    %p51 = scmp.eq.s32.totalorder %s25, 0
    %p52 = por %p50, %p51
    %s54 = sadd.s32 %s53, 1
    %p57 = scmp.eq.s32.totalorder %s19, 1
    %p58 = scmp.ne.s32.totalorder %s53, %s55
    %p59 = scmp.eq.s32.totalorder %s19, 0
    %p60 = por %p58, %p59
    %p61 = scmp.ne.s32.totalorder %s53, %s55
    %p62 = scmp.eq.s32.totalorder %s24, 1
    %p63 = por %p61, %p62
    %p64 = scmp.ne.s32.totalorder %s55, %s56
    %p65 = scmp.eq.s32.totalorder %s24, 0
    %p66 = por %p64, %p65
    %p67 = scmp.ne.s32.totalorder %s55, %s56
    %p68 = scmp.eq.s32.totalorder %s25, 1
    %p69 = por %p67, %p68
    %p71 = scmp.ne.s32.totalorder %s56, %s70
    %p72 = scmp.eq.s32.totalorder %s25, 0
    %p73 = por %p71, %p72
    %s75 = sadd.s32 %s74, 1
    %p78 = scmp.eq.s32.totalorder %s19, 1
    %p79 = scmp.ne.s32.totalorder %s74, %s76
    %p80 = scmp.eq.s32.totalorder %s19, 0
    %p81 = por %p79, %p80
    %p82 = scmp.ne.s32.totalorder %s74, %s76
    %p83 = scmp.eq.s32.totalorder %s24, 1
    %p84 = por %p82, %p83
    %p85 = scmp.ne.s32.totalorder %s76, %s77
    %p86 = scmp.eq.s32.totalorder %s24, 0
    %p87 = por %p85, %p86
    %p88 = scmp.ne.s32.totalorder %s76, %s77
    %p89 = scmp.eq.s32.totalorder %s25, 1
    %p90 = por %p88, %p89
    %p92 = scmp.ne.s32.totalorder %s77, %s91
    %p93 = scmp.eq.s32.totalorder %s25, 0
    %p94 = por %p92, %p93
    %s96 = sadd.s32 %s95, 1
    %p99 = scmp.eq.s32.totalorder %s19, 1
    %p100 = scmp.ne.s32.totalorder %s95, %s97
    %p101 = scmp.eq.s32.totalorder %s19, 0
    %p102 = por %p100, %p101
    %p103 = scmp.ne.s32.totalorder %s95, %s97
    %p104 = scmp.eq.s32.totalorder %s24, 1
    %p105 = por %p103, %p104
    %p106 = scmp.ne.s32.totalorder %s97, %s98
    %p107 = scmp.eq.s32.totalorder %s24, 0
    %p108 = por %p106, %p107
    %p109 = scmp.ne.s32.totalorder %s97, %s98
    %p110 = scmp.eq.s32.totalorder %s25, 1
    %p111 = por %p109, %p110
    %p113 = scmp.ne.s32.totalorder %s98, %s112
    %p114 = scmp.eq.s32.totalorder %s25, 0
    %p115 = por %p113, %p114
    %s117 = sadd.s32 %s116, 1
    %p120 = scmp.eq.s32.totalorder %s19, 1
    %p121 = scmp.ne.s32.totalorder %s116, %s118
    %p122 = scmp.eq.s32.totalorder %s19, 0
    %p123 = por %p121, %p122
    %p124 = scmp.ne.s32.totalorder %s116, %s118
    %p125 = scmp.eq.s32.totalorder %s24, 1
    %p126 = por %p124, %p125
    %p127 = scmp.ne.s32.totalorder %s118, %s119
    %p128 = scmp.eq.s32.totalorder %s24, 0
    %p129 = por %p127, %p128
    %p130 = scmp.ne.s32.totalorder %s118, %s119
    %p131 = scmp.eq.s32.totalorder %s25, 1
    %p132 = por %p130, %p131
    %p134 = scmp.ne.s32.totalorder %s119, %s133
    %p135 = scmp.eq.s32.totalorder %s25, 0
    %p136 = por %p134, %p135
    %s138 = sadd.s32 %s137, 1
    %p141 = scmp.eq.s32.totalorder %s19, 1
    %p142 = scmp.ne.s32.totalorder %s137, %s139
    %p143 = scmp.eq.s32.totalorder %s19, 0
    %p144 = por %p142, %p143
    %p145 = scmp.ne.s32.totalorder %s137, %s139
    %p146 = scmp.eq.s32.totalorder %s24, 1
    %p147 = por %p145, %p146
    %p148 = scmp.ne.s32.totalorder %s139, %s140
    %p149 = scmp.eq.s32.totalorder %s24, 0
    %p150 = por %p148, %p149
    %p151 = scmp.ne.s32.totalorder %s139, %s140
    %p152 = scmp.eq.s32.totalorder %s25, 1
    %p153 = por %p151, %p152
    %p155 = scmp.ne.s32.totalorder %s140, %s154
    %p156 = scmp.eq.s32.totalorder %s25, 0
    %p157 = por %p155, %p156
    %s159 = sadd.s32 %s158, 1
    %p162 = scmp.eq.s32.totalorder %s19, 1
    %p163 = scmp.ne.s32.totalorder %s158, %s160
    %p164 = scmp.eq.s32.totalorder %s19, 0
    %p165 = por %p163, %p164
    %p166 = scmp.ne.s32.totalorder %s158, %s160
    %p167 = scmp.eq.s32.totalorder %s24, 1
    %p168 = por %p166, %p167
    %p169 = scmp.ne.s32.totalorder %s160, %s161
    %p170 = scmp.eq.s32.totalorder %s24, 0
    %p171 = por %p169, %p170
    %p172 = scmp.ne.s32.totalorder %s160, %s161
    %p173 = scmp.eq.s32.totalorder %s25, 1
    %p174 = por %p172, %p173
    %p176 = scmp.ne.s32.totalorder %s161, %s175
    %p177 = scmp.eq.s32.totalorder %s25, 0
    %p178 = por %p176, %p177
    %s180 = sadd.s32 %s179, 1
    %p183 = scmp.eq.s32.totalorder %s19, 1
    %p184 = scmp.ne.s32.totalorder %s179, %s181
    %p185 = scmp.eq.s32.totalorder %s19, 0
    %p186 = por %p184, %p185
    %p187 = scmp.ne.s32.totalorder %s179, %s181
    %p188 = scmp.eq.s32.totalorder %s24, 1
    %p189 = por %p187, %p188
    %p190 = scmp.ne.s32.totalorder %s181, %s182
    %p191 = scmp.eq.s32.totalorder %s24, 0
    %p192 = por %p190, %p191
    %p193 = scmp.ne.s32.totalorder %s181, %s182
    %p194 = scmp.eq.s32.totalorder %s25, 1
    %p195 = por %p193, %p194
    %p197 = scmp.ne.s32.totalorder %s182, %s196
    %p198 = scmp.eq.s32.totalorder %s25, 0
    %p199 = por %p197, %p198
    %s201 = sadd.s32 %s200, 1
    %p204 = scmp.eq.s32.totalorder %s19, 1
    %p205 = scmp.ne.s32.totalorder %s200, %s202
    %p206 = scmp.eq.s32.totalorder %s19, 0
    %p207 = por %p205, %p206
    %p208 = scmp.ne.s32.totalorder %s200, %s202
    %p209 = scmp.eq.s32.totalorder %s24, 1
    %p210 = por %p208, %p209
    %p211 = scmp.ne.s32.totalorder %s202, %s203
    %p212 = scmp.eq.s32.totalorder %s24, 0
    %p213 = por %p211, %p212
    %p214 = scmp.ne.s32.totalorder %s202, %s203
    %p215 = scmp.eq.s32.totalorder %s25, 1
    %p216 = por %p214, %p215
    %p218 = scmp.ne.s32.totalorder %s203, %s217
    %p219 = scmp.eq.s32.totalorder %s25, 0
    %p220 = por %p218, %p219
    %s222 = sadd.s32 %s221, 1
    %p225 = scmp.eq.s32.totalorder %s19, 1
    %p226 = scmp.ne.s32.totalorder %s221, %s223
    %p227 = scmp.eq.s32.totalorder %s19, 0
    %p228 = por %p226, %p227
    %p229 = scmp.ne.s32.totalorder %s221, %s223
    %p230 = scmp.eq.s32.totalorder %s24, 1
    %p231 = por %p229, %p230
    %p232 = scmp.ne.s32.totalorder %s223, %s224
    %p233 = scmp.eq.s32.totalorder %s24, 0
    %p234 = por %p232, %p233
    %p235 = scmp.ne.s32.totalorder %s223, %s224
    %p236 = scmp.eq.s32.totalorder %s25, 1
    %p237 = por %p235, %p236
    %p239 = scmp.ne.s32.totalorder %s224, %s238
    %p240 = scmp.eq.s32.totalorder %s25, 0
    %p241 = por %p239, %p240
    %s243 = sadd.s32 %s242, 1
    %p246 = scmp.eq.s32.totalorder %s19, 1
    %p247 = scmp.ne.s32.totalorder %s242, %s244
    %p248 = scmp.eq.s32.totalorder %s19, 0
    %p249 = por %p247, %p248
    %p250 = scmp.ne.s32.totalorder %s242, %s244
    %p251 = scmp.eq.s32.totalorder %s24, 1
    %p252 = por %p250, %p251
    %p253 = scmp.ne.s32.totalorder %s244, %s245
    %p254 = scmp.eq.s32.totalorder %s24, 0
    %p255 = por %p253, %p254
    %p256 = scmp.ne.s32.totalorder %s244, %s245
    %p257 = scmp.eq.s32.totalorder %s25, 1
    %p258 = por %p256, %p257
    %p260 = scmp.ne.s32.totalorder %s245, %s259
    %p261 = scmp.eq.s32.totalorder %s25, 0
    %p262 = por %p260, %p261
    %s264 = sadd.s32 %s263, 1
    %p267 = scmp.eq.s32.totalorder %s19, 1
    %p268 = scmp.ne.s32.totalorder %s263, %s265
    %p269 = scmp.eq.s32.totalorder %s19, 0
    %p270 = por %p268, %p269
    %p271 = scmp.ne.s32.totalorder %s263, %s265
    %p272 = scmp.eq.s32.totalorder %s24, 1
    %p273 = por %p271, %p272
    %p274 = scmp.ne.s32.totalorder %s265, %s266
    %p275 = scmp.eq.s32.totalorder %s24, 0
    %p276 = por %p274, %p275
    %p277 = scmp.ne.s32.totalorder %s265, %s266
    %p278 = scmp.eq.s32.totalorder %s25, 1
    %p279 = por %p277, %p278
    %p281 = scmp.ne.s32.totalorder %s266, %s280
    %p282 = scmp.eq.s32.totalorder %s25, 0
    %p283 = por %p281, %p282
    %s285 = sadd.s32 %s284, 1
    %p288 = scmp.eq.s32.totalorder %s19, 1
    %p289 = scmp.ne.s32.totalorder %s284, %s286
    %p290 = scmp.eq.s32.totalorder %s19, 0
    %p291 = por %p289, %p290
    %p292 = scmp.ne.s32.totalorder %s284, %s286
    %p293 = scmp.eq.s32.totalorder %s24, 1
    %p294 = por %p292, %p293
    %p295 = scmp.ne.s32.totalorder %s286, %s287
    %p296 = scmp.eq.s32.totalorder %s24, 0
    %p297 = por %p295, %p296
    %p298 = scmp.ne.s32.totalorder %s286, %s287
    %p299 = scmp.eq.s32.totalorder %s25, 1
    %p300 = por %p298, %p299
    %p302 = scmp.ne.s32.totalorder %s287, %s301
    %p303 = scmp.eq.s32.totalorder %s25, 0
    %p304 = por %p302, %p303
    %s305 = ssub.s32 %s19, %s26
    %p306 = scmp.eq.s32.totalorder %s305, 0
    %s308 = sadd.s32 %s307, 1
    %s309 = scalar_select %p306, %s307, %s308
    %p312 = pneg %p306
    %p313 = scmp.eq.s32.totalorder %s19, 1
    %p314 = por %p312, %p313
    %p315 = scmp.ne.s32.totalorder %s307, %s310
    %p316 = scmp.eq.s32.totalorder %s19, 0
    %p317 = por %p315, %p316
    %p318 = scmp.ne.s32.totalorder %s307, %s310
    %p319 = scmp.eq.s32.totalorder %s24, 1
    %p320 = por %p318, %p319
    %p321 = scmp.ne.s32.totalorder %s310, %s311
    %p322 = scmp.eq.s32.totalorder %s24, 0
    %p323 = por %p321, %p322
    %p324 = scmp.ne.s32.totalorder %s310, %s311
    %p325 = scmp.eq.s32.totalorder %s25, 1
    %p326 = por %p324, %p325
    %p328 = scmp.ne.s32.totalorder %s311, %s327
    %p329 = scmp.eq.s32.totalorder %s25, 0
    %p330 = por %p328, %p329
    %p331 = scmp.le.s32.totalorder 1, %s19
    %p332 = scmp.lt.s32.totalorder %s19, 3
    %p333 = pnand %p331, %p332
    %p334 = pneg %p333
    // Predicated region
    $region9: #{closed_call.8} parent=5 // pred_check
      _
    $region10: #{closed_call.8} parent=5 // pred_check_branch
      %336 = sbr.rel (%p333) target = $region12
    $region11: #{closed_call.8} parent=5 // pred_region
      %s337 = ssub.s32 %s19, 1
      // Predicated region
      $region13: #{closed_call.8} parent=11 // pred_check
        %p338 = pneg %p66
      $region14: #{closed_call.8} parent=11 // pred_check_branch
        %340 = sbr.rel (%p338) target = $region16
      $region15: #{closed_call.8} parent=11 // pred_region
        _
      $region16: #{closed_call.8} parent=11 // pred_fallthru
        _
      // Predicated region
      $region17: #{closed_call.8} parent=11 // pred_check
        %p341 = pneg %p87
      $region18: #{closed_call.8} parent=11 // pred_check_branch
        %343 = sbr.rel (%p341) target = $region20
      $region19: #{closed_call.8} parent=11 // pred_region
        _
      $region20: #{closed_call.8} parent=11 // pred_fallthru
        _
      // Predicated region
      $region21: #{closed_call.8} parent=11 // pred_check
        %p344 = pneg %p108
      $region22: #{closed_call.8} parent=11 // pred_check_branch
        %346 = sbr.rel (%p344) target = $region24
      $region23: #{closed_call.8} parent=11 // pred_region
        _
      $region24: #{closed_call.8} parent=11 // pred_fallthru
        _
      // Predicated region
      $region25: #{closed_call.8} parent=11 // pred_check
        %p347 = pneg %p129
      $region26: #{closed_call.8} parent=11 // pred_check_branch
        %349 = sbr.rel (%p347) target = $region28
      $region27: #{closed_call.8} parent=11 // pred_region
        _
      $region28: #{closed_call.8} parent=11 // pred_fallthru
        _
      // Predicated region
      $region29: #{closed_call.8} parent=11 // pred_check
        %p350 = pneg %p150
      $region30: #{closed_call.8} parent=11 // pred_check_branch
        %352 = sbr.rel (%p350) target = $region32
      $region31: #{closed_call.8} parent=11 // pred_region
        _
      $region32: #{closed_call.8} parent=11 // pred_fallthru
        _
      // Predicated region
      $region33: #{closed_call.8} parent=11 // pred_check
        %p353 = pneg %p171
      $region34: #{closed_call.8} parent=11 // pred_check_branch
        %355 = sbr.rel (%p353) target = $region36
      $region35: #{closed_call.8} parent=11 // pred_region
        _
      $region36: #{closed_call.8} parent=11 // pred_fallthru
        _
      // Predicated region
      $region37: #{closed_call.8} parent=11 // pred_check
        %p356 = pneg %p192
      $region38: #{closed_call.8} parent=11 // pred_check_branch
        %358 = sbr.rel (%p356) target = $region40
      $region39: #{closed_call.8} parent=11 // pred_region
        _
      $region40: #{closed_call.8} parent=11 // pred_fallthru
        _
      // Predicated region
      $region41: #{closed_call.8} parent=11 // pred_check
        %p359 = pneg %p213
      $region42: #{closed_call.8} parent=11 // pred_check_branch
        %361 = sbr.rel (%p359) target = $region44
      $region43: #{closed_call.8} parent=11 // pred_region
        _
      $region44: #{closed_call.8} parent=11 // pred_fallthru
        _
      // Predicated region
      $region45: #{closed_call.8} parent=11 // pred_check
        %p362 = pneg %p234
      $region46: #{closed_call.8} parent=11 // pred_check_branch
        %364 = sbr.rel (%p362) target = $region48
      $region47: #{closed_call.8} parent=11 // pred_region
        _
      $region48: #{closed_call.8} parent=11 // pred_fallthru
        _
      // Predicated region
      $region49: #{closed_call.8} parent=11 // pred_check
        %p365 = pneg %p255
      $region50: #{closed_call.8} parent=11 // pred_check_branch
        %367 = sbr.rel (%p365) target = $region52
      $region51: #{closed_call.8} parent=11 // pred_region
        _
      $region52: #{closed_call.8} parent=11 // pred_fallthru
        _
      // Predicated region
      $region53: #{closed_call.8} parent=11 // pred_check
        %p368 = pneg %p276
      $region54: #{closed_call.8} parent=11 // pred_check_branch
        %370 = sbr.rel (%p368) target = $region56
      $region55: #{closed_call.8} parent=11 // pred_region
        _
      $region56: #{closed_call.8} parent=11 // pred_fallthru
        _
      // Predicated region
      $region57: #{closed_call.8} parent=11 // pred_check
        %p371 = pneg %p297
      $region58: #{closed_call.8} parent=11 // pred_check_branch
        %373 = sbr.rel (%p371) target = $region60
      $region59: #{closed_call.8} parent=11 // pred_region
        _
      $region60: #{closed_call.8} parent=11 // pred_fallthru
        _
    $region12: #{closed_call.8} parent=5 // pred_fallthru
      _
    %p374 = scmp.lt.s32.totalorder %s19, 2
    // Predicated region
    $region61: #{closed_call.8} parent=5 // pred_check
      %p375 = pneg %p374
    $region62: #{closed_call.8} parent=5 // pred_check_branch
      %377 = sbr.rel (%p375) target = $region64
    $region63: #{closed_call.8} parent=5 // pred_region
      // Predicated region
      $region65: #{closed_call.8} parent=63 // pred_check
        %p378 = pneg %p39
      $region66: #{closed_call.8} parent=63 // pred_check_branch
        %380 = sbr.rel (%p378) target = $region68
      $region67: #{closed_call.8} parent=63 // pred_region
        %p381 = scmp.lt.s32.totalorder %s19, 1
        %s382 = scalar_select %p381, %s19, 1
        %s383 = smul.addr %s382, 8
        %s384 = scalar_lea.vmem %s0, %s383
      $region68: #{closed_call.8} parent=63 // pred_fallthru
        _
    $region64: #{closed_call.8} parent=5 // pred_fallthru
      _
    %p385 = scmp.le.s32.totalorder 1, %s19
    %p386 = scmp.lt.s32.totalorder %s19, 3
    %p387 = pnand %p385, %p386
    %p388 = pneg %p387
    // Predicated region
    $region69: #{closed_call.8} parent=5 // pred_check
      _
    $region70: #{closed_call.8} parent=5 // pred_check_branch
      %390 = sbr.rel (%p387) target = $region72
    $region71: #{closed_call.8} parent=5 // pred_region
      %s391 = ssub.s32 %s19, 1
      %p392 = scmp.lt.s32.totalorder %s24, 1
      %s393 = scalar_select %p392, %s24, 1
      %s394 = smul.addr %s393, 8
      %s395 = scalar_lea.vmem %s0, %s394
      %p396 = pneg %p45
      %p397 = pneg %p42
      %p398 = pneg %p66
      %p399 = pneg %p63
      %p400 = pneg %p87
      %p401 = pneg %p84
      %p402 = pneg %p108
      %p403 = pneg %p105
      %p404 = pneg %p129
      %p405 = pneg %p126
      %p406 = pneg %p150
      %p407 = pneg %p147
      %p408 = pneg %p171
      %p409 = pneg %p168
      %p410 = pneg %p192
      %p411 = pneg %p189
      %p412 = pneg %p213
      %p413 = pneg %p210
      %p414 = pneg %p234
      %p415 = pneg %p231
      %p416 = pneg %p255
      %p417 = pneg %p252
      %p418 = pneg %p276
      %p419 = pneg %p273
      %p420 = pneg %p297
      %p421 = pneg %p294
      %p422 = pneg %p323
      %p423 = pneg %p320
      %p424 = scmp.lt.s32.totalorder %s24, 1
      %s425 = scalar_select %p424, %s24, 1
      %s426 = smul.addr %s425, 8
      %s427 = scalar_lea.vmem %s13, %s426
      %p428 = scmp.lt.s32.totalorder %s24, 1
      %s429 = scalar_select %p428, %s24, 1
      %s430 = smul.addr %s429, 8
      %s431 = scalar_lea.vmem %s0, %s430
      %p432 = scmp.lt.s32.totalorder %s24, 1
      %s433 = scalar_select %p432, %s24, 1
      %s434 = smul.addr %s433, 8
      %s435 = scalar_lea.vmem %s13, %s434
      %v436 = vld [vmem:[%s431] sm:$0xff]
      %v437 = vld [vmem:[%s1] sm:$0xff]
      %v438 = vld [vmem:[%s1 + $0x8] sm:$0xff]
      %v439 = vld [vmem:[%s1 + $0x10] sm:$0xff]
      %v440 = vld [vmem:[%s1 + $0x18] sm:$0xff]
      %v441 = vld [vmem:[%s2] sm:$0x1]
      %v443 = vlaneseq
      %v444 = vshrl.u32 %v443, 7
      %v445 = vsub.s32 0, %v444
      %v446 = vrot.slane %v441, %v445
      %vm448 = vcmask 261120
      %v450 = vsel %vm448, %v436, 0
      %452 = vmatprep.subr.mxu0 0.0
      %453 = vmatpush1.msra.mxu0 %v437
      %454 = vmatprep.subr.mxu0 0.0
      %455 = vmatpush1.msra.mxu0 %v438
      %456 = vmatprep.subr.mxu0 0.0
      %457 = vmatpush1.msra.mxu0 %v439
      %458 = vmatprep.subr.mxu0 0.0
      %459 = vmatpush1.msra.mxu0 %v440
      %460 = vmatprep.subr.mxu0 0.0
      %461 = vmatpush1.msra.mxu0 0.0
      %462 = vmatprep.subr.mxu0 0.0
      %463 = vmatpush1.msra.mxu0 0.0
      %464 = vmatprep.subr.mxu0 0.0
      %465 = vmatpush1.msra.mxu0 0.0
      %466 = vmatprep.subr.mxu0 0.0
      %467 = vmatpush1.msra.mxu0 0.0
      %468 = vmatprep.subr.mxu0 0.0
      %469 = vmatpush1.msra.mxu0 0.0
      %470 = vmatprep.subr.mxu0 0.0
      %471 = vmatpush1.msra.mxu0 0.0
      %472 = vmatprep.subr.mxu0 0.0
      %473 = vmatpush1.msra.mxu0 0.0
      %474 = vmatprep.subr.mxu0 0.0
      %475 = vmatpush1.msra.mxu0 0.0
      %476 = vmatprep.subr.mxu0 0.0
      %477 = vmatpush1.msra.mxu0 0.0
      %478 = vmatprep.subr.mxu0 0.0
      %479 = vmatpush1.msra.mxu0 0.0
      %480 = vmatprep.subr.mxu0 0.0
      %481 = vmatpush1.msra.mxu0 0.0
      %482 = vmatprep.subr.mxu0 0.0
      %483 = vmatpush1.msra.mxu0 0.0
      %484 = vmatprep.subr.mxu0 0.0
      %485 = vmatpush1.msra.mxu0 0.0
      %486 = vmatprep.subr.mxu0 0.0
      %487 = vmatpush1.msra.mxu0 0.0
      %488 = vmatprep.subr.mxu0 0.0
      %489 = vmatpush1.msra.mxu0 0.0
      %490 = vmatprep.subr.mxu0 0.0
      %491 = vmatpush1.msra.mxu0 0.0
      %492 = vmatprep.subr.mxu0 0.0
      %493 = vmatpush1.msra.mxu0 0.0
      %494 = vmatprep.subr.mxu0 0.0
      %495 = vmatpush1.msra.mxu0 0.0
      %496 = vmatprep.subr.mxu0 0.0
      %497 = vmatpush1.msra.mxu0 0.0
      %498 = vmatprep.subr.mxu0 0.0
      %499 = vmatpush1.msra.mxu0 0.0
      %500 = vmatprep.subr.mxu0 0.0
      %501 = vmatpush1.msra.mxu0 0.0
      %502 = vmatprep.subr.mxu0 0.0
      %503 = vmatpush1.msra.mxu0 0.0
      %504 = vmatprep.subr.mxu0 0.0
      %505 = vmatpush1.msra.mxu0 0.0
      %506 = vmatprep.subr.mxu0 0.0
      %507 = vmatpush1.msra.mxu0 0.0
      %508 = vmatprep.subr.mxu0 0.0
      %509 = vmatpush1.msra.mxu0 0.0
      %510 = vmatprep.subr.mxu0 0.0
      %511 = vmatpush1.msra.mxu0 0.0
      %512 = vmatprep.subr.mxu0 0.0
      %513 = vmatpush1.msra.mxu0 0.0
      %514 = vmatprep.subr.mxu0 0.0
      %515 = vmatpush1.msra.mxu0 0.0
      %516 = vmatprep.mubr.f32.mxu0 0.0
      %517 = vmatmul.mubr.f32.gmra.mrb[0].mxu0 %v450
      %v518 = vpop.f32.mrb[0].mxu0
      %v519 = vadd.f32 %v446, %v518
      %v520 = vpop.f32.mrb[0].mxu0
      %521 = vdwg.mxu0
      %v522 = vmul.f32 %v519, 0.35355338
      %v523 = vld [vmem:[%s3] sm:$0xff]
      %v524 = vld [vmem:[%s3 + $0x8] sm:$0xff]
      %v525 = vld [vmem:[%s3 + $0x10] sm:$0xff]
      %v526 = vld [vmem:[%s3 + $0x18] sm:$0xff]
      %v527 = vld [vmem:[%s4] sm:$0x1]
      %v529 = vlaneseq
      %v530 = vshrl.u32 %v529, 7
      %v531 = vsub.s32 0, %v530
      %v532 = vrot.slane %v527, %v531
      %v534 = vadd.f32 %v532, 0.0
      %536 = vrot.lane.b32.xlu0 %v519, 96
      %v537 = vpop.permute.xlu0 %536
      %vm538 = vcmask 64512
      %v540 = vsel %vm538, %v522, 0
      %v542 = vsel %vm538, %v537, 0
      %544 = vmatprep.subr.mxu0 0.0
      %545 = vmatpush1.xpose.msra.mxu0 %v542
      %546 = vmatprep.subr.mxu0 0.0
      %547 = vmatpush1.xpose.msra.mxu0 0.0
      %548 = vmatprep.subr.mxu0 0.0
      %549 = vmatpush1.xpose.msra.mxu0 0.0
      %550 = vmatprep.subr.mxu0 0.0
      %551 = vmatpush1.xpose.msra.mxu0 0.0
      %552 = vmatprep.subr.mxu0 0.0
      %553 = vmatpush1.xpose.msra.mxu0 0.0
      %554 = vmatprep.subr.mxu0 0.0
      %555 = vmatpush1.xpose.msra.mxu0 0.0
      %556 = vmatprep.subr.mxu0 0.0
      %557 = vmatpush1.xpose.msra.mxu0 0.0
      %558 = vmatprep.subr.mxu0 0.0
      %559 = vmatpush1.xpose.msra.mxu0 0.0
      %560 = vmatprep.subr.mxu0 0.0
      %561 = vmatpush1.xpose.msra.mxu0 0.0
      %562 = vmatprep.subr.mxu0 0.0
      %563 = vmatpush1.xpose.msra.mxu0 0.0
      %564 = vmatprep.subr.mxu0 0.0
      %565 = vmatpush1.xpose.msra.mxu0 0.0
      %566 = vmatprep.subr.mxu0 0.0
      %567 = vmatpush1.xpose.msra.mxu0 0.0
      %568 = vmatprep.subr.mxu0 0.0
      %569 = vmatpush1.xpose.msra.mxu0 0.0
      %570 = vmatprep.subr.mxu0 0.0
      %571 = vmatpush1.xpose.msra.mxu0 0.0
      %572 = vmatprep.subr.mxu0 0.0
      %573 = vmatpush1.xpose.msra.mxu0 0.0
      %574 = vmatprep.subr.mxu0 0.0
      %575 = vmatpush1.xpose.msra.mxu0 0.0
      %576 = vmatprep.subr.mxu0 0.0
      %577 = vmatpush1.xpose.msra.mxu0 0.0
      %578 = vmatprep.subr.mxu0 0.0
      %579 = vmatpush1.xpose.msra.mxu0 0.0
      %580 = vmatprep.subr.mxu0 0.0
      %581 = vmatpush1.xpose.msra.mxu0 0.0
      %582 = vmatprep.subr.mxu0 0.0
      %583 = vmatpush1.xpose.msra.mxu0 0.0
      %584 = vmatprep.subr.mxu0 0.0
      %585 = vmatpush1.xpose.msra.mxu0 0.0
      %586 = vmatprep.subr.mxu0 0.0
      %587 = vmatpush1.xpose.msra.mxu0 0.0
      %588 = vmatprep.subr.mxu0 0.0
      %589 = vmatpush1.xpose.msra.mxu0 0.0
      %590 = vmatprep.subr.mxu0 0.0
      %591 = vmatpush1.xpose.msra.mxu0 0.0
      %592 = vmatprep.subr.mxu0 0.0
      %593 = vmatpush1.xpose.msra.mxu0 0.0
      %594 = vmatprep.subr.mxu0 0.0
      %595 = vmatpush1.xpose.msra.mxu0 0.0
      %596 = vmatprep.subr.mxu0 0.0
      %597 = vmatpush1.xpose.msra.mxu0 0.0
      %598 = vmatprep.subr.mxu0 0.0
      %599 = vmatpush1.xpose.msra.mxu0 0.0
      %600 = vmatprep.subr.mxu0 0.0
      %601 = vmatpush1.xpose.msra.mxu0 0.0
      %602 = vmatprep.subr.mxu0 0.0
      %603 = vmatpush1.xpose.msra.mxu0 0.0
      %604 = vmatprep.subr.mxu0 0.0
      %605 = vmatpush1.xpose.msra.mxu0 0.0
      %606 = vmatprep.subr.mxu0 0.0
      %607 = vmatpush1.xpose.msra.mxu0 0.0
      %608 = vmatprep.mubr.f32.mxu0 0.0
      %609 = vmatmul.mubr.f32.gmra.mrb[0].mxu0 %v540
      %v610 = vpop.f32.mrb[0].mxu0
      %v611 = vadd.f32 0.0, %v610
      %v612 = vpop.f32.mrb[0].mxu0
      %613 = vdwg.mxu0
      %v614 = vsel %vm538, %v611, -inf
      %615 = vmax.xlane.f32.xlu0 %v614
      %v616 = vpop.xlane.xlu0 %615
      %v617 = vsub.f32 %v611, %v616
      %v618 = vmul.f32 %v617, 1.442695
      %v619 = vpow.pop %v618
      %v620 = vsel %vm538, %v619, 0.0
      %621 = vadd.xlane.f32.xlu0 %v620
      %v622 = vpop.xlane.xlu0 %621
      %v623 = vrcp.pop %v622
      %v624 = vmul.f32 %v619, %v623
      %625 = vrot.lane.b32.xlu0 %v519, 64
      %v626 = vpop.permute.xlu0 %625
      %v629 = vsel %vm538, %v624, 0
      %631 = vmatprep.subr.mxu0 0.0
      %632 = vmatpush1.msra.mxu0 %v626
      %633 = vmatprep.subr.mxu0 0.0
      %634 = vmatpush1.msra.mxu0 0.0
      %635 = vmatprep.subr.mxu0 0.0
      %636 = vmatpush1.msra.mxu0 0.0
      %637 = vmatprep.subr.mxu0 0.0
      %638 = vmatpush1.msra.mxu0 0.0
      %639 = vmatprep.subr.mxu0 0.0
      %640 = vmatpush1.msra.mxu0 0.0
      %641 = vmatprep.subr.mxu0 0.0
      %642 = vmatpush1.msra.mxu0 0.0
      %643 = vmatprep.subr.mxu0 0.0
      %644 = vmatpush1.msra.mxu0 0.0
      %645 = vmatprep.subr.mxu0 0.0
      %646 = vmatpush1.msra.mxu0 0.0
      %647 = vmatprep.subr.mxu0 0.0
      %648 = vmatpush1.msra.mxu0 0.0
      %649 = vmatprep.subr.mxu0 0.0
      %650 = vmatpush1.msra.mxu0 0.0
      %651 = vmatprep.subr.mxu0 0.0
      %652 = vmatpush1.msra.mxu0 0.0
      %653 = vmatprep.subr.mxu0 0.0
      %654 = vmatpush1.msra.mxu0 0.0
      %655 = vmatprep.subr.mxu0 0.0
      %656 = vmatpush1.msra.mxu0 0.0
      %657 = vmatprep.subr.mxu0 0.0
      %658 = vmatpush1.msra.mxu0 0.0
      %659 = vmatprep.subr.mxu0 0.0
      %660 = vmatpush1.msra.mxu0 0.0
      %661 = vmatprep.subr.mxu0 0.0
      %662 = vmatpush1.msra.mxu0 0.0
      %663 = vmatprep.subr.mxu0 0.0
      %664 = vmatpush1.msra.mxu0 0.0
      %665 = vmatprep.subr.mxu0 0.0
      %666 = vmatpush1.msra.mxu0 0.0
      %667 = vmatprep.subr.mxu0 0.0
      %668 = vmatpush1.msra.mxu0 0.0
      %669 = vmatprep.subr.mxu0 0.0
      %670 = vmatpush1.msra.mxu0 0.0
      %671 = vmatprep.subr.mxu0 0.0
      %672 = vmatpush1.msra.mxu0 0.0
      %673 = vmatprep.subr.mxu0 0.0
      %674 = vmatpush1.msra.mxu0 0.0
      %675 = vmatprep.subr.mxu0 0.0
      %676 = vmatpush1.msra.mxu0 0.0
      %677 = vmatprep.subr.mxu0 0.0
      %678 = vmatpush1.msra.mxu0 0.0
      %679 = vmatprep.subr.mxu0 0.0
      %680 = vmatpush1.msra.mxu0 0.0
      %681 = vmatprep.subr.mxu0 0.0
      %682 = vmatpush1.msra.mxu0 0.0
      %683 = vmatprep.subr.mxu0 0.0
      %684 = vmatpush1.msra.mxu0 0.0
      %685 = vmatprep.subr.mxu0 0.0
      %686 = vmatpush1.msra.mxu0 0.0
      %687 = vmatprep.subr.mxu0 0.0
      %688 = vmatpush1.msra.mxu0 0.0
      %689 = vmatprep.subr.mxu0 0.0
      %690 = vmatpush1.msra.mxu0 0.0
      %691 = vmatprep.subr.mxu0 0.0
      %692 = vmatpush1.msra.mxu0 0.0
      %693 = vmatprep.subr.mxu0 0.0
      %694 = vmatpush1.msra.mxu0 0.0
      %695 = vmatprep.mubr.f32.mxu0 0.0
      %696 = vmatmul.mubr.f32.gmra.mrb[0].mxu0 %v629
      %v697 = vpop.f32.mrb[0].mxu0
      %v698 = vadd.f32 0.0, %v697
      %v699 = vpop.f32.mrb[0].mxu0
      %700 = vdwg.mxu0
      %v702 = vsel %vm538, %v698, 0
      %704 = vmatprep.subr.mxu0 0.0
      %705 = vmatpush1.msra.mxu0 %v523
      %706 = vmatprep.subr.mxu0 0.0
      %707 = vmatpush1.msra.mxu0 0.0
      %708 = vmatprep.subr.mxu0 0.0
      %709 = vmatpush1.msra.mxu0 0.0
      %710 = vmatprep.subr.mxu0 0.0
      %711 = vmatpush1.msra.mxu0 0.0
      %712 = vmatprep.subr.mxu0 0.0
      %713 = vmatpush1.msra.mxu0 0.0
      %714 = vmatprep.subr.mxu0 0.0
      %715 = vmatpush1.msra.mxu0 0.0
      %716 = vmatprep.subr.mxu0 0.0
      %717 = vmatpush1.msra.mxu0 0.0
      %718 = vmatprep.subr.mxu0 0.0
      %719 = vmatpush1.msra.mxu0 0.0
      %720 = vmatprep.subr.mxu0 0.0
      %721 = vmatpush1.msra.mxu0 0.0
      %722 = vmatprep.subr.mxu0 0.0
      %723 = vmatpush1.msra.mxu0 0.0
      %724 = vmatprep.subr.mxu0 0.0
      %725 = vmatpush1.msra.mxu0 0.0
      %726 = vmatprep.subr.mxu0 0.0
      %727 = vmatpush1.msra.mxu0 0.0
      %728 = vmatprep.subr.mxu0 0.0
      %729 = vmatpush1.msra.mxu0 0.0
      %730 = vmatprep.subr.mxu0 0.0
      %731 = vmatpush1.msra.mxu0 0.0
      %732 = vmatprep.subr.mxu0 0.0
      %733 = vmatpush1.msra.mxu0 0.0
      %734 = vmatprep.subr.mxu0 0.0
      %735 = vmatpush1.msra.mxu0 0.0
      %736 = vmatprep.subr.mxu0 0.0
      %737 = vmatpush1.msra.mxu0 0.0
      %738 = vmatprep.subr.mxu0 0.0
      %739 = vmatpush1.msra.mxu0 0.0
      %740 = vmatprep.subr.mxu0 0.0
      %741 = vmatpush1.msra.mxu0 0.0
      %742 = vmatprep.subr.mxu0 0.0
      %743 = vmatpush1.msra.mxu0 0.0
      %744 = vmatprep.subr.mxu0 0.0
      %745 = vmatpush1.msra.mxu0 0.0
      %746 = vmatprep.subr.mxu0 0.0
      %747 = vmatpush1.msra.mxu0 0.0
      %748 = vmatprep.subr.mxu0 0.0
      %749 = vmatpush1.msra.mxu0 0.0
      %750 = vmatprep.subr.mxu0 0.0
      %751 = vmatpush1.msra.mxu0 0.0
      %752 = vmatprep.subr.mxu0 0.0
      %753 = vmatpush1.msra.mxu0 0.0
      %754 = vmatprep.subr.mxu0 0.0
      %755 = vmatpush1.msra.mxu0 0.0
      %756 = vmatprep.subr.mxu0 0.0
      %757 = vmatpush1.msra.mxu0 0.0
      %758 = vmatprep.subr.mxu0 0.0
      %759 = vmatpush1.msra.mxu0 0.0
      %760 = vmatprep.subr.mxu0 0.0
      %761 = vmatpush1.msra.mxu0 0.0
      %762 = vmatprep.subr.mxu0 0.0
      %763 = vmatpush1.msra.mxu0 0.0
      %764 = vmatprep.subr.mxu0 0.0
      %765 = vmatpush1.msra.mxu0 0.0
      %766 = vmatprep.subr.mxu0 0.0
      %767 = vmatpush1.msra.mxu0 0.0
      %768 = vmatprep.mubr.f32.mxu0 0.0
      %769 = vmatmul.mubr.f32.gmra.mrb[0].mxu0 %v702
      %v770 = vpop.f32.mrb[0].mxu0
      %v771 = vadd.f32 0.0, %v770
      %v772 = vpop.f32.mrb[0].mxu0
      %773 = vdwg.mxu0
      %v774 = vadd.f32 %v534, %v771
      %775 = vrot.lane.b32.xlu0 %v522, 120
      %v776 = vpop.permute.xlu0 %775
      %777 = vrot.lane.b32.xlu0 %v519, 88
      %v778 = vpop.permute.xlu0 %777
      %v779 = vsel %vm538, %v776, 0
      %v781 = vsel %vm538, %v778, 0
      %783 = vmatprep.subr.mxu0 0.0
      %784 = vmatpush1.xpose.msra.mxu0 %v781
      %785 = vmatprep.subr.mxu0 0.0
      %786 = vmatpush1.xpose.msra.mxu0 0.0
      %787 = vmatprep.subr.mxu0 0.0
      %788 = vmatpush1.xpose.msra.mxu0 0.0
      %789 = vmatprep.subr.mxu0 0.0
      %790 = vmatpush1.xpose.msra.mxu0 0.0
      %791 = vmatprep.subr.mxu0 0.0
      %792 = vmatpush1.xpose.msra.mxu0 0.0
      %793 = vmatprep.subr.mxu0 0.0
      %794 = vmatpush1.xpose.msra.mxu0 0.0
      %795 = vmatprep.subr.mxu0 0.0
      %796 = vmatpush1.xpose.msra.mxu0 0.0
      %797 = vmatprep.subr.mxu0 0.0
      %798 = vmatpush1.xpose.msra.mxu0 0.0
      %799 = vmatprep.subr.mxu0 0.0
      %800 = vmatpush1.xpose.msra.mxu0 0.0
      %801 = vmatprep.subr.mxu0 0.0
      %802 = vmatpush1.xpose.msra.mxu0 0.0
      %803 = vmatprep.subr.mxu0 0.0
      %804 = vmatpush1.xpose.msra.mxu0 0.0
      %805 = vmatprep.subr.mxu0 0.0
      %806 = vmatpush1.xpose.msra.mxu0 0.0
      %807 = vmatprep.subr.mxu0 0.0
      %808 = vmatpush1.xpose.msra.mxu0 0.0
      %809 = vmatprep.subr.mxu0 0.0
      %810 = vmatpush1.xpose.msra.mxu0 0.0
      %811 = vmatprep.subr.mxu0 0.0
      %812 = vmatpush1.xpose.msra.mxu0 0.0
      %813 = vmatprep.subr.mxu0 0.0
      %814 = vmatpush1.xpose.msra.mxu0 0.0
      %815 = vmatprep.subr.mxu0 0.0
      %816 = vmatpush1.xpose.msra.mxu0 0.0
      %817 = vmatprep.subr.mxu0 0.0
      %818 = vmatpush1.xpose.msra.mxu0 0.0
      %819 = vmatprep.subr.mxu0 0.0
      %820 = vmatpush1.xpose.msra.mxu0 0.0
      %821 = vmatprep.subr.mxu0 0.0
      %822 = vmatpush1.xpose.msra.mxu0 0.0
      %823 = vmatprep.subr.mxu0 0.0
      %824 = vmatpush1.xpose.msra.mxu0 0.0
      %825 = vmatprep.subr.mxu0 0.0
      %826 = vmatpush1.xpose.msra.mxu0 0.0
      %827 = vmatprep.subr.mxu0 0.0
      %828 = vmatpush1.xpose.msra.mxu0 0.0
      %829 = vmatprep.subr.mxu0 0.0
      %830 = vmatpush1.xpose.msra.mxu0 0.0
      %831 = vmatprep.subr.mxu0 0.0
      %832 = vmatpush1.xpose.msra.mxu0 0.0
      %833 = vmatprep.subr.mxu0 0.0
      %834 = vmatpush1.xpose.msra.mxu0 0.0
      %835 = vmatprep.subr.mxu0 0.0
      %836 = vmatpush1.xpose.msra.mxu0 0.0
      %837 = vmatprep.subr.mxu0 0.0
      %838 = vmatpush1.xpose.msra.mxu0 0.0
      %839 = vmatprep.subr.mxu0 0.0
      %840 = vmatpush1.xpose.msra.mxu0 0.0
      %841 = vmatprep.subr.mxu0 0.0
      %842 = vmatpush1.xpose.msra.mxu0 0.0
      %843 = vmatprep.subr.mxu0 0.0
      %844 = vmatpush1.xpose.msra.mxu0 0.0
      %845 = vmatprep.subr.mxu0 0.0
      %846 = vmatpush1.xpose.msra.mxu0 0.0
      %847 = vmatprep.mubr.f32.mxu0 0.0
      %848 = vmatmul.mubr.f32.gmra.mrb[0].mxu0 %v779
      %v849 = vpop.f32.mrb[0].mxu0
      %v850 = vadd.f32 0.0, %v849
      %v851 = vpop.f32.mrb[0].mxu0
      %852 = vdwg.mxu0
      %v853 = vsel %vm538, %v850, -inf
      %854 = vmax.xlane.f32.xlu0 %v853
      %v855 = vpop.xlane.xlu0 %854
      %v856 = vsub.f32 %v850, %v855
      %v857 = vmul.f32 %v856, 1.442695
      %v858 = vpow.pop %v857
      %v859 = vsel %vm538, %v858, 0.0
      %860 = vadd.xlane.f32.xlu0 %v859
      %v861 = vpop.xlane.xlu0 %860
      %v862 = vrcp.pop %v861
      %v863 = vmul.f32 %v858, %v862
      %864 = vrot.lane.b32.xlu0 %v519, 56
      %v865 = vpop.permute.xlu0 %864
      %v868 = vsel %vm538, %v863, 0
      %870 = vmatprep.subr.mxu0 0.0
      %871 = vmatpush1.msra.mxu0 %v865
      %872 = vmatprep.subr.mxu0 0.0
      %873 = vmatpush1.msra.mxu0 0.0
      %874 = vmatprep.subr.mxu0 0.0
      %875 = vmatpush1.msra.mxu0 0.0
      %876 = vmatprep.subr.mxu0 0.0
      %877 = vmatpush1.msra.mxu0 0.0
      %878 = vmatprep.subr.mxu0 0.0
      %879 = vmatpush1.msra.mxu0 0.0
      %880 = vmatprep.subr.mxu0 0.0
      %881 = vmatpush1.msra.mxu0 0.0
      %882 = vmatprep.subr.mxu0 0.0
      %883 = vmatpush1.msra.mxu0 0.0
      %884 = vmatprep.subr.mxu0 0.0
      %885 = vmatpush1.msra.mxu0 0.0
      %886 = vmatprep.subr.mxu0 0.0
      %887 = vmatpush1.msra.mxu0 0.0
      %888 = vmatprep.subr.mxu0 0.0
      %889 = vmatpush1.msra.mxu0 0.0
      %890 = vmatprep.subr.mxu0 0.0
      %891 = vmatpush1.msra.mxu0 0.0
      %892 = vmatprep.subr.mxu0 0.0
      %893 = vmatpush1.msra.mxu0 0.0
      %894 = vmatprep.subr.mxu0 0.0
      %895 = vmatpush1.msra.mxu0 0.0
      %896 = vmatprep.subr.mxu0 0.0
      %897 = vmatpush1.msra.mxu0 0.0
      %898 = vmatprep.subr.mxu0 0.0
      %899 = vmatpush1.msra.mxu0 0.0
      %900 = vmatprep.subr.mxu0 0.0
      %901 = vmatpush1.msra.mxu0 0.0
      %902 = vmatprep.subr.mxu0 0.0
      %903 = vmatpush1.msra.mxu0 0.0
      %904 = vmatprep.subr.mxu0 0.0
      %905 = vmatpush1.msra.mxu0 0.0
      %906 = vmatprep.subr.mxu0 0.0
      %907 = vmatpush1.msra.mxu0 0.0
      %908 = vmatprep.subr.mxu0 0.0
      %909 = vmatpush1.msra.mxu0 0.0
      %910 = vmatprep.subr.mxu0 0.0
      %911 = vmatpush1.msra.mxu0 0.0
      %912 = vmatprep.subr.mxu0 0.0
      %913 = vmatpush1.msra.mxu0 0.0
      %914 = vmatprep.subr.mxu0 0.0
      %915 = vmatpush1.msra.mxu0 0.0
      %916 = vmatprep.subr.mxu0 0.0
      %917 = vmatpush1.msra.mxu0 0.0
      %918 = vmatprep.subr.mxu0 0.0
      %919 = vmatpush1.msra.mxu0 0.0
      %920 = vmatprep.subr.mxu0 0.0
      %921 = vmatpush1.msra.mxu0 0.0
      %922 = vmatprep.subr.mxu0 0.0
      %923 = vmatpush1.msra.mxu0 0.0
      %924 = vmatprep.subr.mxu0 0.0
      %925 = vmatpush1.msra.mxu0 0.0
      %926 = vmatprep.subr.mxu0 0.0
      %927 = vmatpush1.msra.mxu0 0.0
      %928 = vmatprep.subr.mxu0 0.0
      %929 = vmatpush1.msra.mxu0 0.0
      %930 = vmatprep.subr.mxu0 0.0
      %931 = vmatpush1.msra.mxu0 0.0
      %932 = vmatprep.subr.mxu0 0.0
      %933 = vmatpush1.msra.mxu0 0.0
      %934 = vmatprep.mubr.f32.mxu0 0.0
      %935 = vmatmul.mubr.f32.gmra.mrb[0].mxu0 %v868
      %v936 = vpop.f32.mrb[0].mxu0
      %v937 = vadd.f32 0.0, %v936
      %v938 = vpop.f32.mrb[0].mxu0
      %939 = vdwg.mxu0
      %v941 = vsel %vm538, %v937, 0
      %943 = vmatprep.subr.mxu0 0.0
      %944 = vmatpush1.msra.mxu0 %v524
      %945 = vmatprep.subr.mxu0 0.0
      %946 = vmatpush1.msra.mxu0 0.0
      %947 = vmatprep.subr.mxu0 0.0
      %948 = vmatpush1.msra.mxu0 0.0
      %949 = vmatprep.subr.mxu0 0.0
      %950 = vmatpush1.msra.mxu0 0.0
      %951 = vmatprep.subr.mxu0 0.0
      %952 = vmatpush1.msra.mxu0 0.0
      %953 = vmatprep.subr.mxu0 0.0
      %954 = vmatpush1.msra.mxu0 0.0
      %955 = vmatprep.subr.mxu0 0.0
      %956 = vmatpush1.msra.mxu0 0.0
      %957 = vmatprep.subr.mxu0 0.0
      %958 = vmatpush1.msra.mxu0 0.0
      %959 = vmatprep.subr.mxu0 0.0
      %960 = vmatpush1.msra.mxu0 0.0
      %961 = vmatprep.subr.mxu0 0.0
      %962 = vmatpush1.msra.mxu0 0.0
      %963 = vmatprep.subr.mxu0 0.0
      %964 = vmatpush1.msra.mxu0 0.0
      %965 = vmatprep.subr.mxu0 0.0
      %966 = vmatpush1.msra.mxu0 0.0
      %967 = vmatprep.subr.mxu0 0.0
      %968 = vmatpush1.msra.mxu0 0.0
      %969 = vmatprep.subr.mxu0 0.0
      %970 = vmatpush1.msra.mxu0 0.0
      %971 = vmatprep.subr.mxu0 0.0
      %972 = vmatpush1.msra.mxu0 0.0
      %973 = vmatprep.subr.mxu0 0.0
      %974 = vmatpush1.msra.mxu0 0.0
      %975 = vmatprep.subr.mxu0 0.0
      %976 = vmatpush1.msra.mxu0 0.0
      %977 = vmatprep.subr.mxu0 0.0
      %978 = vmatpush1.msra.mxu0 0.0
      %979 = vmatprep.subr.mxu0 0.0
      %980 = vmatpush1.msra.mxu0 0.0
      %981 = vmatprep.subr.mxu0 0.0
      %982 = vmatpush1.msra.mxu0 0.0
      %983 = vmatprep.subr.mxu0 0.0
      %984 = vmatpush1.msra.mxu0 0.0
      %985 = vmatprep.subr.mxu0 0.0
      %986 = vmatpush1.msra.mxu0 0.0
      %987 = vmatprep.subr.mxu0 0.0
      %988 = vmatpush1.msra.mxu0 0.0
      %989 = vmatprep.subr.mxu0 0.0
      %990 = vmatpush1.msra.mxu0 0.0
      %991 = vmatprep.subr.mxu0 0.0
      %992 = vmatpush1.msra.mxu0 0.0
      %993 = vmatprep.subr.mxu0 0.0
      %994 = vmatpush1.msra.mxu0 0.0
      %995 = vmatprep.subr.mxu0 0.0
      %996 = vmatpush1.msra.mxu0 0.0
      %997 = vmatprep.subr.mxu0 0.0
      %998 = vmatpush1.msra.mxu0 0.0
      %999 = vmatprep.subr.mxu0 0.0
      %1000 = vmatpush1.msra.mxu0 0.0
      %1001 = vmatprep.subr.mxu0 0.0
      %1002 = vmatpush1.msra.mxu0 0.0
      %1003 = vmatprep.subr.mxu0 0.0
      %1004 = vmatpush1.msra.mxu0 0.0
      %1005 = vmatprep.subr.mxu0 0.0
      %1006 = vmatpush1.msra.mxu0 0.0
      %1007 = vmatprep.mubr.f32.mxu0 0.0
      %1008 = vmatmul.mubr.f32.gmra.mrb[0].mxu0 %v941
      %v1009 = vpop.f32.mrb[0].mxu0
      %v1010 = vadd.f32 0.0, %v1009
      %v1011 = vpop.f32.mrb[0].mxu0
      %1012 = vdwg.mxu0
      %v1013 = vadd.f32 %v774, %v1010
      %1014 = vrot.lane.b32.xlu0 %v522, 112
      %v1015 = vpop.permute.xlu0 %1014
      %1016 = vrot.lane.b32.xlu0 %v519, 80
      %v1017 = vpop.permute.xlu0 %1016
      %v1018 = vsel %vm538, %v1015, 0
      %v1020 = vsel %vm538, %v1017, 0
      %1022 = vmatprep.subr.mxu0 0.0
      %1023 = vmatpush1.xpose.msra.mxu0 %v1020
      %1024 = vmatprep.subr.mxu0 0.0
      %1025 = vmatpush1.xpose.msra.mxu0 0.0
      %1026 = vmatprep.subr.mxu0 0.0
      %1027 = vmatpush1.xpose.msra.mxu0 0.0
      %1028 = vmatprep.subr.mxu0 0.0
      %1029 = vmatpush1.xpose.msra.mxu0 0.0
      %1030 = vmatprep.subr.mxu0 0.0
      %1031 = vmatpush1.xpose.msra.mxu0 0.0
      %1032 = vmatprep.subr.mxu0 0.0
      %1033 = vmatpush1.xpose.msra.mxu0 0.0
      %1034 = vmatprep.subr.mxu0 0.0
      %1035 = vmatpush1.xpose.msra.mxu0 0.0
      %1036 = vmatprep.subr.mxu0 0.0
      %1037 = vmatpush1.xpose.msra.mxu0 0.0
      %1038 = vmatprep.subr.mxu0 0.0
      %1039 = vmatpush1.xpose.msra.mxu0 0.0
      %1040 = vmatprep.subr.mxu0 0.0
      %1041 = vmatpush1.xpose.msra.mxu0 0.0
      %1042 = vmatprep.subr.mxu0 0.0
      %1043 = vmatpush1.xpose.msra.mxu0 0.0
      %1044 = vmatprep.subr.mxu0 0.0
      %1045 = vmatpush1.xpose.msra.mxu0 0.0
      %1046 = vmatprep.subr.mxu0 0.0
      %1047 = vmatpush1.xpose.msra.mxu0 0.0
      %1048 = vmatprep.subr.mxu0 0.0
      %1049 = vmatpush1.xpose.msra.mxu0 0.0
      %1050 = vmatprep.subr.mxu0 0.0
      %1051 = vmatpush1.xpose.msra.mxu0 0.0
      %1052 = vmatprep.subr.mxu0 0.0
      %1053 = vmatpush1.xpose.msra.mxu0 0.0
      %1054 = vmatprep.subr.mxu0 0.0
      %1055 = vmatpush1.xpose.msra.mxu0 0.0
      %1056 = vmatprep.subr.mxu0 0.0
      %1057 = vmatpush1.xpose.msra.mxu0 0.0
      %1058 = vmatprep.subr.mxu0 0.0
      %1059 = vmatpush1.xpose.msra.mxu0 0.0
      %1060 = vmatprep.subr.mxu0 0.0
      %1061 = vmatpush1.xpose.msra.mxu0 0.0
      %1062 = vmatprep.subr.mxu0 0.0
      %1063 = vmatpush1.xpose.msra.mxu0 0.0
      %1064 = vmatprep.subr.mxu0 0.0
      %1065 = vmatpush1.xpose.msra.mxu0 0.0
      %1066 = vmatprep.subr.mxu0 0.0
      %1067 = vmatpush1.xpose.msra.mxu0 0.0
      %1068 = vmatprep.subr.mxu0 0.0
      %1069 = vmatpush1.xpose.msra.mxu0 0.0
      %1070 = vmatprep.subr.mxu0 0.0
      %1071 = vmatpush1.xpose.msra.mxu0 0.0
      %1072 = vmatprep.subr.mxu0 0.0
      %1073 = vmatpush1.xpose.msra.mxu0 0.0
      %1074 = vmatprep.subr.mxu0 0.0
      %1075 = vmatpush1.xpose.msra.mxu0 0.0
      %1076 = vmatprep.subr.mxu0 0.0
      %1077 = vmatpush1.xpose.msra.mxu0 0.0
      %1078 = vmatprep.subr.mxu0 0.0
      %1079 = vmatpush1.xpose.msra.mxu0 0.0
      %1080 = vmatprep.subr.mxu0 0.0
      %1081 = vmatpush1.xpose.msra.mxu0 0.0
      %1082 = vmatprep.subr.mxu0 0.0
      %1083 = vmatpush1.xpose.msra.mxu0 0.0
      %1084 = vmatprep.subr.mxu0 0.0
      %1085 = vmatpush1.xpose.msra.mxu0 0.0
      %1086 = vmatprep.mubr.f32.mxu0 0.0
      %1087 = vmatmul.mubr.f32.gmra.mrb[0].mxu0 %v1018
      %v1088 = vpop.f32.mrb[0].mxu0
      %v1089 = vadd.f32 0.0, %v1088
      %v1090 = vpop.f32.mrb[0].mxu0
      %1091 = vdwg.mxu0
      %v1092 = vsel %vm538, %v1089, -inf
      %1093 = vmax.xlane.f32.xlu0 %v1092
      %v1094 = vpop.xlane.xlu0 %1093
      %v1095 = vsub.f32 %v1089, %v1094
      %v1096 = vmul.f32 %v1095, 1.442695
      %v1097 = vpow.pop %v1096
      %v1098 = vsel %vm538, %v1097, 0.0
      %1099 = vadd.xlane.f32.xlu0 %v1098
      %v1100 = vpop.xlane.xlu0 %1099
      %v1101 = vrcp.pop %v1100
      %v1102 = vmul.f32 %v1097, %v1101
      %1103 = vrot.lane.b32.xlu0 %v519, 48
      %v1104 = vpop.permute.xlu0 %1103
      %v1107 = vsel %vm538, %v1102, 0
      %1109 = vmatprep.subr.mxu0 0.0
      %1110 = vmatpush1.msra.mxu0 %v1104
      %1111 = vmatprep.subr.mxu0 0.0
      %1112 = vmatpush1.msra.mxu0 0.0
      %1113 = vmatprep.subr.mxu0 0.0
      %1114 = vmatpush1.msra.mxu0 0.0
      %1115 = vmatprep.subr.mxu0 0.0
      %1116 = vmatpush1.msra.mxu0 0.0
      %1117 = vmatprep.subr.mxu0 0.0
      %1118 = vmatpush1.msra.mxu0 0.0
      %1119 = vmatprep.subr.mxu0 0.0
      %1120 = vmatpush1.msra.mxu0 0.0
      %1121 = vmatprep.subr.mxu0 0.0
      %1122 = vmatpush1.msra.mxu0 0.0
      %1123 = vmatprep.subr.mxu0 0.0
      %1124 = vmatpush1.msra.mxu0 0.0
      %1125 = vmatprep.subr.mxu0 0.0
      %1126 = vmatpush1.msra.mxu0 0.0
      %1127 = vmatprep.subr.mxu0 0.0
      %1128 = vmatpush1.msra.mxu0 0.0
      %1129 = vmatprep.subr.mxu0 0.0
      %1130 = vmatpush1.msra.mxu0 0.0
      %1131 = vmatprep.subr.mxu0 0.0
      %1132 = vmatpush1.msra.mxu0 0.0
      %1133 = vmatprep.subr.mxu0 0.0
      %1134 = vmatpush1.msra.mxu0 0.0
      %1135 = vmatprep.subr.mxu0 0.0
      %1136 = vmatpush1.msra.mxu0 0.0
      %1137 = vmatprep.subr.mxu0 0.0
      %1138 = vmatpush1.msra.mxu0 0.0
      %1139 = vmatprep.subr.mxu0 0.0
      %1140 = vmatpush1.msra.mxu0 0.0
      %1141 = vmatprep.subr.mxu0 0.0
      %1142 = vmatpush1.msra.mxu0 0.0
      %1143 = vmatprep.subr.mxu0 0.0
      %1144 = vmatpush1.msra.mxu0 0.0
      %1145 = vmatprep.subr.mxu0 0.0
      %1146 = vmatpush1.msra.mxu0 0.0
      %1147 = vmatprep.subr.mxu0 0.0
      %1148 = vmatpush1.msra.mxu0 0.0
      %1149 = vmatprep.subr.mxu0 0.0
      %1150 = vmatpush1.msra.mxu0 0.0
      %1151 = vmatprep.subr.mxu0 0.0
      %1152 = vmatpush1.msra.mxu0 0.0
      %1153 = vmatprep.subr.mxu0 0.0
      %1154 = vmatpush1.msra.mxu0 0.0
      %1155 = vmatprep.subr.mxu0 0.0
      %1156 = vmatpush1.msra.mxu0 0.0
      %1157 = vmatprep.subr.mxu0 0.0
      %1158 = vmatpush1.msra.mxu0 0.0
      %1159 = vmatprep.subr.mxu0 0.0
      %1160 = vmatpush1.msra.mxu0 0.0
      %1161 = vmatprep.subr.mxu0 0.0
      %1162 = vmatpush1.msra.mxu0 0.0
      %1163 = vmatprep.subr.mxu0 0.0
      %1164 = vmatpush1.msra.mxu0 0.0
      %1165 = vmatprep.subr.mxu0 0.0
      %1166 = vmatpush1.msra.mxu0 0.0
      %1167 = vmatprep.subr.mxu0 0.0
      %1168 = vmatpush1.msra.mxu0 0.0
      %1169 = vmatprep.subr.mxu0 0.0
      %1170 = vmatpush1.msra.mxu0 0.0
      %1171 = vmatprep.subr.mxu0 0.0
      %1172 = vmatpush1.msra.mxu0 0.0
      %1173 = vmatprep.mubr.f32.mxu0 0.0
      %1174 = vmatmul.mubr.f32.gmra.mrb[0].mxu0 %v1107
      %v1175 = vpop.f32.mrb[0].mxu0
      %v1176 = vadd.f32 0.0, %v1175
      %v1177 = vpop.f32.mrb[0].mxu0
      %1178 = vdwg.mxu0
      %v1180 = vsel %vm538, %v1176, 0
      %1182 = vmatprep.subr.mxu0 0.0
      %1183 = vmatpush1.msra.mxu0 %v525
      %1184 = vmatprep.subr.mxu0 0.0
      %1185 = vmatpush1.msra.mxu0 0.0
      %1186 = vmatprep.subr.mxu0 0.0
      %1187 = vmatpush1.msra.mxu0 0.0
      %1188 = vmatprep.subr.mxu0 0.0
      %1189 = vmatpush1.msra.mxu0 0.0
      %1190 = vmatprep.subr.mxu0 0.0
      %1191 = vmatpush1.msra.mxu0 0.0
      %1192 = vmatprep.subr.mxu0 0.0
      %1193 = vmatpush1.msra.mxu0 0.0
      %1194 = vmatprep.subr.mxu0 0.0
      %1195 = vmatpush1.msra.mxu0 0.0
      %1196 = vmatprep.subr.mxu0 0.0
      %1197 = vmatpush1.msra.mxu0 0.0
      %1198 = vmatprep.subr.mxu0 0.0
      %1199 = vmatpush1.msra.mxu0 0.0
      %1200 = vmatprep.subr.mxu0 0.0
      %1201 = vmatpush1.msra.mxu0 0.0
      %1202 = vmatprep.subr.mxu0 0.0
      %1203 = vmatpush1.msra.mxu0 0.0
      %1204 = vmatprep.subr.mxu0 0.0
      %1205 = vmatpush1.msra.mxu0 0.0
      %1206 = vmatprep.subr.mxu0 0.0
      %1207 = vmatpush1.msra.mxu0 0.0
      %1208 = vmatprep.subr.mxu0 0.0
      %1209 = vmatpush1.msra.mxu0 0.0
      %1210 = vmatprep.subr.mxu0 0.0
      %1211 = vmatpush1.msra.mxu0 0.0
      %1212 = vmatprep.subr.mxu0 0.0
      %1213 = vmatpush1.msra.mxu0 0.0
      %1214 = vmatprep.subr.mxu0 0.0
      %1215 = vmatpush1.msra.mxu0 0.0
      %1216 = vmatprep.subr.mxu0 0.0
      %1217 = vmatpush1.msra.mxu0 0.0
      %1218 = vmatprep.subr.mxu0 0.0
      %1219 = vmatpush1.msra.mxu0 0.0
      %1220 = vmatprep.subr.mxu0 0.0
      %1221 = vmatpush1.msra.mxu0 0.0
      %1222 = vmatprep.subr.mxu0 0.0
      %1223 = vmatpush1.msra.mxu0 0.0
      %1224 = vmatprep.subr.mxu0 0.0
      %1225 = vmatpush1.msra.mxu0 0.0
      %1226 = vmatprep.subr.mxu0 0.0
      %1227 = vmatpush1.msra.mxu0 0.0
      %1228 = vmatprep.subr.mxu0 0.0
      %1229 = vmatpush1.msra.mxu0 0.0
      %1230 = vmatprep.subr.mxu0 0.0
      %1231 = vmatpush1.msra.mxu0 0.0
      %1232 = vmatprep.subr.mxu0 0.0
      %1233 = vmatpush1.msra.mxu0 0.0
      %1234 = vmatprep.subr.mxu0 0.0
      %1235 = vmatpush1.msra.mxu0 0.0
      %1236 = vmatprep.subr.mxu0 0.0
      %1237 = vmatpush1.msra.mxu0 0.0
      %1238 = vmatprep.subr.mxu0 0.0
      %1239 = vmatpush1.msra.mxu0 0.0
      %1240 = vmatprep.subr.mxu0 0.0
      %1241 = vmatpush1.msra.mxu0 0.0
      %1242 = vmatprep.subr.mxu0 0.0
      %1243 = vmatpush1.msra.mxu0 0.0
      %1244 = vmatprep.subr.mxu0 0.0
      %1245 = vmatpush1.msra.mxu0 0.0
      %1246 = vmatprep.mubr.f32.mxu0 0.0
      %1247 = vmatmul.mubr.f32.gmra.mrb[0].mxu0 %v1180
      %v1248 = vpop.f32.mrb[0].mxu0
      %v1249 = vadd.f32 0.0, %v1248
      %v1250 = vpop.f32.mrb[0].mxu0
      %1251 = vdwg.mxu0
      %v1252 = vadd.f32 %v1013, %v1249
      %1253 = vrot.lane.b32.xlu0 %v522, 104
      %v1254 = vpop.permute.xlu0 %1253
      %1255 = vrot.lane.b32.xlu0 %v519, 72
      %v1256 = vpop.permute.xlu0 %1255
      %v1257 = vsel %vm538, %v1254, 0
      %v1259 = vsel %vm538, %v1256, 0
      %1261 = vmatprep.subr.mxu0 0.0
      %1262 = vmatpush1.xpose.msra.mxu0 %v1259
      %1263 = vmatprep.subr.mxu0 0.0
      %1264 = vmatpush1.xpose.msra.mxu0 0.0
      %1265 = vmatprep.subr.mxu0 0.0
      %1266 = vmatpush1.xpose.msra.mxu0 0.0
      %1267 = vmatprep.subr.mxu0 0.0
      %1268 = vmatpush1.xpose.msra.mxu0 0.0
      %1269 = vmatprep.subr.mxu0 0.0
      %1270 = vmatpush1.xpose.msra.mxu0 0.0
      %1271 = vmatprep.subr.mxu0 0.0
      %1272 = vmatpush1.xpose.msra.mxu0 0.0
      %1273 = vmatprep.subr.mxu0 0.0
      %1274 = vmatpush1.xpose.msra.mxu0 0.0
      %1275 = vmatprep.subr.mxu0 0.0
      %1276 = vmatpush1.xpose.msra.mxu0 0.0
      %1277 = vmatprep.subr.mxu0 0.0
      %1278 = vmatpush1.xpose.msra.mxu0 0.0
      %1279 = vmatprep.subr.mxu0 0.0
      %1280 = vmatpush1.xpose.msra.mxu0 0.0
      %1281 = vmatprep.subr.mxu0 0.0
      %1282 = vmatpush1.xpose.msra.mxu0 0.0
      %1283 = vmatprep.subr.mxu0 0.0
      %1284 = vmatpush1.xpose.msra.mxu0 0.0
      %1285 = vmatprep.subr.mxu0 0.0
      %1286 = vmatpush1.xpose.msra.mxu0 0.0
      %1287 = vmatprep.subr.mxu0 0.0
      %1288 = vmatpush1.xpose.msra.mxu0 0.0
      %1289 = vmatprep.subr.mxu0 0.0
      %1290 = vmatpush1.xpose.msra.mxu0 0.0
      %1291 = vmatprep.subr.mxu0 0.0
      %1292 = vmatpush1.xpose.msra.mxu0 0.0
      %1293 = vmatprep.subr.mxu0 0.0
      %1294 = vmatpush1.xpose.msra.mxu0 0.0
      %1295 = vmatprep.subr.mxu0 0.0
      %1296 = vmatpush1.xpose.msra.mxu0 0.0
      %1297 = vmatprep.subr.mxu0 0.0
      %1298 = vmatpush1.xpose.msra.mxu0 0.0
      %1299 = vmatprep.subr.mxu0 0.0
      %1300 = vmatpush1.xpose.msra.mxu0 0.0
      %1301 = vmatprep.subr.mxu0 0.0
      %1302 = vmatpush1.xpose.msra.mxu0 0.0
      %1303 = vmatprep.subr.mxu0 0.0
      %1304 = vmatpush1.xpose.msra.mxu0 0.0
      %1305 = vmatprep.subr.mxu0 0.0
      %1306 = vmatpush1.xpose.msra.mxu0 0.0
      %1307 = vmatprep.subr.mxu0 0.0
      %1308 = vmatpush1.xpose.msra.mxu0 0.0
      %1309 = vmatprep.subr.mxu0 0.0
      %1310 = vmatpush1.xpose.msra.mxu0 0.0
      %1311 = vmatprep.subr.mxu0 0.0
      %1312 = vmatpush1.xpose.msra.mxu0 0.0
      %1313 = vmatprep.subr.mxu0 0.0
      %1314 = vmatpush1.xpose.msra.mxu0 0.0
      %1315 = vmatprep.subr.mxu0 0.0
      %1316 = vmatpush1.xpose.msra.mxu0 0.0
      %1317 = vmatprep.subr.mxu0 0.0
      %1318 = vmatpush1.xpose.msra.mxu0 0.0
      %1319 = vmatprep.subr.mxu0 0.0
      %1320 = vmatpush1.xpose.msra.mxu0 0.0
      %1321 = vmatprep.subr.mxu0 0.0
      %1322 = vmatpush1.xpose.msra.mxu0 0.0
      %1323 = vmatprep.subr.mxu0 0.0
      %1324 = vmatpush1.xpose.msra.mxu0 0.0
      %1325 = vmatprep.mubr.f32.mxu0 0.0
      %1326 = vmatmul.mubr.f32.gmra.mrb[0].mxu0 %v1257
      %v1327 = vpop.f32.mrb[0].mxu0
      %v1328 = vadd.f32 0.0, %v1327
      %v1329 = vpop.f32.mrb[0].mxu0
      %1330 = vdwg.mxu0
      %v1331 = vsel %vm538, %v1328, -inf
      %1332 = vmax.xlane.f32.xlu0 %v1331
      %v1333 = vpop.xlane.xlu0 %1332
      %v1334 = vsub.f32 %v1328, %v1333
      %v1335 = vmul.f32 %v1334, 1.442695
      %v1336 = vpow.pop %v1335
      %v1337 = vsel %vm538, %v1336, 0.0
      %1338 = vadd.xlane.f32.xlu0 %v1337
      %v1339 = vpop.xlane.xlu0 %1338
      %v1340 = vrcp.pop %v1339
      %v1341 = vmul.f32 %v1336, %v1340
      %1342 = vrot.lane.b32.xlu0 %v519, 40
      %v1343 = vpop.permute.xlu0 %1342
      %v1346 = vsel %vm538, %v1341, 0
      %1348 = vmatprep.subr.mxu0 0.0
      %1349 = vmatpush1.msra.mxu0 %v1343
      %1350 = vmatprep.subr.mxu0 0.0
      %1351 = vmatpush1.msra.mxu0 0.0
      %1352 = vmatprep.subr.mxu0 0.0
      %1353 = vmatpush1.msra.mxu0 0.0
      %1354 = vmatprep.subr.mxu0 0.0
      %1355 = vmatpush1.msra.mxu0 0.0
      %1356 = vmatprep.subr.mxu0 0.0
      %1357 = vmatpush1.msra.mxu0 0.0
      %1358 = vmatprep.subr.mxu0 0.0
      %1359 = vmatpush1.msra.mxu0 0.0
      %1360 = vmatprep.subr.mxu0 0.0
      %1361 = vmatpush1.msra.mxu0 0.0
      %1362 = vmatprep.subr.mxu0 0.0
      %1363 = vmatpush1.msra.mxu0 0.0
      %1364 = vmatprep.subr.mxu0 0.0
      %1365 = vmatpush1.msra.mxu0 0.0
      %1366 = vmatprep.subr.mxu0 0.0
      %1367 = vmatpush1.msra.mxu0 0.0
      %1368 = vmatprep.subr.mxu0 0.0
      %1369 = vmatpush1.msra.mxu0 0.0
      %1370 = vmatprep.subr.mxu0 0.0
      %1371 = vmatpush1.msra.mxu0 0.0
      %1372 = vmatprep.subr.mxu0 0.0
      %1373 = vmatpush1.msra.mxu0 0.0
      %1374 = vmatprep.subr.mxu0 0.0
      %1375 = vmatpush1.msra.mxu0 0.0
      %1376 = vmatprep.subr.mxu0 0.0
      %1377 = vmatpush1.msra.mxu0 0.0
      %1378 = vmatprep.subr.mxu0 0.0
      %1379 = vmatpush1.msra.mxu0 0.0
      %1380 = vmatprep.subr.mxu0 0.0
      %1381 = vmatpush1.msra.mxu0 0.0
      %1382 = vmatprep.subr.mxu0 0.0
      %1383 = vmatpush1.msra.mxu0 0.0
      %1384 = vmatprep.subr.mxu0 0.0
      %1385 = vmatpush1.msra.mxu0 0.0
      %1386 = vmatprep.subr.mxu0 0.0
      %1387 = vmatpush1.msra.mxu0 0.0
      %1388 = vmatprep.subr.mxu0 0.0
      %1389 = vmatpush1.msra.mxu0 0.0
      %1390 = vmatprep.subr.mxu0 0.0
      %1391 = vmatpush1.msra.mxu0 0.0
      %1392 = vmatprep.subr.mxu0 0.0
      %1393 = vmatpush1.msra.mxu0 0.0
      %1394 = vmatprep.subr.mxu0 0.0
      %1395 = vmatpush1.msra.mxu0 0.0
      %1396 = vmatprep.subr.mxu0 0.0
      %1397 = vmatpush1.msra.mxu0 0.0
      %1398 = vmatprep.subr.mxu0 0.0
      %1399 = vmatpush1.msra.mxu0 0.0
      %1400 = vmatprep.subr.mxu0 0.0
      %1401 = vmatpush1.msra.mxu0 0.0
      %1402 = vmatprep.subr.mxu0 0.0
      %1403 = vmatpush1.msra.mxu0 0.0
      %1404 = vmatprep.subr.mxu0 0.0
      %1405 = vmatpush1.msra.mxu0 0.0
      %1406 = vmatprep.subr.mxu0 0.0
      %1407 = vmatpush1.msra.mxu0 0.0
      %1408 = vmatprep.subr.mxu0 0.0
      %1409 = vmatpush1.msra.mxu0 0.0
      %1410 = vmatprep.subr.mxu0 0.0
      %1411 = vmatpush1.msra.mxu0 0.0
      %1412 = vmatprep.mubr.f32.mxu0 0.0
      %1413 = vmatmul.mubr.f32.gmra.mrb[0].mxu0 %v1346
      %v1414 = vpop.f32.mrb[0].mxu0
      %v1415 = vadd.f32 0.0, %v1414
      %v1416 = vpop.f32.mrb[0].mxu0
      %1417 = vdwg.mxu0
      %v1419 = vsel %vm538, %v1415, 0
      %1421 = vmatprep.subr.mxu0 0.0
      %1422 = vmatpush1.msra.mxu0 %v526
      %1423 = vmatprep.subr.mxu0 0.0
      %1424 = vmatpush1.msra.mxu0 0.0
      %1425 = vmatprep.subr.mxu0 0.0
      %1426 = vmatpush1.msra.mxu0 0.0
      %1427 = vmatprep.subr.mxu0 0.0
      %1428 = vmatpush1.msra.mxu0 0.0
      %1429 = vmatprep.subr.mxu0 0.0
      %1430 = vmatpush1.msra.mxu0 0.0
      %1431 = vmatprep.subr.mxu0 0.0
      %1432 = vmatpush1.msra.mxu0 0.0
      %1433 = vmatprep.subr.mxu0 0.0
      %1434 = vmatpush1.msra.mxu0 0.0
      %1435 = vmatprep.subr.mxu0 0.0
      %1436 = vmatpush1.msra.mxu0 0.0
      %1437 = vmatprep.subr.mxu0 0.0
      %1438 = vmatpush1.msra.mxu0 0.0
      %1439 = vmatprep.subr.mxu0 0.0
      %1440 = vmatpush1.msra.mxu0 0.0
      %1441 = vmatprep.subr.mxu0 0.0
      %1442 = vmatpush1.msra.mxu0 0.0
      %1443 = vmatprep.subr.mxu0 0.0
      %1444 = vmatpush1.msra.mxu0 0.0
      %1445 = vmatprep.subr.mxu0 0.0
      %1446 = vmatpush1.msra.mxu0 0.0
      %1447 = vmatprep.subr.mxu0 0.0
      %1448 = vmatpush1.msra.mxu0 0.0
      %1449 = vmatprep.subr.mxu0 0.0
      %1450 = vmatpush1.msra.mxu0 0.0
      %1451 = vmatprep.subr.mxu0 0.0
      %1452 = vmatpush1.msra.mxu0 0.0
      %1453 = vmatprep.subr.mxu0 0.0
      %1454 = vmatpush1.msra.mxu0 0.0
      %1455 = vmatprep.subr.mxu0 0.0
      %1456 = vmatpush1.msra.mxu0 0.0
      %1457 = vmatprep.subr.mxu0 0.0
      %1458 = vmatpush1.msra.mxu0 0.0
      %1459 = vmatprep.subr.mxu0 0.0
      %1460 = vmatpush1.msra.mxu0 0.0
      %1461 = vmatprep.subr.mxu0 0.0
      %1462 = vmatpush1.msra.mxu0 0.0
      %1463 = vmatprep.subr.mxu0 0.0
      %1464 = vmatpush1.msra.mxu0 0.0
      %1465 = vmatprep.subr.mxu0 0.0
      %1466 = vmatpush1.msra.mxu0 0.0
      %1467 = vmatprep.subr.mxu0 0.0
      %1468 = vmatpush1.msra.mxu0 0.0
      %1469 = vmatprep.subr.mxu0 0.0
      %1470 = vmatpush1.msra.mxu0 0.0
      %1471 = vmatprep.subr.mxu0 0.0
      %1472 = vmatpush1.msra.mxu0 0.0
      %1473 = vmatprep.subr.mxu0 0.0
      %1474 = vmatpush1.msra.mxu0 0.0
      %1475 = vmatprep.subr.mxu0 0.0
      %1476 = vmatpush1.msra.mxu0 0.0
      %1477 = vmatprep.subr.mxu0 0.0
      %1478 = vmatpush1.msra.mxu0 0.0
      %1479 = vmatprep.subr.mxu0 0.0
      %1480 = vmatpush1.msra.mxu0 0.0
      %1481 = vmatprep.subr.mxu0 0.0
      %1482 = vmatpush1.msra.mxu0 0.0
      %1483 = vmatprep.subr.mxu0 0.0
      %1484 = vmatpush1.msra.mxu0 0.0
      %1485 = vmatprep.mubr.f32.mxu0 0.0
      %1486 = vmatmul.mubr.f32.gmra.mrb[0].mxu0 %v1419
      %v1487 = vpop.f32.mrb[0].mxu0
      %v1488 = vadd.f32 0.0, %v1487
      %v1489 = vpop.f32.mrb[0].mxu0
      %1490 = vdwg.mxu0
      %v1491 = vadd.f32 %v1252, %v1488
      %v1492 = vadd.f32 %v436, %v1491
      %v1493 = vld [vmem:[%s5] sm:$0x1]
      %v1494 = vld [vmem:[%s6] sm:$0x1]
      %v1495 = vsel %vm448, %v1492, 0.0
      %1496 = vadd.xlane.f32.xlu0 %v1495
      %v1497 = vpop.xlane.xlu0 %1496
      %v1498 = vrcp.pop 32.0
      %v1499 = vmul.f32 %v1497, %v1498
      %v1500 = vsub.f32 %v1492, %v1499
      %v1501 = vmul.f32 %v1500, %v1500
      %v1502 = vsel %vm448, %v1501, 0.0
      %1503 = vadd.xlane.f32.xlu0 %v1502
      %v1504 = vpop.xlane.xlu0 %1503
      %v1505 = vmul.f32 %v1504, %v1498
      %v1506 = vadd.f32 %v1505, 1e-05
      %v1507 = vrsqrt.pop %v1506
      %v1508 = vmul.f32 %v1500, %v1507
      %v1510 = vlaneseq
      %v1511 = vshrl.u32 %v1510, 7
      %v1512 = vsub.s32 0, %v1511
      %v1513 = vrot.slane %v1493, %v1512
      %v1515 = vmul.f32 %v1508, %v1513
      %v1517 = vlaneseq
      %v1518 = vshrl.u32 %v1517, 7
      %v1519 = vsub.s32 0, %v1518
      %v1520 = vrot.slane %v1494, %v1519
      %v1522 = vadd.f32 %v1515, %v1520
      %v1523 = vld [vmem:[%s7] sm:$0xff]
      %v1524 = vld [vmem:[%s7 + $0x8] sm:$0xff]
      %v1525 = vld [vmem:[%s7 + $0x10] sm:$0xff]
      %v1526 = vld [vmem:[%s7 + $0x18] sm:$0xff]
      %v1527 = vld [vmem:[%s7 + $0x20] sm:$0xff]
      %v1528 = vld [vmem:[%s7 + $0x28] sm:$0xff]
      %v1529 = vld [vmem:[%s7 + $0x30] sm:$0xff]
      %v1530 = vld [vmem:[%s7 + $0x38] sm:$0xff]
      %v1531 = vld [vmem:[%s7 + $0x40] sm:$0xff]
      %v1532 = vld [vmem:[%s7 + $0x48] sm:$0xff]
      %v1533 = vld [vmem:[%s7 + $0x50] sm:$0xff]
      %v1534 = vld [vmem:[%s7 + $0x58] sm:$0xff]
      %v1535 = vld [vmem:[%s7 + $0x60] sm:$0xff]
      %v1536 = vld [vmem:[%s7 + $0x68] sm:$0xff]
      %v1537 = vld [vmem:[%s7 + $0x70] sm:$0xff]
      %v1538 = vld [vmem:[%s7 + $0x78] sm:$0xff]
      %v1539 = vld [vmem:[%s7 + $0x80] sm:$0xff]
      %v1540 = vld [vmem:[%s7 + $0x88] sm:$0xff]
      %v1541 = vld [vmem:[%s7 + $0x90] sm:$0xff]
      %v1542 = vld [vmem:[%s7 + $0x98] sm:$0xff]
      %v1543 = vld [vmem:[%s7 + $0xa0] sm:$0xff]
      %v1544 = vld [vmem:[%s7 + $0xa8] sm:$0xff]
      %v1545 = vld [vmem:[%s7 + $0xb0] sm:$0xff]
      %v1546 = vld [vmem:[%s7 + $0xb8] sm:$0xff]
      %v1547 = vld [vmem:[%s7 + $0xc0] sm:$0xff]
      %v1548 = vld [vmem:[%s7 + $0xc8] sm:$0xff]
      %v1549 = vld [vmem:[%s7 + $0xd0] sm:$0xff]
      %v1550 = vld [vmem:[%s7 + $0xd8] sm:$0xff]
      %v1551 = vld [vmem:[%s7 + $0xe0] sm:$0xff]
      %v1552 = vld [vmem:[%s7 + $0xe8] sm:$0xff]
      %v1553 = vld [vmem:[%s7 + $0xf0] sm:$0xff]
      %v1554 = vld [vmem:[%s7 + $0xf8] sm:$0xff]
      %v1555 = vld [vmem:[%s7 + $0x100] sm:$0xff]
      %v1556 = vld [vmem:[%s7 + $0x108] sm:$0xff]
      %v1557 = vld [vmem:[%s7 + $0x110] sm:$0xff]
      %v1558 = vld [vmem:[%s7 + $0x118] sm:$0xff]
      %v1559 = vld [vmem:[%s7 + $0x120] sm:$0xff]
      %v1560 = vld [vmem:[%s7 + $0x128] sm:$0xff]
      %v1561 = vld [vmem:[%s7 + $0x130] sm:$0xff]
      %v1562 = vld [vmem:[%s7 + $0x138] sm:$0xff]
      %v1563 = vld [vmem:[%s7 + $0x140] sm:$0xff]
      %v1564 = vld [vmem:[%s7 + $0x148] sm:$0xff]
      %v1565 = vld [vmem:[%s7 + $0x150] sm:$0xff]
      %v1566 = vld [vmem:[%s7 + $0x158] sm:$0xff]
      %v1567 = vld [vmem:[%s7 + $0x160] sm:$0xff]
      %v1568 = vld [vmem:[%s7 + $0x168] sm:$0xff]
      %v1569 = vld [vmem:[%s7 + $0x170] sm:$0xff]
      %v1570 = vld [vmem:[%s7 + $0x178] sm:$0xff]
      %v1571 = vld [vmem:[%s7 + $0x180] sm:$0xff]
      %v1572 = vld [vmem:[%s7 + $0x188] sm:$0xff]
      %v1573 = vld [vmem:[%s7 + $0x190] sm:$0xff]
      %v1574 = vld [vmem:[%s7 + $0x198] sm:$0xff]
      %v1575 = vld [vmem:[%s7 + $0x1a0] sm:$0xff]
      %v1576 = vld [vmem:[%s7 + $0x1a8] sm:$0xff]
      %v1577 = vld [vmem:[%s7 + $0x1b0] sm:$0xff]
      %v1578 = vld [vmem:[%s7 + $0x1b8] sm:$0xff]
      %v1579 = vld [vmem:[%s7 + $0x1c0] sm:$0xff]
      %v1580 = vld [vmem:[%s7 + $0x1c8] sm:$0xff]
      %v1581 = vld [vmem:[%s7 + $0x1d0] sm:$0xff]
      %v1582 = vld [vmem:[%s7 + $0x1d8] sm:$0xff]
      %v1583 = vld [vmem:[%s7 + $0x1e0] sm:$0xff]
      %v1584 = vld [vmem:[%s7 + $0x1e8] sm:$0xff]
      %v1585 = vld [vmem:[%s7 + $0x1f0] sm:$0xff]
      %v1586 = vld [vmem:[%s7 + $0x1f8] sm:$0xff]
      %v1587 = vld [vmem:[%s8] sm:$0xff]
      %v1588 = vld [vmem:[%s8 + $0x8] sm:$0xff]
      %v1591 = vlaneseq
      %v1592 = vshrl.u32 %v1591, 7
      %v1593 = vsub.s32 0, %v1592
      %v1594 = vrot.slane %v1587, %v1593
      %v1595 = vlaneseq
      %v1596 = vshrl.u32 %v1595, 7
      %v1597 = vsub.s32 1, %v1596
      %v1598 = vrot.slane %v1587, %v1597
      %v1599 = vlaneseq
      %v1600 = vshrl.u32 %v1599, 7
      %v1601 = vsub.s32 2, %v1600
      %v1602 = vrot.slane %v1587, %v1601
      %v1603 = vlaneseq
      %v1604 = vshrl.u32 %v1603, 7
      %v1605 = vsub.s32 3, %v1604
      %v1606 = vrot.slane %v1587, %v1605
      %v1607 = vlaneseq
      %v1608 = vshrl.u32 %v1607, 7
      %v1609 = vsub.s32 4, %v1608
      %v1610 = vrot.slane %v1587, %v1609
      %v1611 = vlaneseq
      %v1612 = vshrl.u32 %v1611, 7
      %v1613 = vsub.s32 5, %v1612
      %v1614 = vrot.slane %v1587, %v1613
      %v1615 = vlaneseq
      %v1616 = vshrl.u32 %v1615, 7
      %v1617 = vsub.s32 6, %v1616
      %v1618 = vrot.slane %v1587, %v1617
      %v1619 = vlaneseq
      %v1620 = vshrl.u32 %v1619, 7
      %v1621 = vsub.s32 7, %v1620
      %v1622 = vrot.slane %v1587, %v1621
      %v1623 = vlaneseq
      %v1624 = vshrl.u32 %v1623, 7
      %v1625 = vsub.s32 0, %v1624
      %v1626 = vrot.slane %v1588, %v1625
      %v1627 = vlaneseq
      %v1628 = vshrl.u32 %v1627, 7
      %v1629 = vsub.s32 1, %v1628
      %v1630 = vrot.slane %v1588, %v1629
      %v1631 = vlaneseq
      %v1632 = vshrl.u32 %v1631, 7
      %v1633 = vsub.s32 2, %v1632
      %v1634 = vrot.slane %v1588, %v1633
      %v1635 = vlaneseq
      %v1636 = vshrl.u32 %v1635, 7
      %v1637 = vsub.s32 3, %v1636
      %v1638 = vrot.slane %v1588, %v1637
      %v1639 = vlaneseq
      %v1640 = vshrl.u32 %v1639, 7
      %v1641 = vsub.s32 4, %v1640
      %v1642 = vrot.slane %v1588, %v1641
      %v1643 = vlaneseq
      %v1644 = vshrl.u32 %v1643, 7
      %v1645 = vsub.s32 5, %v1644
      %v1646 = vrot.slane %v1588, %v1645
      %v1647 = vlaneseq
      %v1648 = vshrl.u32 %v1647, 7
      %v1649 = vsub.s32 6, %v1648
      %v1650 = vrot.slane %v1588, %v1649
      %v1651 = vlaneseq
      %v1652 = vshrl.u32 %v1651, 7
      %v1653 = vsub.s32 7, %v1652
      %v1654 = vrot.slane %v1588, %v1653
      %v1672 = vsel %vm448, %v1522, 0
      %1674 = vmatprep.subr.mxu0 %v1524
      %1675 = vmatpush1.msra.mxu0 %v1523
      %1676 = vmatprep.subr.mxu0 %v1540
      %1677 = vmatpush1.msra.mxu0 %v1539
      %1678 = vmatprep.subr.mxu0 %v1556
      %1679 = vmatpush1.msra.mxu0 %v1555
      %1680 = vmatprep.subr.mxu0 %v1572
      %1681 = vmatpush1.msra.mxu0 %v1571
      %1682 = vmatprep.subr.mxu0 0.0
      %1683 = vmatpush1.msra.mxu0 0.0
      %1684 = vmatprep.subr.mxu0 0.0
      %1685 = vmatpush1.msra.mxu0 0.0
      %1686 = vmatprep.subr.mxu0 0.0
      %1687 = vmatpush1.msra.mxu0 0.0
      %1688 = vmatprep.subr.mxu0 0.0
      %1689 = vmatpush1.msra.mxu0 0.0
      %1690 = vmatprep.subr.mxu0 0.0
      %1691 = vmatpush1.msra.mxu0 0.0
      %1692 = vmatprep.subr.mxu0 0.0
      %1693 = vmatpush1.msra.mxu0 0.0
      %1694 = vmatprep.subr.mxu0 0.0
      %1695 = vmatpush1.msra.mxu0 0.0
      %1696 = vmatprep.subr.mxu0 0.0
      %1697 = vmatpush1.msra.mxu0 0.0
      %1698 = vmatprep.subr.mxu0 0.0
      %1699 = vmatpush1.msra.mxu0 0.0
      %1700 = vmatprep.subr.mxu0 0.0
      %1701 = vmatpush1.msra.mxu0 0.0
      %1702 = vmatprep.subr.mxu0 0.0
      %1703 = vmatpush1.msra.mxu0 0.0
      %1704 = vmatprep.subr.mxu0 0.0
      %1705 = vmatpush1.msra.mxu0 0.0
      %1706 = vmatprep.subr.mxu0 0.0
      %1707 = vmatpush1.msra.mxu0 0.0
      %1708 = vmatprep.subr.mxu0 0.0
      %1709 = vmatpush1.msra.mxu0 0.0
      %1710 = vmatprep.subr.mxu0 0.0
      %1711 = vmatpush1.msra.mxu0 0.0
      %1712 = vmatprep.subr.mxu0 0.0
      %1713 = vmatpush1.msra.mxu0 0.0
      %1714 = vmatprep.subr.mxu0 0.0
      %1715 = vmatpush1.msra.mxu0 0.0
      %1716 = vmatprep.subr.mxu0 0.0
      %1717 = vmatpush1.msra.mxu0 0.0
      %1718 = vmatprep.subr.mxu0 0.0
      %1719 = vmatpush1.msra.mxu0 0.0
      %1720 = vmatprep.subr.mxu0 0.0
      %1721 = vmatpush1.msra.mxu0 0.0
      %1722 = vmatprep.subr.mxu0 0.0
      %1723 = vmatpush1.msra.mxu0 0.0
      %1724 = vmatprep.subr.mxu0 0.0
      %1725 = vmatpush1.msra.mxu0 0.0
      %1726 = vmatprep.subr.mxu0 0.0
      %1727 = vmatpush1.msra.mxu0 0.0
      %1728 = vmatprep.subr.mxu0 0.0
      %1729 = vmatpush1.msra.mxu0 0.0
      %1730 = vmatprep.subr.mxu0 0.0
      %1731 = vmatpush1.msra.mxu0 0.0
      %1732 = vmatprep.subr.mxu0 0.0
      %1733 = vmatpush1.msra.mxu0 0.0
      %1734 = vmatprep.subr.mxu0 0.0
      %1735 = vmatpush1.msra.mxu0 0.0
      %1736 = vmatprep.subr.mxu0 0.0
      %1737 = vmatpush1.msra.mxu0 0.0
      %1738 = vmatprep.mubr.f32.mxu0 0.0
      %1739 = vmatmul.mubr.f32.gmra.mrb[0].mxu0 %v1672
      %v1740 = vpop.f32.mrb[0].mxu0
      %v1741 = vadd.f32 %v1594, %v1740
      %v1742 = vpop.f32.mrb[0].mxu0
      %v1743 = vadd.f32 %v1598, %v1742
      %1744 = vdwg.mxu0
      %1745 = vmatprep.subr.mxu0 %v1526
      %1746 = vmatpush1.msra.mxu0 %v1525
      %1747 = vmatprep.subr.mxu0 %v1542
      %1748 = vmatpush1.msra.mxu0 %v1541
      %1749 = vmatprep.subr.mxu0 %v1558
      %1750 = vmatpush1.msra.mxu0 %v1557
      %1751 = vmatprep.subr.mxu0 %v1574
      %1752 = vmatpush1.msra.mxu0 %v1573
      %1753 = vmatprep.subr.mxu0 0.0
      %1754 = vmatpush1.msra.mxu0 0.0
      %1755 = vmatprep.subr.mxu0 0.0
      %1756 = vmatpush1.msra.mxu0 0.0
      %1757 = vmatprep.subr.mxu0 0.0
      %1758 = vmatpush1.msra.mxu0 0.0
      %1759 = vmatprep.subr.mxu0 0.0
      %1760 = vmatpush1.msra.mxu0 0.0
      %1761 = vmatprep.subr.mxu0 0.0
      %1762 = vmatpush1.msra.mxu0 0.0
      %1763 = vmatprep.subr.mxu0 0.0
      %1764 = vmatpush1.msra.mxu0 0.0
      %1765 = vmatprep.subr.mxu0 0.0
      %1766 = vmatpush1.msra.mxu0 0.0
      %1767 = vmatprep.subr.mxu0 0.0
      %1768 = vmatpush1.msra.mxu0 0.0
      %1769 = vmatprep.subr.mxu0 0.0
      %1770 = vmatpush1.msra.mxu0 0.0
      %1771 = vmatprep.subr.mxu0 0.0
      %1772 = vmatpush1.msra.mxu0 0.0
      %1773 = vmatprep.subr.mxu0 0.0
      %1774 = vmatpush1.msra.mxu0 0.0
      %1775 = vmatprep.subr.mxu0 0.0
      %1776 = vmatpush1.msra.mxu0 0.0
      %1777 = vmatprep.subr.mxu0 0.0
      %1778 = vmatpush1.msra.mxu0 0.0
      %1779 = vmatprep.subr.mxu0 0.0
      %1780 = vmatpush1.msra.mxu0 0.0
      %1781 = vmatprep.subr.mxu0 0.0
      %1782 = vmatpush1.msra.mxu0 0.0
      %1783 = vmatprep.subr.mxu0 0.0
      %1784 = vmatpush1.msra.mxu0 0.0
      %1785 = vmatprep.subr.mxu0 0.0
      %1786 = vmatpush1.msra.mxu0 0.0
      %1787 = vmatprep.subr.mxu0 0.0
      %1788 = vmatpush1.msra.mxu0 0.0
      %1789 = vmatprep.subr.mxu0 0.0
      %1790 = vmatpush1.msra.mxu0 0.0
      %1791 = vmatprep.subr.mxu0 0.0
      %1792 = vmatpush1.msra.mxu0 0.0
      %1793 = vmatprep.subr.mxu0 0.0
      %1794 = vmatpush1.msra.mxu0 0.0
      %1795 = vmatprep.subr.mxu0 0.0
      %1796 = vmatpush1.msra.mxu0 0.0
      %1797 = vmatprep.subr.mxu0 0.0
      %1798 = vmatpush1.msra.mxu0 0.0
      %1799 = vmatprep.subr.mxu0 0.0
      %1800 = vmatpush1.msra.mxu0 0.0
      %1801 = vmatprep.subr.mxu0 0.0
      %1802 = vmatpush1.msra.mxu0 0.0
      %1803 = vmatprep.subr.mxu0 0.0
      %1804 = vmatpush1.msra.mxu0 0.0
      %1805 = vmatprep.subr.mxu0 0.0
      %1806 = vmatpush1.msra.mxu0 0.0
      %1807 = vmatprep.subr.mxu0 0.0
      %1808 = vmatpush1.msra.mxu0 0.0
      %1809 = vmatprep.mubr.f32.mxu0 0.0
      %1810 = vmatmul.mubr.f32.gmra.mrb[0].mxu0 %v1672
      %v1811 = vpop.f32.mrb[0].mxu0
      %v1812 = vadd.f32 %v1602, %v1811
      %v1813 = vpop.f32.mrb[0].mxu0
      %v1814 = vadd.f32 %v1606, %v1813
      %1815 = vdwg.mxu0
      %1816 = vmatprep.subr.mxu0 %v1528
      %1817 = vmatpush1.msra.mxu0 %v1527
      %1818 = vmatprep.subr.mxu0 %v1544
      %1819 = vmatpush1.msra.mxu0 %v1543
      %1820 = vmatprep.subr.mxu0 %v1560
      %1821 = vmatpush1.msra.mxu0 %v1559
      %1822 = vmatprep.subr.mxu0 %v1576
      %1823 = vmatpush1.msra.mxu0 %v1575
      %1824 = vmatprep.subr.mxu0 0.0
      %1825 = vmatpush1.msra.mxu0 0.0
      %1826 = vmatprep.subr.mxu0 0.0
      %1827 = vmatpush1.msra.mxu0 0.0
      %1828 = vmatprep.subr.mxu0 0.0
      %1829 = vmatpush1.msra.mxu0 0.0
      %1830 = vmatprep.subr.mxu0 0.0
      %1831 = vmatpush1.msra.mxu0 0.0
      %1832 = vmatprep.subr.mxu0 0.0
      %1833 = vmatpush1.msra.mxu0 0.0
      %1834 = vmatprep.subr.mxu0 0.0
      %1835 = vmatpush1.msra.mxu0 0.0
      %1836 = vmatprep.subr.mxu0 0.0
      %1837 = vmatpush1.msra.mxu0 0.0
      %1838 = vmatprep.subr.mxu0 0.0
      %1839 = vmatpush1.msra.mxu0 0.0
      %1840 = vmatprep.subr.mxu0 0.0
      %1841 = vmatpush1.msra.mxu0 0.0
      %1842 = vmatprep.subr.mxu0 0.0
      %1843 = vmatpush1.msra.mxu0 0.0
      %1844 = vmatprep.subr.mxu0 0.0
      %1845 = vmatpush1.msra.mxu0 0.0
      %1846 = vmatprep.subr.mxu0 0.0
      %1847 = vmatpush1.msra.mxu0 0.0
      %1848 = vmatprep.subr.mxu0 0.0
      %1849 = vmatpush1.msra.mxu0 0.0
      %1850 = vmatprep.subr.mxu0 0.0
      %1851 = vmatpush1.msra.mxu0 0.0
      %1852 = vmatprep.subr.mxu0 0.0
      %1853 = vmatpush1.msra.mxu0 0.0
      %1854 = vmatprep.subr.mxu0 0.0
      %1855 = vmatpush1.msra.mxu0 0.0
      %1856 = vmatprep.subr.mxu0 0.0
      %1857 = vmatpush1.msra.mxu0 0.0
      %1858 = vmatprep.subr.mxu0 0.0
      %1859 = vmatpush1.msra.mxu0 0.0
      %1860 = vmatprep.subr.mxu0 0.0
      %1861 = vmatpush1.msra.mxu0 0.0
      %1862 = vmatprep.subr.mxu0 0.0
      %1863 = vmatpush1.msra.mxu0 0.0
      %1864 = vmatprep.subr.mxu0 0.0
      %1865 = vmatpush1.msra.mxu0 0.0
      %1866 = vmatprep.subr.mxu0 0.0
      %1867 = vmatpush1.msra.mxu0 0.0
      %1868 = vmatprep.subr.mxu0 0.0
      %1869 = vmatpush1.msra.mxu0 0.0
      %1870 = vmatprep.subr.mxu0 0.0
      %1871 = vmatpush1.msra.mxu0 0.0
      %1872 = vmatprep.subr.mxu0 0.0
      %1873 = vmatpush1.msra.mxu0 0.0
      %1874 = vmatprep.subr.mxu0 0.0
      %1875 = vmatpush1.msra.mxu0 0.0
      %1876 = vmatprep.subr.mxu0 0.0
      %1877 = vmatpush1.msra.mxu0 0.0
      %1878 = vmatprep.subr.mxu0 0.0
      %1879 = vmatpush1.msra.mxu0 0.0
      %1880 = vmatprep.mubr.f32.mxu0 0.0
      %1881 = vmatmul.mubr.f32.gmra.mrb[0].mxu0 %v1672
      %v1882 = vpop.f32.mrb[0].mxu0
      %v1883 = vadd.f32 %v1610, %v1882
      %v1884 = vpop.f32.mrb[0].mxu0
      %v1885 = vadd.f32 %v1614, %v1884
      %1886 = vdwg.mxu0
      %1887 = vmatprep.subr.mxu0 %v1530
      %1888 = vmatpush1.msra.mxu0 %v1529
      %1889 = vmatprep.subr.mxu0 %v1546
      %1890 = vmatpush1.msra.mxu0 %v1545
      %1891 = vmatprep.subr.mxu0 %v1562
      %1892 = vmatpush1.msra.mxu0 %v1561
      %1893 = vmatprep.subr.mxu0 %v1578
      %1894 = vmatpush1.msra.mxu0 %v1577
      %1895 = vmatprep.subr.mxu0 0.0
      %1896 = vmatpush1.msra.mxu0 0.0
      %1897 = vmatprep.subr.mxu0 0.0
      %1898 = vmatpush1.msra.mxu0 0.0
      %1899 = vmatprep.subr.mxu0 0.0
      %1900 = vmatpush1.msra.mxu0 0.0
      %1901 = vmatprep.subr.mxu0 0.0
      %1902 = vmatpush1.msra.mxu0 0.0
      %1903 = vmatprep.subr.mxu0 0.0
      %1904 = vmatpush1.msra.mxu0 0.0
      %1905 = vmatprep.subr.mxu0 0.0
      %1906 = vmatpush1.msra.mxu0 0.0
      %1907 = vmatprep.subr.mxu0 0.0
      %1908 = vmatpush1.msra.mxu0 0.0
      %1909 = vmatprep.subr.mxu0 0.0
      %1910 = vmatpush1.msra.mxu0 0.0
      %1911 = vmatprep.subr.mxu0 0.0
      %1912 = vmatpush1.msra.mxu0 0.0
      %1913 = vmatprep.subr.mxu0 0.0
      %1914 = vmatpush1.msra.mxu0 0.0
      %1915 = vmatprep.subr.mxu0 0.0
      %1916 = vmatpush1.msra.mxu0 0.0
      %1917 = vmatprep.subr.mxu0 0.0
      %1918 = vmatpush1.msra.mxu0 0.0
      %1919 = vmatprep.subr.mxu0 0.0
      %1920 = vmatpush1.msra.mxu0 0.0
      %1921 = vmatprep.subr.mxu0 0.0
      %1922 = vmatpush1.msra.mxu0 0.0
      %1923 = vmatprep.subr.mxu0 0.0
      %1924 = vmatpush1.msra.mxu0 0.0
      %1925 = vmatprep.subr.mxu0 0.0
      %1926 = vmatpush1.msra.mxu0 0.0
      %1927 = vmatprep.subr.mxu0 0.0
      %1928 = vmatpush1.msra.mxu0 0.0
      %1929 = vmatprep.subr.mxu0 0.0
      %1930 = vmatpush1.msra.mxu0 0.0
      %1931 = vmatprep.subr.mxu0 0.0
      %1932 = vmatpush1.msra.mxu0 0.0
      %1933 = vmatprep.subr.mxu0 0.0
      %1934 = vmatpush1.msra.mxu0 0.0
      %1935 = vmatprep.subr.mxu0 0.0
      %1936 = vmatpush1.msra.mxu0 0.0
      %1937 = vmatprep.subr.mxu0 0.0
      %1938 = vmatpush1.msra.mxu0 0.0
      %1939 = vmatprep.subr.mxu0 0.0
      %1940 = vmatpush1.msra.mxu0 0.0
      %1941 = vmatprep.subr.mxu0 0.0
      %1942 = vmatpush1.msra.mxu0 0.0
      %1943 = vmatprep.subr.mxu0 0.0
      %1944 = vmatpush1.msra.mxu0 0.0
      %1945 = vmatprep.subr.mxu0 0.0
      %1946 = vmatpush1.msra.mxu0 0.0
      %1947 = vmatprep.subr.mxu0 0.0
      %1948 = vmatpush1.msra.mxu0 0.0
      %1949 = vmatprep.subr.mxu0 0.0
      %1950 = vmatpush1.msra.mxu0 0.0
      %1951 = vmatprep.mubr.f32.mxu0 0.0
      %1952 = vmatmul.mubr.f32.gmra.mrb[0].mxu0 %v1672
      %v1953 = vpop.f32.mrb[0].mxu0
      %v1954 = vadd.f32 %v1618, %v1953
      %v1955 = vpop.f32.mrb[0].mxu0
      %v1956 = vadd.f32 %v1622, %v1955
      %1957 = vdwg.mxu0
      %1958 = vmatprep.subr.mxu0 %v1532
      %1959 = vmatpush1.msra.mxu0 %v1531
      %1960 = vmatprep.subr.mxu0 %v1548
      %1961 = vmatpush1.msra.mxu0 %v1547
      %1962 = vmatprep.subr.mxu0 %v1564
      %1963 = vmatpush1.msra.mxu0 %v1563
      %1964 = vmatprep.subr.mxu0 %v1580
      %1965 = vmatpush1.msra.mxu0 %v1579
      %1966 = vmatprep.subr.mxu0 0.0
      %1967 = vmatpush1.msra.mxu0 0.0
      %1968 = vmatprep.subr.mxu0 0.0
      %1969 = vmatpush1.msra.mxu0 0.0
      %1970 = vmatprep.subr.mxu0 0.0
      %1971 = vmatpush1.msra.mxu0 0.0
      %1972 = vmatprep.subr.mxu0 0.0
      %1973 = vmatpush1.msra.mxu0 0.0
      %1974 = vmatprep.subr.mxu0 0.0
      %1975 = vmatpush1.msra.mxu0 0.0
      %1976 = vmatprep.subr.mxu0 0.0
      %1977 = vmatpush1.msra.mxu0 0.0
      %1978 = vmatprep.subr.mxu0 0.0
      %1979 = vmatpush1.msra.mxu0 0.0
      %1980 = vmatprep.subr.mxu0 0.0
      %1981 = vmatpush1.msra.mxu0 0.0
      %1982 = vmatprep.subr.mxu0 0.0
      %1983 = vmatpush1.msra.mxu0 0.0
      %1984 = vmatprep.subr.mxu0 0.0
      %1985 = vmatpush1.msra.mxu0 0.0
      %1986 = vmatprep.subr.mxu0 0.0
      %1987 = vmatpush1.msra.mxu0 0.0
      %1988 = vmatprep.subr.mxu0 0.0
      %1989 = vmatpush1.msra.mxu0 0.0
      %1990 = vmatprep.subr.mxu0 0.0
      %1991 = vmatpush1.msra.mxu0 0.0
      %1992 = vmatprep.subr.mxu0 0.0
      %1993 = vmatpush1.msra.mxu0 0.0
      %1994 = vmatprep.subr.mxu0 0.0
      %1995 = vmatpush1.msra.mxu0 0.0
      %1996 = vmatprep.subr.mxu0 0.0
      %1997 = vmatpush1.msra.mxu0 0.0
      %1998 = vmatprep.subr.mxu0 0.0
      %1999 = vmatpush1.msra.mxu0 0.0
      %2000 = vmatprep.subr.mxu0 0.0
      %2001 = vmatpush1.msra.mxu0 0.0
      %2002 = vmatprep.subr.mxu0 0.0
      %2003 = vmatpush1.msra.mxu0 0.0
      %2004 = vmatprep.subr.mxu0 0.0
      %2005 = vmatpush1.msra.mxu0 0.0
      %2006 = vmatprep.subr.mxu0 0.0
      %2007 = vmatpush1.msra.mxu0 0.0
      %2008 = vmatprep.subr.mxu0 0.0
      %2009 = vmatpush1.msra.mxu0 0.0
      %2010 = vmatprep.subr.mxu0 0.0
      %2011 = vmatpush1.msra.mxu0 0.0
      %2012 = vmatprep.subr.mxu0 0.0
      %2013 = vmatpush1.msra.mxu0 0.0
      %2014 = vmatprep.subr.mxu0 0.0
      %2015 = vmatpush1.msra.mxu0 0.0
      %2016 = vmatprep.subr.mxu0 0.0
      %2017 = vmatpush1.msra.mxu0 0.0
      %2018 = vmatprep.subr.mxu0 0.0
      %2019 = vmatpush1.msra.mxu0 0.0
      %2020 = vmatprep.subr.mxu0 0.0
      %2021 = vmatpush1.msra.mxu0 0.0
      %2022 = vmatprep.mubr.f32.mxu0 0.0
      %2023 = vmatmul.mubr.f32.gmra.mrb[0].mxu0 %v1672
      %v2024 = vpop.f32.mrb[0].mxu0
      %v2025 = vadd.f32 %v1626, %v2024
      %v2026 = vpop.f32.mrb[0].mxu0
      %v2027 = vadd.f32 %v1630, %v2026
      %2028 = vdwg.mxu0
      %2029 = vmatprep.subr.mxu0 %v1534
      %2030 = vmatpush1.msra.mxu0 %v1533
      %2031 = vmatprep.subr.mxu0 %v1550
      %2032 = vmatpush1.msra.mxu0 %v1549
      %2033 = vmatprep.subr.mxu0 %v1566
      %2034 = vmatpush1.msra.mxu0 %v1565
      %2035 = vmatprep.subr.mxu0 %v1582
      %2036 = vmatpush1.msra.mxu0 %v1581
      %2037 = vmatprep.subr.mxu0 0.0
      %2038 = vmatpush1.msra.mxu0 0.0
      %2039 = vmatprep.subr.mxu0 0.0
      %2040 = vmatpush1.msra.mxu0 0.0
      %2041 = vmatprep.subr.mxu0 0.0
      %2042 = vmatpush1.msra.mxu0 0.0
      %2043 = vmatprep.subr.mxu0 0.0
      %2044 = vmatpush1.msra.mxu0 0.0
      %2045 = vmatprep.subr.mxu0 0.0
      %2046 = vmatpush1.msra.mxu0 0.0
      %2047 = vmatprep.subr.mxu0 0.0
      %2048 = vmatpush1.msra.mxu0 0.0
      %2049 = vmatprep.subr.mxu0 0.0
      %2050 = vmatpush1.msra.mxu0 0.0
      %2051 = vmatprep.subr.mxu0 0.0
      %2052 = vmatpush1.msra.mxu0 0.0
      %2053 = vmatprep.subr.mxu0 0.0
      %2054 = vmatpush1.msra.mxu0 0.0
      %2055 = vmatprep.subr.mxu0 0.0
      %2056 = vmatpush1.msra.mxu0 0.0
      %2057 = vmatprep.subr.mxu0 0.0
      %2058 = vmatpush1.msra.mxu0 0.0
      %2059 = vmatprep.subr.mxu0 0.0
      %2060 = vmatpush1.msra.mxu0 0.0
      %2061 = vmatprep.subr.mxu0 0.0
      %2062 = vmatpush1.msra.mxu0 0.0
      %2063 = vmatprep.subr.mxu0 0.0
      %2064 = vmatpush1.msra.mxu0 0.0
      %2065 = vmatprep.subr.mxu0 0.0
      %2066 = vmatpush1.msra.mxu0 0.0
      %2067 = vmatprep.subr.mxu0 0.0
      %2068 = vmatpush1.msra.mxu0 0.0
      %2069 = vmatprep.subr.mxu0 0.0
      %2070 = vmatpush1.msra.mxu0 0.0
      %2071 = vmatprep.subr.mxu0 0.0
      %2072 = vmatpush1.msra.mxu0 0.0
      %2073 = vmatprep.subr.mxu0 0.0
      %2074 = vmatpush1.msra.mxu0 0.0
      %2075 = vmatprep.subr.mxu0 0.0
      %2076 = vmatpush1.msra.mxu0 0.0
      %2077 = vmatprep.subr.mxu0 0.0
      %2078 = vmatpush1.msra.mxu0 0.0
      %2079 = vmatprep.subr.mxu0 0.0
      %2080 = vmatpush1.msra.mxu0 0.0
      %2081 = vmatprep.subr.mxu0 0.0
      %2082 = vmatpush1.msra.mxu0 0.0
      %2083 = vmatprep.subr.mxu0 0.0
      %2084 = vmatpush1.msra.mxu0 0.0
      %2085 = vmatprep.subr.mxu0 0.0
      %2086 = vmatpush1.msra.mxu0 0.0
      %2087 = vmatprep.subr.mxu0 0.0
      %2088 = vmatpush1.msra.mxu0 0.0
      %2089 = vmatprep.subr.mxu0 0.0
      %2090 = vmatpush1.msra.mxu0 0.0
      %2091 = vmatprep.subr.mxu0 0.0
      %2092 = vmatpush1.msra.mxu0 0.0
      %2093 = vmatprep.mubr.f32.mxu0 0.0
      %2094 = vmatmul.mubr.f32.gmra.mrb[0].mxu0 %v1672
      %v2095 = vpop.f32.mrb[0].mxu0
      %v2096 = vadd.f32 %v1634, %v2095
      %v2097 = vpop.f32.mrb[0].mxu0
      %v2098 = vadd.f32 %v1638, %v2097
      %2099 = vdwg.mxu0
      %2100 = vmatprep.subr.mxu0 %v1536
      %2101 = vmatpush1.msra.mxu0 %v1535
      %2102 = vmatprep.subr.mxu0 %v1552
      %2103 = vmatpush1.msra.mxu0 %v1551
      %2104 = vmatprep.subr.mxu0 %v1568
      %2105 = vmatpush1.msra.mxu0 %v1567
      %2106 = vmatprep.subr.mxu0 %v1584
      %2107 = vmatpush1.msra.mxu0 %v1583
      %2108 = vmatprep.subr.mxu0 0.0
      %2109 = vmatpush1.msra.mxu0 0.0
      %2110 = vmatprep.subr.mxu0 0.0
      %2111 = vmatpush1.msra.mxu0 0.0
      %2112 = vmatprep.subr.mxu0 0.0
      %2113 = vmatpush1.msra.mxu0 0.0
      %2114 = vmatprep.subr.mxu0 0.0
      %2115 = vmatpush1.msra.mxu0 0.0
      %2116 = vmatprep.subr.mxu0 0.0
      %2117 = vmatpush1.msra.mxu0 0.0
      %2118 = vmatprep.subr.mxu0 0.0
      %2119 = vmatpush1.msra.mxu0 0.0
      %2120 = vmatprep.subr.mxu0 0.0
      %2121 = vmatpush1.msra.mxu0 0.0
      %2122 = vmatprep.subr.mxu0 0.0
      %2123 = vmatpush1.msra.mxu0 0.0
      %2124 = vmatprep.subr.mxu0 0.0
      %2125 = vmatpush1.msra.mxu0 0.0
      %2126 = vmatprep.subr.mxu0 0.0
      %2127 = vmatpush1.msra.mxu0 0.0
      %2128 = vmatprep.subr.mxu0 0.0
      %2129 = vmatpush1.msra.mxu0 0.0
      %2130 = vmatprep.subr.mxu0 0.0
      %2131 = vmatpush1.msra.mxu0 0.0
      %2132 = vmatprep.subr.mxu0 0.0
      %2133 = vmatpush1.msra.mxu0 0.0
      %2134 = vmatprep.subr.mxu0 0.0
      %2135 = vmatpush1.msra.mxu0 0.0
      %2136 = vmatprep.subr.mxu0 0.0
      %2137 = vmatpush1.msra.mxu0 0.0
      %2138 = vmatprep.subr.mxu0 0.0
      %2139 = vmatpush1.msra.mxu0 0.0
      %2140 = vmatprep.subr.mxu0 0.0
      %2141 = vmatpush1.msra.mxu0 0.0
      %2142 = vmatprep.subr.mxu0 0.0
      %2143 = vmatpush1.msra.mxu0 0.0
      %2144 = vmatprep.subr.mxu0 0.0
      %2145 = vmatpush1.msra.mxu0 0.0
      %2146 = vmatprep.subr.mxu0 0.0
      %2147 = vmatpush1.msra.mxu0 0.0
      %2148 = vmatprep.subr.mxu0 0.0
      %2149 = vmatpush1.msra.mxu0 0.0
      %2150 = vmatprep.subr.mxu0 0.0
      %2151 = vmatpush1.msra.mxu0 0.0
      %2152 = vmatprep.subr.mxu0 0.0
      %2153 = vmatpush1.msra.mxu0 0.0
      %2154 = vmatprep.subr.mxu0 0.0
      %2155 = vmatpush1.msra.mxu0 0.0
      %2156 = vmatprep.subr.mxu0 0.0
      %2157 = vmatpush1.msra.mxu0 0.0
      %2158 = vmatprep.subr.mxu0 0.0
      %2159 = vmatpush1.msra.mxu0 0.0
      %2160 = vmatprep.subr.mxu0 0.0
      %2161 = vmatpush1.msra.mxu0 0.0
      %2162 = vmatprep.subr.mxu0 0.0
      %2163 = vmatpush1.msra.mxu0 0.0
      %2164 = vmatprep.mubr.f32.mxu0 0.0
      %2165 = vmatmul.mubr.f32.gmra.mrb[0].mxu0 %v1672
      %v2166 = vpop.f32.mrb[0].mxu0
      %v2167 = vadd.f32 %v1642, %v2166
      %v2168 = vpop.f32.mrb[0].mxu0
      %v2169 = vadd.f32 %v1646, %v2168
      %2170 = vdwg.mxu0
      %2171 = vmatprep.subr.mxu0 %v1538
      %2172 = vmatpush1.msra.mxu0 %v1537
      %2173 = vmatprep.subr.mxu0 %v1554
      %2174 = vmatpush1.msra.mxu0 %v1553
      %2175 = vmatprep.subr.mxu0 %v1570
      %2176 = vmatpush1.msra.mxu0 %v1569
      %2177 = vmatprep.subr.mxu0 %v1586
      %2178 = vmatpush1.msra.mxu0 %v1585
      %2179 = vmatprep.subr.mxu0 0.0
      %2180 = vmatpush1.msra.mxu0 0.0
      %2181 = vmatprep.subr.mxu0 0.0
      %2182 = vmatpush1.msra.mxu0 0.0
      %2183 = vmatprep.subr.mxu0 0.0
      %2184 = vmatpush1.msra.mxu0 0.0
      %2185 = vmatprep.subr.mxu0 0.0
      %2186 = vmatpush1.msra.mxu0 0.0
      %2187 = vmatprep.subr.mxu0 0.0
      %2188 = vmatpush1.msra.mxu0 0.0
      %2189 = vmatprep.subr.mxu0 0.0
      %2190 = vmatpush1.msra.mxu0 0.0
      %2191 = vmatprep.subr.mxu0 0.0
      %2192 = vmatpush1.msra.mxu0 0.0
      %2193 = vmatprep.subr.mxu0 0.0
      %2194 = vmatpush1.msra.mxu0 0.0
      %2195 = vmatprep.subr.mxu0 0.0
      %2196 = vmatpush1.msra.mxu0 0.0
      %2197 = vmatprep.subr.mxu0 0.0
      %2198 = vmatpush1.msra.mxu0 0.0
      %2199 = vmatprep.subr.mxu0 0.0
      %2200 = vmatpush1.msra.mxu0 0.0
      %2201 = vmatprep.subr.mxu0 0.0
      %2202 = vmatpush1.msra.mxu0 0.0
      %2203 = vmatprep.subr.mxu0 0.0
      %2204 = vmatpush1.msra.mxu0 0.0
      %2205 = vmatprep.subr.mxu0 0.0
      %2206 = vmatpush1.msra.mxu0 0.0
      %2207 = vmatprep.subr.mxu0 0.0
      %2208 = vmatpush1.msra.mxu0 0.0
      %2209 = vmatprep.subr.mxu0 0.0
      %2210 = vmatpush1.msra.mxu0 0.0
      %2211 = vmatprep.subr.mxu0 0.0
      %2212 = vmatpush1.msra.mxu0 0.0
      %2213 = vmatprep.subr.mxu0 0.0
      %2214 = vmatpush1.msra.mxu0 0.0
      %2215 = vmatprep.subr.mxu0 0.0
      %2216 = vmatpush1.msra.mxu0 0.0
      %2217 = vmatprep.subr.mxu0 0.0
      %2218 = vmatpush1.msra.mxu0 0.0
      %2219 = vmatprep.subr.mxu0 0.0
      %2220 = vmatpush1.msra.mxu0 0.0
      %2221 = vmatprep.subr.mxu0 0.0
      %2222 = vmatpush1.msra.mxu0 0.0
      %2223 = vmatprep.subr.mxu0 0.0
      %2224 = vmatpush1.msra.mxu0 0.0
      %2225 = vmatprep.subr.mxu0 0.0
      %2226 = vmatpush1.msra.mxu0 0.0
      %2227 = vmatprep.subr.mxu0 0.0
      %2228 = vmatpush1.msra.mxu0 0.0
      %2229 = vmatprep.subr.mxu0 0.0
      %2230 = vmatpush1.msra.mxu0 0.0
      %2231 = vmatprep.subr.mxu0 0.0
      %2232 = vmatpush1.msra.mxu0 0.0
      %2233 = vmatprep.subr.mxu0 0.0
      %2234 = vmatpush1.msra.mxu0 0.0
      %2235 = vmatprep.mubr.f32.mxu0 0.0
      %2236 = vmatmul.mubr.f32.gmra.mrb[0].mxu0 %v1672
      %v2237 = vpop.f32.mrb[0].mxu0
      %v2238 = vadd.f32 %v1650, %v2237
      %v2239 = vpop.f32.mrb[0].mxu0
      %v2240 = vadd.f32 %v1654, %v2239
      %2241 = vdwg.mxu0
      %v2242 = vmax.f32 %v1741, 0.0
      %v2243 = vmax.f32 %v1743, 0.0
      %v2244 = vmax.f32 %v1812, 0.0
      %v2245 = vmax.f32 %v1814, 0.0
      %v2246 = vmax.f32 %v1883, 0.0
      %v2247 = vmax.f32 %v1885, 0.0
      %v2248 = vmax.f32 %v1954, 0.0
      %v2249 = vmax.f32 %v1956, 0.0
      %v2250 = vmax.f32 %v2025, 0.0
      %v2251 = vmax.f32 %v2027, 0.0
      %v2252 = vmax.f32 %v2096, 0.0
      %v2253 = vmax.f32 %v2098, 0.0
      %v2254 = vmax.f32 %v2167, 0.0
      %v2255 = vmax.f32 %v2169, 0.0
      %v2256 = vmax.f32 %v2238, 0.0
      %v2257 = vmax.f32 %v2240, 0.0
      %v2258 = vld [vmem:[%s9] sm:$0xff]
      %v2259 = vld [vmem:[%s9 + $0x8] sm:$0xff]
      %v2260 = vld [vmem:[%s9 + $0x10] sm:$0xff]
      %v2261 = vld [vmem:[%s9 + $0x18] sm:$0xff]
      %v2262 = vld [vmem:[%s9 + $0x20] sm:$0xff]
      %v2263 = vld [vmem:[%s9 + $0x28] sm:$0xff]
      %v2264 = vld [vmem:[%s9 + $0x30] sm:$0xff]
      %v2265 = vld [vmem:[%s9 + $0x38] sm:$0xff]
      %v2266 = vld [vmem:[%s9 + $0x40] sm:$0xff]
      %v2267 = vld [vmem:[%s9 + $0x48] sm:$0xff]
      %v2268 = vld [vmem:[%s9 + $0x50] sm:$0xff]
      %v2269 = vld [vmem:[%s9 + $0x58] sm:$0xff]
      %v2270 = vld [vmem:[%s9 + $0x60] sm:$0xff]
      %v2271 = vld [vmem:[%s9 + $0x68] sm:$0xff]
      %v2272 = vld [vmem:[%s9 + $0x70] sm:$0xff]
      %v2273 = vld [vmem:[%s9 + $0x78] sm:$0xff]
      %v2274 = vld [vmem:[%s9 + $0x80] sm:$0xff]
      %v2275 = vld [vmem:[%s9 + $0x88] sm:$0xff]
      %v2276 = vld [vmem:[%s9 + $0x90] sm:$0xff]
      %v2277 = vld [vmem:[%s9 + $0x98] sm:$0xff]
      %v2278 = vld [vmem:[%s9 + $0xa0] sm:$0xff]
      %v2279 = vld [vmem:[%s9 + $0xa8] sm:$0xff]
      %v2280 = vld [vmem:[%s9 + $0xb0] sm:$0xff]
      %v2281 = vld [vmem:[%s9 + $0xb8] sm:$0xff]
      %v2282 = vld [vmem:[%s9 + $0xc0] sm:$0xff]
      %v2283 = vld [vmem:[%s9 + $0xc8] sm:$0xff]
      %v2284 = vld [vmem:[%s9 + $0xd0] sm:$0xff]
      %v2285 = vld [vmem:[%s9 + $0xd8] sm:$0xff]
      %v2286 = vld [vmem:[%s9 + $0xe0] sm:$0xff]
      %v2287 = vld [vmem:[%s9 + $0xe8] sm:$0xff]
      %v2288 = vld [vmem:[%s9 + $0xf0] sm:$0xff]
      %v2289 = vld [vmem:[%s9 + $0xf8] sm:$0xff]
      %v2290 = vld [vmem:[%s9 + $0x100] sm:$0xff]
      %v2291 = vld [vmem:[%s9 + $0x108] sm:$0xff]
      %v2292 = vld [vmem:[%s9 + $0x110] sm:$0xff]
      %v2293 = vld [vmem:[%s9 + $0x118] sm:$0xff]
      %v2294 = vld [vmem:[%s9 + $0x120] sm:$0xff]
      %v2295 = vld [vmem:[%s9 + $0x128] sm:$0xff]
      %v2296 = vld [vmem:[%s9 + $0x130] sm:$0xff]
      %v2297 = vld [vmem:[%s9 + $0x138] sm:$0xff]
      %v2298 = vld [vmem:[%s9 + $0x140] sm:$0xff]
      %v2299 = vld [vmem:[%s9 + $0x148] sm:$0xff]
      %v2300 = vld [vmem:[%s9 + $0x150] sm:$0xff]
      %v2301 = vld [vmem:[%s9 + $0x158] sm:$0xff]
      %v2302 = vld [vmem:[%s9 + $0x160] sm:$0xff]
      %v2303 = vld [vmem:[%s9 + $0x168] sm:$0xff]
      %v2304 = vld [vmem:[%s9 + $0x170] sm:$0xff]
      %v2305 = vld [vmem:[%s9 + $0x178] sm:$0xff]
      %v2306 = vld [vmem:[%s9 + $0x180] sm:$0xff]
      %v2307 = vld [vmem:[%s9 + $0x188] sm:$0xff]
      %v2308 = vld [vmem:[%s9 + $0x190] sm:$0xff]
      %v2309 = vld [vmem:[%s9 + $0x198] sm:$0xff]
      %v2310 = vld [vmem:[%s9 + $0x1a0] sm:$0xff]
      %v2311 = vld [vmem:[%s9 + $0x1a8] sm:$0xff]
      %v2312 = vld [vmem:[%s9 + $0x1b0] sm:$0xff]
      %v2313 = vld [vmem:[%s9 + $0x1b8] sm:$0xff]
      %v2314 = vld [vmem:[%s9 + $0x1c0] sm:$0xff]
      %v2315 = vld [vmem:[%s9 + $0x1c8] sm:$0xff]
      %v2316 = vld [vmem:[%s9 + $0x1d0] sm:$0xff]
      %v2317 = vld [vmem:[%s9 + $0x1d8] sm:$0xff]
      %v2318 = vld [vmem:[%s9 + $0x1e0] sm:$0xff]
      %v2319 = vld [vmem:[%s9 + $0x1e8] sm:$0xff]
      %v2320 = vld [vmem:[%s9 + $0x1f0] sm:$0xff]
      %v2321 = vld [vmem:[%s9 + $0x1f8] sm:$0xff]
      %v2322 = vld [vmem:[%s9 + $0x200] sm:$0xff]
      %v2323 = vld [vmem:[%s9 + $0x208] sm:$0xff]
      %v2324 = vld [vmem:[%s9 + $0x210] sm:$0xff]
      %v2325 = vld [vmem:[%s9 + $0x218] sm:$0xff]
      %v2326 = vld [vmem:[%s9 + $0x220] sm:$0xff]
      %v2327 = vld [vmem:[%s9 + $0x228] sm:$0xff]
      %v2328 = vld [vmem:[%s9 + $0x230] sm:$0xff]
      %v2329 = vld [vmem:[%s9 + $0x238] sm:$0xff]
      %v2330 = vld [vmem:[%s9 + $0x240] sm:$0xff]
      %v2331 = vld [vmem:[%s9 + $0x248] sm:$0xff]
      %v2332 = vld [vmem:[%s9 + $0x250] sm:$0xff]
      %v2333 = vld [vmem:[%s9 + $0x258] sm:$0xff]
      %v2334 = vld [vmem:[%s9 + $0x260] sm:$0xff]
      %v2335 = vld [vmem:[%s9 + $0x268] sm:$0xff]
      %v2336 = vld [vmem:[%s9 + $0x270] sm:$0xff]
      %v2337 = vld [vmem:[%s9 + $0x278] sm:$0xff]
      %v2338 = vld [vmem:[%s9 + $0x280] sm:$0xff]
      %v2339 = vld [vmem:[%s9 + $0x288] sm:$0xff]
      %v2340 = vld [vmem:[%s9 + $0x290] sm:$0xff]
      %v2341 = vld [vmem:[%s9 + $0x298] sm:$0xff]
      %v2342 = vld [vmem:[%s9 + $0x2a0] sm:$0xff]
      %v2343 = vld [vmem:[%s9 + $0x2a8] sm:$0xff]
      %v2344 = vld [vmem:[%s9 + $0x2b0] sm:$0xff]
      %v2345 = vld [vmem:[%s9 + $0x2b8] sm:$0xff]
      %v2346 = vld [vmem:[%s9 + $0x2c0] sm:$0xff]
      %v2347 = vld [vmem:[%s9 + $0x2c8] sm:$0xff]
      %v2348 = vld [vmem:[%s9 + $0x2d0] sm:$0xff]
      %v2349 = vld [vmem:[%s9 + $0x2d8] sm:$0xff]
      %v2350 = vld [vmem:[%s9 + $0x2e0] sm:$0xff]
      %v2351 = vld [vmem:[%s9 + $0x2e8] sm:$0xff]
      %v2352 = vld [vmem:[%s9 + $0x2f0] sm:$0xff]
      %v2353 = vld [vmem:[%s9 + $0x2f8] sm:$0xff]
      %v2354 = vld [vmem:[%s9 + $0x300] sm:$0xff]
      %v2355 = vld [vmem:[%s9 + $0x308] sm:$0xff]
      %v2356 = vld [vmem:[%s9 + $0x310] sm:$0xff]
      %v2357 = vld [vmem:[%s9 + $0x318] sm:$0xff]
      %v2358 = vld [vmem:[%s9 + $0x320] sm:$0xff]
      %v2359 = vld [vmem:[%s9 + $0x328] sm:$0xff]
      %v2360 = vld [vmem:[%s9 + $0x330] sm:$0xff]
      %v2361 = vld [vmem:[%s9 + $0x338] sm:$0xff]
      %v2362 = vld [vmem:[%s9 + $0x340] sm:$0xff]
      %v2363 = vld [vmem:[%s9 + $0x348] sm:$0xff]
      %v2364 = vld [vmem:[%s9 + $0x350] sm:$0xff]
      %v2365 = vld [vmem:[%s9 + $0x358] sm:$0xff]
      %v2366 = vld [vmem:[%s9 + $0x360] sm:$0xff]
      %v2367 = vld [vmem:[%s9 + $0x368] sm:$0xff]
      %v2368 = vld [vmem:[%s9 + $0x370] sm:$0xff]
      %v2369 = vld [vmem:[%s9 + $0x378] sm:$0xff]
      %v2370 = vld [vmem:[%s9 + $0x380] sm:$0xff]
      %v2371 = vld [vmem:[%s9 + $0x388] sm:$0xff]
      %v2372 = vld [vmem:[%s9 + $0x390] sm:$0xff]
      %v2373 = vld [vmem:[%s9 + $0x398] sm:$0xff]
      %v2374 = vld [vmem:[%s9 + $0x3a0] sm:$0xff]
      %v2375 = vld [vmem:[%s9 + $0x3a8] sm:$0xff]
      %v2376 = vld [vmem:[%s9 + $0x3b0] sm:$0xff]
      %v2377 = vld [vmem:[%s9 + $0x3b8] sm:$0xff]
      %v2378 = vld [vmem:[%s9 + $0x3c0] sm:$0xff]
      %v2379 = vld [vmem:[%s9 + $0x3c8] sm:$0xff]
      %v2380 = vld [vmem:[%s9 + $0x3d0] sm:$0xff]
      %v2381 = vld [vmem:[%s9 + $0x3d8] sm:$0xff]
      %v2382 = vld [vmem:[%s9 + $0x3e0] sm:$0xff]
      %v2383 = vld [vmem:[%s9 + $0x3e8] sm:$0xff]
      %v2384 = vld [vmem:[%s9 + $0x3f0] sm:$0xff]
      %v2385 = vld [vmem:[%s9 + $0x3f8] sm:$0xff]
      %v2386 = vld [vmem:[%s9 + $0x400] sm:$0xff]
      %v2387 = vld [vmem:[%s9 + $0x408] sm:$0xff]
      %v2388 = vld [vmem:[%s9 + $0x410] sm:$0xff]
      %v2389 = vld [vmem:[%s9 + $0x418] sm:$0xff]
      %v2390 = vld [vmem:[%s9 + $0x420] sm:$0xff]
      %v2391 = vld [vmem:[%s9 + $0x428] sm:$0xff]
      %v2392 = vld [vmem:[%s9 + $0x430] sm:$0xff]
      %v2393 = vld [vmem:[%s9 + $0x438] sm:$0xff]
      %v2394 = vld [vmem:[%s9 + $0x440] sm:$0xff]
      %v2395 = vld [vmem:[%s9 + $0x448] sm:$0xff]
      %v2396 = vld [vmem:[%s9 + $0x450] sm:$0xff]
      %v2397 = vld [vmem:[%s9 + $0x458] sm:$0xff]
      %v2398 = vld [vmem:[%s9 + $0x460] sm:$0xff]
      %v2399 = vld [vmem:[%s9 + $0x468] sm:$0xff]
      %v2400 = vld [vmem:[%s9 + $0x470] sm:$0xff]
      %v2401 = vld [vmem:[%s9 + $0x478] sm:$0xff]
      %v2402 = vld [vmem:[%s9 + $0x480] sm:$0xff]
      %v2403 = vld [vmem:[%s9 + $0x488] sm:$0xff]
      %v2404 = vld [vmem:[%s9 + $0x490] sm:$0xff]
      %v2405 = vld [vmem:[%s9 + $0x498] sm:$0xff]
      %v2406 = vld [vmem:[%s9 + $0x4a0] sm:$0xff]
      %v2407 = vld [vmem:[%s9 + $0x4a8] sm:$0xff]
      %v2408 = vld [vmem:[%s9 + $0x4b0] sm:$0xff]
      %v2409 = vld [vmem:[%s9 + $0x4b8] sm:$0xff]
      %v2410 = vld [vmem:[%s9 + $0x4c0] sm:$0xff]
      %v2411 = vld [vmem:[%s9 + $0x4c8] sm:$0xff]
      %v2412 = vld [vmem:[%s9 + $0x4d0] sm:$0xff]
      %v2413 = vld [vmem:[%s9 + $0x4d8] sm:$0xff]
      %v2414 = vld [vmem:[%s9 + $0x4e0] sm:$0xff]
      %v2415 = vld [vmem:[%s9 + $0x4e8] sm:$0xff]
      %v2416 = vld [vmem:[%s9 + $0x4f0] sm:$0xff]
      %v2417 = vld [vmem:[%s9 + $0x4f8] sm:$0xff]
      %v2418 = vld [vmem:[%s9 + $0x500] sm:$0xff]
      %v2419 = vld [vmem:[%s9 + $0x508] sm:$0xff]
      %v2420 = vld [vmem:[%s9 + $0x510] sm:$0xff]
      %v2421 = vld [vmem:[%s9 + $0x518] sm:$0xff]
      %v2422 = vld [vmem:[%s9 + $0x520] sm:$0xff]
      %v2423 = vld [vmem:[%s9 + $0x528] sm:$0xff]
      %v2424 = vld [vmem:[%s9 + $0x530] sm:$0xff]
      %v2425 = vld [vmem:[%s9 + $0x538] sm:$0xff]
      %v2426 = vld [vmem:[%s9 + $0x540] sm:$0xff]
      %v2427 = vld [vmem:[%s9 + $0x548] sm:$0xff]
      %v2428 = vld [vmem:[%s9 + $0x550] sm:$0xff]
      %v2429 = vld [vmem:[%s9 + $0x558] sm:$0xff]
      %v2430 = vld [vmem:[%s9 + $0x560] sm:$0xff]
      %v2431 = vld [vmem:[%s9 + $0x568] sm:$0xff]
      %v2432 = vld [vmem:[%s9 + $0x570] sm:$0xff]
      %v2433 = vld [vmem:[%s9 + $0x578] sm:$0xff]
      %v2434 = vld [vmem:[%s9 + $0x580] sm:$0xff]
      %v2435 = vld [vmem:[%s9 + $0x588] sm:$0xff]
      %v2436 = vld [vmem:[%s9 + $0x590] sm:$0xff]
      %v2437 = vld [vmem:[%s9 + $0x598] sm:$0xff]
      %v2438 = vld [vmem:[%s9 + $0x5a0] sm:$0xff]
      %v2439 = vld [vmem:[%s9 + $0x5a8] sm:$0xff]
      %v2440 = vld [vmem:[%s9 + $0x5b0] sm:$0xff]
      %v2441 = vld [vmem:[%s9 + $0x5b8] sm:$0xff]
      %v2442 = vld [vmem:[%s9 + $0x5c0] sm:$0xff]
      %v2443 = vld [vmem:[%s9 + $0x5c8] sm:$0xff]
      %v2444 = vld [vmem:[%s9 + $0x5d0] sm:$0xff]
      %v2445 = vld [vmem:[%s9 + $0x5d8] sm:$0xff]
      %v2446 = vld [vmem:[%s9 + $0x5e0] sm:$0xff]
      %v2447 = vld [vmem:[%s9 + $0x5e8] sm:$0xff]
      %v2448 = vld [vmem:[%s9 + $0x5f0] sm:$0xff]
      %v2449 = vld [vmem:[%s9 + $0x5f8] sm:$0xff]
      %v2450 = vld [vmem:[%s9 + $0x600] sm:$0xff]
      %v2451 = vld [vmem:[%s9 + $0x608] sm:$0xff]
      %v2452 = vld [vmem:[%s9 + $0x610] sm:$0xff]
      %v2453 = vld [vmem:[%s9 + $0x618] sm:$0xff]
      %v2454 = vld [vmem:[%s9 + $0x620] sm:$0xff]
      %v2455 = vld [vmem:[%s9 + $0x628] sm:$0xff]
      %v2456 = vld [vmem:[%s9 + $0x630] sm:$0xff]
      %v2457 = vld [vmem:[%s9 + $0x638] sm:$0xff]
      %v2458 = vld [vmem:[%s9 + $0x640] sm:$0xff]
      %v2459 = vld [vmem:[%s9 + $0x648] sm:$0xff]
      %v2460 = vld [vmem:[%s9 + $0x650] sm:$0xff]
      %v2461 = vld [vmem:[%s9 + $0x658] sm:$0xff]
      %v2462 = vld [vmem:[%s9 + $0x660] sm:$0xff]
      %v2463 = vld [vmem:[%s9 + $0x668] sm:$0xff]
      %v2464 = vld [vmem:[%s9 + $0x670] sm:$0xff]
      %v2465 = vld [vmem:[%s9 + $0x678] sm:$0xff]
      %v2466 = vld [vmem:[%s9 + $0x680] sm:$0xff]
      %v2467 = vld [vmem:[%s9 + $0x688] sm:$0xff]
      %v2468 = vld [vmem:[%s9 + $0x690] sm:$0xff]
      %v2469 = vld [vmem:[%s9 + $0x698] sm:$0xff]
      %v2470 = vld [vmem:[%s9 + $0x6a0] sm:$0xff]
      %v2471 = vld [vmem:[%s9 + $0x6a8] sm:$0xff]
      %v2472 = vld [vmem:[%s9 + $0x6b0] sm:$0xff]
      %v2473 = vld [vmem:[%s9 + $0x6b8] sm:$0xff]
      %v2474 = vld [vmem:[%s9 + $0x6c0] sm:$0xff]
      %v2475 = vld [vmem:[%s9 + $0x6c8] sm:$0xff]
      %v2476 = vld [vmem:[%s9 + $0x6d0] sm:$0xff]
      %v2477 = vld [vmem:[%s9 + $0x6d8] sm:$0xff]
      %v2478 = vld [vmem:[%s9 + $0x6e0] sm:$0xff]
      %v2479 = vld [vmem:[%s9 + $0x6e8] sm:$0xff]
      %v2480 = vld [vmem:[%s9 + $0x6f0] sm:$0xff]
      %v2481 = vld [vmem:[%s9 + $0x6f8] sm:$0xff]
      %v2482 = vld [vmem:[%s9 + $0x700] sm:$0xff]
      %v2483 = vld [vmem:[%s9 + $0x708] sm:$0xff]
      %v2484 = vld [vmem:[%s9 + $0x710] sm:$0xff]
      %v2485 = vld [vmem:[%s9 + $0x718] sm:$0xff]
      %v2486 = vld [vmem:[%s9 + $0x720] sm:$0xff]
      %v2487 = vld [vmem:[%s9 + $0x728] sm:$0xff]
      %v2488 = vld [vmem:[%s9 + $0x730] sm:$0xff]
      %v2489 = vld [vmem:[%s9 + $0x738] sm:$0xff]
      %v2490 = vld [vmem:[%s9 + $0x740] sm:$0xff]
      %v2491 = vld [vmem:[%s9 + $0x748] sm:$0xff]
      %v2492 = vld [vmem:[%s9 + $0x750] sm:$0xff]
      %v2493 = vld [vmem:[%s9 + $0x758] sm:$0xff]
      %v2494 = vld [vmem:[%s9 + $0x760] sm:$0xff]
      %v2495 = vld [vmem:[%s9 + $0x768] sm:$0xff]
      %v2496 = vld [vmem:[%s9 + $0x770] sm:$0xff]
      %v2497 = vld [vmem:[%s9 + $0x778] sm:$0xff]
      %v2498 = vld [vmem:[%s9 + $0x780] sm:$0xff]
      %v2499 = vld [vmem:[%s9 + $0x788] sm:$0xff]
      %v2500 = vld [vmem:[%s9 + $0x790] sm:$0xff]
      %v2501 = vld [vmem:[%s9 + $0x798] sm:$0xff]
      %v2502 = vld [vmem:[%s9 + $0x7a0] sm:$0xff]
      %v2503 = vld [vmem:[%s9 + $0x7a8] sm:$0xff]
      %v2504 = vld [vmem:[%s9 + $0x7b0] sm:$0xff]
      %v2505 = vld [vmem:[%s9 + $0x7b8] sm:$0xff]
      %v2506 = vld [vmem:[%s9 + $0x7c0] sm:$0xff]
      %v2507 = vld [vmem:[%s9 + $0x7c8] sm:$0xff]
      %v2508 = vld [vmem:[%s9 + $0x7d0] sm:$0xff]
      %v2509 = vld [vmem:[%s9 + $0x7d8] sm:$0xff]
      %v2510 = vld [vmem:[%s9 + $0x7e0] sm:$0xff]
      %v2511 = vld [vmem:[%s9 + $0x7e8] sm:$0xff]
      %v2512 = vld [vmem:[%s9 + $0x7f0] sm:$0xff]
      %v2513 = vld [vmem:[%s9 + $0x7f8] sm:$0xff]
      %v2514 = vld [vmem:[%s10] sm:$0x1]
      %v2516 = vlaneseq
      %v2517 = vshrl.u32 %v2516, 7
      %v2518 = vsub.s32 0, %v2517
      %v2519 = vrot.slane %v2514, %v2518
      %2521 = vmatprep.subr.mxu0 0.0
      %2522 = vmatpush1.msra.mxu0 %v2258
      %2523 = vmatprep.subr.mxu0 0.0
      %2524 = vmatpush1.msra.mxu0 %v2259
      %2525 = vmatprep.subr.mxu0 0.0
      %2526 = vmatpush1.msra.mxu0 %v2260
      %2527 = vmatprep.subr.mxu0 0.0
      %2528 = vmatpush1.msra.mxu0 %v2261
      %2529 = vmatprep.subr.mxu0 0.0
      %2530 = vmatpush1.msra.mxu0 %v2262
      %2531 = vmatprep.subr.mxu0 0.0
      %2532 = vmatpush1.msra.mxu0 %v2263
      %2533 = vmatprep.subr.mxu0 0.0
      %2534 = vmatpush1.msra.mxu0 %v2264
      %2535 = vmatprep.subr.mxu0 0.0
      %2536 = vmatpush1.msra.mxu0 %v2265
      %2537 = vmatprep.subr.mxu0 0.0
      %2538 = vmatpush1.msra.mxu0 %v2266
      %2539 = vmatprep.subr.mxu0 0.0
      %2540 = vmatpush1.msra.mxu0 %v2267
      %2541 = vmatprep.subr.mxu0 0.0
      %2542 = vmatpush1.msra.mxu0 %v2268
      %2543 = vmatprep.subr.mxu0 0.0
      %2544 = vmatpush1.msra.mxu0 %v2269
      %2545 = vmatprep.subr.mxu0 0.0
      %2546 = vmatpush1.msra.mxu0 %v2270
      %2547 = vmatprep.subr.mxu0 0.0
      %2548 = vmatpush1.msra.mxu0 %v2271
      %2549 = vmatprep.subr.mxu0 0.0
      %2550 = vmatpush1.msra.mxu0 %v2272
      %2551 = vmatprep.subr.mxu0 0.0
      %2552 = vmatpush1.msra.mxu0 %v2273
      %2553 = vmatprep.subr.mxu0 0.0
      %2554 = vmatpush1.msra.mxu0 %v2274
      %2555 = vmatprep.subr.mxu0 0.0
      %2556 = vmatpush1.msra.mxu0 %v2275
      %2557 = vmatprep.subr.mxu0 0.0
      %2558 = vmatpush1.msra.mxu0 %v2276
      %2559 = vmatprep.subr.mxu0 0.0
      %2560 = vmatpush1.msra.mxu0 %v2277
      %2561 = vmatprep.subr.mxu0 0.0
      %2562 = vmatpush1.msra.mxu0 %v2278
      %2563 = vmatprep.subr.mxu0 0.0
      %2564 = vmatpush1.msra.mxu0 %v2279
      %2565 = vmatprep.subr.mxu0 0.0
      %2566 = vmatpush1.msra.mxu0 %v2280
      %2567 = vmatprep.subr.mxu0 0.0
      %2568 = vmatpush1.msra.mxu0 %v2281
      %2569 = vmatprep.subr.mxu0 0.0
      %2570 = vmatpush1.msra.mxu0 %v2282
      %2571 = vmatprep.subr.mxu0 0.0
      %2572 = vmatpush1.msra.mxu0 %v2283
      %2573 = vmatprep.subr.mxu0 0.0
      %2574 = vmatpush1.msra.mxu0 %v2284
      %2575 = vmatprep.subr.mxu0 0.0
      %2576 = vmatpush1.msra.mxu0 %v2285
      %2577 = vmatprep.subr.mxu0 0.0
      %2578 = vmatpush1.msra.mxu0 %v2286
      %2579 = vmatprep.subr.mxu0 0.0
      %2580 = vmatpush1.msra.mxu0 %v2287
      %2581 = vmatprep.subr.mxu0 0.0
      %2582 = vmatpush1.msra.mxu0 %v2288
      %2583 = vmatprep.subr.mxu0 0.0
      %2584 = vmatpush1.msra.mxu0 %v2289
      %2585 = vmatprep.mubr.f32.mxu0 %v2243
      %2586 = vmatmul.mubr.f32.gmra.mrb[0].mxu0 %v2242
      %v2587 = vpop.f32.mrb[0].mxu0
      %v2588 = vadd.f32 %v2519, %v2587
      %v2589 = vpop.f32.mrb[0].mxu0
      %2590 = vdwg.mxu0
      %2591 = vmatprep.subr.mxu0 0.0
      %2592 = vmatpush1.msra.mxu0 %v2290
      %2593 = vmatprep.subr.mxu0 0.0
      %2594 = vmatpush1.msra.mxu0 %v2291
      %2595 = vmatprep.subr.mxu0 0.0
      %2596 = vmatpush1.msra.mxu0 %v2292
      %2597 = vmatprep.subr.mxu0 0.0
      %2598 = vmatpush1.msra.mxu0 %v2293
      %2599 = vmatprep.subr.mxu0 0.0
      %2600 = vmatpush1.msra.mxu0 %v2294
      %2601 = vmatprep.subr.mxu0 0.0
      %2602 = vmatpush1.msra.mxu0 %v2295
      %2603 = vmatprep.subr.mxu0 0.0
      %2604 = vmatpush1.msra.mxu0 %v2296
      %2605 = vmatprep.subr.mxu0 0.0
      %2606 = vmatpush1.msra.mxu0 %v2297
      %2607 = vmatprep.subr.mxu0 0.0
      %2608 = vmatpush1.msra.mxu0 %v2298
      %2609 = vmatprep.subr.mxu0 0.0
      %2610 = vmatpush1.msra.mxu0 %v2299
      %2611 = vmatprep.subr.mxu0 0.0
      %2612 = vmatpush1.msra.mxu0 %v2300
      %2613 = vmatprep.subr.mxu0 0.0
      %2614 = vmatpush1.msra.mxu0 %v2301
      %2615 = vmatprep.subr.mxu0 0.0
      %2616 = vmatpush1.msra.mxu0 %v2302
      %2617 = vmatprep.subr.mxu0 0.0
      %2618 = vmatpush1.msra.mxu0 %v2303
      %2619 = vmatprep.subr.mxu0 0.0
      %2620 = vmatpush1.msra.mxu0 %v2304
      %2621 = vmatprep.subr.mxu0 0.0
      %2622 = vmatpush1.msra.mxu0 %v2305
      %2623 = vmatprep.subr.mxu0 0.0
      %2624 = vmatpush1.msra.mxu0 %v2306
      %2625 = vmatprep.subr.mxu0 0.0
      %2626 = vmatpush1.msra.mxu0 %v2307
      %2627 = vmatprep.subr.mxu0 0.0
      %2628 = vmatpush1.msra.mxu0 %v2308
      %2629 = vmatprep.subr.mxu0 0.0
      %2630 = vmatpush1.msra.mxu0 %v2309
      %2631 = vmatprep.subr.mxu0 0.0
      %2632 = vmatpush1.msra.mxu0 %v2310
      %2633 = vmatprep.subr.mxu0 0.0
      %2634 = vmatpush1.msra.mxu0 %v2311
      %2635 = vmatprep.subr.mxu0 0.0
      %2636 = vmatpush1.msra.mxu0 %v2312
      %2637 = vmatprep.subr.mxu0 0.0
      %2638 = vmatpush1.msra.mxu0 %v2313
      %2639 = vmatprep.subr.mxu0 0.0
      %2640 = vmatpush1.msra.mxu0 %v2314
      %2641 = vmatprep.subr.mxu0 0.0
      %2642 = vmatpush1.msra.mxu0 %v2315
      %2643 = vmatprep.subr.mxu0 0.0
      %2644 = vmatpush1.msra.mxu0 %v2316
      %2645 = vmatprep.subr.mxu0 0.0
      %2646 = vmatpush1.msra.mxu0 %v2317
      %2647 = vmatprep.subr.mxu0 0.0
      %2648 = vmatpush1.msra.mxu0 %v2318
      %2649 = vmatprep.subr.mxu0 0.0
      %2650 = vmatpush1.msra.mxu0 %v2319
      %2651 = vmatprep.subr.mxu0 0.0
      %2652 = vmatpush1.msra.mxu0 %v2320
      %2653 = vmatprep.subr.mxu0 0.0
      %2654 = vmatpush1.msra.mxu0 %v2321
      %2655 = vmatprep.mubr.f32.mxu0 %v2245
      %2656 = vmatmul.mubr.f32.gmra.mrb[0].mxu0 %v2244
      %v2657 = vpop.f32.mrb[0].mxu0
      %v2658 = vadd.f32 %v2588, %v2657
      %v2659 = vpop.f32.mrb[0].mxu0
      %2660 = vdwg.mxu0
      %2661 = vmatprep.subr.mxu0 0.0
      %2662 = vmatpush1.msra.mxu0 %v2322
      %2663 = vmatprep.subr.mxu0 0.0
      %2664 = vmatpush1.msra.mxu0 %v2323
      %2665 = vmatprep.subr.mxu0 0.0
      %2666 = vmatpush1.msra.mxu0 %v2324
      %2667 = vmatprep.subr.mxu0 0.0
      %2668 = vmatpush1.msra.mxu0 %v2325
      %2669 = vmatprep.subr.mxu0 0.0
      %2670 = vmatpush1.msra.mxu0 %v2326
      %2671 = vmatprep.subr.mxu0 0.0
      %2672 = vmatpush1.msra.mxu0 %v2327
      %2673 = vmatprep.subr.mxu0 0.0
      %2674 = vmatpush1.msra.mxu0 %v2328
      %2675 = vmatprep.subr.mxu0 0.0
      %2676 = vmatpush1.msra.mxu0 %v2329
      %2677 = vmatprep.subr.mxu0 0.0
      %2678 = vmatpush1.msra.mxu0 %v2330
      %2679 = vmatprep.subr.mxu0 0.0
      %2680 = vmatpush1.msra.mxu0 %v2331
      %2681 = vmatprep.subr.mxu0 0.0
      %2682 = vmatpush1.msra.mxu0 %v2332
      %2683 = vmatprep.subr.mxu0 0.0
      %2684 = vmatpush1.msra.mxu0 %v2333
      %2685 = vmatprep.subr.mxu0 0.0
      %2686 = vmatpush1.msra.mxu0 %v2334
      %2687 = vmatprep.subr.mxu0 0.0
      %2688 = vmatpush1.msra.mxu0 %v2335
      %2689 = vmatprep.subr.mxu0 0.0
      %2690 = vmatpush1.msra.mxu0 %v2336
      %2691 = vmatprep.subr.mxu0 0.0
      %2692 = vmatpush1.msra.mxu0 %v2337
      %2693 = vmatprep.subr.mxu0 0.0
      %2694 = vmatpush1.msra.mxu0 %v2338
      %2695 = vmatprep.subr.mxu0 0.0
      %2696 = vmatpush1.msra.mxu0 %v2339
      %2697 = vmatprep.subr.mxu0 0.0
      %2698 = vmatpush1.msra.mxu0 %v2340
      %2699 = vmatprep.subr.mxu0 0.0
      %2700 = vmatpush1.msra.mxu0 %v2341
      %2701 = vmatprep.subr.mxu0 0.0
      %2702 = vmatpush1.msra.mxu0 %v2342
      %2703 = vmatprep.subr.mxu0 0.0
      %2704 = vmatpush1.msra.mxu0 %v2343
      %2705 = vmatprep.subr.mxu0 0.0
      %2706 = vmatpush1.msra.mxu0 %v2344
      %2707 = vmatprep.subr.mxu0 0.0
      %2708 = vmatpush1.msra.mxu0 %v2345
      %2709 = vmatprep.subr.mxu0 0.0
      %2710 = vmatpush1.msra.mxu0 %v2346
      %2711 = vmatprep.subr.mxu0 0.0
      %2712 = vmatpush1.msra.mxu0 %v2347
      %2713 = vmatprep.subr.mxu0 0.0
      %2714 = vmatpush1.msra.mxu0 %v2348
      %2715 = vmatprep.subr.mxu0 0.0
      %2716 = vmatpush1.msra.mxu0 %v2349
      %2717 = vmatprep.subr.mxu0 0.0
      %2718 = vmatpush1.msra.mxu0 %v2350
      %2719 = vmatprep.subr.mxu0 0.0
      %2720 = vmatpush1.msra.mxu0 %v2351
      %2721 = vmatprep.subr.mxu0 0.0
      %2722 = vmatpush1.msra.mxu0 %v2352
      %2723 = vmatprep.subr.mxu0 0.0
      %2724 = vmatpush1.msra.mxu0 %v2353
      %2725 = vmatprep.mubr.f32.mxu0 %v2247
      %2726 = vmatmul.mubr.f32.gmra.mrb[0].mxu0 %v2246
      %v2727 = vpop.f32.mrb[0].mxu0
      %v2728 = vadd.f32 %v2658, %v2727
      %v2729 = vpop.f32.mrb[0].mxu0
      %2730 = vdwg.mxu0
      %2731 = vmatprep.subr.mxu0 0.0
      %2732 = vmatpush1.msra.mxu0 %v2354
      %2733 = vmatprep.subr.mxu0 0.0
      %2734 = vmatpush1.msra.mxu0 %v2355
      %2735 = vmatprep.subr.mxu0 0.0
      %2736 = vmatpush1.msra.mxu0 %v2356
      %2737 = vmatprep.subr.mxu0 0.0
      %2738 = vmatpush1.msra.mxu0 %v2357
      %2739 = vmatprep.subr.mxu0 0.0
      %2740 = vmatpush1.msra.mxu0 %v2358
      %2741 = vmatprep.subr.mxu0 0.0
      %2742 = vmatpush1.msra.mxu0 %v2359
      %2743 = vmatprep.subr.mxu0 0.0
      %2744 = vmatpush1.msra.mxu0 %v2360
      %2745 = vmatprep.subr.mxu0 0.0
      %2746 = vmatpush1.msra.mxu0 %v2361
      %2747 = vmatprep.subr.mxu0 0.0
      %2748 = vmatpush1.msra.mxu0 %v2362
      %2749 = vmatprep.subr.mxu0 0.0
      %2750 = vmatpush1.msra.mxu0 %v2363
      %2751 = vmatprep.subr.mxu0 0.0
      %2752 = vmatpush1.msra.mxu0 %v2364
      %2753 = vmatprep.subr.mxu0 0.0
      %2754 = vmatpush1.msra.mxu0 %v2365
      %2755 = vmatprep.subr.mxu0 0.0
      %2756 = vmatpush1.msra.mxu0 %v2366
      %2757 = vmatprep.subr.mxu0 0.0
      %2758 = vmatpush1.msra.mxu0 %v2367
      %2759 = vmatprep.subr.mxu0 0.0
      %2760 = vmatpush1.msra.mxu0 %v2368
      %2761 = vmatprep.subr.mxu0 0.0
      %2762 = vmatpush1.msra.mxu0 %v2369
      %2763 = vmatprep.subr.mxu0 0.0
      %2764 = vmatpush1.msra.mxu0 %v2370
      %2765 = vmatprep.subr.mxu0 0.0
      %2766 = vmatpush1.msra.mxu0 %v2371
      %2767 = vmatprep.subr.mxu0 0.0
      %2768 = vmatpush1.msra.mxu0 %v2372
      %2769 = vmatprep.subr.mxu0 0.0
      %2770 = vmatpush1.msra.mxu0 %v2373
      %2771 = vmatprep.subr.mxu0 0.0
      %2772 = vmatpush1.msra.mxu0 %v2374
      %2773 = vmatprep.subr.mxu0 0.0
      %2774 = vmatpush1.msra.mxu0 %v2375
      %2775 = vmatprep.subr.mxu0 0.0
      %2776 = vmatpush1.msra.mxu0 %v2376
      %2777 = vmatprep.subr.mxu0 0.0
      %2778 = vmatpush1.msra.mxu0 %v2377
      %2779 = vmatprep.subr.mxu0 0.0
      %2780 = vmatpush1.msra.mxu0 %v2378
      %2781 = vmatprep.subr.mxu0 0.0
      %2782 = vmatpush1.msra.mxu0 %v2379
      %2783 = vmatprep.subr.mxu0 0.0
      %2784 = vmatpush1.msra.mxu0 %v2380
      %2785 = vmatprep.subr.mxu0 0.0
      %2786 = vmatpush1.msra.mxu0 %v2381
      %2787 = vmatprep.subr.mxu0 0.0
      %2788 = vmatpush1.msra.mxu0 %v2382
      %2789 = vmatprep.subr.mxu0 0.0
      %2790 = vmatpush1.msra.mxu0 %v2383
      %2791 = vmatprep.subr.mxu0 0.0
      %2792 = vmatpush1.msra.mxu0 %v2384
      %2793 = vmatprep.subr.mxu0 0.0
      %2794 = vmatpush1.msra.mxu0 %v2385
      %2795 = vmatprep.mubr.f32.mxu0 %v2249
      %2796 = vmatmul.mubr.f32.gmra.mrb[0].mxu0 %v2248
      %v2797 = vpop.f32.mrb[0].mxu0
      %v2798 = vadd.f32 %v2728, %v2797
      %v2799 = vpop.f32.mrb[0].mxu0
      %2800 = vdwg.mxu0
      %2801 = vmatprep.subr.mxu0 0.0
      %2802 = vmatpush1.msra.mxu0 %v2386
      %2803 = vmatprep.subr.mxu0 0.0
      %2804 = vmatpush1.msra.mxu0 %v2387
      %2805 = vmatprep.subr.mxu0 0.0
      %2806 = vmatpush1.msra.mxu0 %v2388
      %2807 = vmatprep.subr.mxu0 0.0
      %2808 = vmatpush1.msra.mxu0 %v2389
      %2809 = vmatprep.subr.mxu0 0.0
      %2810 = vmatpush1.msra.mxu0 %v2390
      %2811 = vmatprep.subr.mxu0 0.0
      %2812 = vmatpush1.msra.mxu0 %v2391
      %2813 = vmatprep.subr.mxu0 0.0
      %2814 = vmatpush1.msra.mxu0 %v2392
      %2815 = vmatprep.subr.mxu0 0.0
      %2816 = vmatpush1.msra.mxu0 %v2393
      %2817 = vmatprep.subr.mxu0 0.0
      %2818 = vmatpush1.msra.mxu0 %v2394
      %2819 = vmatprep.subr.mxu0 0.0
      %2820 = vmatpush1.msra.mxu0 %v2395
      %2821 = vmatprep.subr.mxu0 0.0
      %2822 = vmatpush1.msra.mxu0 %v2396
      %2823 = vmatprep.subr.mxu0 0.0
      %2824 = vmatpush1.msra.mxu0 %v2397
      %2825 = vmatprep.subr.mxu0 0.0
      %2826 = vmatpush1.msra.mxu0 %v2398
      %2827 = vmatprep.subr.mxu0 0.0
      %2828 = vmatpush1.msra.mxu0 %v2399
      %2829 = vmatprep.subr.mxu0 0.0
      %2830 = vmatpush1.msra.mxu0 %v2400
      %2831 = vmatprep.subr.mxu0 0.0
      %2832 = vmatpush1.msra.mxu0 %v2401
      %2833 = vmatprep.subr.mxu0 0.0
      %2834 = vmatpush1.msra.mxu0 %v2402
      %2835 = vmatprep.subr.mxu0 0.0
      %2836 = vmatpush1.msra.mxu0 %v2403
      %2837 = vmatprep.subr.mxu0 0.0
      %2838 = vmatpush1.msra.mxu0 %v2404
      %2839 = vmatprep.subr.mxu0 0.0
      %2840 = vmatpush1.msra.mxu0 %v2405
      %2841 = vmatprep.subr.mxu0 0.0
      %2842 = vmatpush1.msra.mxu0 %v2406
      %2843 = vmatprep.subr.mxu0 0.0
      %2844 = vmatpush1.msra.mxu0 %v2407
      %2845 = vmatprep.subr.mxu0 0.0
      %2846 = vmatpush1.msra.mxu0 %v2408
      %2847 = vmatprep.subr.mxu0 0.0
      %2848 = vmatpush1.msra.mxu0 %v2409
      %2849 = vmatprep.subr.mxu0 0.0
      %2850 = vmatpush1.msra.mxu0 %v2410
      %2851 = vmatprep.subr.mxu0 0.0
      %2852 = vmatpush1.msra.mxu0 %v2411
      %2853 = vmatprep.subr.mxu0 0.0
      %2854 = vmatpush1.msra.mxu0 %v2412
      %2855 = vmatprep.subr.mxu0 0.0
      %2856 = vmatpush1.msra.mxu0 %v2413
      %2857 = vmatprep.subr.mxu0 0.0
      %2858 = vmatpush1.msra.mxu0 %v2414
      %2859 = vmatprep.subr.mxu0 0.0
      %2860 = vmatpush1.msra.mxu0 %v2415
      %2861 = vmatprep.subr.mxu0 0.0
      %2862 = vmatpush1.msra.mxu0 %v2416
      %2863 = vmatprep.subr.mxu0 0.0
      %2864 = vmatpush1.msra.mxu0 %v2417
      %2865 = vmatprep.mubr.f32.mxu0 %v2251
      %2866 = vmatmul.mubr.f32.gmra.mrb[0].mxu0 %v2250
      %v2867 = vpop.f32.mrb[0].mxu0
      %v2868 = vadd.f32 %v2798, %v2867
      %v2869 = vpop.f32.mrb[0].mxu0
      %2870 = vdwg.mxu0
      %2871 = vmatprep.subr.mxu0 0.0
      %2872 = vmatpush1.msra.mxu0 %v2418
      %2873 = vmatprep.subr.mxu0 0.0
      %2874 = vmatpush1.msra.mxu0 %v2419
      %2875 = vmatprep.subr.mxu0 0.0
      %2876 = vmatpush1.msra.mxu0 %v2420
      %2877 = vmatprep.subr.mxu0 0.0
      %2878 = vmatpush1.msra.mxu0 %v2421
      %2879 = vmatprep.subr.mxu0 0.0
      %2880 = vmatpush1.msra.mxu0 %v2422
      %2881 = vmatprep.subr.mxu0 0.0
      %2882 = vmatpush1.msra.mxu0 %v2423
      %2883 = vmatprep.subr.mxu0 0.0
      %2884 = vmatpush1.msra.mxu0 %v2424
      %2885 = vmatprep.subr.mxu0 0.0
      %2886 = vmatpush1.msra.mxu0 %v2425
      %2887 = vmatprep.subr.mxu0 0.0
      %2888 = vmatpush1.msra.mxu0 %v2426
      %2889 = vmatprep.subr.mxu0 0.0
      %2890 = vmatpush1.msra.mxu0 %v2427
      %2891 = vmatprep.subr.mxu0 0.0
      %2892 = vmatpush1.msra.mxu0 %v2428
      %2893 = vmatprep.subr.mxu0 0.0
      %2894 = vmatpush1.msra.mxu0 %v2429
      %2895 = vmatprep.subr.mxu0 0.0
      %2896 = vmatpush1.msra.mxu0 %v2430
      %2897 = vmatprep.subr.mxu0 0.0
      %2898 = vmatpush1.msra.mxu0 %v2431
      %2899 = vmatprep.subr.mxu0 0.0
      %2900 = vmatpush1.msra.mxu0 %v2432
      %2901 = vmatprep.subr.mxu0 0.0
      %2902 = vmatpush1.msra.mxu0 %v2433
      %2903 = vmatprep.subr.mxu0 0.0
      %2904 = vmatpush1.msra.mxu0 %v2434
      %2905 = vmatprep.subr.mxu0 0.0
      %2906 = vmatpush1.msra.mxu0 %v2435
      %2907 = vmatprep.subr.mxu0 0.0
      %2908 = vmatpush1.msra.mxu0 %v2436
      %2909 = vmatprep.subr.mxu0 0.0
      %2910 = vmatpush1.msra.mxu0 %v2437
      %2911 = vmatprep.subr.mxu0 0.0
      %2912 = vmatpush1.msra.mxu0 %v2438
      %2913 = vmatprep.subr.mxu0 0.0
      %2914 = vmatpush1.msra.mxu0 %v2439
      %2915 = vmatprep.subr.mxu0 0.0
      %2916 = vmatpush1.msra.mxu0 %v2440
      %2917 = vmatprep.subr.mxu0 0.0
      %2918 = vmatpush1.msra.mxu0 %v2441
      %2919 = vmatprep.subr.mxu0 0.0
      %2920 = vmatpush1.msra.mxu0 %v2442
      %2921 = vmatprep.subr.mxu0 0.0
      %2922 = vmatpush1.msra.mxu0 %v2443
      %2923 = vmatprep.subr.mxu0 0.0
      %2924 = vmatpush1.msra.mxu0 %v2444
      %2925 = vmatprep.subr.mxu0 0.0
      %2926 = vmatpush1.msra.mxu0 %v2445
      %2927 = vmatprep.subr.mxu0 0.0
      %2928 = vmatpush1.msra.mxu0 %v2446
      %2929 = vmatprep.subr.mxu0 0.0
      %2930 = vmatpush1.msra.mxu0 %v2447
      %2931 = vmatprep.subr.mxu0 0.0
      %2932 = vmatpush1.msra.mxu0 %v2448
      %2933 = vmatprep.subr.mxu0 0.0
      %2934 = vmatpush1.msra.mxu0 %v2449
      %2935 = vmatprep.mubr.f32.mxu0 %v2253
      %2936 = vmatmul.mubr.f32.gmra.mrb[0].mxu0 %v2252
      %v2937 = vpop.f32.mrb[0].mxu0
      %v2938 = vadd.f32 %v2868, %v2937
      %v2939 = vpop.f32.mrb[0].mxu0
      %2940 = vdwg.mxu0
      %2941 = vmatprep.subr.mxu0 0.0
      %2942 = vmatpush1.msra.mxu0 %v2450
      %2943 = vmatprep.subr.mxu0 0.0
      %2944 = vmatpush1.msra.mxu0 %v2451
      %2945 = vmatprep.subr.mxu0 0.0
      %2946 = vmatpush1.msra.mxu0 %v2452
      %2947 = vmatprep.subr.mxu0 0.0
      %2948 = vmatpush1.msra.mxu0 %v2453
      %2949 = vmatprep.subr.mxu0 0.0
      %2950 = vmatpush1.msra.mxu0 %v2454
      %2951 = vmatprep.subr.mxu0 0.0
      %2952 = vmatpush1.msra.mxu0 %v2455
      %2953 = vmatprep.subr.mxu0 0.0
      %2954 = vmatpush1.msra.mxu0 %v2456
      %2955 = vmatprep.subr.mxu0 0.0
      %2956 = vmatpush1.msra.mxu0 %v2457
      %2957 = vmatprep.subr.mxu0 0.0
      %2958 = vmatpush1.msra.mxu0 %v2458
      %2959 = vmatprep.subr.mxu0 0.0
      %2960 = vmatpush1.msra.mxu0 %v2459
      %2961 = vmatprep.subr.mxu0 0.0
      %2962 = vmatpush1.msra.mxu0 %v2460
      %2963 = vmatprep.subr.mxu0 0.0
      %2964 = vmatpush1.msra.mxu0 %v2461
      %2965 = vmatprep.subr.mxu0 0.0
      %2966 = vmatpush1.msra.mxu0 %v2462
      %2967 = vmatprep.subr.mxu0 0.0
      %2968 = vmatpush1.msra.mxu0 %v2463
      %2969 = vmatprep.subr.mxu0 0.0
      %2970 = vmatpush1.msra.mxu0 %v2464
      %2971 = vmatprep.subr.mxu0 0.0
      %2972 = vmatpush1.msra.mxu0 %v2465
      %2973 = vmatprep.subr.mxu0 0.0
      %2974 = vmatpush1.msra.mxu0 %v2466
      %2975 = vmatprep.subr.mxu0 0.0
      %2976 = vmatpush1.msra.mxu0 %v2467
      %2977 = vmatprep.subr.mxu0 0.0
      %2978 = vmatpush1.msra.mxu0 %v2468
      %2979 = vmatprep.subr.mxu0 0.0
      %2980 = vmatpush1.msra.mxu0 %v2469
      %2981 = vmatprep.subr.mxu0 0.0
      %2982 = vmatpush1.msra.mxu0 %v2470
      %2983 = vmatprep.subr.mxu0 0.0
      %2984 = vmatpush1.msra.mxu0 %v2471
      %2985 = vmatprep.subr.mxu0 0.0
      %2986 = vmatpush1.msra.mxu0 %v2472
      %2987 = vmatprep.subr.mxu0 0.0
      %2988 = vmatpush1.msra.mxu0 %v2473
      %2989 = vmatprep.subr.mxu0 0.0
      %2990 = vmatpush1.msra.mxu0 %v2474
      %2991 = vmatprep.subr.mxu0 0.0
      %2992 = vmatpush1.msra.mxu0 %v2475
      %2993 = vmatprep.subr.mxu0 0.0
      %2994 = vmatpush1.msra.mxu0 %v2476
      %2995 = vmatprep.subr.mxu0 0.0
      %2996 = vmatpush1.msra.mxu0 %v2477
      %2997 = vmatprep.subr.mxu0 0.0
      %2998 = vmatpush1.msra.mxu0 %v2478
      %2999 = vmatprep.subr.mxu0 0.0
      %3000 = vmatpush1.msra.mxu0 %v2479
      %3001 = vmatprep.subr.mxu0 0.0
      %3002 = vmatpush1.msra.mxu0 %v2480
      %3003 = vmatprep.subr.mxu0 0.0
      %3004 = vmatpush1.msra.mxu0 %v2481
      %3005 = vmatprep.mubr.f32.mxu0 %v2255
      %3006 = vmatmul.mubr.f32.gmra.mrb[0].mxu0 %v2254
      %v3007 = vpop.f32.mrb[0].mxu0
      %v3008 = vadd.f32 %v2938, %v3007
      %v3009 = vpop.f32.mrb[0].mxu0
      %3010 = vdwg.mxu0
      %3011 = vmatprep.subr.mxu0 0.0
      %3012 = vmatpush1.msra.mxu0 %v2482
      %3013 = vmatprep.subr.mxu0 0.0
      %3014 = vmatpush1.msra.mxu0 %v2483
      %3015 = vmatprep.subr.mxu0 0.0
      %3016 = vmatpush1.msra.mxu0 %v2484
      %3017 = vmatprep.subr.mxu0 0.0
      %3018 = vmatpush1.msra.mxu0 %v2485
      %3019 = vmatprep.subr.mxu0 0.0
      %3020 = vmatpush1.msra.mxu0 %v2486
      %3021 = vmatprep.subr.mxu0 0.0
      %3022 = vmatpush1.msra.mxu0 %v2487
      %3023 = vmatprep.subr.mxu0 0.0
      %3024 = vmatpush1.msra.mxu0 %v2488
      %3025 = vmatprep.subr.mxu0 0.0
      %3026 = vmatpush1.msra.mxu0 %v2489
      %3027 = vmatprep.subr.mxu0 0.0
      %3028 = vmatpush1.msra.mxu0 %v2490
      %3029 = vmatprep.subr.mxu0 0.0
      %3030 = vmatpush1.msra.mxu0 %v2491
      %3031 = vmatprep.subr.mxu0 0.0
      %3032 = vmatpush1.msra.mxu0 %v2492
      %3033 = vmatprep.subr.mxu0 0.0
      %3034 = vmatpush1.msra.mxu0 %v2493
      %3035 = vmatprep.subr.mxu0 0.0
      %3036 = vmatpush1.msra.mxu0 %v2494
      %3037 = vmatprep.subr.mxu0 0.0
      %3038 = vmatpush1.msra.mxu0 %v2495
      %3039 = vmatprep.subr.mxu0 0.0
      %3040 = vmatpush1.msra.mxu0 %v2496
      %3041 = vmatprep.subr.mxu0 0.0
      %3042 = vmatpush1.msra.mxu0 %v2497
      %3043 = vmatprep.subr.mxu0 0.0
      %3044 = vmatpush1.msra.mxu0 %v2498
      %3045 = vmatprep.subr.mxu0 0.0
      %3046 = vmatpush1.msra.mxu0 %v2499
      %3047 = vmatprep.subr.mxu0 0.0
      %3048 = vmatpush1.msra.mxu0 %v2500
      %3049 = vmatprep.subr.mxu0 0.0
      %3050 = vmatpush1.msra.mxu0 %v2501
      %3051 = vmatprep.subr.mxu0 0.0
      %3052 = vmatpush1.msra.mxu0 %v2502
      %3053 = vmatprep.subr.mxu0 0.0
      %3054 = vmatpush1.msra.mxu0 %v2503
      %3055 = vmatprep.subr.mxu0 0.0
      %3056 = vmatpush1.msra.mxu0 %v2504
      %3057 = vmatprep.subr.mxu0 0.0
      %3058 = vmatpush1.msra.mxu0 %v2505
      %3059 = vmatprep.subr.mxu0 0.0
      %3060 = vmatpush1.msra.mxu0 %v2506
      %3061 = vmatprep.subr.mxu0 0.0
      %3062 = vmatpush1.msra.mxu0 %v2507
      %3063 = vmatprep.subr.mxu0 0.0
      %3064 = vmatpush1.msra.mxu0 %v2508
      %3065 = vmatprep.subr.mxu0 0.0
      %3066 = vmatpush1.msra.mxu0 %v2509
      %3067 = vmatprep.subr.mxu0 0.0
      %3068 = vmatpush1.msra.mxu0 %v2510
      %3069 = vmatprep.subr.mxu0 0.0
      %3070 = vmatpush1.msra.mxu0 %v2511
      %3071 = vmatprep.subr.mxu0 0.0
      %3072 = vmatpush1.msra.mxu0 %v2512
      %3073 = vmatprep.subr.mxu0 0.0
      %3074 = vmatpush1.msra.mxu0 %v2513
      %3075 = vmatprep.mubr.f32.mxu0 %v2257
      %3076 = vmatmul.mubr.f32.gmra.mrb[0].mxu0 %v2256
      %v3077 = vpop.f32.mrb[0].mxu0
      %v3078 = vadd.f32 %v3008, %v3077
      %v3079 = vpop.f32.mrb[0].mxu0
      %3080 = vdwg.mxu0
      %v3081 = vadd.f32 %v1522, %v3078
      %v3082 = vld [vmem:[%s11] sm:$0x1]
      %v3083 = vld [vmem:[%s12] sm:$0x1]
      %v3084 = vsel %vm448, %v3081, 0.0
      %3085 = vadd.xlane.f32.xlu0 %v3084
      %v3086 = vpop.xlane.xlu0 %3085
      %v3087 = vmul.f32 %v3086, %v1498
      %v3088 = vsub.f32 %v3081, %v3087
      %v3089 = vmul.f32 %v3088, %v3088
      %v3090 = vsel %vm448, %v3089, 0.0
      %3091 = vadd.xlane.f32.xlu0 %v3090
      %v3092 = vpop.xlane.xlu0 %3091
      %v3093 = vmul.f32 %v3092, %v1498
      %v3094 = vadd.f32 %v3093, 1e-05
      %v3095 = vrsqrt.pop %v3094
      %v3096 = vmul.f32 %v3088, %v3095
      %v3098 = vlaneseq
      %v3099 = vshrl.u32 %v3098, 7
      %v3100 = vsub.s32 0, %v3099
      %v3101 = vrot.slane %v3082, %v3100
      %v3103 = vmul.f32 %v3096, %v3101
      %v3105 = vlaneseq
      %v3106 = vshrl.u32 %v3105, 7
      %v3107 = vsub.s32 0, %v3106
      %v3108 = vrot.slane %v3083, %v3107
      %v3110 = vadd.f32 %v3103, %v3108
      %3111 = vst.msk [vmem:[%s435] sm:$0xff] %vm448, %v3110
      %p3112 = scmp.lt.s32.totalorder %s24, 1
      %s3113 = scalar_select %p3112, %s24, 1
      %s3114 = smul.addr %s3113, 8
      %s3115 = scalar_lea.vmem %s13, %s3114
      // Predicated region
      $region73: #{closed_call.8} parent=71 // pred_check
        %p3116 = pneg %p320
      $region74: #{closed_call.8} parent=71 // pred_check_branch
        %3118 = sbr.rel (%p3116) target = $region76
      $region75: #{closed_call.8} parent=71 // pred_region
        _
      $region76: #{closed_call.8} parent=71 // pred_fallthru
        _
    $region72: #{closed_call.8} parent=5 // pred_fallthru
      _
    %p3119 = scmp.le.s32.totalorder 2, %s19
    // Predicated region
    $region77: #{closed_call.8} parent=5 // pred_check
      %p3120 = pneg %p3119
    $region78: #{closed_call.8} parent=5 // pred_check_branch
      %3122 = sbr.rel (%p3120) target = $region80
    $region79: #{closed_call.8} parent=5 // pred_region
      %s3123 = ssub.s32 %s19, 2
      // Predicated region
      $region81: #{closed_call.8} parent=79 // pred_check
        %p3124 = pneg %p326
      $region82: #{closed_call.8} parent=79 // pred_check_branch
        %3126 = sbr.rel (%p3124) target = $region84
      $region83: #{closed_call.8} parent=79 // pred_region
        %p3127 = scmp.lt.s32.totalorder %s25, 1
        %s3128 = scalar_select %p3127, %s25, 1
        %s3129 = smul.addr %s3128, 8
        %s3130 = scalar_lea.vmem %s13, %s3129
      $region84: #{closed_call.8} parent=79 // pred_fallthru
        _
    $region80: #{closed_call.8} parent=5 // pred_fallthru
      _
  $region6: #{closed_call.8} parent=0 // loop_footer
    %s23 = sadd.s32 1, %s19
  $region7: #{closed_call.8} parent=0 // loop_footer_branch
    %18 = sbr.rel target = $region3
  $region8: #{closed_call.8} parent=0 // loop_exit
    _

// kernel: closed_call.9
$region0: #{closed_call.9}
  #allocation0 [shape = 'u32[]', space=smem, size = 0x4, offset = 0x4, fixed_abs, tag = 'smem constant byte address 0x4 - core index']
  #allocation1 [shape = 'u32[144,128]{1,0:T(1,128)}', space=vmem, size = 0x12000, scoped, tag = 'internal scratch']
  %s0 = inlined_call_operand.vmem [shape: f32[2,8,32], index: 0, kind: input, shape index: {}]
  %s1 = inlined_call_operand.vmem [shape: f32[2,8,32], index: 1, kind: input, shape index: {}]
  %s2 = inlined_call_operand.vmem [shape: f32[32,96], index: 2, kind: input, shape index: {}]
  %s3 = inlined_call_operand.vmem [shape: f32[1,96], index: 3, kind: input, shape index: {}]
  %s4 = inlined_call_operand.vmem [shape: f32[32,32], index: 4, kind: input, shape index: {}]
  %s5 = inlined_call_operand.vmem [shape: f32[1,32], index: 5, kind: input, shape index: {}]
  %s6 = inlined_call_operand.vmem [shape: f32[1,32], index: 6, kind: input, shape index: {}]
  %s7 = inlined_call_operand.vmem [shape: f32[1,32], index: 7, kind: input, shape index: {}]
  %s8 = inlined_call_operand.vmem [shape: f32[32,96], index: 8, kind: input, shape index: {}]
  %s9 = inlined_call_operand.vmem [shape: f32[1,96], index: 9, kind: input, shape index: {}]
  %s10 = inlined_call_operand.vmem [shape: f32[32,32], index: 10, kind: input, shape index: {}]
  %s11 = inlined_call_operand.vmem [shape: f32[1,32], index: 11, kind: input, shape index: {}]
  %s12 = inlined_call_operand.vmem [shape: f32[1,32], index: 12, kind: input, shape index: {}]
  %s13 = inlined_call_operand.vmem [shape: f32[1,32], index: 13, kind: input, shape index: {}]
  %s14 = inlined_call_operand.vmem [shape: f32[32,2048], index: 14, kind: input, shape index: {}]
  %s15 = inlined_call_operand.vmem [shape: f32[1,2048], index: 15, kind: input, shape index: {}]
  %s16 = inlined_call_operand.vmem [shape: f32[2048,32], index: 16, kind: input, shape index: {}]
  %s17 = inlined_call_operand.vmem [shape: f32[1,32], index: 17, kind: input, shape index: {}]
  %s18 = inlined_call_operand.vmem [shape: f32[1,32], index: 18, kind: input, shape index: {}]
  %s19 = inlined_call_operand.vmem [shape: f32[1,32], index: 19, kind: input, shape index: {}]
  %s20 = inlined_call_operand.vmem [shape: f32[2,8,32], index: 20, kind: output, shape index: {}]
  %s21 = sld [smem:[#allocation0]]
  $region113: #{closed_call.9} parent=0
    _
  %s23 = ssub.s32 1, %s21
  %s24 = scalar_select 0, %s23, %s21
  loop: start=0, step=1, limit=4
  $region2: #{closed_call.9} parent=0 // loop_pre_header
    _
  $region3: #{closed_call.9} parent=0 // loop_header
    %s26 = sphi 0, %s30
    %p27 = scmp.ge.s32.totalorder %s26, 4
    %s36 = sphi 0, %s38
    %s39 = sphi 0, %s36
    %s40 = sphi 0, %s39
    %s56 = sphi 0, %s40
    %s62 = sphi 0, %s64
    %s65 = sphi 0, %s62
    %s66 = sphi 0, %s65
    %s82 = sphi 0, %s66
    %s86 = sphi 0, %s86
    %s88 = sphi 0, %s86
    %s89 = sphi 0, %s88
    %s103 = sphi 0, %s89
    %s107 = sphi 0, %s107
    %s109 = sphi 0, %s107
    %s110 = sphi 0, %s109
    %s124 = sphi 0, %s110
    %s128 = sphi 0, %s128
    %s130 = sphi 0, %s128
    %s131 = sphi 0, %s130
    %s145 = sphi 0, %s131
    %s149 = sphi 0, %s149
    %s151 = sphi 0, %s149
    %s152 = sphi 0, %s151
    %s166 = sphi 0, %s152
    %s170 = sphi 0, %s170
    %s172 = sphi 0, %s170
    %s173 = sphi 0, %s172
    %s187 = sphi 0, %s173
    %s191 = sphi 0, %s191
    %s193 = sphi 0, %s191
    %s194 = sphi 0, %s193
    %s208 = sphi 0, %s194
    %s212 = sphi 0, %s212
    %s214 = sphi 0, %s212
    %s215 = sphi 0, %s214
    %s229 = sphi 0, %s215
    %s233 = sphi 0, %s233
    %s235 = sphi 0, %s233
    %s236 = sphi 0, %s235
    %s250 = sphi 0, %s236
    %s254 = sphi 0, %s254
    %s256 = sphi 0, %s254
    %s257 = sphi 0, %s256
    %s271 = sphi 0, %s257
    %s275 = sphi 0, %s275
    %s277 = sphi 0, %s275
    %s278 = sphi 0, %s277
    %s292 = sphi 0, %s278
    %s296 = sphi 0, %s296
    %s298 = sphi 0, %s296
    %s299 = sphi 0, %s298
    %s313 = sphi 0, %s299
    %s317 = sphi 0, %s317
    %s319 = sphi 0, %s317
    %s320 = sphi 0, %s319
    %s334 = sphi 0, %s320
    %s338 = sphi 0, %s338
    %s340 = sphi 0, %s338
    %s341 = sphi 0, %s340
    %s355 = sphi 0, %s341
    %s359 = sphi 0, %s359
    %s361 = sphi 0, %s359
    %s362 = sphi 0, %s361
    %s376 = sphi 0, %s362
    %s380 = sphi 0, %s380
    %s382 = sphi 0, %s380
    %s383 = sphi 0, %s382
    %s397 = sphi 0, %s383
    %s401 = sphi 0, %s401
    %s403 = sphi 0, %s401
    %s404 = sphi 0, %s403
    %s418 = sphi 0, %s404
    %s422 = sphi 0, %s422
    %s424 = sphi 0, %s422
    %s425 = sphi 0, %s424
    %s439 = sphi 0, %s425
    %s443 = sphi 0, %s443
    %s445 = sphi 0, %s443
    %s446 = sphi 0, %s445
    %s460 = sphi 0, %s446
    %s466 = sphi 0, %s468
    %s469 = sphi 0, %s466
    %s470 = sphi 0, %s469
    %s486 = sphi 0, %s470
  $region4: #{closed_call.9} parent=0 // loop_header_branch
    %29 = sbr.rel (%p27) target = $region8
  $region5: #{closed_call.9} parent=0 // loop_body
    %s31 = ssub.s32 %s26, 1
    %s32 = ssub.s32 %s26, 2
    %s33 = sadd.s32 %s26, 1
    %s34 = ssub.s32 %s26, %s33
    %p35 = scmp.eq.s32.totalorder %s34, 0
    %s37 = sadd.s32 %s36, 1
    %s38 = scalar_select %p35, %s36, %s37
    %p41 = pneg %p35
    %p42 = scmp.eq.s32.totalorder %s26, 1
    %p43 = por %p41, %p42
    %p44 = scmp.ne.s32.totalorder %s36, %s39
    %p45 = scmp.eq.s32.totalorder %s26, 0
    %p46 = por %p44, %p45
    %p47 = scmp.ne.s32.totalorder %s36, %s39
    %p48 = scmp.eq.s32.totalorder %s31, 1
    %p49 = por %p47, %p48
    %p50 = scmp.ne.s32.totalorder %s39, %s40
    %p51 = scmp.eq.s32.totalorder %s31, 0
    %p52 = por %p50, %p51
    %p53 = scmp.ne.s32.totalorder %s39, %s40
    %p54 = scmp.eq.s32.totalorder %s32, 1
    %p55 = por %p53, %p54
    %p57 = scmp.ne.s32.totalorder %s40, %s56
    %p58 = scmp.eq.s32.totalorder %s32, 0
    %p59 = por %p57, %p58
    %s60 = ssub.s32 %s26, %s33
    %p61 = scmp.eq.s32.totalorder %s60, 0
    %s63 = sadd.s32 %s62, 1
    %s64 = scalar_select %p61, %s62, %s63
    %p67 = pneg %p61
    %p68 = scmp.eq.s32.totalorder %s26, 1
    %p69 = por %p67, %p68
    %p70 = scmp.ne.s32.totalorder %s62, %s65
    %p71 = scmp.eq.s32.totalorder %s26, 0
    %p72 = por %p70, %p71
    %p73 = scmp.ne.s32.totalorder %s62, %s65
    %p74 = scmp.eq.s32.totalorder %s31, 1
    %p75 = por %p73, %p74
    %p76 = scmp.ne.s32.totalorder %s65, %s66
    %p77 = scmp.eq.s32.totalorder %s31, 0
    %p78 = por %p76, %p77
    %p79 = scmp.ne.s32.totalorder %s65, %s66
    %p80 = scmp.eq.s32.totalorder %s32, 1
    %p81 = por %p79, %p80
    %p83 = scmp.ne.s32.totalorder %s66, %s82
    %p84 = scmp.eq.s32.totalorder %s32, 0
    %p85 = por %p83, %p84
    %s87 = sadd.s32 %s86, 1
    %p90 = scmp.eq.s32.totalorder %s26, 1
    %p91 = scmp.ne.s32.totalorder %s86, %s88
    %p92 = scmp.eq.s32.totalorder %s26, 0
    %p93 = por %p91, %p92
    %p94 = scmp.ne.s32.totalorder %s86, %s88
    %p95 = scmp.eq.s32.totalorder %s31, 1
    %p96 = por %p94, %p95
    %p97 = scmp.ne.s32.totalorder %s88, %s89
    %p98 = scmp.eq.s32.totalorder %s31, 0
    %p99 = por %p97, %p98
    %p100 = scmp.ne.s32.totalorder %s88, %s89
    %p101 = scmp.eq.s32.totalorder %s32, 1
    %p102 = por %p100, %p101
    %p104 = scmp.ne.s32.totalorder %s89, %s103
    %p105 = scmp.eq.s32.totalorder %s32, 0
    %p106 = por %p104, %p105
    %s108 = sadd.s32 %s107, 1
    %p111 = scmp.eq.s32.totalorder %s26, 1
    %p112 = scmp.ne.s32.totalorder %s107, %s109
    %p113 = scmp.eq.s32.totalorder %s26, 0
    %p114 = por %p112, %p113
    %p115 = scmp.ne.s32.totalorder %s107, %s109
    %p116 = scmp.eq.s32.totalorder %s31, 1
    %p117 = por %p115, %p116
    %p118 = scmp.ne.s32.totalorder %s109, %s110
    %p119 = scmp.eq.s32.totalorder %s31, 0
    %p120 = por %p118, %p119
    %p121 = scmp.ne.s32.totalorder %s109, %s110
    %p122 = scmp.eq.s32.totalorder %s32, 1
    %p123 = por %p121, %p122
    %p125 = scmp.ne.s32.totalorder %s110, %s124
    %p126 = scmp.eq.s32.totalorder %s32, 0
    %p127 = por %p125, %p126
    %s129 = sadd.s32 %s128, 1
    %p132 = scmp.eq.s32.totalorder %s26, 1
    %p133 = scmp.ne.s32.totalorder %s128, %s130
    %p134 = scmp.eq.s32.totalorder %s26, 0
    %p135 = por %p133, %p134
    %p136 = scmp.ne.s32.totalorder %s128, %s130
    %p137 = scmp.eq.s32.totalorder %s31, 1
    %p138 = por %p136, %p137
    %p139 = scmp.ne.s32.totalorder %s130, %s131
    %p140 = scmp.eq.s32.totalorder %s31, 0
    %p141 = por %p139, %p140
    %p142 = scmp.ne.s32.totalorder %s130, %s131
    %p143 = scmp.eq.s32.totalorder %s32, 1
    %p144 = por %p142, %p143
    %p146 = scmp.ne.s32.totalorder %s131, %s145
    %p147 = scmp.eq.s32.totalorder %s32, 0
    %p148 = por %p146, %p147
    %s150 = sadd.s32 %s149, 1
    %p153 = scmp.eq.s32.totalorder %s26, 1
    %p154 = scmp.ne.s32.totalorder %s149, %s151
    %p155 = scmp.eq.s32.totalorder %s26, 0
    %p156 = por %p154, %p155
    %p157 = scmp.ne.s32.totalorder %s149, %s151
    %p158 = scmp.eq.s32.totalorder %s31, 1
    %p159 = por %p157, %p158
    %p160 = scmp.ne.s32.totalorder %s151, %s152
    %p161 = scmp.eq.s32.totalorder %s31, 0
    %p162 = por %p160, %p161
    %p163 = scmp.ne.s32.totalorder %s151, %s152
    %p164 = scmp.eq.s32.totalorder %s32, 1
    %p165 = por %p163, %p164
    %p167 = scmp.ne.s32.totalorder %s152, %s166
    %p168 = scmp.eq.s32.totalorder %s32, 0
    %p169 = por %p167, %p168
    %s171 = sadd.s32 %s170, 1
    %p174 = scmp.eq.s32.totalorder %s26, 1
    %p175 = scmp.ne.s32.totalorder %s170, %s172
    %p176 = scmp.eq.s32.totalorder %s26, 0
    %p177 = por %p175, %p176
    %p178 = scmp.ne.s32.totalorder %s170, %s172
    %p179 = scmp.eq.s32.totalorder %s31, 1
    %p180 = por %p178, %p179
    %p181 = scmp.ne.s32.totalorder %s172, %s173
    %p182 = scmp.eq.s32.totalorder %s31, 0
    %p183 = por %p181, %p182
    %p184 = scmp.ne.s32.totalorder %s172, %s173
    %p185 = scmp.eq.s32.totalorder %s32, 1
    %p186 = por %p184, %p185
    %p188 = scmp.ne.s32.totalorder %s173, %s187
    %p189 = scmp.eq.s32.totalorder %s32, 0
    %p190 = por %p188, %p189
    %s192 = sadd.s32 %s191, 1
    %p195 = scmp.eq.s32.totalorder %s26, 1
    %p196 = scmp.ne.s32.totalorder %s191, %s193
    %p197 = scmp.eq.s32.totalorder %s26, 0
    %p198 = por %p196, %p197
    %p199 = scmp.ne.s32.totalorder %s191, %s193
    %p200 = scmp.eq.s32.totalorder %s31, 1
    %p201 = por %p199, %p200
    %p202 = scmp.ne.s32.totalorder %s193, %s194
    %p203 = scmp.eq.s32.totalorder %s31, 0
    %p204 = por %p202, %p203
    %p205 = scmp.ne.s32.totalorder %s193, %s194
    %p206 = scmp.eq.s32.totalorder %s32, 1
    %p207 = por %p205, %p206
    %p209 = scmp.ne.s32.totalorder %s194, %s208
    %p210 = scmp.eq.s32.totalorder %s32, 0
    %p211 = por %p209, %p210
    %s213 = sadd.s32 %s212, 1
    %p216 = scmp.eq.s32.totalorder %s26, 1
    %p217 = scmp.ne.s32.totalorder %s212, %s214
    %p218 = scmp.eq.s32.totalorder %s26, 0
    %p219 = por %p217, %p218
    %p220 = scmp.ne.s32.totalorder %s212, %s214
    %p221 = scmp.eq.s32.totalorder %s31, 1
    %p222 = por %p220, %p221
    %p223 = scmp.ne.s32.totalorder %s214, %s215
    %p224 = scmp.eq.s32.totalorder %s31, 0
    %p225 = por %p223, %p224
    %p226 = scmp.ne.s32.totalorder %s214, %s215
    %p227 = scmp.eq.s32.totalorder %s32, 1
    %p228 = por %p226, %p227
    %p230 = scmp.ne.s32.totalorder %s215, %s229
    %p231 = scmp.eq.s32.totalorder %s32, 0
    %p232 = por %p230, %p231
    %s234 = sadd.s32 %s233, 1
    %p237 = scmp.eq.s32.totalorder %s26, 1
    %p238 = scmp.ne.s32.totalorder %s233, %s235
    %p239 = scmp.eq.s32.totalorder %s26, 0
    %p240 = por %p238, %p239
    %p241 = scmp.ne.s32.totalorder %s233, %s235
    %p242 = scmp.eq.s32.totalorder %s31, 1
    %p243 = por %p241, %p242
    %p244 = scmp.ne.s32.totalorder %s235, %s236
    %p245 = scmp.eq.s32.totalorder %s31, 0
    %p246 = por %p244, %p245
    %p247 = scmp.ne.s32.totalorder %s235, %s236
    %p248 = scmp.eq.s32.totalorder %s32, 1
    %p249 = por %p247, %p248
    %p251 = scmp.ne.s32.totalorder %s236, %s250
    %p252 = scmp.eq.s32.totalorder %s32, 0
    %p253 = por %p251, %p252
    %s255 = sadd.s32 %s254, 1
    %p258 = scmp.eq.s32.totalorder %s26, 1
    %p259 = scmp.ne.s32.totalorder %s254, %s256
    %p260 = scmp.eq.s32.totalorder %s26, 0
    %p261 = por %p259, %p260
    %p262 = scmp.ne.s32.totalorder %s254, %s256
    %p263 = scmp.eq.s32.totalorder %s31, 1
    %p264 = por %p262, %p263
    %p265 = scmp.ne.s32.totalorder %s256, %s257
    %p266 = scmp.eq.s32.totalorder %s31, 0
    %p267 = por %p265, %p266
    %p268 = scmp.ne.s32.totalorder %s256, %s257
    %p269 = scmp.eq.s32.totalorder %s32, 1
    %p270 = por %p268, %p269
    %p272 = scmp.ne.s32.totalorder %s257, %s271
    %p273 = scmp.eq.s32.totalorder %s32, 0
    %p274 = por %p272, %p273
    %s276 = sadd.s32 %s275, 1
    %p279 = scmp.eq.s32.totalorder %s26, 1
    %p280 = scmp.ne.s32.totalorder %s275, %s277
    %p281 = scmp.eq.s32.totalorder %s26, 0
    %p282 = por %p280, %p281
    %p283 = scmp.ne.s32.totalorder %s275, %s277
    %p284 = scmp.eq.s32.totalorder %s31, 1
    %p285 = por %p283, %p284
    %p286 = scmp.ne.s32.totalorder %s277, %s278
    %p287 = scmp.eq.s32.totalorder %s31, 0
    %p288 = por %p286, %p287
    %p289 = scmp.ne.s32.totalorder %s277, %s278
    %p290 = scmp.eq.s32.totalorder %s32, 1
    %p291 = por %p289, %p290
    %p293 = scmp.ne.s32.totalorder %s278, %s292
    %p294 = scmp.eq.s32.totalorder %s32, 0
    %p295 = por %p293, %p294
    %s297 = sadd.s32 %s296, 1
    %p300 = scmp.eq.s32.totalorder %s26, 1
    %p301 = scmp.ne.s32.totalorder %s296, %s298
    %p302 = scmp.eq.s32.totalorder %s26, 0
    %p303 = por %p301, %p302
    %p304 = scmp.ne.s32.totalorder %s296, %s298
    %p305 = scmp.eq.s32.totalorder %s31, 1
    %p306 = por %p304, %p305
    %p307 = scmp.ne.s32.totalorder %s298, %s299
    %p308 = scmp.eq.s32.totalorder %s31, 0
    %p309 = por %p307, %p308
    %p310 = scmp.ne.s32.totalorder %s298, %s299
    %p311 = scmp.eq.s32.totalorder %s32, 1
    %p312 = por %p310, %p311
    %p314 = scmp.ne.s32.totalorder %s299, %s313
    %p315 = scmp.eq.s32.totalorder %s32, 0
    %p316 = por %p314, %p315
    %s318 = sadd.s32 %s317, 1
    %p321 = scmp.eq.s32.totalorder %s26, 1
    %p322 = scmp.ne.s32.totalorder %s317, %s319
    %p323 = scmp.eq.s32.totalorder %s26, 0
    %p324 = por %p322, %p323
    %p325 = scmp.ne.s32.totalorder %s317, %s319
    %p326 = scmp.eq.s32.totalorder %s31, 1
    %p327 = por %p325, %p326
    %p328 = scmp.ne.s32.totalorder %s319, %s320
    %p329 = scmp.eq.s32.totalorder %s31, 0
    %p330 = por %p328, %p329
    %p331 = scmp.ne.s32.totalorder %s319, %s320
    %p332 = scmp.eq.s32.totalorder %s32, 1
    %p333 = por %p331, %p332
    %p335 = scmp.ne.s32.totalorder %s320, %s334
    %p336 = scmp.eq.s32.totalorder %s32, 0
    %p337 = por %p335, %p336
    %s339 = sadd.s32 %s338, 1
    %p342 = scmp.eq.s32.totalorder %s26, 1
    %p343 = scmp.ne.s32.totalorder %s338, %s340
    %p344 = scmp.eq.s32.totalorder %s26, 0
    %p345 = por %p343, %p344
    %p346 = scmp.ne.s32.totalorder %s338, %s340
    %p347 = scmp.eq.s32.totalorder %s31, 1
    %p348 = por %p346, %p347
    %p349 = scmp.ne.s32.totalorder %s340, %s341
    %p350 = scmp.eq.s32.totalorder %s31, 0
    %p351 = por %p349, %p350
    %p352 = scmp.ne.s32.totalorder %s340, %s341
    %p353 = scmp.eq.s32.totalorder %s32, 1
    %p354 = por %p352, %p353
    %p356 = scmp.ne.s32.totalorder %s341, %s355
    %p357 = scmp.eq.s32.totalorder %s32, 0
    %p358 = por %p356, %p357
    %s360 = sadd.s32 %s359, 1
    %p363 = scmp.eq.s32.totalorder %s26, 1
    %p364 = scmp.ne.s32.totalorder %s359, %s361
    %p365 = scmp.eq.s32.totalorder %s26, 0
    %p366 = por %p364, %p365
    %p367 = scmp.ne.s32.totalorder %s359, %s361
    %p368 = scmp.eq.s32.totalorder %s31, 1
    %p369 = por %p367, %p368
    %p370 = scmp.ne.s32.totalorder %s361, %s362
    %p371 = scmp.eq.s32.totalorder %s31, 0
    %p372 = por %p370, %p371
    %p373 = scmp.ne.s32.totalorder %s361, %s362
    %p374 = scmp.eq.s32.totalorder %s32, 1
    %p375 = por %p373, %p374
    %p377 = scmp.ne.s32.totalorder %s362, %s376
    %p378 = scmp.eq.s32.totalorder %s32, 0
    %p379 = por %p377, %p378
    %s381 = sadd.s32 %s380, 1
    %p384 = scmp.eq.s32.totalorder %s26, 1
    %p385 = scmp.ne.s32.totalorder %s380, %s382
    %p386 = scmp.eq.s32.totalorder %s26, 0
    %p387 = por %p385, %p386
    %p388 = scmp.ne.s32.totalorder %s380, %s382
    %p389 = scmp.eq.s32.totalorder %s31, 1
    %p390 = por %p388, %p389
    %p391 = scmp.ne.s32.totalorder %s382, %s383
    %p392 = scmp.eq.s32.totalorder %s31, 0
    %p393 = por %p391, %p392
    %p394 = scmp.ne.s32.totalorder %s382, %s383
    %p395 = scmp.eq.s32.totalorder %s32, 1
    %p396 = por %p394, %p395
    %p398 = scmp.ne.s32.totalorder %s383, %s397
    %p399 = scmp.eq.s32.totalorder %s32, 0
    %p400 = por %p398, %p399
    %s402 = sadd.s32 %s401, 1
    %p405 = scmp.eq.s32.totalorder %s26, 1
    %p406 = scmp.ne.s32.totalorder %s401, %s403
    %p407 = scmp.eq.s32.totalorder %s26, 0
    %p408 = por %p406, %p407
    %p409 = scmp.ne.s32.totalorder %s401, %s403
    %p410 = scmp.eq.s32.totalorder %s31, 1
    %p411 = por %p409, %p410
    %p412 = scmp.ne.s32.totalorder %s403, %s404
    %p413 = scmp.eq.s32.totalorder %s31, 0
    %p414 = por %p412, %p413
    %p415 = scmp.ne.s32.totalorder %s403, %s404
    %p416 = scmp.eq.s32.totalorder %s32, 1
    %p417 = por %p415, %p416
    %p419 = scmp.ne.s32.totalorder %s404, %s418
    %p420 = scmp.eq.s32.totalorder %s32, 0
    %p421 = por %p419, %p420
    %s423 = sadd.s32 %s422, 1
    %p426 = scmp.eq.s32.totalorder %s26, 1
    %p427 = scmp.ne.s32.totalorder %s422, %s424
    %p428 = scmp.eq.s32.totalorder %s26, 0
    %p429 = por %p427, %p428
    %p430 = scmp.ne.s32.totalorder %s422, %s424
    %p431 = scmp.eq.s32.totalorder %s31, 1
    %p432 = por %p430, %p431
    %p433 = scmp.ne.s32.totalorder %s424, %s425
    %p434 = scmp.eq.s32.totalorder %s31, 0
    %p435 = por %p433, %p434
    %p436 = scmp.ne.s32.totalorder %s424, %s425
    %p437 = scmp.eq.s32.totalorder %s32, 1
    %p438 = por %p436, %p437
    %p440 = scmp.ne.s32.totalorder %s425, %s439
    %p441 = scmp.eq.s32.totalorder %s32, 0
    %p442 = por %p440, %p441
    %s444 = sadd.s32 %s443, 1
    %p447 = scmp.eq.s32.totalorder %s26, 1
    %p448 = scmp.ne.s32.totalorder %s443, %s445
    %p449 = scmp.eq.s32.totalorder %s26, 0
    %p450 = por %p448, %p449
    %p451 = scmp.ne.s32.totalorder %s443, %s445
    %p452 = scmp.eq.s32.totalorder %s31, 1
    %p453 = por %p451, %p452
    %p454 = scmp.ne.s32.totalorder %s445, %s446
    %p455 = scmp.eq.s32.totalorder %s31, 0
    %p456 = por %p454, %p455
    %p457 = scmp.ne.s32.totalorder %s445, %s446
    %p458 = scmp.eq.s32.totalorder %s32, 1
    %p459 = por %p457, %p458
    %p461 = scmp.ne.s32.totalorder %s446, %s460
    %p462 = scmp.eq.s32.totalorder %s32, 0
    %p463 = por %p461, %p462
    %s464 = ssub.s32 %s26, %s33
    %p465 = scmp.eq.s32.totalorder %s464, 0
    %s467 = sadd.s32 %s466, 1
    %s468 = scalar_select %p465, %s466, %s467
    %p471 = pneg %p465
    %p472 = scmp.eq.s32.totalorder %s26, 1
    %p473 = por %p471, %p472
    %p474 = scmp.ne.s32.totalorder %s466, %s469
    %p475 = scmp.eq.s32.totalorder %s26, 0
    %p476 = por %p474, %p475
    %p477 = scmp.ne.s32.totalorder %s466, %s469
    %p478 = scmp.eq.s32.totalorder %s31, 1
    %p479 = por %p477, %p478
    %p480 = scmp.ne.s32.totalorder %s469, %s470
    %p481 = scmp.eq.s32.totalorder %s31, 0
    %p482 = por %p480, %p481
    %p483 = scmp.ne.s32.totalorder %s469, %s470
    %p484 = scmp.eq.s32.totalorder %s32, 1
    %p485 = por %p483, %p484
    %p487 = scmp.ne.s32.totalorder %s470, %s486
    %p488 = scmp.eq.s32.totalorder %s32, 0
    %p489 = por %p487, %p488
    %p490 = scmp.le.s32.totalorder 1, %s26
    %p491 = scmp.lt.s32.totalorder %s26, 3
    %p492 = pnand %p490, %p491
    %p493 = pneg %p492
    // Predicated region
    $region9: #{closed_call.9} parent=5 // pred_check
      _
    $region10: #{closed_call.9} parent=5 // pred_check_branch
      %495 = sbr.rel (%p492) target = $region12
    $region11: #{closed_call.9} parent=5 // pred_region
      %s496 = ssub.s32 %s26, 1
      // Predicated region
      $region13: #{closed_call.9} parent=11 // pred_check
        %p497 = pneg %p99
      $region14: #{closed_call.9} parent=11 // pred_check_branch
        %499 = sbr.rel (%p497) target = $region16
      $region15: #{closed_call.9} parent=11 // pred_region
        _
      $region16: #{closed_call.9} parent=11 // pred_fallthru
        _
      // Predicated region
      $region17: #{closed_call.9} parent=11 // pred_check
        %p500 = pneg %p120
      $region18: #{closed_call.9} parent=11 // pred_check_branch
        %502 = sbr.rel (%p500) target = $region20
      $region19: #{closed_call.9} parent=11 // pred_region
        _
      $region20: #{closed_call.9} parent=11 // pred_fallthru
        _
      // Predicated region
      $region21: #{closed_call.9} parent=11 // pred_check
        %p503 = pneg %p141
      $region22: #{closed_call.9} parent=11 // pred_check_branch
        %505 = sbr.rel (%p503) target = $region24
      $region23: #{closed_call.9} parent=11 // pred_region
        _
      $region24: #{closed_call.9} parent=11 // pred_fallthru
        _
      // Predicated region
      $region25: #{closed_call.9} parent=11 // pred_check
        %p506 = pneg %p162
      $region26: #{closed_call.9} parent=11 // pred_check_branch
        %508 = sbr.rel (%p506) target = $region28
      $region27: #{closed_call.9} parent=11 // pred_region
        _
      $region28: #{closed_call.9} parent=11 // pred_fallthru
        _
      // Predicated region
      $region29: #{closed_call.9} parent=11 // pred_check
        %p509 = pneg %p183
      $region30: #{closed_call.9} parent=11 // pred_check_branch
        %511 = sbr.rel (%p509) target = $region32
      $region31: #{closed_call.9} parent=11 // pred_region
        _
      $region32: #{closed_call.9} parent=11 // pred_fallthru
        _
      // Predicated region
      $region33: #{closed_call.9} parent=11 // pred_check
        %p512 = pneg %p204
      $region34: #{closed_call.9} parent=11 // pred_check_branch
        %514 = sbr.rel (%p512) target = $region36
      $region35: #{closed_call.9} parent=11 // pred_region
        _
      $region36: #{closed_call.9} parent=11 // pred_fallthru
        _
      // Predicated region
      $region37: #{closed_call.9} parent=11 // pred_check
        %p515 = pneg %p225
      $region38: #{closed_call.9} parent=11 // pred_check_branch
        %517 = sbr.rel (%p515) target = $region40
      $region39: #{closed_call.9} parent=11 // pred_region
        _
      $region40: #{closed_call.9} parent=11 // pred_fallthru
        _
      // Predicated region
      $region41: #{closed_call.9} parent=11 // pred_check
        %p518 = pneg %p246
      $region42: #{closed_call.9} parent=11 // pred_check_branch
        %520 = sbr.rel (%p518) target = $region44
      $region43: #{closed_call.9} parent=11 // pred_region
        _
      $region44: #{closed_call.9} parent=11 // pred_fallthru
        _
      // Predicated region
      $region45: #{closed_call.9} parent=11 // pred_check
        %p521 = pneg %p267
      $region46: #{closed_call.9} parent=11 // pred_check_branch
        %523 = sbr.rel (%p521) target = $region48
      $region47: #{closed_call.9} parent=11 // pred_region
        _
      $region48: #{closed_call.9} parent=11 // pred_fallthru
        _
      // Predicated region
      $region49: #{closed_call.9} parent=11 // pred_check
        %p524 = pneg %p288
      $region50: #{closed_call.9} parent=11 // pred_check_branch
        %526 = sbr.rel (%p524) target = $region52
      $region51: #{closed_call.9} parent=11 // pred_region
        _
      $region52: #{closed_call.9} parent=11 // pred_fallthru
        _
      // Predicated region
      $region53: #{closed_call.9} parent=11 // pred_check
        %p527 = pneg %p309
      $region54: #{closed_call.9} parent=11 // pred_check_branch
        %529 = sbr.rel (%p527) target = $region56
      $region55: #{closed_call.9} parent=11 // pred_region
        _
      $region56: #{closed_call.9} parent=11 // pred_fallthru
        _
      // Predicated region
      $region57: #{closed_call.9} parent=11 // pred_check
        %p530 = pneg %p330
      $region58: #{closed_call.9} parent=11 // pred_check_branch
        %532 = sbr.rel (%p530) target = $region60
      $region59: #{closed_call.9} parent=11 // pred_region
        _
      $region60: #{closed_call.9} parent=11 // pred_fallthru
        _
      // Predicated region
      $region61: #{closed_call.9} parent=11 // pred_check
        %p533 = pneg %p351
      $region62: #{closed_call.9} parent=11 // pred_check_branch
        %535 = sbr.rel (%p533) target = $region64
      $region63: #{closed_call.9} parent=11 // pred_region
        _
      $region64: #{closed_call.9} parent=11 // pred_fallthru
        _
      // Predicated region
      $region65: #{closed_call.9} parent=11 // pred_check
        %p536 = pneg %p372
      $region66: #{closed_call.9} parent=11 // pred_check_branch
        %538 = sbr.rel (%p536) target = $region68
      $region67: #{closed_call.9} parent=11 // pred_region
        _
      $region68: #{closed_call.9} parent=11 // pred_fallthru
        _
      // Predicated region
      $region69: #{closed_call.9} parent=11 // pred_check
        %p539 = pneg %p393
      $region70: #{closed_call.9} parent=11 // pred_check_branch
        %541 = sbr.rel (%p539) target = $region72
      $region71: #{closed_call.9} parent=11 // pred_region
        _
      $region72: #{closed_call.9} parent=11 // pred_fallthru
        _
      // Predicated region
      $region73: #{closed_call.9} parent=11 // pred_check
        %p542 = pneg %p414
      $region74: #{closed_call.9} parent=11 // pred_check_branch
        %544 = sbr.rel (%p542) target = $region76
      $region75: #{closed_call.9} parent=11 // pred_region
        _
      $region76: #{closed_call.9} parent=11 // pred_fallthru
        _
      // Predicated region
      $region77: #{closed_call.9} parent=11 // pred_check
        %p545 = pneg %p435
      $region78: #{closed_call.9} parent=11 // pred_check_branch
        %547 = sbr.rel (%p545) target = $region80
      $region79: #{closed_call.9} parent=11 // pred_region
        _
      $region80: #{closed_call.9} parent=11 // pred_fallthru
        _
      // Predicated region
      $region81: #{closed_call.9} parent=11 // pred_check
        %p548 = pneg %p456
      $region82: #{closed_call.9} parent=11 // pred_check_branch
        %550 = sbr.rel (%p548) target = $region84
      $region83: #{closed_call.9} parent=11 // pred_region
        _
      $region84: #{closed_call.9} parent=11 // pred_fallthru
        _
    $region12: #{closed_call.9} parent=5 // pred_fallthru
      _
    %p551 = scmp.lt.s32.totalorder %s26, 2
    // Predicated region
    $region85: #{closed_call.9} parent=5 // pred_check
      %p552 = pneg %p551
    $region86: #{closed_call.9} parent=5 // pred_check_branch
      %554 = sbr.rel (%p552) target = $region88
    $region87: #{closed_call.9} parent=5 // pred_region
      // Predicated region
      $region89: #{closed_call.9} parent=87 // pred_check
        %p555 = pneg %p46
      $region90: #{closed_call.9} parent=87 // pred_check_branch
        %557 = sbr.rel (%p555) target = $region92
      $region91: #{closed_call.9} parent=87 // pred_region
        %p558 = scmp.lt.s32.totalorder %s26, 1
        %s559 = scalar_select %p558, %s26, 1
        %s560 = smul.addr %s559, 8
        %s561 = scalar_lea.vmem %s0, %s560
      $region92: #{closed_call.9} parent=87 // pred_fallthru
        _
      // Predicated region
      $region93: #{closed_call.9} parent=87 // pred_check
        %p562 = pneg %p72
      $region94: #{closed_call.9} parent=87 // pred_check_branch
        %564 = sbr.rel (%p562) target = $region96
      $region95: #{closed_call.9} parent=87 // pred_region
        %p565 = scmp.lt.s32.totalorder %s26, 1
        %s566 = scalar_select %p565, %s26, 1
        %s567 = smul.addr %s566, 8
        %s568 = scalar_lea.vmem %s1, %s567
      $region96: #{closed_call.9} parent=87 // pred_fallthru
        _
    $region88: #{closed_call.9} parent=5 // pred_fallthru
      _
    %p569 = scmp.le.s32.totalorder 1, %s26
    %p570 = scmp.lt.s32.totalorder %s26, 3
    %p571 = pnand %p569, %p570
    %p572 = pneg %p571
    // Predicated region
    $region97: #{closed_call.9} parent=5 // pred_check
      _
    $region98: #{closed_call.9} parent=5 // pred_check_branch
      %574 = sbr.rel (%p571) target = $region100
    $region99: #{closed_call.9} parent=5 // pred_region
      %s575 = ssub.s32 %s26, 1
      %p576 = scmp.lt.s32.totalorder %s31, 1
      %s577 = scalar_select %p576, %s31, 1
      %s578 = smul.addr %s577, 8
      %s579 = scalar_lea.vmem %s0, %s578
      %p580 = pneg %p52
      %p581 = pneg %p49
      %p582 = scmp.lt.s32.totalorder %s31, 1
      %s583 = scalar_select %p582, %s31, 1
      %s584 = smul.addr %s583, 8
      %s585 = scalar_lea.vmem %s1, %s584
      %p586 = pneg %p78
      %p587 = pneg %p75
      %p588 = pneg %p99
      %p589 = pneg %p96
      %p590 = pneg %p120
      %p591 = pneg %p117
      %p592 = pneg %p141
      %p593 = pneg %p138
      %p594 = pneg %p162
      %p595 = pneg %p159
      %p596 = pneg %p183
      %p597 = pneg %p180
      %p598 = pneg %p204
      %p599 = pneg %p201
      %p600 = pneg %p225
      %p601 = pneg %p222
      %p602 = pneg %p246
      %p603 = pneg %p243
      %p604 = pneg %p267
      %p605 = pneg %p264
      %p606 = pneg %p288
      %p607 = pneg %p285
      %p608 = pneg %p309
      %p609 = pneg %p306
      %p610 = pneg %p330
      %p611 = pneg %p327
      %p612 = pneg %p351
      %p613 = pneg %p348
      %p614 = pneg %p372
      %p615 = pneg %p369
      %p616 = pneg %p393
      %p617 = pneg %p390
      %p618 = pneg %p414
      %p619 = pneg %p411
      %p620 = pneg %p435
      %p621 = pneg %p432
      %p622 = pneg %p456
      %p623 = pneg %p453
      %p624 = pneg %p482
      %p625 = pneg %p479
      %p626 = scmp.lt.s32.totalorder %s31, 1
      %s627 = scalar_select %p626, %s31, 1
      %s628 = smul.addr %s627, 8
      %s629 = scalar_lea.vmem %s20, %s628
      %p630 = scmp.lt.s32.totalorder %s31, 1
      %s631 = scalar_select %p630, %s31, 1
      %s632 = smul.addr %s631, 8
      %s633 = scalar_lea.vmem %s0, %s632
      %p634 = scmp.lt.s32.totalorder %s31, 1
      %s635 = scalar_select %p634, %s31, 1
      %s636 = smul.addr %s635, 8
      %s637 = scalar_lea.vmem %s1, %s636
      %p638 = scmp.lt.s32.totalorder %s31, 1
      %s639 = scalar_select %p638, %s31, 1
      %s640 = smul.addr %s639, 8
      %s641 = scalar_lea.vmem %s20, %s640
      %v642 = vld [vmem:[%s633] sm:$0xff]
      %v643 = vld [vmem:[%s637] sm:$0xff]
      %v644 = vld [vmem:[%s2] sm:$0xff]
      %v645 = vld [vmem:[%s2 + $0x8] sm:$0xff]
      %v646 = vld [vmem:[%s2 + $0x10] sm:$0xff]
      %v647 = vld [vmem:[%s2 + $0x18] sm:$0xff]
      %v648 = vld [vmem:[%s3] sm:$0x1]
      %v650 = vlaneseq
      %v651 = vshrl.u32 %v650, 7
      %v652 = vsub.s32 0, %v651
      %v653 = vrot.slane %v648, %v652
      %vm655 = vcmask 261120
      %v657 = vsel %vm655, %v642, 0
      %659 = vmatprep.subr.mxu0 0.0
      %660 = vmatpush1.msra.mxu0 %v644
      %661 = vmatprep.subr.mxu0 0.0
      %662 = vmatpush1.msra.mxu0 %v645
      %663 = vmatprep.subr.mxu0 0.0
      %664 = vmatpush1.msra.mxu0 %v646
      %665 = vmatprep.subr.mxu0 0.0
      %666 = vmatpush1.msra.mxu0 %v647
      %667 = vmatprep.subr.mxu0 0.0
      %668 = vmatpush1.msra.mxu0 0.0
      %669 = vmatprep.subr.mxu0 0.0
      %670 = vmatpush1.msra.mxu0 0.0
      %671 = vmatprep.subr.mxu0 0.0
      %672 = vmatpush1.msra.mxu0 0.0
      %673 = vmatprep.subr.mxu0 0.0
      %674 = vmatpush1.msra.mxu0 0.0
      %675 = vmatprep.subr.mxu0 0.0
      %676 = vmatpush1.msra.mxu0 0.0
      %677 = vmatprep.subr.mxu0 0.0
      %678 = vmatpush1.msra.mxu0 0.0
      %679 = vmatprep.subr.mxu0 0.0
      %680 = vmatpush1.msra.mxu0 0.0
      %681 = vmatprep.subr.mxu0 0.0
      %682 = vmatpush1.msra.mxu0 0.0
      %683 = vmatprep.subr.mxu0 0.0
      %684 = vmatpush1.msra.mxu0 0.0
      %685 = vmatprep.subr.mxu0 0.0
      %686 = vmatpush1.msra.mxu0 0.0
      %687 = vmatprep.subr.mxu0 0.0
      %688 = vmatpush1.msra.mxu0 0.0
      %689 = vmatprep.subr.mxu0 0.0
      %690 = vmatpush1.msra.mxu0 0.0
      %691 = vmatprep.subr.mxu0 0.0
      %692 = vmatpush1.msra.mxu0 0.0
      %693 = vmatprep.subr.mxu0 0.0
      %694 = vmatpush1.msra.mxu0 0.0
      %695 = vmatprep.subr.mxu0 0.0
      %696 = vmatpush1.msra.mxu0 0.0
      %697 = vmatprep.subr.mxu0 0.0
      %698 = vmatpush1.msra.mxu0 0.0
      %699 = vmatprep.subr.mxu0 0.0
      %700 = vmatpush1.msra.mxu0 0.0
      %701 = vmatprep.subr.mxu0 0.0
      %702 = vmatpush1.msra.mxu0 0.0
      %703 = vmatprep.subr.mxu0 0.0
      %704 = vmatpush1.msra.mxu0 0.0
      %705 = vmatprep.subr.mxu0 0.0
      %706 = vmatpush1.msra.mxu0 0.0
      %707 = vmatprep.subr.mxu0 0.0
      %708 = vmatpush1.msra.mxu0 0.0
      %709 = vmatprep.subr.mxu0 0.0
      %710 = vmatpush1.msra.mxu0 0.0
      %711 = vmatprep.subr.mxu0 0.0
      %712 = vmatpush1.msra.mxu0 0.0
      %713 = vmatprep.subr.mxu0 0.0
      %714 = vmatpush1.msra.mxu0 0.0
      %715 = vmatprep.subr.mxu0 0.0
      %716 = vmatpush1.msra.mxu0 0.0
      %717 = vmatprep.subr.mxu0 0.0
      %718 = vmatpush1.msra.mxu0 0.0
      %719 = vmatprep.subr.mxu0 0.0
      %720 = vmatpush1.msra.mxu0 0.0
      %721 = vmatprep.subr.mxu0 0.0
      %722 = vmatpush1.msra.mxu0 0.0
      %723 = vmatprep.mubr.f32.mxu0 0.0
      %724 = vmatmul.mubr.f32.gmra.mrb[0].mxu0 %v657
      %v725 = vpop.f32.mrb[0].mxu0
      %v726 = vadd.f32 %v653, %v725
      %v727 = vpop.f32.mrb[0].mxu0
      %728 = vdwg.mxu0
      %v729 = vmul.f32 %v726, 0.35355338
      %v730 = vld [vmem:[%s4] sm:$0xff]
      %v731 = vld [vmem:[%s4 + $0x8] sm:$0xff]
      %v732 = vld [vmem:[%s4 + $0x10] sm:$0xff]
      %v733 = vld [vmem:[%s4 + $0x18] sm:$0xff]
      %v734 = vld [vmem:[%s5] sm:$0x1]
      %v736 = vlaneseq
      %v737 = vshrl.u32 %v736, 7
      %v738 = vsub.s32 0, %v737
      %v739 = vrot.slane %v734, %v738
      %v741 = vadd.f32 %v739, 0.0
      %743 = vrot.lane.b32.xlu0 %v726, 96
      %v744 = vpop.permute.xlu0 %743
      %vm745 = vcmask 64512
      %v747 = vsel %vm745, %v729, 0
      %v749 = vsel %vm745, %v744, 0
      %751 = vmatprep.subr.mxu0 0.0
      %752 = vmatpush1.xpose.msra.mxu0 %v749
      %753 = vmatprep.subr.mxu0 0.0
      %754 = vmatpush1.xpose.msra.mxu0 0.0
      %755 = vmatprep.subr.mxu0 0.0
      %756 = vmatpush1.xpose.msra.mxu0 0.0
      %757 = vmatprep.subr.mxu0 0.0
      %758 = vmatpush1.xpose.msra.mxu0 0.0
      %759 = vmatprep.subr.mxu0 0.0
      %760 = vmatpush1.xpose.msra.mxu0 0.0
      %761 = vmatprep.subr.mxu0 0.0
      %762 = vmatpush1.xpose.msra.mxu0 0.0
      %763 = vmatprep.subr.mxu0 0.0
      %764 = vmatpush1.xpose.msra.mxu0 0.0
      %765 = vmatprep.subr.mxu0 0.0
      %766 = vmatpush1.xpose.msra.mxu0 0.0
      %767 = vmatprep.subr.mxu0 0.0
      %768 = vmatpush1.xpose.msra.mxu0 0.0
      %769 = vmatprep.subr.mxu0 0.0
      %770 = vmatpush1.xpose.msra.mxu0 0.0
      %771 = vmatprep.subr.mxu0 0.0
      %772 = vmatpush1.xpose.msra.mxu0 0.0
      %773 = vmatprep.subr.mxu0 0.0
      %774 = vmatpush1.xpose.msra.mxu0 0.0
      %775 = vmatprep.subr.mxu0 0.0
      %776 = vmatpush1.xpose.msra.mxu0 0.0
      %777 = vmatprep.subr.mxu0 0.0
      %778 = vmatpush1.xpose.msra.mxu0 0.0
      %779 = vmatprep.subr.mxu0 0.0
      %780 = vmatpush1.xpose.msra.mxu0 0.0
      %781 = vmatprep.subr.mxu0 0.0
      %782 = vmatpush1.xpose.msra.mxu0 0.0
      %783 = vmatprep.subr.mxu0 0.0
      %784 = vmatpush1.xpose.msra.mxu0 0.0
      %785 = vmatprep.subr.mxu0 0.0
      %786 = vmatpush1.xpose.msra.mxu0 0.0
      %787 = vmatprep.subr.mxu0 0.0
      %788 = vmatpush1.xpose.msra.mxu0 0.0
      %789 = vmatprep.subr.mxu0 0.0
      %790 = vmatpush1.xpose.msra.mxu0 0.0
      %791 = vmatprep.subr.mxu0 0.0
      %792 = vmatpush1.xpose.msra.mxu0 0.0
      %793 = vmatprep.subr.mxu0 0.0
      %794 = vmatpush1.xpose.msra.mxu0 0.0
      %795 = vmatprep.subr.mxu0 0.0
      %796 = vmatpush1.xpose.msra.mxu0 0.0
      %797 = vmatprep.subr.mxu0 0.0
      %798 = vmatpush1.xpose.msra.mxu0 0.0
      %799 = vmatprep.subr.mxu0 0.0
      %800 = vmatpush1.xpose.msra.mxu0 0.0
      %801 = vmatprep.subr.mxu0 0.0
      %802 = vmatpush1.xpose.msra.mxu0 0.0
      %803 = vmatprep.subr.mxu0 0.0
      %804 = vmatpush1.xpose.msra.mxu0 0.0
      %805 = vmatprep.subr.mxu0 0.0
      %806 = vmatpush1.xpose.msra.mxu0 0.0
      %807 = vmatprep.subr.mxu0 0.0
      %808 = vmatpush1.xpose.msra.mxu0 0.0
      %809 = vmatprep.subr.mxu0 0.0
      %810 = vmatpush1.xpose.msra.mxu0 0.0
      %811 = vmatprep.subr.mxu0 0.0
      %812 = vmatpush1.xpose.msra.mxu0 0.0
      %813 = vmatprep.subr.mxu0 0.0
      %814 = vmatpush1.xpose.msra.mxu0 0.0
      %815 = vmatprep.mubr.f32.mxu0 0.0
      %816 = vmatmul.mubr.f32.gmra.mrb[0].mxu0 %v747
      %v817 = vpop.f32.mrb[0].mxu0
      %v818 = vadd.f32 0.0, %v817
      %v819 = vpop.f32.mrb[0].mxu0
      %820 = vdwg.mxu0
      %v821 = vsel %vm745, %v818, -inf
      %822 = vmax.xlane.f32.xlu0 %v821
      %v823 = vpop.xlane.xlu0 %822
      %v824 = vsub.f32 %v818, %v823
      %v825 = vmul.f32 %v824, 1.442695
      %v826 = vpow.pop %v825
      %v827 = vsel %vm745, %v826, 0.0
      %828 = vadd.xlane.f32.xlu0 %v827
      %v829 = vpop.xlane.xlu0 %828
      %v830 = vrcp.pop %v829
      %v831 = vmul.f32 %v826, %v830
      %832 = vrot.lane.b32.xlu0 %v726, 64
      %v833 = vpop.permute.xlu0 %832
      %v836 = vsel %vm745, %v831, 0
      %838 = vmatprep.subr.mxu0 0.0
      %839 = vmatpush1.msra.mxu0 %v833
      %840 = vmatprep.subr.mxu0 0.0
      %841 = vmatpush1.msra.mxu0 0.0
      %842 = vmatprep.subr.mxu0 0.0
      %843 = vmatpush1.msra.mxu0 0.0
      %844 = vmatprep.subr.mxu0 0.0
      %845 = vmatpush1.msra.mxu0 0.0
      %846 = vmatprep.subr.mxu0 0.0
      %847 = vmatpush1.msra.mxu0 0.0
      %848 = vmatprep.subr.mxu0 0.0
      %849 = vmatpush1.msra.mxu0 0.0
      %850 = vmatprep.subr.mxu0 0.0
      %851 = vmatpush1.msra.mxu0 0.0
      %852 = vmatprep.subr.mxu0 0.0
      %853 = vmatpush1.msra.mxu0 0.0
      %854 = vmatprep.subr.mxu0 0.0
      %855 = vmatpush1.msra.mxu0 0.0
      %856 = vmatprep.subr.mxu0 0.0
      %857 = vmatpush1.msra.mxu0 0.0
      %858 = vmatprep.subr.mxu0 0.0
      %859 = vmatpush1.msra.mxu0 0.0
      %860 = vmatprep.subr.mxu0 0.0
      %861 = vmatpush1.msra.mxu0 0.0
      %862 = vmatprep.subr.mxu0 0.0
      %863 = vmatpush1.msra.mxu0 0.0
      %864 = vmatprep.subr.mxu0 0.0
      %865 = vmatpush1.msra.mxu0 0.0
      %866 = vmatprep.subr.mxu0 0.0
      %867 = vmatpush1.msra.mxu0 0.0
      %868 = vmatprep.subr.mxu0 0.0
      %869 = vmatpush1.msra.mxu0 0.0
      %870 = vmatprep.subr.mxu0 0.0
      %871 = vmatpush1.msra.mxu0 0.0
      %872 = vmatprep.subr.mxu0 0.0
      %873 = vmatpush1.msra.mxu0 0.0
      %874 = vmatprep.subr.mxu0 0.0
      %875 = vmatpush1.msra.mxu0 0.0
      %876 = vmatprep.subr.mxu0 0.0
      %877 = vmatpush1.msra.mxu0 0.0
      %878 = vmatprep.subr.mxu0 0.0
      %879 = vmatpush1.msra.mxu0 0.0
      %880 = vmatprep.subr.mxu0 0.0
      %881 = vmatpush1.msra.mxu0 0.0
      %882 = vmatprep.subr.mxu0 0.0
      %883 = vmatpush1.msra.mxu0 0.0
      %884 = vmatprep.subr.mxu0 0.0
      %885 = vmatpush1.msra.mxu0 0.0
      %886 = vmatprep.subr.mxu0 0.0
      %887 = vmatpush1.msra.mxu0 0.0
      %888 = vmatprep.subr.mxu0 0.0
      %889 = vmatpush1.msra.mxu0 0.0
      %890 = vmatprep.subr.mxu0 0.0
      %891 = vmatpush1.msra.mxu0 0.0
      %892 = vmatprep.subr.mxu0 0.0
      %893 = vmatpush1.msra.mxu0 0.0
      %894 = vmatprep.subr.mxu0 0.0
      %895 = vmatpush1.msra.mxu0 0.0
      %896 = vmatprep.subr.mxu0 0.0
      %897 = vmatpush1.msra.mxu0 0.0
      %898 = vmatprep.subr.mxu0 0.0
      %899 = vmatpush1.msra.mxu0 0.0
      %900 = vmatprep.subr.mxu0 0.0
      %901 = vmatpush1.msra.mxu0 0.0
      %902 = vmatprep.mubr.f32.mxu0 0.0
      %903 = vmatmul.mubr.f32.gmra.mrb[0].mxu0 %v836
      %v904 = vpop.f32.mrb[0].mxu0
      %v905 = vadd.f32 0.0, %v904
      %v906 = vpop.f32.mrb[0].mxu0
      %907 = vdwg.mxu0
      %v909 = vsel %vm745, %v905, 0
      %911 = vmatprep.subr.mxu0 0.0
      %912 = vmatpush1.msra.mxu0 %v730
      %913 = vmatprep.subr.mxu0 0.0
      %914 = vmatpush1.msra.mxu0 0.0
      %915 = vmatprep.subr.mxu0 0.0
      %916 = vmatpush1.msra.mxu0 0.0
      %917 = vmatprep.subr.mxu0 0.0
      %918 = vmatpush1.msra.mxu0 0.0
      %919 = vmatprep.subr.mxu0 0.0
      %920 = vmatpush1.msra.mxu0 0.0
      %921 = vmatprep.subr.mxu0 0.0
      %922 = vmatpush1.msra.mxu0 0.0
      %923 = vmatprep.subr.mxu0 0.0
      %924 = vmatpush1.msra.mxu0 0.0
      %925 = vmatprep.subr.mxu0 0.0
      %926 = vmatpush1.msra.mxu0 0.0
      %927 = vmatprep.subr.mxu0 0.0
      %928 = vmatpush1.msra.mxu0 0.0
      %929 = vmatprep.subr.mxu0 0.0
      %930 = vmatpush1.msra.mxu0 0.0
      %931 = vmatprep.subr.mxu0 0.0
      %932 = vmatpush1.msra.mxu0 0.0
      %933 = vmatprep.subr.mxu0 0.0
      %934 = vmatpush1.msra.mxu0 0.0
      %935 = vmatprep.subr.mxu0 0.0
      %936 = vmatpush1.msra.mxu0 0.0
      %937 = vmatprep.subr.mxu0 0.0
      %938 = vmatpush1.msra.mxu0 0.0
      %939 = vmatprep.subr.mxu0 0.0
      %940 = vmatpush1.msra.mxu0 0.0
      %941 = vmatprep.subr.mxu0 0.0
      %942 = vmatpush1.msra.mxu0 0.0
      %943 = vmatprep.subr.mxu0 0.0
      %944 = vmatpush1.msra.mxu0 0.0
      %945 = vmatprep.subr.mxu0 0.0
      %946 = vmatpush1.msra.mxu0 0.0
      %947 = vmatprep.subr.mxu0 0.0
      %948 = vmatpush1.msra.mxu0 0.0
      %949 = vmatprep.subr.mxu0 0.0
      %950 = vmatpush1.msra.mxu0 0.0
      %951 = vmatprep.subr.mxu0 0.0
      %952 = vmatpush1.msra.mxu0 0.0
      %953 = vmatprep.subr.mxu0 0.0
      %954 = vmatpush1.msra.mxu0 0.0
      %955 = vmatprep.subr.mxu0 0.0
      %956 = vmatpush1.msra.mxu0 0.0
      %957 = vmatprep.subr.mxu0 0.0
      %958 = vmatpush1.msra.mxu0 0.0
      %959 = vmatprep.subr.mxu0 0.0
      %960 = vmatpush1.msra.mxu0 0.0
      %961 = vmatprep.subr.mxu0 0.0
      %962 = vmatpush1.msra.mxu0 0.0
      %963 = vmatprep.subr.mxu0 0.0
      %964 = vmatpush1.msra.mxu0 0.0
      %965 = vmatprep.subr.mxu0 0.0
      %966 = vmatpush1.msra.mxu0 0.0
      %967 = vmatprep.subr.mxu0 0.0
      %968 = vmatpush1.msra.mxu0 0.0
      %969 = vmatprep.subr.mxu0 0.0
      %970 = vmatpush1.msra.mxu0 0.0
      %971 = vmatprep.subr.mxu0 0.0
      %972 = vmatpush1.msra.mxu0 0.0
      %973 = vmatprep.subr.mxu0 0.0
      %974 = vmatpush1.msra.mxu0 0.0
      %975 = vmatprep.mubr.f32.mxu0 0.0
      %976 = vmatmul.mubr.f32.gmra.mrb[0].mxu0 %v909
      %v977 = vpop.f32.mrb[0].mxu0
      %v978 = vadd.f32 0.0, %v977
      %v979 = vpop.f32.mrb[0].mxu0
      %980 = vdwg.mxu0
      %v981 = vadd.f32 %v741, %v978
      %982 = vrot.lane.b32.xlu0 %v729, 120
      %v983 = vpop.permute.xlu0 %982
      %984 = vrot.lane.b32.xlu0 %v726, 88
      %v985 = vpop.permute.xlu0 %984
      %v986 = vsel %vm745, %v983, 0
      %v988 = vsel %vm745, %v985, 0
      %990 = vmatprep.subr.mxu0 0.0
      %991 = vmatpush1.xpose.msra.mxu0 %v988
      %992 = vmatprep.subr.mxu0 0.0
      %993 = vmatpush1.xpose.msra.mxu0 0.0
      %994 = vmatprep.subr.mxu0 0.0
      %995 = vmatpush1.xpose.msra.mxu0 0.0
      %996 = vmatprep.subr.mxu0 0.0
      %997 = vmatpush1.xpose.msra.mxu0 0.0
      %998 = vmatprep.subr.mxu0 0.0
      %999 = vmatpush1.xpose.msra.mxu0 0.0
      %1000 = vmatprep.subr.mxu0 0.0
      %1001 = vmatpush1.xpose.msra.mxu0 0.0
      %1002 = vmatprep.subr.mxu0 0.0
      %1003 = vmatpush1.xpose.msra.mxu0 0.0
      %1004 = vmatprep.subr.mxu0 0.0
      %1005 = vmatpush1.xpose.msra.mxu0 0.0
      %1006 = vmatprep.subr.mxu0 0.0
      %1007 = vmatpush1.xpose.msra.mxu0 0.0
      %1008 = vmatprep.subr.mxu0 0.0
      %1009 = vmatpush1.xpose.msra.mxu0 0.0
      %1010 = vmatprep.subr.mxu0 0.0
      %1011 = vmatpush1.xpose.msra.mxu0 0.0
      %1012 = vmatprep.subr.mxu0 0.0
      %1013 = vmatpush1.xpose.msra.mxu0 0.0
      %1014 = vmatprep.subr.mxu0 0.0
      %1015 = vmatpush1.xpose.msra.mxu0 0.0
      %1016 = vmatprep.subr.mxu0 0.0
      %1017 = vmatpush1.xpose.msra.mxu0 0.0
      %1018 = vmatprep.subr.mxu0 0.0
      %1019 = vmatpush1.xpose.msra.mxu0 0.0
      %1020 = vmatprep.subr.mxu0 0.0
      %1021 = vmatpush1.xpose.msra.mxu0 0.0
      %1022 = vmatprep.subr.mxu0 0.0
      %1023 = vmatpush1.xpose.msra.mxu0 0.0
      %1024 = vmatprep.subr.mxu0 0.0
      %1025 = vmatpush1.xpose.msra.mxu0 0.0
      %1026 = vmatprep.subr.mxu0 0.0
      %1027 = vmatpush1.xpose.msra.mxu0 0.0
      %1028 = vmatprep.subr.mxu0 0.0
      %1029 = vmatpush1.xpose.msra.mxu0 0.0
      %1030 = vmatprep.subr.mxu0 0.0
      %1031 = vmatpush1.xpose.msra.mxu0 0.0
      %1032 = vmatprep.subr.mxu0 0.0
      %1033 = vmatpush1.xpose.msra.mxu0 0.0
      %1034 = vmatprep.subr.mxu0 0.0
      %1035 = vmatpush1.xpose.msra.mxu0 0.0
      %1036 = vmatprep.subr.mxu0 0.0
      %1037 = vmatpush1.xpose.msra.mxu0 0.0
      %1038 = vmatprep.subr.mxu0 0.0
      %1039 = vmatpush1.xpose.msra.mxu0 0.0
      %1040 = vmatprep.subr.mxu0 0.0
      %1041 = vmatpush1.xpose.msra.mxu0 0.0
      %1042 = vmatprep.subr.mxu0 0.0
      %1043 = vmatpush1.xpose.msra.mxu0 0.0
      %1044 = vmatprep.subr.mxu0 0.0
      %1045 = vmatpush1.xpose.msra.mxu0 0.0
      %1046 = vmatprep.subr.mxu0 0.0
      %1047 = vmatpush1.xpose.msra.mxu0 0.0
      %1048 = vmatprep.subr.mxu0 0.0
      %1049 = vmatpush1.xpose.msra.mxu0 0.0
      %1050 = vmatprep.subr.mxu0 0.0
      %1051 = vmatpush1.xpose.msra.mxu0 0.0
      %1052 = vmatprep.subr.mxu0 0.0
      %1053 = vmatpush1.xpose.msra.mxu0 0.0
      %1054 = vmatprep.mubr.f32.mxu0 0.0
      %1055 = vmatmul.mubr.f32.gmra.mrb[0].mxu0 %v986
      %v1056 = vpop.f32.mrb[0].mxu0
      %v1057 = vadd.f32 0.0, %v1056
      %v1058 = vpop.f32.mrb[0].mxu0
      %1059 = vdwg.mxu0
      %v1060 = vsel %vm745, %v1057, -inf
      %1061 = vmax.xlane.f32.xlu0 %v1060
      %v1062 = vpop.xlane.xlu0 %1061
      %v1063 = vsub.f32 %v1057, %v1062
      %v1064 = vmul.f32 %v1063, 1.442695
      %v1065 = vpow.pop %v1064
      %v1066 = vsel %vm745, %v1065, 0.0
      %1067 = vadd.xlane.f32.xlu0 %v1066
      %v1068 = vpop.xlane.xlu0 %1067
      %v1069 = vrcp.pop %v1068
      %v1070 = vmul.f32 %v1065, %v1069
      %1071 = vrot.lane.b32.xlu0 %v726, 56
      %v1072 = vpop.permute.xlu0 %1071
      %v1075 = vsel %vm745, %v1070, 0
      %1077 = vmatprep.subr.mxu0 0.0
      %1078 = vmatpush1.msra.mxu0 %v1072
      %1079 = vmatprep.subr.mxu0 0.0
      %1080 = vmatpush1.msra.mxu0 0.0
      %1081 = vmatprep.subr.mxu0 0.0
      %1082 = vmatpush1.msra.mxu0 0.0
      %1083 = vmatprep.subr.mxu0 0.0
      %1084 = vmatpush1.msra.mxu0 0.0
      %1085 = vmatprep.subr.mxu0 0.0
      %1086 = vmatpush1.msra.mxu0 0.0
      %1087 = vmatprep.subr.mxu0 0.0
      %1088 = vmatpush1.msra.mxu0 0.0
      %1089 = vmatprep.subr.mxu0 0.0
      %1090 = vmatpush1.msra.mxu0 0.0
      %1091 = vmatprep.subr.mxu0 0.0
      %1092 = vmatpush1.msra.mxu0 0.0
      %1093 = vmatprep.subr.mxu0 0.0
      %1094 = vmatpush1.msra.mxu0 0.0
      %1095 = vmatprep.subr.mxu0 0.0
      %1096 = vmatpush1.msra.mxu0 0.0
      %1097 = vmatprep.subr.mxu0 0.0
      %1098 = vmatpush1.msra.mxu0 0.0
      %1099 = vmatprep.subr.mxu0 0.0
      %1100 = vmatpush1.msra.mxu0 0.0
      %1101 = vmatprep.subr.mxu0 0.0
      %1102 = vmatpush1.msra.mxu0 0.0
      %1103 = vmatprep.subr.mxu0 0.0
      %1104 = vmatpush1.msra.mxu0 0.0
      %1105 = vmatprep.subr.mxu0 0.0
      %1106 = vmatpush1.msra.mxu0 0.0
      %1107 = vmatprep.subr.mxu0 0.0
      %1108 = vmatpush1.msra.mxu0 0.0
      %1109 = vmatprep.subr.mxu0 0.0
      %1110 = vmatpush1.msra.mxu0 0.0
      %1111 = vmatprep.subr.mxu0 0.0
      %1112 = vmatpush1.msra.mxu0 0.0
      %1113 = vmatprep.subr.mxu0 0.0
      %1114 = vmatpush1.msra.mxu0 0.0
      %1115 = vmatprep.subr.mxu0 0.0
      %1116 = vmatpush1.msra.mxu0 0.0
      %1117 = vmatprep.subr.mxu0 0.0
      %1118 = vmatpush1.msra.mxu0 0.0
      %1119 = vmatprep.subr.mxu0 0.0
      %1120 = vmatpush1.msra.mxu0 0.0
      %1121 = vmatprep.subr.mxu0 0.0
      %1122 = vmatpush1.msra.mxu0 0.0
      %1123 = vmatprep.subr.mxu0 0.0
      %1124 = vmatpush1.msra.mxu0 0.0
      %1125 = vmatprep.subr.mxu0 0.0
      %1126 = vmatpush1.msra.mxu0 0.0
      %1127 = vmatprep.subr.mxu0 0.0
      %1128 = vmatpush1.msra.mxu0 0.0
      %1129 = vmatprep.subr.mxu0 0.0
      %1130 = vmatpush1.msra.mxu0 0.0
      %1131 = vmatprep.subr.mxu0 0.0
      %1132 = vmatpush1.msra.mxu0 0.0
      %1133 = vmatprep.subr.mxu0 0.0
      %1134 = vmatpush1.msra.mxu0 0.0
      %1135 = vmatprep.subr.mxu0 0.0
      %1136 = vmatpush1.msra.mxu0 0.0
      %1137 = vmatprep.subr.mxu0 0.0
      %1138 = vmatpush1.msra.mxu0 0.0
      %1139 = vmatprep.subr.mxu0 0.0
      %1140 = vmatpush1.msra.mxu0 0.0
      %1141 = vmatprep.mubr.f32.mxu0 0.0
      %1142 = vmatmul.mubr.f32.gmra.mrb[0].mxu0 %v1075
      %v1143 = vpop.f32.mrb[0].mxu0
      %v1144 = vadd.f32 0.0, %v1143
      %v1145 = vpop.f32.mrb[0].mxu0
      %1146 = vdwg.mxu0
      %v1148 = vsel %vm745, %v1144, 0
      %1150 = vmatprep.subr.mxu0 0.0
      %1151 = vmatpush1.msra.mxu0 %v731
      %1152 = vmatprep.subr.mxu0 0.0
      %1153 = vmatpush1.msra.mxu0 0.0
      %1154 = vmatprep.subr.mxu0 0.0
      %1155 = vmatpush1.msra.mxu0 0.0
      %1156 = vmatprep.subr.mxu0 0.0
      %1157 = vmatpush1.msra.mxu0 0.0
      %1158 = vmatprep.subr.mxu0 0.0
      %1159 = vmatpush1.msra.mxu0 0.0
      %1160 = vmatprep.subr.mxu0 0.0
      %1161 = vmatpush1.msra.mxu0 0.0
      %1162 = vmatprep.subr.mxu0 0.0
      %1163 = vmatpush1.msra.mxu0 0.0
      %1164 = vmatprep.subr.mxu0 0.0
      %1165 = vmatpush1.msra.mxu0 0.0
      %1166 = vmatprep.subr.mxu0 0.0
      %1167 = vmatpush1.msra.mxu0 0.0
      %1168 = vmatprep.subr.mxu0 0.0
      %1169 = vmatpush1.msra.mxu0 0.0
      %1170 = vmatprep.subr.mxu0 0.0
      %1171 = vmatpush1.msra.mxu0 0.0
      %1172 = vmatprep.subr.mxu0 0.0
      %1173 = vmatpush1.msra.mxu0 0.0
      %1174 = vmatprep.subr.mxu0 0.0
      %1175 = vmatpush1.msra.mxu0 0.0
      %1176 = vmatprep.subr.mxu0 0.0
      %1177 = vmatpush1.msra.mxu0 0.0
      %1178 = vmatprep.subr.mxu0 0.0
      %1179 = vmatpush1.msra.mxu0 0.0
      %1180 = vmatprep.subr.mxu0 0.0
      %1181 = vmatpush1.msra.mxu0 0.0
      %1182 = vmatprep.subr.mxu0 0.0
      %1183 = vmatpush1.msra.mxu0 0.0
      %1184 = vmatprep.subr.mxu0 0.0
      %1185 = vmatpush1.msra.mxu0 0.0
      %1186 = vmatprep.subr.mxu0 0.0
      %1187 = vmatpush1.msra.mxu0 0.0
      %1188 = vmatprep.subr.mxu0 0.0
      %1189 = vmatpush1.msra.mxu0 0.0
      %1190 = vmatprep.subr.mxu0 0.0
      %1191 = vmatpush1.msra.mxu0 0.0
      %1192 = vmatprep.subr.mxu0 0.0
      %1193 = vmatpush1.msra.mxu0 0.0
      %1194 = vmatprep.subr.mxu0 0.0
      %1195 = vmatpush1.msra.mxu0 0.0
      %1196 = vmatprep.subr.mxu0 0.0
      %1197 = vmatpush1.msra.mxu0 0.0
      %1198 = vmatprep.subr.mxu0 0.0
      %1199 = vmatpush1.msra.mxu0 0.0
      %1200 = vmatprep.subr.mxu0 0.0
      %1201 = vmatpush1.msra.mxu0 0.0
      %1202 = vmatprep.subr.mxu0 0.0
      %1203 = vmatpush1.msra.mxu0 0.0
      %1204 = vmatprep.subr.mxu0 0.0
      %1205 = vmatpush1.msra.mxu0 0.0
      %1206 = vmatprep.subr.mxu0 0.0
      %1207 = vmatpush1.msra.mxu0 0.0
      %1208 = vmatprep.subr.mxu0 0.0
      %1209 = vmatpush1.msra.mxu0 0.0
      %1210 = vmatprep.subr.mxu0 0.0
      %1211 = vmatpush1.msra.mxu0 0.0
      %1212 = vmatprep.subr.mxu0 0.0
      %1213 = vmatpush1.msra.mxu0 0.0
      %1214 = vmatprep.mubr.f32.mxu0 0.0
      %1215 = vmatmul.mubr.f32.gmra.mrb[0].mxu0 %v1148
      %v1216 = vpop.f32.mrb[0].mxu0
      %v1217 = vadd.f32 0.0, %v1216
      %v1218 = vpop.f32.mrb[0].mxu0
      %1219 = vdwg.mxu0
      %v1220 = vadd.f32 %v981, %v1217
      %1221 = vrot.lane.b32.xlu0 %v729, 112
      %v1222 = vpop.permute.xlu0 %1221
      %1223 = vrot.lane.b32.xlu0 %v726, 80
      %v1224 = vpop.permute.xlu0 %1223
      %v1225 = vsel %vm745, %v1222, 0
      %v1227 = vsel %vm745, %v1224, 0
      %1229 = vmatprep.subr.mxu0 0.0
      %1230 = vmatpush1.xpose.msra.mxu0 %v1227
      %1231 = vmatprep.subr.mxu0 0.0
      %1232 = vmatpush1.xpose.msra.mxu0 0.0
      %1233 = vmatprep.subr.mxu0 0.0
      %1234 = vmatpush1.xpose.msra.mxu0 0.0
      %1235 = vmatprep.subr.mxu0 0.0
      %1236 = vmatpush1.xpose.msra.mxu0 0.0
      %1237 = vmatprep.subr.mxu0 0.0
      %1238 = vmatpush1.xpose.msra.mxu0 0.0
      %1239 = vmatprep.subr.mxu0 0.0
      %1240 = vmatpush1.xpose.msra.mxu0 0.0
      %1241 = vmatprep.subr.mxu0 0.0
      %1242 = vmatpush1.xpose.msra.mxu0 0.0
      %1243 = vmatprep.subr.mxu0 0.0
      %1244 = vmatpush1.xpose.msra.mxu0 0.0
      %1245 = vmatprep.subr.mxu0 0.0
      %1246 = vmatpush1.xpose.msra.mxu0 0.0
      %1247 = vmatprep.subr.mxu0 0.0
      %1248 = vmatpush1.xpose.msra.mxu0 0.0
      %1249 = vmatprep.subr.mxu0 0.0
      %1250 = vmatpush1.xpose.msra.mxu0 0.0
      %1251 = vmatprep.subr.mxu0 0.0
      %1252 = vmatpush1.xpose.msra.mxu0 0.0
      %1253 = vmatprep.subr.mxu0 0.0
      %1254 = vmatpush1.xpose.msra.mxu0 0.0
      %1255 = vmatprep.subr.mxu0 0.0
      %1256 = vmatpush1.xpose.msra.mxu0 0.0
      %1257 = vmatprep.subr.mxu0 0.0
      %1258 = vmatpush1.xpose.msra.mxu0 0.0
      %1259 = vmatprep.subr.mxu0 0.0
      %1260 = vmatpush1.xpose.msra.mxu0 0.0
      %1261 = vmatprep.subr.mxu0 0.0
      %1262 = vmatpush1.xpose.msra.mxu0 0.0
      %1263 = vmatprep.subr.mxu0 0.0
      %1264 = vmatpush1.xpose.msra.mxu0 0.0
      %1265 = vmatprep.subr.mxu0 0.0
      %1266 = vmatpush1.xpose.msra.mxu0 0.0
      %1267 = vmatprep.subr.mxu0 0.0
      %1268 = vmatpush1.xpose.msra.mxu0 0.0
      %1269 = vmatprep.subr.mxu0 0.0
      %1270 = vmatpush1.xpose.msra.mxu0 0.0
      %1271 = vmatprep.subr.mxu0 0.0
      %1272 = vmatpush1.xpose.msra.mxu0 0.0
      %1273 = vmatprep.subr.mxu0 0.0
      %1274 = vmatpush1.xpose.msra.mxu0 0.0
      %1275 = vmatprep.subr.mxu0 0.0
      %1276 = vmatpush1.xpose.msra.mxu0 0.0
      %1277 = vmatprep.subr.mxu0 0.0
      %1278 = vmatpush1.xpose.msra.mxu0 0.0
      %1279 = vmatprep.subr.mxu0 0.0
      %1280 = vmatpush1.xpose.msra.mxu0 0.0
      %1281 = vmatprep.subr.mxu0 0.0
      %1282 = vmatpush1.xpose.msra.mxu0 0.0
      %1283 = vmatprep.subr.mxu0 0.0
      %1284 = vmatpush1.xpose.msra.mxu0 0.0
      %1285 = vmatprep.subr.mxu0 0.0
      %1286 = vmatpush1.xpose.msra.mxu0 0.0
      %1287 = vmatprep.subr.mxu0 0.0
      %1288 = vmatpush1.xpose.msra.mxu0 0.0
      %1289 = vmatprep.subr.mxu0 0.0
      %1290 = vmatpush1.xpose.msra.mxu0 0.0
      %1291 = vmatprep.subr.mxu0 0.0
      %1292 = vmatpush1.xpose.msra.mxu0 0.0
      %1293 = vmatprep.mubr.f32.mxu0 0.0
      %1294 = vmatmul.mubr.f32.gmra.mrb[0].mxu0 %v1225
      %v1295 = vpop.f32.mrb[0].mxu0
      %v1296 = vadd.f32 0.0, %v1295
      %v1297 = vpop.f32.mrb[0].mxu0
      %1298 = vdwg.mxu0
      %v1299 = vsel %vm745, %v1296, -inf
      %1300 = vmax.xlane.f32.xlu0 %v1299
      %v1301 = vpop.xlane.xlu0 %1300
      %v1302 = vsub.f32 %v1296, %v1301
      %v1303 = vmul.f32 %v1302, 1.442695
      %v1304 = vpow.pop %v1303
      %v1305 = vsel %vm745, %v1304, 0.0
      %1306 = vadd.xlane.f32.xlu0 %v1305
      %v1307 = vpop.xlane.xlu0 %1306
      %v1308 = vrcp.pop %v1307
      %v1309 = vmul.f32 %v1304, %v1308
      %1310 = vrot.lane.b32.xlu0 %v726, 48
      %v1311 = vpop.permute.xlu0 %1310
      %v1314 = vsel %vm745, %v1309, 0
      %1316 = vmatprep.subr.mxu0 0.0
      %1317 = vmatpush1.msra.mxu0 %v1311
      %1318 = vmatprep.subr.mxu0 0.0
      %1319 = vmatpush1.msra.mxu0 0.0
      %1320 = vmatprep.subr.mxu0 0.0
      %1321 = vmatpush1.msra.mxu0 0.0
      %1322 = vmatprep.subr.mxu0 0.0
      %1323 = vmatpush1.msra.mxu0 0.0
      %1324 = vmatprep.subr.mxu0 0.0
      %1325 = vmatpush1.msra.mxu0 0.0
      %1326 = vmatprep.subr.mxu0 0.0
      %1327 = vmatpush1.msra.mxu0 0.0
      %1328 = vmatprep.subr.mxu0 0.0
      %1329 = vmatpush1.msra.mxu0 0.0
      %1330 = vmatprep.subr.mxu0 0.0
      %1331 = vmatpush1.msra.mxu0 0.0
      %1332 = vmatprep.subr.mxu0 0.0
      %1333 = vmatpush1.msra.mxu0 0.0
      %1334 = vmatprep.subr.mxu0 0.0
      %1335 = vmatpush1.msra.mxu0 0.0
      %1336 = vmatprep.subr.mxu0 0.0
      %1337 = vmatpush1.msra.mxu0 0.0
      %1338 = vmatprep.subr.mxu0 0.0
      %1339 = vmatpush1.msra.mxu0 0.0
      %1340 = vmatprep.subr.mxu0 0.0
      %1341 = vmatpush1.msra.mxu0 0.0
      %1342 = vmatprep.subr.mxu0 0.0
      %1343 = vmatpush1.msra.mxu0 0.0
      %1344 = vmatprep.subr.mxu0 0.0
      %1345 = vmatpush1.msra.mxu0 0.0
      %1346 = vmatprep.subr.mxu0 0.0
      %1347 = vmatpush1.msra.mxu0 0.0
      %1348 = vmatprep.subr.mxu0 0.0
      %1349 = vmatpush1.msra.mxu0 0.0
      %1350 = vmatprep.subr.mxu0 0.0
      %1351 = vmatpush1.msra.mxu0 0.0
      %1352 = vmatprep.subr.mxu0 0.0
      %1353 = vmatpush1.msra.mxu0 0.0
      %1354 = vmatprep.subr.mxu0 0.0
      %1355 = vmatpush1.msra.mxu0 0.0
      %1356 = vmatprep.subr.mxu0 0.0
      %1357 = vmatpush1.msra.mxu0 0.0
      %1358 = vmatprep.subr.mxu0 0.0
      %1359 = vmatpush1.msra.mxu0 0.0
      %1360 = vmatprep.subr.mxu0 0.0
      %1361 = vmatpush1.msra.mxu0 0.0
      %1362 = vmatprep.subr.mxu0 0.0
      %1363 = vmatpush1.msra.mxu0 0.0
      %1364 = vmatprep.subr.mxu0 0.0
      %1365 = vmatpush1.msra.mxu0 0.0
      %1366 = vmatprep.subr.mxu0 0.0
      %1367 = vmatpush1.msra.mxu0 0.0
      %1368 = vmatprep.subr.mxu0 0.0
      %1369 = vmatpush1.msra.mxu0 0.0
      %1370 = vmatprep.subr.mxu0 0.0
      %1371 = vmatpush1.msra.mxu0 0.0
      %1372 = vmatprep.subr.mxu0 0.0
      %1373 = vmatpush1.msra.mxu0 0.0
      %1374 = vmatprep.subr.mxu0 0.0
      %1375 = vmatpush1.msra.mxu0 0.0
      %1376 = vmatprep.subr.mxu0 0.0
      %1377 = vmatpush1.msra.mxu0 0.0
      %1378 = vmatprep.subr.mxu0 0.0
      %1379 = vmatpush1.msra.mxu0 0.0
      %1380 = vmatprep.mubr.f32.mxu0 0.0
      %1381 = vmatmul.mubr.f32.gmra.mrb[0].mxu0 %v1314
      %v1382 = vpop.f32.mrb[0].mxu0
      %v1383 = vadd.f32 0.0, %v1382
      %v1384 = vpop.f32.mrb[0].mxu0
      %1385 = vdwg.mxu0
      %v1387 = vsel %vm745, %v1383, 0
      %1389 = vmatprep.subr.mxu0 0.0
      %1390 = vmatpush1.msra.mxu0 %v732
      %1391 = vmatprep.subr.mxu0 0.0
      %1392 = vmatpush1.msra.mxu0 0.0
      %1393 = vmatprep.subr.mxu0 0.0
      %1394 = vmatpush1.msra.mxu0 0.0
      %1395 = vmatprep.subr.mxu0 0.0
      %1396 = vmatpush1.msra.mxu0 0.0
      %1397 = vmatprep.subr.mxu0 0.0
      %1398 = vmatpush1.msra.mxu0 0.0
      %1399 = vmatprep.subr.mxu0 0.0
      %1400 = vmatpush1.msra.mxu0 0.0
      %1401 = vmatprep.subr.mxu0 0.0
      %1402 = vmatpush1.msra.mxu0 0.0
      %1403 = vmatprep.subr.mxu0 0.0
      %1404 = vmatpush1.msra.mxu0 0.0
      %1405 = vmatprep.subr.mxu0 0.0
      %1406 = vmatpush1.msra.mxu0 0.0
      %1407 = vmatprep.subr.mxu0 0.0
      %1408 = vmatpush1.msra.mxu0 0.0
      %1409 = vmatprep.subr.mxu0 0.0
      %1410 = vmatpush1.msra.mxu0 0.0
      %1411 = vmatprep.subr.mxu0 0.0
      %1412 = vmatpush1.msra.mxu0 0.0
      %1413 = vmatprep.subr.mxu0 0.0
      %1414 = vmatpush1.msra.mxu0 0.0
      %1415 = vmatprep.subr.mxu0 0.0
      %1416 = vmatpush1.msra.mxu0 0.0
      %1417 = vmatprep.subr.mxu0 0.0
      %1418 = vmatpush1.msra.mxu0 0.0
      %1419 = vmatprep.subr.mxu0 0.0
      %1420 = vmatpush1.msra.mxu0 0.0
      %1421 = vmatprep.subr.mxu0 0.0
      %1422 = vmatpush1.msra.mxu0 0.0
      %1423 = vmatprep.subr.mxu0 0.0
      %1424 = vmatpush1.msra.mxu0 0.0
      %1425 = vmatprep.subr.mxu0 0.0
      %1426 = vmatpush1.msra.mxu0 0.0
      %1427 = vmatprep.subr.mxu0 0.0
      %1428 = vmatpush1.msra.mxu0 0.0
      %1429 = vmatprep.subr.mxu0 0.0
      %1430 = vmatpush1.msra.mxu0 0.0
      %1431 = vmatprep.subr.mxu0 0.0
      %1432 = vmatpush1.msra.mxu0 0.0
      %1433 = vmatprep.subr.mxu0 0.0
      %1434 = vmatpush1.msra.mxu0 0.0
      %1435 = vmatprep.subr.mxu0 0.0
      %1436 = vmatpush1.msra.mxu0 0.0
      %1437 = vmatprep.subr.mxu0 0.0
      %1438 = vmatpush1.msra.mxu0 0.0
      %1439 = vmatprep.subr.mxu0 0.0
      %1440 = vmatpush1.msra.mxu0 0.0
      %1441 = vmatprep.subr.mxu0 0.0
      %1442 = vmatpush1.msra.mxu0 0.0
      %1443 = vmatprep.subr.mxu0 0.0
      %1444 = vmatpush1.msra.mxu0 0.0
      %1445 = vmatprep.subr.mxu0 0.0
      %1446 = vmatpush1.msra.mxu0 0.0
      %1447 = vmatprep.subr.mxu0 0.0
      %1448 = vmatpush1.msra.mxu0 0.0
      %1449 = vmatprep.subr.mxu0 0.0
      %1450 = vmatpush1.msra.mxu0 0.0
      %1451 = vmatprep.subr.mxu0 0.0
      %1452 = vmatpush1.msra.mxu0 0.0
      %1453 = vmatprep.mubr.f32.mxu0 0.0
      %1454 = vmatmul.mubr.f32.gmra.mrb[0].mxu0 %v1387
      %v1455 = vpop.f32.mrb[0].mxu0
      %v1456 = vadd.f32 0.0, %v1455
      %v1457 = vpop.f32.mrb[0].mxu0
      %1458 = vdwg.mxu0
      %v1459 = vadd.f32 %v1220, %v1456
      %1460 = vrot.lane.b32.xlu0 %v729, 104
      %v1461 = vpop.permute.xlu0 %1460
      %1462 = vrot.lane.b32.xlu0 %v726, 72
      %v1463 = vpop.permute.xlu0 %1462
      %v1464 = vsel %vm745, %v1461, 0
      %v1466 = vsel %vm745, %v1463, 0
      %1468 = vmatprep.subr.mxu0 0.0
      %1469 = vmatpush1.xpose.msra.mxu0 %v1466
      %1470 = vmatprep.subr.mxu0 0.0
      %1471 = vmatpush1.xpose.msra.mxu0 0.0
      %1472 = vmatprep.subr.mxu0 0.0
      %1473 = vmatpush1.xpose.msra.mxu0 0.0
      %1474 = vmatprep.subr.mxu0 0.0
      %1475 = vmatpush1.xpose.msra.mxu0 0.0
      %1476 = vmatprep.subr.mxu0 0.0
      %1477 = vmatpush1.xpose.msra.mxu0 0.0
      %1478 = vmatprep.subr.mxu0 0.0
      %1479 = vmatpush1.xpose.msra.mxu0 0.0
      %1480 = vmatprep.subr.mxu0 0.0
      %1481 = vmatpush1.xpose.msra.mxu0 0.0
      %1482 = vmatprep.subr.mxu0 0.0
      %1483 = vmatpush1.xpose.msra.mxu0 0.0
      %1484 = vmatprep.subr.mxu0 0.0
      %1485 = vmatpush1.xpose.msra.mxu0 0.0
      %1486 = vmatprep.subr.mxu0 0.0
      %1487 = vmatpush1.xpose.msra.mxu0 0.0
      %1488 = vmatprep.subr.mxu0 0.0
      %1489 = vmatpush1.xpose.msra.mxu0 0.0
      %1490 = vmatprep.subr.mxu0 0.0
      %1491 = vmatpush1.xpose.msra.mxu0 0.0
      %1492 = vmatprep.subr.mxu0 0.0
      %1493 = vmatpush1.xpose.msra.mxu0 0.0
      %1494 = vmatprep.subr.mxu0 0.0
      %1495 = vmatpush1.xpose.msra.mxu0 0.0
      %1496 = vmatprep.subr.mxu0 0.0
      %1497 = vmatpush1.xpose.msra.mxu0 0.0
      %1498 = vmatprep.subr.mxu0 0.0
      %1499 = vmatpush1.xpose.msra.mxu0 0.0
      %1500 = vmatprep.subr.mxu0 0.0
      %1501 = vmatpush1.xpose.msra.mxu0 0.0
      %1502 = vmatprep.subr.mxu0 0.0
      %1503 = vmatpush1.xpose.msra.mxu0 0.0
      %1504 = vmatprep.subr.mxu0 0.0
      %1505 = vmatpush1.xpose.msra.mxu0 0.0
      %1506 = vmatprep.subr.mxu0 0.0
      %1507 = vmatpush1.xpose.msra.mxu0 0.0
      %1508 = vmatprep.subr.mxu0 0.0
      %1509 = vmatpush1.xpose.msra.mxu0 0.0
      %1510 = vmatprep.subr.mxu0 0.0
      %1511 = vmatpush1.xpose.msra.mxu0 0.0
      %1512 = vmatprep.subr.mxu0 0.0
      %1513 = vmatpush1.xpose.msra.mxu0 0.0
      %1514 = vmatprep.subr.mxu0 0.0
      %1515 = vmatpush1.xpose.msra.mxu0 0.0
      %1516 = vmatprep.subr.mxu0 0.0
      %1517 = vmatpush1.xpose.msra.mxu0 0.0
      %1518 = vmatprep.subr.mxu0 0.0
      %1519 = vmatpush1.xpose.msra.mxu0 0.0
      %1520 = vmatprep.subr.mxu0 0.0
      %1521 = vmatpush1.xpose.msra.mxu0 0.0
      %1522 = vmatprep.subr.mxu0 0.0
      %1523 = vmatpush1.xpose.msra.mxu0 0.0
      %1524 = vmatprep.subr.mxu0 0.0
      %1525 = vmatpush1.xpose.msra.mxu0 0.0
      %1526 = vmatprep.subr.mxu0 0.0
      %1527 = vmatpush1.xpose.msra.mxu0 0.0
      %1528 = vmatprep.subr.mxu0 0.0
      %1529 = vmatpush1.xpose.msra.mxu0 0.0
      %1530 = vmatprep.subr.mxu0 0.0
      %1531 = vmatpush1.xpose.msra.mxu0 0.0
      %1532 = vmatprep.mubr.f32.mxu0 0.0
      %1533 = vmatmul.mubr.f32.gmra.mrb[0].mxu0 %v1464
      %v1534 = vpop.f32.mrb[0].mxu0
      %v1535 = vadd.f32 0.0, %v1534
      %v1536 = vpop.f32.mrb[0].mxu0
      %1537 = vdwg.mxu0
      %v1538 = vsel %vm745, %v1535, -inf
      %1539 = vmax.xlane.f32.xlu0 %v1538
      %v1540 = vpop.xlane.xlu0 %1539
      %v1541 = vsub.f32 %v1535, %v1540
      %v1542 = vmul.f32 %v1541, 1.442695
      %v1543 = vpow.pop %v1542
      %v1544 = vsel %vm745, %v1543, 0.0
      %1545 = vadd.xlane.f32.xlu0 %v1544
      %v1546 = vpop.xlane.xlu0 %1545
      %v1547 = vrcp.pop %v1546
      %v1548 = vmul.f32 %v1543, %v1547
      %1549 = vrot.lane.b32.xlu0 %v726, 40
      %v1550 = vpop.permute.xlu0 %1549
      %v1553 = vsel %vm745, %v1548, 0
      %1555 = vmatprep.subr.mxu0 0.0
      %1556 = vmatpush1.msra.mxu0 %v1550
      %1557 = vmatprep.subr.mxu0 0.0
      %1558 = vmatpush1.msra.mxu0 0.0
      %1559 = vmatprep.subr.mxu0 0.0
      %1560 = vmatpush1.msra.mxu0 0.0
      %1561 = vmatprep.subr.mxu0 0.0
      %1562 = vmatpush1.msra.mxu0 0.0
      %1563 = vmatprep.subr.mxu0 0.0
      %1564 = vmatpush1.msra.mxu0 0.0
      %1565 = vmatprep.subr.mxu0 0.0
      %1566 = vmatpush1.msra.mxu0 0.0
      %1567 = vmatprep.subr.mxu0 0.0
      %1568 = vmatpush1.msra.mxu0 0.0
      %1569 = vmatprep.subr.mxu0 0.0
      %1570 = vmatpush1.msra.mxu0 0.0
      %1571 = vmatprep.subr.mxu0 0.0
      %1572 = vmatpush1.msra.mxu0 0.0
      %1573 = vmatprep.subr.mxu0 0.0
      %1574 = vmatpush1.msra.mxu0 0.0
      %1575 = vmatprep.subr.mxu0 0.0
      %1576 = vmatpush1.msra.mxu0 0.0
      %1577 = vmatprep.subr.mxu0 0.0
      %1578 = vmatpush1.msra.mxu0 0.0
      %1579 = vmatprep.subr.mxu0 0.0
      %1580 = vmatpush1.msra.mxu0 0.0
      %1581 = vmatprep.subr.mxu0 0.0
      %1582 = vmatpush1.msra.mxu0 0.0
      %1583 = vmatprep.subr.mxu0 0.0
      %1584 = vmatpush1.msra.mxu0 0.0
      %1585 = vmatprep.subr.mxu0 0.0
      %1586 = vmatpush1.msra.mxu0 0.0
      %1587 = vmatprep.subr.mxu0 0.0
      %1588 = vmatpush1.msra.mxu0 0.0
      %1589 = vmatprep.subr.mxu0 0.0
      %1590 = vmatpush1.msra.mxu0 0.0
      %1591 = vmatprep.subr.mxu0 0.0
      %1592 = vmatpush1.msra.mxu0 0.0
      %1593 = vmatprep.subr.mxu0 0.0
      %1594 = vmatpush1.msra.mxu0 0.0
      %1595 = vmatprep.subr.mxu0 0.0
      %1596 = vmatpush1.msra.mxu0 0.0
      %1597 = vmatprep.subr.mxu0 0.0
      %1598 = vmatpush1.msra.mxu0 0.0
      %1599 = vmatprep.subr.mxu0 0.0
      %1600 = vmatpush1.msra.mxu0 0.0
      %1601 = vmatprep.subr.mxu0 0.0
      %1602 = vmatpush1.msra.mxu0 0.0
      %1603 = vmatprep.subr.mxu0 0.0
      %1604 = vmatpush1.msra.mxu0 0.0
      %1605 = vmatprep.subr.mxu0 0.0
      %1606 = vmatpush1.msra.mxu0 0.0
      %1607 = vmatprep.subr.mxu0 0.0
      %1608 = vmatpush1.msra.mxu0 0.0
      %1609 = vmatprep.subr.mxu0 0.0
      %1610 = vmatpush1.msra.mxu0 0.0
      %1611 = vmatprep.subr.mxu0 0.0
      %1612 = vmatpush1.msra.mxu0 0.0
      %1613 = vmatprep.subr.mxu0 0.0
      %1614 = vmatpush1.msra.mxu0 0.0
      %1615 = vmatprep.subr.mxu0 0.0
      %1616 = vmatpush1.msra.mxu0 0.0
      %1617 = vmatprep.subr.mxu0 0.0
      %1618 = vmatpush1.msra.mxu0 0.0
      %1619 = vmatprep.mubr.f32.mxu0 0.0
      %1620 = vmatmul.mubr.f32.gmra.mrb[0].mxu0 %v1553
      %v1621 = vpop.f32.mrb[0].mxu0
      %v1622 = vadd.f32 0.0, %v1621
      %v1623 = vpop.f32.mrb[0].mxu0
      %1624 = vdwg.mxu0
      %v1626 = vsel %vm745, %v1622, 0
      %1628 = vmatprep.subr.mxu0 0.0
      %1629 = vmatpush1.msra.mxu0 %v733
      %1630 = vmatprep.subr.mxu0 0.0
      %1631 = vmatpush1.msra.mxu0 0.0
      %1632 = vmatprep.subr.mxu0 0.0
      %1633 = vmatpush1.msra.mxu0 0.0
      %1634 = vmatprep.subr.mxu0 0.0
      %1635 = vmatpush1.msra.mxu0 0.0
      %1636 = vmatprep.subr.mxu0 0.0
      %1637 = vmatpush1.msra.mxu0 0.0
      %1638 = vmatprep.subr.mxu0 0.0
      %1639 = vmatpush1.msra.mxu0 0.0
      %1640 = vmatprep.subr.mxu0 0.0
      %1641 = vmatpush1.msra.mxu0 0.0
      %1642 = vmatprep.subr.mxu0 0.0
      %1643 = vmatpush1.msra.mxu0 0.0
      %1644 = vmatprep.subr.mxu0 0.0
      %1645 = vmatpush1.msra.mxu0 0.0
      %1646 = vmatprep.subr.mxu0 0.0
      %1647 = vmatpush1.msra.mxu0 0.0
      %1648 = vmatprep.subr.mxu0 0.0
      %1649 = vmatpush1.msra.mxu0 0.0
      %1650 = vmatprep.subr.mxu0 0.0
      %1651 = vmatpush1.msra.mxu0 0.0
      %1652 = vmatprep.subr.mxu0 0.0
      %1653 = vmatpush1.msra.mxu0 0.0
      %1654 = vmatprep.subr.mxu0 0.0
      %1655 = vmatpush1.msra.mxu0 0.0
      %1656 = vmatprep.subr.mxu0 0.0
      %1657 = vmatpush1.msra.mxu0 0.0
      %1658 = vmatprep.subr.mxu0 0.0
      %1659 = vmatpush1.msra.mxu0 0.0
      %1660 = vmatprep.subr.mxu0 0.0
      %1661 = vmatpush1.msra.mxu0 0.0
      %1662 = vmatprep.subr.mxu0 0.0
      %1663 = vmatpush1.msra.mxu0 0.0
      %1664 = vmatprep.subr.mxu0 0.0
      %1665 = vmatpush1.msra.mxu0 0.0
      %1666 = vmatprep.subr.mxu0 0.0
      %1667 = vmatpush1.msra.mxu0 0.0
      %1668 = vmatprep.subr.mxu0 0.0
      %1669 = vmatpush1.msra.mxu0 0.0
      %1670 = vmatprep.subr.mxu0 0.0
      %1671 = vmatpush1.msra.mxu0 0.0
      %1672 = vmatprep.subr.mxu0 0.0
      %1673 = vmatpush1.msra.mxu0 0.0
      %1674 = vmatprep.subr.mxu0 0.0
      %1675 = vmatpush1.msra.mxu0 0.0
      %1676 = vmatprep.subr.mxu0 0.0
      %1677 = vmatpush1.msra.mxu0 0.0
      %1678 = vmatprep.subr.mxu0 0.0
      %1679 = vmatpush1.msra.mxu0 0.0
      %1680 = vmatprep.subr.mxu0 0.0
      %1681 = vmatpush1.msra.mxu0 0.0
      %1682 = vmatprep.subr.mxu0 0.0
      %1683 = vmatpush1.msra.mxu0 0.0
      %1684 = vmatprep.subr.mxu0 0.0
      %1685 = vmatpush1.msra.mxu0 0.0
      %1686 = vmatprep.subr.mxu0 0.0
      %1687 = vmatpush1.msra.mxu0 0.0
      %1688 = vmatprep.subr.mxu0 0.0
      %1689 = vmatpush1.msra.mxu0 0.0
      %1690 = vmatprep.subr.mxu0 0.0
      %1691 = vmatpush1.msra.mxu0 0.0
      %1692 = vmatprep.mubr.f32.mxu0 0.0
      %1693 = vmatmul.mubr.f32.gmra.mrb[0].mxu0 %v1626
      %v1694 = vpop.f32.mrb[0].mxu0
      %v1695 = vadd.f32 0.0, %v1694
      %v1696 = vpop.f32.mrb[0].mxu0
      %1697 = vdwg.mxu0
      %v1698 = vadd.f32 %v1459, %v1695
      %v1699 = vadd.f32 %v642, %v1698
      %v1700 = vld [vmem:[%s6] sm:$0x1]
      %v1701 = vld [vmem:[%s7] sm:$0x1]
      %v1702 = vsel %vm655, %v1699, 0.0
      %1703 = vadd.xlane.f32.xlu0 %v1702
      %v1704 = vpop.xlane.xlu0 %1703
      %v1705 = vrcp.pop 32.0
      %v1706 = vmul.f32 %v1704, %v1705
      %v1707 = vsub.f32 %v1699, %v1706
      %v1708 = vmul.f32 %v1707, %v1707
      %v1709 = vsel %vm655, %v1708, 0.0
      %1710 = vadd.xlane.f32.xlu0 %v1709
      %v1711 = vpop.xlane.xlu0 %1710
      %v1712 = vmul.f32 %v1711, %v1705
      %v1713 = vadd.f32 %v1712, 1e-05
      %v1714 = vrsqrt.pop %v1713
      %v1715 = vmul.f32 %v1707, %v1714
      %v1717 = vlaneseq
      %v1718 = vshrl.u32 %v1717, 7
      %v1719 = vsub.s32 0, %v1718
      %v1720 = vrot.slane %v1700, %v1719
      %v1722 = vmul.f32 %v1715, %v1720
      %v1724 = vlaneseq
      %v1725 = vshrl.u32 %v1724, 7
      %v1726 = vsub.s32 0, %v1725
      %v1727 = vrot.slane %v1701, %v1726
      %v1729 = vadd.f32 %v1722, %v1727
      %v1730 = vld [vmem:[%s8] sm:$0xff]
      %v1731 = vld [vmem:[%s8 + $0x8] sm:$0xff]
      %v1732 = vld [vmem:[%s8 + $0x10] sm:$0xff]
      %v1733 = vld [vmem:[%s8 + $0x18] sm:$0xff]
      %v1734 = vld [vmem:[%s9] sm:$0x1]
      %v1736 = vlaneseq
      %v1737 = vshrl.u32 %v1736, 7
      %v1738 = vsub.s32 0, %v1737
      %v1739 = vrot.slane %v1734, %v1738
      %v1742 = vsel %vm655, %v1729, 0
      %1744 = vmatprep.subr.mxu0 0.0
      %1745 = vmatpush1.msra.mxu0 %v1730
      %1746 = vmatprep.subr.mxu0 0.0
      %1747 = vmatpush1.msra.mxu0 %v1731
      %1748 = vmatprep.subr.mxu0 0.0
      %1749 = vmatpush1.msra.mxu0 %v1732
      %1750 = vmatprep.subr.mxu0 0.0
      %1751 = vmatpush1.msra.mxu0 %v1733
      %1752 = vmatprep.subr.mxu0 0.0
      %1753 = vmatpush1.msra.mxu0 0.0
      %1754 = vmatprep.subr.mxu0 0.0
      %1755 = vmatpush1.msra.mxu0 0.0
      %1756 = vmatprep.subr.mxu0 0.0
      %1757 = vmatpush1.msra.mxu0 0.0
      %1758 = vmatprep.subr.mxu0 0.0
      %1759 = vmatpush1.msra.mxu0 0.0
      %1760 = vmatprep.subr.mxu0 0.0
      %1761 = vmatpush1.msra.mxu0 0.0
      %1762 = vmatprep.subr.mxu0 0.0
      %1763 = vmatpush1.msra.mxu0 0.0
      %1764 = vmatprep.subr.mxu0 0.0
      %1765 = vmatpush1.msra.mxu0 0.0
      %1766 = vmatprep.subr.mxu0 0.0
      %1767 = vmatpush1.msra.mxu0 0.0
      %1768 = vmatprep.subr.mxu0 0.0
      %1769 = vmatpush1.msra.mxu0 0.0
      %1770 = vmatprep.subr.mxu0 0.0
      %1771 = vmatpush1.msra.mxu0 0.0
      %1772 = vmatprep.subr.mxu0 0.0
      %1773 = vmatpush1.msra.mxu0 0.0
      %1774 = vmatprep.subr.mxu0 0.0
      %1775 = vmatpush1.msra.mxu0 0.0
      %1776 = vmatprep.subr.mxu0 0.0
      %1777 = vmatpush1.msra.mxu0 0.0
      %1778 = vmatprep.subr.mxu0 0.0
      %1779 = vmatpush1.msra.mxu0 0.0
      %1780 = vmatprep.subr.mxu0 0.0
      %1781 = vmatpush1.msra.mxu0 0.0
      %1782 = vmatprep.subr.mxu0 0.0
      %1783 = vmatpush1.msra.mxu0 0.0
      %1784 = vmatprep.subr.mxu0 0.0
      %1785 = vmatpush1.msra.mxu0 0.0
      %1786 = vmatprep.subr.mxu0 0.0
      %1787 = vmatpush1.msra.mxu0 0.0
      %1788 = vmatprep.subr.mxu0 0.0
      %1789 = vmatpush1.msra.mxu0 0.0
      %1790 = vmatprep.subr.mxu0 0.0
      %1791 = vmatpush1.msra.mxu0 0.0
      %1792 = vmatprep.subr.mxu0 0.0
      %1793 = vmatpush1.msra.mxu0 0.0
      %1794 = vmatprep.subr.mxu0 0.0
      %1795 = vmatpush1.msra.mxu0 0.0
      %1796 = vmatprep.subr.mxu0 0.0
      %1797 = vmatpush1.msra.mxu0 0.0
      %1798 = vmatprep.subr.mxu0 0.0
      %1799 = vmatpush1.msra.mxu0 0.0
      %1800 = vmatprep.subr.mxu0 0.0
      %1801 = vmatpush1.msra.mxu0 0.0
      %1802 = vmatprep.subr.mxu0 0.0
      %1803 = vmatpush1.msra.mxu0 0.0
      %1804 = vmatprep.subr.mxu0 0.0
      %1805 = vmatpush1.msra.mxu0 0.0
      %1806 = vmatprep.subr.mxu0 0.0
      %1807 = vmatpush1.msra.mxu0 0.0
      %1808 = vmatprep.mubr.f32.mxu0 0.0
      %1809 = vmatmul.mubr.f32.gmra.mrb[0].mxu0 %v1742
      %v1810 = vpop.f32.mrb[0].mxu0
      %v1811 = vadd.f32 %v1739, %v1810
      %v1812 = vpop.f32.mrb[0].mxu0
      %1813 = vdwg.mxu0
      %1818 = vrot.lane.b32.xlu0 %v1730, 96
      %v1819 = vpop.permute.xlu0 %1818
      %1820 = vrot.lane.b32.xlu0 %v1731, 96
      %v1821 = vpop.permute.xlu0 %1820
      %1822 = vrot.lane.b32.xlu0 %v1732, 96
      %v1823 = vpop.permute.xlu0 %1822
      %1824 = vrot.lane.b32.xlu0 %v1733, 96
      %v1825 = vpop.permute.xlu0 %1824
      %1830 = vrot.lane.b32.xlu0 %v1739, 96
      %v1831 = vpop.permute.xlu0 %1830
      %v1834 = vsel %vm655, %v643, 0
      %1836 = vmatprep.subr.mxu0 0.0
      %1837 = vmatpush1.msra.mxu0 %v1819
      %1838 = vmatprep.subr.mxu0 0.0
      %1839 = vmatpush1.msra.mxu0 %v1821
      %1840 = vmatprep.subr.mxu0 0.0
      %1841 = vmatpush1.msra.mxu0 %v1823
      %1842 = vmatprep.subr.mxu0 0.0
      %1843 = vmatpush1.msra.mxu0 %v1825
      %1844 = vmatprep.subr.mxu0 0.0
      %1845 = vmatpush1.msra.mxu0 0.0
      %1846 = vmatprep.subr.mxu0 0.0
      %1847 = vmatpush1.msra.mxu0 0.0
      %1848 = vmatprep.subr.mxu0 0.0
      %1849 = vmatpush1.msra.mxu0 0.0
      %1850 = vmatprep.subr.mxu0 0.0
      %1851 = vmatpush1.msra.mxu0 0.0
      %1852 = vmatprep.subr.mxu0 0.0
      %1853 = vmatpush1.msra.mxu0 0.0
      %1854 = vmatprep.subr.mxu0 0.0
      %1855 = vmatpush1.msra.mxu0 0.0
      %1856 = vmatprep.subr.mxu0 0.0
      %1857 = vmatpush1.msra.mxu0 0.0
      %1858 = vmatprep.subr.mxu0 0.0
      %1859 = vmatpush1.msra.mxu0 0.0
      %1860 = vmatprep.subr.mxu0 0.0
      %1861 = vmatpush1.msra.mxu0 0.0
      %1862 = vmatprep.subr.mxu0 0.0
      %1863 = vmatpush1.msra.mxu0 0.0
      %1864 = vmatprep.subr.mxu0 0.0
      %1865 = vmatpush1.msra.mxu0 0.0
      %1866 = vmatprep.subr.mxu0 0.0
      %1867 = vmatpush1.msra.mxu0 0.0
      %1868 = vmatprep.subr.mxu0 0.0
      %1869 = vmatpush1.msra.mxu0 0.0
      %1870 = vmatprep.subr.mxu0 0.0
      %1871 = vmatpush1.msra.mxu0 0.0
      %1872 = vmatprep.subr.mxu0 0.0
      %1873 = vmatpush1.msra.mxu0 0.0
      %1874 = vmatprep.subr.mxu0 0.0
      %1875 = vmatpush1.msra.mxu0 0.0
      %1876 = vmatprep.subr.mxu0 0.0
      %1877 = vmatpush1.msra.mxu0 0.0
      %1878 = vmatprep.subr.mxu0 0.0
      %1879 = vmatpush1.msra.mxu0 0.0
      %1880 = vmatprep.subr.mxu0 0.0
      %1881 = vmatpush1.msra.mxu0 0.0
      %1882 = vmatprep.subr.mxu0 0.0
      %1883 = vmatpush1.msra.mxu0 0.0
      %1884 = vmatprep.subr.mxu0 0.0
      %1885 = vmatpush1.msra.mxu0 0.0
      %1886 = vmatprep.subr.mxu0 0.0
      %1887 = vmatpush1.msra.mxu0 0.0
      %1888 = vmatprep.subr.mxu0 0.0
      %1889 = vmatpush1.msra.mxu0 0.0
      %1890 = vmatprep.subr.mxu0 0.0
      %1891 = vmatpush1.msra.mxu0 0.0
      %1892 = vmatprep.subr.mxu0 0.0
      %1893 = vmatpush1.msra.mxu0 0.0
      %1894 = vmatprep.subr.mxu0 0.0
      %1895 = vmatpush1.msra.mxu0 0.0
      %1896 = vmatprep.subr.mxu0 0.0
      %1897 = vmatpush1.msra.mxu0 0.0
      %1898 = vmatprep.subr.mxu0 0.0
      %1899 = vmatpush1.msra.mxu0 0.0
      %1900 = vmatprep.mubr.f32.mxu0 0.0
      %1901 = vmatmul.mubr.f32.gmra.mrb[0].mxu0 %v1834
      %v1902 = vpop.f32.mrb[0].mxu0
      %v1903 = vadd.f32 %v1831, %v1902
      %v1904 = vpop.f32.mrb[0].mxu0
      %1905 = vdwg.mxu0
      %v1906 = vmul.f32 %v1811, 0.35355338
      %v1907 = vld [vmem:[%s10] sm:$0xff]
      %v1908 = vld [vmem:[%s10 + $0x8] sm:$0xff]
      %v1909 = vld [vmem:[%s10 + $0x10] sm:$0xff]
      %v1910 = vld [vmem:[%s10 + $0x18] sm:$0xff]
      %v1911 = vld [vmem:[%s11] sm:$0x1]
      %v1913 = vlaneseq
      %v1914 = vshrl.u32 %v1913, 7
      %v1915 = vsub.s32 0, %v1914
      %v1916 = vrot.slane %v1911, %v1915
      %v1918 = vadd.f32 %v1916, 0.0
      %v1920 = vsel %vm745, %v1906, 0
      %v1923 = vsel %vm745, %v1903, 0
      %1925 = vmatprep.subr.mxu0 0.0
      %1926 = vmatpush1.xpose.msra.mxu0 %v1923
      %1927 = vmatprep.subr.mxu0 0.0
      %1928 = vmatpush1.xpose.msra.mxu0 0.0
      %1929 = vmatprep.subr.mxu0 0.0
      %1930 = vmatpush1.xpose.msra.mxu0 0.0
      %1931 = vmatprep.subr.mxu0 0.0
      %1932 = vmatpush1.xpose.msra.mxu0 0.0
      %1933 = vmatprep.subr.mxu0 0.0
      %1934 = vmatpush1.xpose.msra.mxu0 0.0
      %1935 = vmatprep.subr.mxu0 0.0
      %1936 = vmatpush1.xpose.msra.mxu0 0.0
      %1937 = vmatprep.subr.mxu0 0.0
      %1938 = vmatpush1.xpose.msra.mxu0 0.0
      %1939 = vmatprep.subr.mxu0 0.0
      %1940 = vmatpush1.xpose.msra.mxu0 0.0
      %1941 = vmatprep.subr.mxu0 0.0
      %1942 = vmatpush1.xpose.msra.mxu0 0.0
      %1943 = vmatprep.subr.mxu0 0.0
      %1944 = vmatpush1.xpose.msra.mxu0 0.0
      %1945 = vmatprep.subr.mxu0 0.0
      %1946 = vmatpush1.xpose.msra.mxu0 0.0
      %1947 = vmatprep.subr.mxu0 0.0
      %1948 = vmatpush1.xpose.msra.mxu0 0.0
      %1949 = vmatprep.subr.mxu0 0.0
      %1950 = vmatpush1.xpose.msra.mxu0 0.0
      %1951 = vmatprep.subr.mxu0 0.0
      %1952 = vmatpush1.xpose.msra.mxu0 0.0
      %1953 = vmatprep.subr.mxu0 0.0
      %1954 = vmatpush1.xpose.msra.mxu0 0.0
      %1955 = vmatprep.subr.mxu0 0.0
      %1956 = vmatpush1.xpose.msra.mxu0 0.0
      %1957 = vmatprep.subr.mxu0 0.0
      %1958 = vmatpush1.xpose.msra.mxu0 0.0
      %1959 = vmatprep.subr.mxu0 0.0
      %1960 = vmatpush1.xpose.msra.mxu0 0.0
      %1961 = vmatprep.subr.mxu0 0.0
      %1962 = vmatpush1.xpose.msra.mxu0 0.0
      %1963 = vmatprep.subr.mxu0 0.0
      %1964 = vmatpush1.xpose.msra.mxu0 0.0
      %1965 = vmatprep.subr.mxu0 0.0
      %1966 = vmatpush1.xpose.msra.mxu0 0.0
      %1967 = vmatprep.subr.mxu0 0.0
      %1968 = vmatpush1.xpose.msra.mxu0 0.0
      %1969 = vmatprep.subr.mxu0 0.0
      %1970 = vmatpush1.xpose.msra.mxu0 0.0
      %1971 = vmatprep.subr.mxu0 0.0
      %1972 = vmatpush1.xpose.msra.mxu0 0.0
      %1973 = vmatprep.subr.mxu0 0.0
      %1974 = vmatpush1.xpose.msra.mxu0 0.0
      %1975 = vmatprep.subr.mxu0 0.0
      %1976 = vmatpush1.xpose.msra.mxu0 0.0
      %1977 = vmatprep.subr.mxu0 0.0
      %1978 = vmatpush1.xpose.msra.mxu0 0.0
      %1979 = vmatprep.subr.mxu0 0.0
      %1980 = vmatpush1.xpose.msra.mxu0 0.0
      %1981 = vmatprep.subr.mxu0 0.0
      %1982 = vmatpush1.xpose.msra.mxu0 0.0
      %1983 = vmatprep.subr.mxu0 0.0
      %1984 = vmatpush1.xpose.msra.mxu0 0.0
      %1985 = vmatprep.subr.mxu0 0.0
      %1986 = vmatpush1.xpose.msra.mxu0 0.0
      %1987 = vmatprep.subr.mxu0 0.0
      %1988 = vmatpush1.xpose.msra.mxu0 0.0
      %1989 = vmatprep.mubr.f32.mxu0 0.0
      %1990 = vmatmul.mubr.f32.gmra.mrb[0].mxu0 %v1920
      %v1991 = vpop.f32.mrb[0].mxu0
      %v1992 = vadd.f32 0.0, %v1991
      %v1993 = vpop.f32.mrb[0].mxu0
      %1994 = vdwg.mxu0
      %v1995 = vsel %vm745, %v1992, -inf
      %1996 = vmax.xlane.f32.xlu0 %v1995
      %v1997 = vpop.xlane.xlu0 %1996
      %v1998 = vsub.f32 %v1992, %v1997
      %v1999 = vmul.f32 %v1998, 1.442695
      %v2000 = vpow.pop %v1999
      %v2001 = vsel %vm745, %v2000, 0.0
      %2002 = vadd.xlane.f32.xlu0 %v2001
      %v2003 = vpop.xlane.xlu0 %2002
      %v2004 = vrcp.pop %v2003
      %v2005 = vmul.f32 %v2000, %v2004
      %2006 = vrot.lane.b32.xlu0 %v1903, 96
      %v2007 = vpop.permute.xlu0 %2006
      %v2010 = vsel %vm745, %v2005, 0
      %2012 = vmatprep.subr.mxu0 0.0
      %2013 = vmatpush1.msra.mxu0 %v2007
      %2014 = vmatprep.subr.mxu0 0.0
      %2015 = vmatpush1.msra.mxu0 0.0
      %2016 = vmatprep.subr.mxu0 0.0
      %2017 = vmatpush1.msra.mxu0 0.0
      %2018 = vmatprep.subr.mxu0 0.0
      %2019 = vmatpush1.msra.mxu0 0.0
      %2020 = vmatprep.subr.mxu0 0.0
      %2021 = vmatpush1.msra.mxu0 0.0
      %2022 = vmatprep.subr.mxu0 0.0
      %2023 = vmatpush1.msra.mxu0 0.0
      %2024 = vmatprep.subr.mxu0 0.0
      %2025 = vmatpush1.msra.mxu0 0.0
      %2026 = vmatprep.subr.mxu0 0.0
      %2027 = vmatpush1.msra.mxu0 0.0
      %2028 = vmatprep.subr.mxu0 0.0
      %2029 = vmatpush1.msra.mxu0 0.0
      %2030 = vmatprep.subr.mxu0 0.0
      %2031 = vmatpush1.msra.mxu0 0.0
      %2032 = vmatprep.subr.mxu0 0.0
      %2033 = vmatpush1.msra.mxu0 0.0
      %2034 = vmatprep.subr.mxu0 0.0
      %2035 = vmatpush1.msra.mxu0 0.0
      %2036 = vmatprep.subr.mxu0 0.0
      %2037 = vmatpush1.msra.mxu0 0.0
      %2038 = vmatprep.subr.mxu0 0.0
      %2039 = vmatpush1.msra.mxu0 0.0
      %2040 = vmatprep.subr.mxu0 0.0
      %2041 = vmatpush1.msra.mxu0 0.0
      %2042 = vmatprep.subr.mxu0 0.0
      %2043 = vmatpush1.msra.mxu0 0.0
      %2044 = vmatprep.subr.mxu0 0.0
      %2045 = vmatpush1.msra.mxu0 0.0
      %2046 = vmatprep.subr.mxu0 0.0
      %2047 = vmatpush1.msra.mxu0 0.0
      %2048 = vmatprep.subr.mxu0 0.0
      %2049 = vmatpush1.msra.mxu0 0.0
      %2050 = vmatprep.subr.mxu0 0.0
      %2051 = vmatpush1.msra.mxu0 0.0
      %2052 = vmatprep.subr.mxu0 0.0
      %2053 = vmatpush1.msra.mxu0 0.0
      %2054 = vmatprep.subr.mxu0 0.0
      %2055 = vmatpush1.msra.mxu0 0.0
      %2056 = vmatprep.subr.mxu0 0.0
      %2057 = vmatpush1.msra.mxu0 0.0
      %2058 = vmatprep.subr.mxu0 0.0
      %2059 = vmatpush1.msra.mxu0 0.0
      %2060 = vmatprep.subr.mxu0 0.0
      %2061 = vmatpush1.msra.mxu0 0.0
      %2062 = vmatprep.subr.mxu0 0.0
      %2063 = vmatpush1.msra.mxu0 0.0
      %2064 = vmatprep.subr.mxu0 0.0
      %2065 = vmatpush1.msra.mxu0 0.0
      %2066 = vmatprep.subr.mxu0 0.0
      %2067 = vmatpush1.msra.mxu0 0.0
      %2068 = vmatprep.subr.mxu0 0.0
      %2069 = vmatpush1.msra.mxu0 0.0
      %2070 = vmatprep.subr.mxu0 0.0
      %2071 = vmatpush1.msra.mxu0 0.0
      %2072 = vmatprep.subr.mxu0 0.0
      %2073 = vmatpush1.msra.mxu0 0.0
      %2074 = vmatprep.subr.mxu0 0.0
      %2075 = vmatpush1.msra.mxu0 0.0
      %2076 = vmatprep.mubr.f32.mxu0 0.0
      %2077 = vmatmul.mubr.f32.gmra.mrb[0].mxu0 %v2010
      %v2078 = vpop.f32.mrb[0].mxu0
      %v2079 = vadd.f32 0.0, %v2078
      %v2080 = vpop.f32.mrb[0].mxu0
      %2081 = vdwg.mxu0
      %v2083 = vsel %vm745, %v2079, 0
      %2085 = vmatprep.subr.mxu0 0.0
      %2086 = vmatpush1.msra.mxu0 %v1907
      %2087 = vmatprep.subr.mxu0 0.0
      %2088 = vmatpush1.msra.mxu0 0.0
      %2089 = vmatprep.subr.mxu0 0.0
      %2090 = vmatpush1.msra.mxu0 0.0
      %2091 = vmatprep.subr.mxu0 0.0
      %2092 = vmatpush1.msra.mxu0 0.0
      %2093 = vmatprep.subr.mxu0 0.0
      %2094 = vmatpush1.msra.mxu0 0.0
      %2095 = vmatprep.subr.mxu0 0.0
      %2096 = vmatpush1.msra.mxu0 0.0
      %2097 = vmatprep.subr.mxu0 0.0
      %2098 = vmatpush1.msra.mxu0 0.0
      %2099 = vmatprep.subr.mxu0 0.0
      %2100 = vmatpush1.msra.mxu0 0.0
      %2101 = vmatprep.subr.mxu0 0.0
      %2102 = vmatpush1.msra.mxu0 0.0
      %2103 = vmatprep.subr.mxu0 0.0
      %2104 = vmatpush1.msra.mxu0 0.0
      %2105 = vmatprep.subr.mxu0 0.0
      %2106 = vmatpush1.msra.mxu0 0.0
      %2107 = vmatprep.subr.mxu0 0.0
      %2108 = vmatpush1.msra.mxu0 0.0
      %2109 = vmatprep.subr.mxu0 0.0
      %2110 = vmatpush1.msra.mxu0 0.0
      %2111 = vmatprep.subr.mxu0 0.0
      %2112 = vmatpush1.msra.mxu0 0.0
      %2113 = vmatprep.subr.mxu0 0.0
      %2114 = vmatpush1.msra.mxu0 0.0
      %2115 = vmatprep.subr.mxu0 0.0
      %2116 = vmatpush1.msra.mxu0 0.0
      %2117 = vmatprep.subr.mxu0 0.0
      %2118 = vmatpush1.msra.mxu0 0.0
      %2119 = vmatprep.subr.mxu0 0.0
      %2120 = vmatpush1.msra.mxu0 0.0
      %2121 = vmatprep.subr.mxu0 0.0
      %2122 = vmatpush1.msra.mxu0 0.0
      %2123 = vmatprep.subr.mxu0 0.0
      %2124 = vmatpush1.msra.mxu0 0.0
      %2125 = vmatprep.subr.mxu0 0.0
      %2126 = vmatpush1.msra.mxu0 0.0
      %2127 = vmatprep.subr.mxu0 0.0
      %2128 = vmatpush1.msra.mxu0 0.0
      %2129 = vmatprep.subr.mxu0 0.0
      %2130 = vmatpush1.msra.mxu0 0.0
      %2131 = vmatprep.subr.mxu0 0.0
      %2132 = vmatpush1.msra.mxu0 0.0
      %2133 = vmatprep.subr.mxu0 0.0
      %2134 = vmatpush1.msra.mxu0 0.0
      %2135 = vmatprep.subr.mxu0 0.0
      %2136 = vmatpush1.msra.mxu0 0.0
      %2137 = vmatprep.subr.mxu0 0.0
      %2138 = vmatpush1.msra.mxu0 0.0
      %2139 = vmatprep.subr.mxu0 0.0
      %2140 = vmatpush1.msra.mxu0 0.0
      %2141 = vmatprep.subr.mxu0 0.0
      %2142 = vmatpush1.msra.mxu0 0.0
      %2143 = vmatprep.subr.mxu0 0.0
      %2144 = vmatpush1.msra.mxu0 0.0
      %2145 = vmatprep.subr.mxu0 0.0
      %2146 = vmatpush1.msra.mxu0 0.0
      %2147 = vmatprep.subr.mxu0 0.0
      %2148 = vmatpush1.msra.mxu0 0.0
      %2149 = vmatprep.mubr.f32.mxu0 0.0
      %2150 = vmatmul.mubr.f32.gmra.mrb[0].mxu0 %v2083
      %v2151 = vpop.f32.mrb[0].mxu0
      %v2152 = vadd.f32 0.0, %v2151
      %v2153 = vpop.f32.mrb[0].mxu0
      %2154 = vdwg.mxu0
      %v2155 = vadd.f32 %v1918, %v2152
      %2156 = vrot.lane.b32.xlu0 %v1906, 120
      %v2157 = vpop.permute.xlu0 %2156
      %2158 = vrot.lane.b32.xlu0 %v1903, 120
      %v2159 = vpop.permute.xlu0 %2158
      %v2160 = vsel %vm745, %v2157, 0
      %v2162 = vsel %vm745, %v2159, 0
      %2164 = vmatprep.subr.mxu0 0.0
      %2165 = vmatpush1.xpose.msra.mxu0 %v2162
      %2166 = vmatprep.subr.mxu0 0.0
      %2167 = vmatpush1.xpose.msra.mxu0 0.0
      %2168 = vmatprep.subr.mxu0 0.0
      %2169 = vmatpush1.xpose.msra.mxu0 0.0
      %2170 = vmatprep.subr.mxu0 0.0
      %2171 = vmatpush1.xpose.msra.mxu0 0.0
      %2172 = vmatprep.subr.mxu0 0.0
      %2173 = vmatpush1.xpose.msra.mxu0 0.0
      %2174 = vmatprep.subr.mxu0 0.0
      %2175 = vmatpush1.xpose.msra.mxu0 0.0
      %2176 = vmatprep.subr.mxu0 0.0
      %2177 = vmatpush1.xpose.msra.mxu0 0.0
      %2178 = vmatprep.subr.mxu0 0.0
      %2179 = vmatpush1.xpose.msra.mxu0 0.0
      %2180 = vmatprep.subr.mxu0 0.0
      %2181 = vmatpush1.xpose.msra.mxu0 0.0
      %2182 = vmatprep.subr.mxu0 0.0
      %2183 = vmatpush1.xpose.msra.mxu0 0.0
      %2184 = vmatprep.subr.mxu0 0.0
      %2185 = vmatpush1.xpose.msra.mxu0 0.0
      %2186 = vmatprep.subr.mxu0 0.0
      %2187 = vmatpush1.xpose.msra.mxu0 0.0
      %2188 = vmatprep.subr.mxu0 0.0
      %2189 = vmatpush1.xpose.msra.mxu0 0.0
      %2190 = vmatprep.subr.mxu0 0.0
      %2191 = vmatpush1.xpose.msra.mxu0 0.0
      %2192 = vmatprep.subr.mxu0 0.0
      %2193 = vmatpush1.xpose.msra.mxu0 0.0
      %2194 = vmatprep.subr.mxu0 0.0
      %2195 = vmatpush1.xpose.msra.mxu0 0.0
      %2196 = vmatprep.subr.mxu0 0.0
      %2197 = vmatpush1.xpose.msra.mxu0 0.0
      %2198 = vmatprep.subr.mxu0 0.0
      %2199 = vmatpush1.xpose.msra.mxu0 0.0
      %2200 = vmatprep.subr.mxu0 0.0
      %2201 = vmatpush1.xpose.msra.mxu0 0.0
      %2202 = vmatprep.subr.mxu0 0.0
      %2203 = vmatpush1.xpose.msra.mxu0 0.0
      %2204 = vmatprep.subr.mxu0 0.0
      %2205 = vmatpush1.xpose.msra.mxu0 0.0
      %2206 = vmatprep.subr.mxu0 0.0
      %2207 = vmatpush1.xpose.msra.mxu0 0.0
      %2208 = vmatprep.subr.mxu0 0.0
      %2209 = vmatpush1.xpose.msra.mxu0 0.0
      %2210 = vmatprep.subr.mxu0 0.0
      %2211 = vmatpush1.xpose.msra.mxu0 0.0
      %2212 = vmatprep.subr.mxu0 0.0
      %2213 = vmatpush1.xpose.msra.mxu0 0.0
      %2214 = vmatprep.subr.mxu0 0.0
      %2215 = vmatpush1.xpose.msra.mxu0 0.0
      %2216 = vmatprep.subr.mxu0 0.0
      %2217 = vmatpush1.xpose.msra.mxu0 0.0
      %2218 = vmatprep.subr.mxu0 0.0
      %2219 = vmatpush1.xpose.msra.mxu0 0.0
      %2220 = vmatprep.subr.mxu0 0.0
      %2221 = vmatpush1.xpose.msra.mxu0 0.0
      %2222 = vmatprep.subr.mxu0 0.0
      %2223 = vmatpush1.xpose.msra.mxu0 0.0
      %2224 = vmatprep.subr.mxu0 0.0
      %2225 = vmatpush1.xpose.msra.mxu0 0.0
      %2226 = vmatprep.subr.mxu0 0.0
      %2227 = vmatpush1.xpose.msra.mxu0 0.0
      %2228 = vmatprep.mubr.f32.mxu0 0.0
      %2229 = vmatmul.mubr.f32.gmra.mrb[0].mxu0 %v2160
      %v2230 = vpop.f32.mrb[0].mxu0
      %v2231 = vadd.f32 0.0, %v2230
      %v2232 = vpop.f32.mrb[0].mxu0
      %2233 = vdwg.mxu0
      %v2234 = vsel %vm745, %v2231, -inf
      %2235 = vmax.xlane.f32.xlu0 %v2234
      %v2236 = vpop.xlane.xlu0 %2235
      %v2237 = vsub.f32 %v2231, %v2236
      %v2238 = vmul.f32 %v2237, 1.442695
      %v2239 = vpow.pop %v2238
      %v2240 = vsel %vm745, %v2239, 0.0
      %2241 = vadd.xlane.f32.xlu0 %v2240
      %v2242 = vpop.xlane.xlu0 %2241
      %v2243 = vrcp.pop %v2242
      %v2244 = vmul.f32 %v2239, %v2243
      %2245 = vrot.lane.b32.xlu0 %v1903, 88
      %v2246 = vpop.permute.xlu0 %2245
      %v2249 = vsel %vm745, %v2244, 0
      %2251 = vmatprep.subr.mxu0 0.0
      %2252 = vmatpush1.msra.mxu0 %v2246
      %2253 = vmatprep.subr.mxu0 0.0
      %2254 = vmatpush1.msra.mxu0 0.0
      %2255 = vmatprep.subr.mxu0 0.0
      %2256 = vmatpush1.msra.mxu0 0.0
      %2257 = vmatprep.subr.mxu0 0.0
      %2258 = vmatpush1.msra.mxu0 0.0
      %2259 = vmatprep.subr.mxu0 0.0
      %2260 = vmatpush1.msra.mxu0 0.0
      %2261 = vmatprep.subr.mxu0 0.0
      %2262 = vmatpush1.msra.mxu0 0.0
      %2263 = vmatprep.subr.mxu0 0.0
      %2264 = vmatpush1.msra.mxu0 0.0
      %2265 = vmatprep.subr.mxu0 0.0
      %2266 = vmatpush1.msra.mxu0 0.0
      %2267 = vmatprep.subr.mxu0 0.0
      %2268 = vmatpush1.msra.mxu0 0.0
      %2269 = vmatprep.subr.mxu0 0.0
      %2270 = vmatpush1.msra.mxu0 0.0
      %2271 = vmatprep.subr.mxu0 0.0
      %2272 = vmatpush1.msra.mxu0 0.0
      %2273 = vmatprep.subr.mxu0 0.0
      %2274 = vmatpush1.msra.mxu0 0.0
      %2275 = vmatprep.subr.mxu0 0.0
      %2276 = vmatpush1.msra.mxu0 0.0
      %2277 = vmatprep.subr.mxu0 0.0
      %2278 = vmatpush1.msra.mxu0 0.0
      %2279 = vmatprep.subr.mxu0 0.0
      %2280 = vmatpush1.msra.mxu0 0.0
      %2281 = vmatprep.subr.mxu0 0.0
      %2282 = vmatpush1.msra.mxu0 0.0
      %2283 = vmatprep.subr.mxu0 0.0
      %2284 = vmatpush1.msra.mxu0 0.0
      %2285 = vmatprep.subr.mxu0 0.0
      %2286 = vmatpush1.msra.mxu0 0.0
      %2287 = vmatprep.subr.mxu0 0.0
      %2288 = vmatpush1.msra.mxu0 0.0
      %2289 = vmatprep.subr.mxu0 0.0
      %2290 = vmatpush1.msra.mxu0 0.0
      %2291 = vmatprep.subr.mxu0 0.0
      %2292 = vmatpush1.msra.mxu0 0.0
      %2293 = vmatprep.subr.mxu0 0.0
      %2294 = vmatpush1.msra.mxu0 0.0
      %2295 = vmatprep.subr.mxu0 0.0
      %2296 = vmatpush1.msra.mxu0 0.0
      %2297 = vmatprep.subr.mxu0 0.0
      %2298 = vmatpush1.msra.mxu0 0.0
      %2299 = vmatprep.subr.mxu0 0.0
      %2300 = vmatpush1.msra.mxu0 0.0
      %2301 = vmatprep.subr.mxu0 0.0
      %2302 = vmatpush1.msra.mxu0 0.0
      %2303 = vmatprep.subr.mxu0 0.0
      %2304 = vmatpush1.msra.mxu0 0.0
      %2305 = vmatprep.subr.mxu0 0.0
      %2306 = vmatpush1.msra.mxu0 0.0
      %2307 = vmatprep.subr.mxu0 0.0
      %2308 = vmatpush1.msra.mxu0 0.0
      %2309 = vmatprep.subr.mxu0 0.0
      %2310 = vmatpush1.msra.mxu0 0.0
      %2311 = vmatprep.subr.mxu0 0.0
      %2312 = vmatpush1.msra.mxu0 0.0
      %2313 = vmatprep.subr.mxu0 0.0
      %2314 = vmatpush1.msra.mxu0 0.0
      %2315 = vmatprep.mubr.f32.mxu0 0.0
      %2316 = vmatmul.mubr.f32.gmra.mrb[0].mxu0 %v2249
      %v2317 = vpop.f32.mrb[0].mxu0
      %v2318 = vadd.f32 0.0, %v2317
      %v2319 = vpop.f32.mrb[0].mxu0
      %2320 = vdwg.mxu0
      %v2322 = vsel %vm745, %v2318, 0
      %2324 = vmatprep.subr.mxu0 0.0
      %2325 = vmatpush1.msra.mxu0 %v1908
      %2326 = vmatprep.subr.mxu0 0.0
      %2327 = vmatpush1.msra.mxu0 0.0
      %2328 = vmatprep.subr.mxu0 0.0
      %2329 = vmatpush1.msra.mxu0 0.0
      %2330 = vmatprep.subr.mxu0 0.0
      %2331 = vmatpush1.msra.mxu0 0.0
      %2332 = vmatprep.subr.mxu0 0.0
      %2333 = vmatpush1.msra.mxu0 0.0
      %2334 = vmatprep.subr.mxu0 0.0
      %2335 = vmatpush1.msra.mxu0 0.0
      %2336 = vmatprep.subr.mxu0 0.0
      %2337 = vmatpush1.msra.mxu0 0.0
      %2338 = vmatprep.subr.mxu0 0.0
      %2339 = vmatpush1.msra.mxu0 0.0
      %2340 = vmatprep.subr.mxu0 0.0
      %2341 = vmatpush1.msra.mxu0 0.0
      %2342 = vmatprep.subr.mxu0 0.0
      %2343 = vmatpush1.msra.mxu0 0.0
      %2344 = vmatprep.subr.mxu0 0.0
      %2345 = vmatpush1.msra.mxu0 0.0
      %2346 = vmatprep.subr.mxu0 0.0
      %2347 = vmatpush1.msra.mxu0 0.0
      %2348 = vmatprep.subr.mxu0 0.0
      %2349 = vmatpush1.msra.mxu0 0.0
      %2350 = vmatprep.subr.mxu0 0.0
      %2351 = vmatpush1.msra.mxu0 0.0
      %2352 = vmatprep.subr.mxu0 0.0
      %2353 = vmatpush1.msra.mxu0 0.0
      %2354 = vmatprep.subr.mxu0 0.0
      %2355 = vmatpush1.msra.mxu0 0.0
      %2356 = vmatprep.subr.mxu0 0.0
      %2357 = vmatpush1.msra.mxu0 0.0
      %2358 = vmatprep.subr.mxu0 0.0
      %2359 = vmatpush1.msra.mxu0 0.0
      %2360 = vmatprep.subr.mxu0 0.0
      %2361 = vmatpush1.msra.mxu0 0.0
      %2362 = vmatprep.subr.mxu0 0.0
      %2363 = vmatpush1.msra.mxu0 0.0
      %2364 = vmatprep.subr.mxu0 0.0
      %2365 = vmatpush1.msra.mxu0 0.0
      %2366 = vmatprep.subr.mxu0 0.0
      %2367 = vmatpush1.msra.mxu0 0.0
      %2368 = vmatprep.subr.mxu0 0.0
      %2369 = vmatpush1.msra.mxu0 0.0
      %2370 = vmatprep.subr.mxu0 0.0
      %2371 = vmatpush1.msra.mxu0 0.0
      %2372 = vmatprep.subr.mxu0 0.0
      %2373 = vmatpush1.msra.mxu0 0.0
      %2374 = vmatprep.subr.mxu0 0.0
      %2375 = vmatpush1.msra.mxu0 0.0
      %2376 = vmatprep.subr.mxu0 0.0
      %2377 = vmatpush1.msra.mxu0 0.0
      %2378 = vmatprep.subr.mxu0 0.0
      %2379 = vmatpush1.msra.mxu0 0.0
      %2380 = vmatprep.subr.mxu0 0.0
      %2381 = vmatpush1.msra.mxu0 0.0
      %2382 = vmatprep.subr.mxu0 0.0
      %2383 = vmatpush1.msra.mxu0 0.0
      %2384 = vmatprep.subr.mxu0 0.0
      %2385 = vmatpush1.msra.mxu0 0.0
      %2386 = vmatprep.subr.mxu0 0.0
      %2387 = vmatpush1.msra.mxu0 0.0
      %2388 = vmatprep.mubr.f32.mxu0 0.0
      %2389 = vmatmul.mubr.f32.gmra.mrb[0].mxu0 %v2322
      %v2390 = vpop.f32.mrb[0].mxu0
      %v2391 = vadd.f32 0.0, %v2390
      %v2392 = vpop.f32.mrb[0].mxu0
      %2393 = vdwg.mxu0
      %v2394 = vadd.f32 %v2155, %v2391
      %2395 = vrot.lane.b32.xlu0 %v1906, 112
      %v2396 = vpop.permute.xlu0 %2395
      %2397 = vrot.lane.b32.xlu0 %v1903, 112
      %v2398 = vpop.permute.xlu0 %2397
      %v2399 = vsel %vm745, %v2396, 0
      %v2401 = vsel %vm745, %v2398, 0
      %2403 = vmatprep.subr.mxu0 0.0
      %2404 = vmatpush1.xpose.msra.mxu0 %v2401
      %2405 = vmatprep.subr.mxu0 0.0
      %2406 = vmatpush1.xpose.msra.mxu0 0.0
      %2407 = vmatprep.subr.mxu0 0.0
      %2408 = vmatpush1.xpose.msra.mxu0 0.0
      %2409 = vmatprep.subr.mxu0 0.0
      %2410 = vmatpush1.xpose.msra.mxu0 0.0
      %2411 = vmatprep.subr.mxu0 0.0
      %2412 = vmatpush1.xpose.msra.mxu0 0.0
      %2413 = vmatprep.subr.mxu0 0.0
      %2414 = vmatpush1.xpose.msra.mxu0 0.0
      %2415 = vmatprep.subr.mxu0 0.0
      %2416 = vmatpush1.xpose.msra.mxu0 0.0
      %2417 = vmatprep.subr.mxu0 0.0
      %2418 = vmatpush1.xpose.msra.mxu0 0.0
      %2419 = vmatprep.subr.mxu0 0.0
      %2420 = vmatpush1.xpose.msra.mxu0 0.0
      %2421 = vmatprep.subr.mxu0 0.0
      %2422 = vmatpush1.xpose.msra.mxu0 0.0
      %2423 = vmatprep.subr.mxu0 0.0
      %2424 = vmatpush1.xpose.msra.mxu0 0.0
      %2425 = vmatprep.subr.mxu0 0.0
      %2426 = vmatpush1.xpose.msra.mxu0 0.0
      %2427 = vmatprep.subr.mxu0 0.0
      %2428 = vmatpush1.xpose.msra.mxu0 0.0
      %2429 = vmatprep.subr.mxu0 0.0
      %2430 = vmatpush1.xpose.msra.mxu0 0.0
      %2431 = vmatprep.subr.mxu0 0.0
      %2432 = vmatpush1.xpose.msra.mxu0 0.0
      %2433 = vmatprep.subr.mxu0 0.0
      %2434 = vmatpush1.xpose.msra.mxu0 0.0
      %2435 = vmatprep.subr.mxu0 0.0
      %2436 = vmatpush1.xpose.msra.mxu0 0.0
      %2437 = vmatprep.subr.mxu0 0.0
      %2438 = vmatpush1.xpose.msra.mxu0 0.0
      %2439 = vmatprep.subr.mxu0 0.0
      %2440 = vmatpush1.xpose.msra.mxu0 0.0
      %2441 = vmatprep.subr.mxu0 0.0
      %2442 = vmatpush1.xpose.msra.mxu0 0.0
      %2443 = vmatprep.subr.mxu0 0.0
      %2444 = vmatpush1.xpose.msra.mxu0 0.0
      %2445 = vmatprep.subr.mxu0 0.0
      %2446 = vmatpush1.xpose.msra.mxu0 0.0
      %2447 = vmatprep.subr.mxu0 0.0
      %2448 = vmatpush1.xpose.msra.mxu0 0.0
      %2449 = vmatprep.subr.mxu0 0.0
      %2450 = vmatpush1.xpose.msra.mxu0 0.0
      %2451 = vmatprep.subr.mxu0 0.0
      %2452 = vmatpush1.xpose.msra.mxu0 0.0
      %2453 = vmatprep.subr.mxu0 0.0
      %2454 = vmatpush1.xpose.msra.mxu0 0.0
      %2455 = vmatprep.subr.mxu0 0.0
      %2456 = vmatpush1.xpose.msra.mxu0 0.0
      %2457 = vmatprep.subr.mxu0 0.0
      %2458 = vmatpush1.xpose.msra.mxu0 0.0
      %2459 = vmatprep.subr.mxu0 0.0
      %2460 = vmatpush1.xpose.msra.mxu0 0.0
      %2461 = vmatprep.subr.mxu0 0.0
      %2462 = vmatpush1.xpose.msra.mxu0 0.0
      %2463 = vmatprep.subr.mxu0 0.0
      %2464 = vmatpush1.xpose.msra.mxu0 0.0
      %2465 = vmatprep.subr.mxu0 0.0
      %2466 = vmatpush1.xpose.msra.mxu0 0.0
      %2467 = vmatprep.mubr.f32.mxu0 0.0
      %2468 = vmatmul.mubr.f32.gmra.mrb[0].mxu0 %v2399
      %v2469 = vpop.f32.mrb[0].mxu0
      %v2470 = vadd.f32 0.0, %v2469
      %v2471 = vpop.f32.mrb[0].mxu0
      %2472 = vdwg.mxu0
      %v2473 = vsel %vm745, %v2470, -inf
      %2474 = vmax.xlane.f32.xlu0 %v2473
      %v2475 = vpop.xlane.xlu0 %2474
      %v2476 = vsub.f32 %v2470, %v2475
      %v2477 = vmul.f32 %v2476, 1.442695
      %v2478 = vpow.pop %v2477
      %v2479 = vsel %vm745, %v2478, 0.0
      %2480 = vadd.xlane.f32.xlu0 %v2479
      %v2481 = vpop.xlane.xlu0 %2480
      %v2482 = vrcp.pop %v2481
      %v2483 = vmul.f32 %v2478, %v2482
      %2484 = vrot.lane.b32.xlu0 %v1903, 80
      %v2485 = vpop.permute.xlu0 %2484
      %v2488 = vsel %vm745, %v2483, 0
      %2490 = vmatprep.subr.mxu0 0.0
      %2491 = vmatpush1.msra.mxu0 %v2485
      %2492 = vmatprep.subr.mxu0 0.0
      %2493 = vmatpush1.msra.mxu0 0.0
      %2494 = vmatprep.subr.mxu0 0.0
      %2495 = vmatpush1.msra.mxu0 0.0
      %2496 = vmatprep.subr.mxu0 0.0
      %2497 = vmatpush1.msra.mxu0 0.0
      %2498 = vmatprep.subr.mxu0 0.0
      %2499 = vmatpush1.msra.mxu0 0.0
      %2500 = vmatprep.subr.mxu0 0.0
      %2501 = vmatpush1.msra.mxu0 0.0
      %2502 = vmatprep.subr.mxu0 0.0
      %2503 = vmatpush1.msra.mxu0 0.0
      %2504 = vmatprep.subr.mxu0 0.0
      %2505 = vmatpush1.msra.mxu0 0.0
      %2506 = vmatprep.subr.mxu0 0.0
      %2507 = vmatpush1.msra.mxu0 0.0
      %2508 = vmatprep.subr.mxu0 0.0
      %2509 = vmatpush1.msra.mxu0 0.0
      %2510 = vmatprep.subr.mxu0 0.0
      %2511 = vmatpush1.msra.mxu0 0.0
      %2512 = vmatprep.subr.mxu0 0.0
      %2513 = vmatpush1.msra.mxu0 0.0
      %2514 = vmatprep.subr.mxu0 0.0
      %2515 = vmatpush1.msra.mxu0 0.0
      %2516 = vmatprep.subr.mxu0 0.0
      %2517 = vmatpush1.msra.mxu0 0.0
      %2518 = vmatprep.subr.mxu0 0.0
      %2519 = vmatpush1.msra.mxu0 0.0
      %2520 = vmatprep.subr.mxu0 0.0
      %2521 = vmatpush1.msra.mxu0 0.0
      %2522 = vmatprep.subr.mxu0 0.0
      %2523 = vmatpush1.msra.mxu0 0.0
      %2524 = vmatprep.subr.mxu0 0.0
      %2525 = vmatpush1.msra.mxu0 0.0
      %2526 = vmatprep.subr.mxu0 0.0
      %2527 = vmatpush1.msra.mxu0 0.0
      %2528 = vmatprep.subr.mxu0 0.0
      %2529 = vmatpush1.msra.mxu0 0.0
      %2530 = vmatprep.subr.mxu0 0.0
      %2531 = vmatpush1.msra.mxu0 0.0
      %2532 = vmatprep.subr.mxu0 0.0
      %2533 = vmatpush1.msra.mxu0 0.0
      %2534 = vmatprep.subr.mxu0 0.0
      %2535 = vmatpush1.msra.mxu0 0.0
      %2536 = vmatprep.subr.mxu0 0.0
      %2537 = vmatpush1.msra.mxu0 0.0
      %2538 = vmatprep.subr.mxu0 0.0
      %2539 = vmatpush1.msra.mxu0 0.0
      %2540 = vmatprep.subr.mxu0 0.0
      %2541 = vmatpush1.msra.mxu0 0.0
      %2542 = vmatprep.subr.mxu0 0.0
      %2543 = vmatpush1.msra.mxu0 0.0
      %2544 = vmatprep.subr.mxu0 0.0
      %2545 = vmatpush1.msra.mxu0 0.0
      %2546 = vmatprep.subr.mxu0 0.0
      %2547 = vmatpush1.msra.mxu0 0.0
      %2548 = vmatprep.subr.mxu0 0.0
      %2549 = vmatpush1.msra.mxu0 0.0
      %2550 = vmatprep.subr.mxu0 0.0
      %2551 = vmatpush1.msra.mxu0 0.0
      %2552 = vmatprep.subr.mxu0 0.0
      %2553 = vmatpush1.msra.mxu0 0.0
      %2554 = vmatprep.mubr.f32.mxu0 0.0
      %2555 = vmatmul.mubr.f32.gmra.mrb[0].mxu0 %v2488
      %v2556 = vpop.f32.mrb[0].mxu0
      %v2557 = vadd.f32 0.0, %v2556
      %v2558 = vpop.f32.mrb[0].mxu0
      %2559 = vdwg.mxu0
      %v2561 = vsel %vm745, %v2557, 0
      %2563 = vmatprep.subr.mxu0 0.0
      %2564 = vmatpush1.msra.mxu0 %v1909
      %2565 = vmatprep.subr.mxu0 0.0
      %2566 = vmatpush1.msra.mxu0 0.0
      %2567 = vmatprep.subr.mxu0 0.0
      %2568 = vmatpush1.msra.mxu0 0.0
      %2569 = vmatprep.subr.mxu0 0.0
      %2570 = vmatpush1.msra.mxu0 0.0
      %2571 = vmatprep.subr.mxu0 0.0
      %2572 = vmatpush1.msra.mxu0 0.0
      %2573 = vmatprep.subr.mxu0 0.0
      %2574 = vmatpush1.msra.mxu0 0.0
      %2575 = vmatprep.subr.mxu0 0.0
      %2576 = vmatpush1.msra.mxu0 0.0
      %2577 = vmatprep.subr.mxu0 0.0
      %2578 = vmatpush1.msra.mxu0 0.0
      %2579 = vmatprep.subr.mxu0 0.0
      %2580 = vmatpush1.msra.mxu0 0.0
      %2581 = vmatprep.subr.mxu0 0.0
      %2582 = vmatpush1.msra.mxu0 0.0
      %2583 = vmatprep.subr.mxu0 0.0
      %2584 = vmatpush1.msra.mxu0 0.0
      %2585 = vmatprep.subr.mxu0 0.0
      %2586 = vmatpush1.msra.mxu0 0.0
      %2587 = vmatprep.subr.mxu0 0.0
      %2588 = vmatpush1.msra.mxu0 0.0
      %2589 = vmatprep.subr.mxu0 0.0
      %2590 = vmatpush1.msra.mxu0 0.0
      %2591 = vmatprep.subr.mxu0 0.0
      %2592 = vmatpush1.msra.mxu0 0.0
      %2593 = vmatprep.subr.mxu0 0.0
      %2594 = vmatpush1.msra.mxu0 0.0
      %2595 = vmatprep.subr.mxu0 0.0
      %2596 = vmatpush1.msra.mxu0 0.0
      %2597 = vmatprep.subr.mxu0 0.0
      %2598 = vmatpush1.msra.mxu0 0.0
      %2599 = vmatprep.subr.mxu0 0.0
      %2600 = vmatpush1.msra.mxu0 0.0
      %2601 = vmatprep.subr.mxu0 0.0
      %2602 = vmatpush1.msra.mxu0 0.0
      %2603 = vmatprep.subr.mxu0 0.0
      %2604 = vmatpush1.msra.mxu0 0.0
      %2605 = vmatprep.subr.mxu0 0.0
      %2606 = vmatpush1.msra.mxu0 0.0
      %2607 = vmatprep.subr.mxu0 0.0
      %2608 = vmatpush1.msra.mxu0 0.0
      %2609 = vmatprep.subr.mxu0 0.0
      %2610 = vmatpush1.msra.mxu0 0.0
      %2611 = vmatprep.subr.mxu0 0.0
      %2612 = vmatpush1.msra.mxu0 0.0
      %2613 = vmatprep.subr.mxu0 0.0
      %2614 = vmatpush1.msra.mxu0 0.0
      %2615 = vmatprep.subr.mxu0 0.0
      %2616 = vmatpush1.msra.mxu0 0.0
      %2617 = vmatprep.subr.mxu0 0.0
      %2618 = vmatpush1.msra.mxu0 0.0
      %2619 = vmatprep.subr.mxu0 0.0
      %2620 = vmatpush1.msra.mxu0 0.0
      %2621 = vmatprep.subr.mxu0 0.0
      %2622 = vmatpush1.msra.mxu0 0.0
      %2623 = vmatprep.subr.mxu0 0.0
      %2624 = vmatpush1.msra.mxu0 0.0
      %2625 = vmatprep.subr.mxu0 0.0
      %2626 = vmatpush1.msra.mxu0 0.0
      %2627 = vmatprep.mubr.f32.mxu0 0.0
      %2628 = vmatmul.mubr.f32.gmra.mrb[0].mxu0 %v2561
      %v2629 = vpop.f32.mrb[0].mxu0
      %v2630 = vadd.f32 0.0, %v2629
      %v2631 = vpop.f32.mrb[0].mxu0
      %2632 = vdwg.mxu0
      %v2633 = vadd.f32 %v2394, %v2630
      %2634 = vrot.lane.b32.xlu0 %v1906, 104
      %v2635 = vpop.permute.xlu0 %2634
      %2636 = vrot.lane.b32.xlu0 %v1903, 104
      %v2637 = vpop.permute.xlu0 %2636
      %v2638 = vsel %vm745, %v2635, 0
      %v2640 = vsel %vm745, %v2637, 0
      %2642 = vmatprep.subr.mxu0 0.0
      %2643 = vmatpush1.xpose.msra.mxu0 %v2640
      %2644 = vmatprep.subr.mxu0 0.0
      %2645 = vmatpush1.xpose.msra.mxu0 0.0
      %2646 = vmatprep.subr.mxu0 0.0
      %2647 = vmatpush1.xpose.msra.mxu0 0.0
      %2648 = vmatprep.subr.mxu0 0.0
      %2649 = vmatpush1.xpose.msra.mxu0 0.0
      %2650 = vmatprep.subr.mxu0 0.0
      %2651 = vmatpush1.xpose.msra.mxu0 0.0
      %2652 = vmatprep.subr.mxu0 0.0
      %2653 = vmatpush1.xpose.msra.mxu0 0.0
      %2654 = vmatprep.subr.mxu0 0.0
      %2655 = vmatpush1.xpose.msra.mxu0 0.0
      %2656 = vmatprep.subr.mxu0 0.0
      %2657 = vmatpush1.xpose.msra.mxu0 0.0
      %2658 = vmatprep.subr.mxu0 0.0
      %2659 = vmatpush1.xpose.msra.mxu0 0.0
      %2660 = vmatprep.subr.mxu0 0.0
      %2661 = vmatpush1.xpose.msra.mxu0 0.0
      %2662 = vmatprep.subr.mxu0 0.0
      %2663 = vmatpush1.xpose.msra.mxu0 0.0
      %2664 = vmatprep.subr.mxu0 0.0
      %2665 = vmatpush1.xpose.msra.mxu0 0.0
      %2666 = vmatprep.subr.mxu0 0.0
      %2667 = vmatpush1.xpose.msra.mxu0 0.0
      %2668 = vmatprep.subr.mxu0 0.0
      %2669 = vmatpush1.xpose.msra.mxu0 0.0
      %2670 = vmatprep.subr.mxu0 0.0
      %2671 = vmatpush1.xpose.msra.mxu0 0.0
      %2672 = vmatprep.subr.mxu0 0.0
      %2673 = vmatpush1.xpose.msra.mxu0 0.0
      %2674 = vmatprep.subr.mxu0 0.0
      %2675 = vmatpush1.xpose.msra.mxu0 0.0
      %2676 = vmatprep.subr.mxu0 0.0
      %2677 = vmatpush1.xpose.msra.mxu0 0.0
      %2678 = vmatprep.subr.mxu0 0.0
      %2679 = vmatpush1.xpose.msra.mxu0 0.0
      %2680 = vmatprep.subr.mxu0 0.0
      %2681 = vmatpush1.xpose.msra.mxu0 0.0
      %2682 = vmatprep.subr.mxu0 0.0
      %2683 = vmatpush1.xpose.msra.mxu0 0.0
      %2684 = vmatprep.subr.mxu0 0.0
      %2685 = vmatpush1.xpose.msra.mxu0 0.0
      %2686 = vmatprep.subr.mxu0 0.0
      %2687 = vmatpush1.xpose.msra.mxu0 0.0
      %2688 = vmatprep.subr.mxu0 0.0
      %2689 = vmatpush1.xpose.msra.mxu0 0.0
      %2690 = vmatprep.subr.mxu0 0.0
      %2691 = vmatpush1.xpose.msra.mxu0 0.0
      %2692 = vmatprep.subr.mxu0 0.0
      %2693 = vmatpush1.xpose.msra.mxu0 0.0
      %2694 = vmatprep.subr.mxu0 0.0
      %2695 = vmatpush1.xpose.msra.mxu0 0.0
      %2696 = vmatprep.subr.mxu0 0.0
      %2697 = vmatpush1.xpose.msra.mxu0 0.0
      %2698 = vmatprep.subr.mxu0 0.0
      %2699 = vmatpush1.xpose.msra.mxu0 0.0
      %2700 = vmatprep.subr.mxu0 0.0
      %2701 = vmatpush1.xpose.msra.mxu0 0.0
      %2702 = vmatprep.subr.mxu0 0.0
      %2703 = vmatpush1.xpose.msra.mxu0 0.0
      %2704 = vmatprep.subr.mxu0 0.0
      %2705 = vmatpush1.xpose.msra.mxu0 0.0
      %2706 = vmatprep.mubr.f32.mxu0 0.0
      %2707 = vmatmul.mubr.f32.gmra.mrb[0].mxu0 %v2638
      %v2708 = vpop.f32.mrb[0].mxu0
      %v2709 = vadd.f32 0.0, %v2708
      %v2710 = vpop.f32.mrb[0].mxu0
      %2711 = vdwg.mxu0
      %v2712 = vsel %vm745, %v2709, -inf
      %2713 = vmax.xlane.f32.xlu0 %v2712
      %v2714 = vpop.xlane.xlu0 %2713
      %v2715 = vsub.f32 %v2709, %v2714
      %v2716 = vmul.f32 %v2715, 1.442695
      %v2717 = vpow.pop %v2716
      %v2718 = vsel %vm745, %v2717, 0.0
      %2719 = vadd.xlane.f32.xlu0 %v2718
      %v2720 = vpop.xlane.xlu0 %2719
      %v2721 = vrcp.pop %v2720
      %v2722 = vmul.f32 %v2717, %v2721
      %2723 = vrot.lane.b32.xlu0 %v1903, 72
      %v2724 = vpop.permute.xlu0 %2723
      %v2727 = vsel %vm745, %v2722, 0
      %2729 = vmatprep.subr.mxu0 0.0
      %2730 = vmatpush1.msra.mxu0 %v2724
      %2731 = vmatprep.subr.mxu0 0.0
      %2732 = vmatpush1.msra.mxu0 0.0
      %2733 = vmatprep.subr.mxu0 0.0
      %2734 = vmatpush1.msra.mxu0 0.0
      %2735 = vmatprep.subr.mxu0 0.0
      %2736 = vmatpush1.msra.mxu0 0.0
      %2737 = vmatprep.subr.mxu0 0.0
      %2738 = vmatpush1.msra.mxu0 0.0
      %2739 = vmatprep.subr.mxu0 0.0
      %2740 = vmatpush1.msra.mxu0 0.0
      %2741 = vmatprep.subr.mxu0 0.0
      %2742 = vmatpush1.msra.mxu0 0.0
      %2743 = vmatprep.subr.mxu0 0.0
      %2744 = vmatpush1.msra.mxu0 0.0
      %2745 = vmatprep.subr.mxu0 0.0
      %2746 = vmatpush1.msra.mxu0 0.0
      %2747 = vmatprep.subr.mxu0 0.0
      %2748 = vmatpush1.msra.mxu0 0.0
      %2749 = vmatprep.subr.mxu0 0.0
      %2750 = vmatpush1.msra.mxu0 0.0
      %2751 = vmatprep.subr.mxu0 0.0
      %2752 = vmatpush1.msra.mxu0 0.0
      %2753 = vmatprep.subr.mxu0 0.0
      %2754 = vmatpush1.msra.mxu0 0.0
      %2755 = vmatprep.subr.mxu0 0.0
      %2756 = vmatpush1.msra.mxu0 0.0
      %2757 = vmatprep.subr.mxu0 0.0
      %2758 = vmatpush1.msra.mxu0 0.0
      %2759 = vmatprep.subr.mxu0 0.0
      %2760 = vmatpush1.msra.mxu0 0.0
      %2761 = vmatprep.subr.mxu0 0.0
      %2762 = vmatpush1.msra.mxu0 0.0
      %2763 = vmatprep.subr.mxu0 0.0
      %2764 = vmatpush1.msra.mxu0 0.0
      %2765 = vmatprep.subr.mxu0 0.0
      %2766 = vmatpush1.msra.mxu0 0.0
      %2767 = vmatprep.subr.mxu0 0.0
      %2768 = vmatpush1.msra.mxu0 0.0
      %2769 = vmatprep.subr.mxu0 0.0
      %2770 = vmatpush1.msra.mxu0 0.0
      %2771 = vmatprep.subr.mxu0 0.0
      %2772 = vmatpush1.msra.mxu0 0.0
      %2773 = vmatprep.subr.mxu0 0.0
      %2774 = vmatpush1.msra.mxu0 0.0
      %2775 = vmatprep.subr.mxu0 0.0
      %2776 = vmatpush1.msra.mxu0 0.0
      %2777 = vmatprep.subr.mxu0 0.0
      %2778 = vmatpush1.msra.mxu0 0.0
      %2779 = vmatprep.subr.mxu0 0.0
      %2780 = vmatpush1.msra.mxu0 0.0
      %2781 = vmatprep.subr.mxu0 0.0
      %2782 = vmatpush1.msra.mxu0 0.0
      %2783 = vmatprep.subr.mxu0 0.0
      %2784 = vmatpush1.msra.mxu0 0.0
      %2785 = vmatprep.subr.mxu0 0.0
      %2786 = vmatpush1.msra.mxu0 0.0
      %2787 = vmatprep.subr.mxu0 0.0
      %2788 = vmatpush1.msra.mxu0 0.0
      %2789 = vmatprep.subr.mxu0 0.0
      %2790 = vmatpush1.msra.mxu0 0.0
      %2791 = vmatprep.subr.mxu0 0.0
      %2792 = vmatpush1.msra.mxu0 0.0
      %2793 = vmatprep.mubr.f32.mxu0 0.0
      %2794 = vmatmul.mubr.f32.gmra.mrb[0].mxu0 %v2727
      %v2795 = vpop.f32.mrb[0].mxu0
      %v2796 = vadd.f32 0.0, %v2795
      %v2797 = vpop.f32.mrb[0].mxu0
      %2798 = vdwg.mxu0
      %v2800 = vsel %vm745, %v2796, 0
      %2802 = vmatprep.subr.mxu0 0.0
      %2803 = vmatpush1.msra.mxu0 %v1910
      %2804 = vmatprep.subr.mxu0 0.0
      %2805 = vmatpush1.msra.mxu0 0.0
      %2806 = vmatprep.subr.mxu0 0.0
      %2807 = vmatpush1.msra.mxu0 0.0
      %2808 = vmatprep.subr.mxu0 0.0
      %2809 = vmatpush1.msra.mxu0 0.0
      %2810 = vmatprep.subr.mxu0 0.0
      %2811 = vmatpush1.msra.mxu0 0.0
      %2812 = vmatprep.subr.mxu0 0.0
      %2813 = vmatpush1.msra.mxu0 0.0
      %2814 = vmatprep.subr.mxu0 0.0
      %2815 = vmatpush1.msra.mxu0 0.0
      %2816 = vmatprep.subr.mxu0 0.0
      %2817 = vmatpush1.msra.mxu0 0.0
      %2818 = vmatprep.subr.mxu0 0.0
      %2819 = vmatpush1.msra.mxu0 0.0
      %2820 = vmatprep.subr.mxu0 0.0
      %2821 = vmatpush1.msra.mxu0 0.0
      %2822 = vmatprep.subr.mxu0 0.0
      %2823 = vmatpush1.msra.mxu0 0.0
      %2824 = vmatprep.subr.mxu0 0.0
      %2825 = vmatpush1.msra.mxu0 0.0
      %2826 = vmatprep.subr.mxu0 0.0
      %2827 = vmatpush1.msra.mxu0 0.0
      %2828 = vmatprep.subr.mxu0 0.0
      %2829 = vmatpush1.msra.mxu0 0.0
      %2830 = vmatprep.subr.mxu0 0.0
      %2831 = vmatpush1.msra.mxu0 0.0
      %2832 = vmatprep.subr.mxu0 0.0
      %2833 = vmatpush1.msra.mxu0 0.0
      %2834 = vmatprep.subr.mxu0 0.0
      %2835 = vmatpush1.msra.mxu0 0.0
      %2836 = vmatprep.subr.mxu0 0.0
      %2837 = vmatpush1.msra.mxu0 0.0
      %2838 = vmatprep.subr.mxu0 0.0
      %2839 = vmatpush1.msra.mxu0 0.0
      %2840 = vmatprep.subr.mxu0 0.0
      %2841 = vmatpush1.msra.mxu0 0.0
      %2842 = vmatprep.subr.mxu0 0.0
      %2843 = vmatpush1.msra.mxu0 0.0
      %2844 = vmatprep.subr.mxu0 0.0
      %2845 = vmatpush1.msra.mxu0 0.0
      %2846 = vmatprep.subr.mxu0 0.0
      %2847 = vmatpush1.msra.mxu0 0.0
      %2848 = vmatprep.subr.mxu0 0.0
      %2849 = vmatpush1.msra.mxu0 0.0
      %2850 = vmatprep.subr.mxu0 0.0
      %2851 = vmatpush1.msra.mxu0 0.0
      %2852 = vmatprep.subr.mxu0 0.0
      %2853 = vmatpush1.msra.mxu0 0.0
      %2854 = vmatprep.subr.mxu0 0.0
      %2855 = vmatpush1.msra.mxu0 0.0
      %2856 = vmatprep.subr.mxu0 0.0
      %2857 = vmatpush1.msra.mxu0 0.0
      %2858 = vmatprep.subr.mxu0 0.0
      %2859 = vmatpush1.msra.mxu0 0.0
      %2860 = vmatprep.subr.mxu0 0.0
      %2861 = vmatpush1.msra.mxu0 0.0
      %2862 = vmatprep.subr.mxu0 0.0
      %2863 = vmatpush1.msra.mxu0 0.0
      %2864 = vmatprep.subr.mxu0 0.0
      %2865 = vmatpush1.msra.mxu0 0.0
      %2866 = vmatprep.mubr.f32.mxu0 0.0
      %2867 = vmatmul.mubr.f32.gmra.mrb[0].mxu0 %v2800
      %v2868 = vpop.f32.mrb[0].mxu0
      %v2869 = vadd.f32 0.0, %v2868
      %v2870 = vpop.f32.mrb[0].mxu0
      %2871 = vdwg.mxu0
      %v2872 = vadd.f32 %v2633, %v2869
      %v2873 = vadd.f32 %v1729, %v2872
      %v2874 = vld [vmem:[%s12] sm:$0x1]
      %v2875 = vld [vmem:[%s13] sm:$0x1]
      %v2876 = vsel %vm655, %v2873, 0.0
      %2877 = vadd.xlane.f32.xlu0 %v2876
      %v2878 = vpop.xlane.xlu0 %2877
      %v2879 = vmul.f32 %v2878, %v1705
      %v2880 = vsub.f32 %v2873, %v2879
      %v2881 = vmul.f32 %v2880, %v2880
      %v2882 = vsel %vm655, %v2881, 0.0
      %2883 = vadd.xlane.f32.xlu0 %v2882
      %v2884 = vpop.xlane.xlu0 %2883
      %v2885 = vmul.f32 %v2884, %v1705
      %v2886 = vadd.f32 %v2885, 1e-05
      %v2887 = vrsqrt.pop %v2886
      %v2888 = vmul.f32 %v2880, %v2887
      %v2890 = vlaneseq
      %v2891 = vshrl.u32 %v2890, 7
      %v2892 = vsub.s32 0, %v2891
      %v2893 = vrot.slane %v2874, %v2892
      %v2895 = vmul.f32 %v2888, %v2893
      %v2897 = vlaneseq
      %v2898 = vshrl.u32 %v2897, 7
      %v2899 = vsub.s32 0, %v2898
      %v2900 = vrot.slane %v2875, %v2899
      %v2902 = vadd.f32 %v2895, %v2900
      %v2903 = vld [vmem:[%s14] sm:$0xff]
      %v2904 = vld [vmem:[%s14 + $0x8] sm:$0xff]
      %v2905 = vld [vmem:[%s14 + $0x10] sm:$0xff]
      %v2906 = vld [vmem:[%s14 + $0x18] sm:$0xff]
      %v2907 = vld [vmem:[%s14 + $0x20] sm:$0xff]
      %v2908 = vld [vmem:[%s14 + $0x28] sm:$0xff]
      %v2909 = vld [vmem:[%s14 + $0x30] sm:$0xff]
      %v2910 = vld [vmem:[%s14 + $0x38] sm:$0xff]
      %v2911 = vld [vmem:[%s14 + $0x40] sm:$0xff]
      %v2912 = vld [vmem:[%s14 + $0x48] sm:$0xff]
      %v2913 = vld [vmem:[%s14 + $0x50] sm:$0xff]
      %v2914 = vld [vmem:[%s14 + $0x58] sm:$0xff]
      %v2915 = vld [vmem:[%s14 + $0x60] sm:$0xff]
      %v2916 = vld [vmem:[%s14 + $0x68] sm:$0xff]
      %v2917 = vld [vmem:[%s14 + $0x70] sm:$0xff]
      %v2918 = vld [vmem:[%s14 + $0x78] sm:$0xff]
      %v2919 = vld [vmem:[%s14 + $0x80] sm:$0xff]
      %v2920 = vld [vmem:[%s14 + $0x88] sm:$0xff]
      %v2921 = vld [vmem:[%s14 + $0x90] sm:$0xff]
      %v2922 = vld [vmem:[%s14 + $0x98] sm:$0xff]
      %v2923 = vld [vmem:[%s14 + $0xa0] sm:$0xff]
      %v2924 = vld [vmem:[%s14 + $0xa8] sm:$0xff]
      %v2925 = vld [vmem:[%s14 + $0xb0] sm:$0xff]
      %v2926 = vld [vmem:[%s14 + $0xb8] sm:$0xff]
      %v2927 = vld [vmem:[%s14 + $0xc0] sm:$0xff]
      %v2928 = vld [vmem:[%s14 + $0xc8] sm:$0xff]
      %v2929 = vld [vmem:[%s14 + $0xd0] sm:$0xff]
      %v2930 = vld [vmem:[%s14 + $0xd8] sm:$0xff]
      %v2931 = vld [vmem:[%s14 + $0xe0] sm:$0xff]
      %v2932 = vld [vmem:[%s14 + $0xe8] sm:$0xff]
      %v2933 = vld [vmem:[%s14 + $0xf0] sm:$0xff]
      %v2934 = vld [vmem:[%s14 + $0xf8] sm:$0xff]
      %v2935 = vld [vmem:[%s14 + $0x100] sm:$0xff]
      %v2936 = vld [vmem:[%s14 + $0x108] sm:$0xff]
      %v2937 = vld [vmem:[%s14 + $0x110] sm:$0xff]
      %v2938 = vld [vmem:[%s14 + $0x118] sm:$0xff]
      %v2939 = vld [vmem:[%s14 + $0x120] sm:$0xff]
      %v2940 = vld [vmem:[%s14 + $0x128] sm:$0xff]
      %v2941 = vld [vmem:[%s14 + $0x130] sm:$0xff]
      %v2942 = vld [vmem:[%s14 + $0x138] sm:$0xff]
      %v2943 = vld [vmem:[%s14 + $0x140] sm:$0xff]
      %v2944 = vld [vmem:[%s14 + $0x148] sm:$0xff]
      %v2945 = vld [vmem:[%s14 + $0x150] sm:$0xff]
      %v2946 = vld [vmem:[%s14 + $0x158] sm:$0xff]
      %v2947 = vld [vmem:[%s14 + $0x160] sm:$0xff]
      %v2948 = vld [vmem:[%s14 + $0x168] sm:$0xff]
      %v2949 = vld [vmem:[%s14 + $0x170] sm:$0xff]
      %v2950 = vld [vmem:[%s14 + $0x178] sm:$0xff]
      %v2951 = vld [vmem:[%s14 + $0x180] sm:$0xff]
      %v2952 = vld [vmem:[%s14 + $0x188] sm:$0xff]
      %v2953 = vld [vmem:[%s14 + $0x190] sm:$0xff]
      %v2954 = vld [vmem:[%s14 + $0x198] sm:$0xff]
      %v2955 = vld [vmem:[%s14 + $0x1a0] sm:$0xff]
      %v2956 = vld [vmem:[%s14 + $0x1a8] sm:$0xff]
      %v2957 = vld [vmem:[%s14 + $0x1b0] sm:$0xff]
      %v2958 = vld [vmem:[%s14 + $0x1b8] sm:$0xff]
      %v2959 = vld [vmem:[%s14 + $0x1c0] sm:$0xff]
      %v2960 = vld [vmem:[%s14 + $0x1c8] sm:$0xff]
      %v2961 = vld [vmem:[%s14 + $0x1d0] sm:$0xff]
      %v2962 = vld [vmem:[%s14 + $0x1d8] sm:$0xff]
      %v2963 = vld [vmem:[%s14 + $0x1e0] sm:$0xff]
      %v2964 = vld [vmem:[%s14 + $0x1e8] sm:$0xff]
      %v2965 = vld [vmem:[%s14 + $0x1f0] sm:$0xff]
      %v2966 = vld [vmem:[%s14 + $0x1f8] sm:$0xff]
      %v2967 = vld [vmem:[%s15] sm:$0xff]
      %v2968 = vld [vmem:[%s15 + $0x8] sm:$0xff]
      %v2971 = vlaneseq
      %v2972 = vshrl.u32 %v2971, 7
      %v2973 = vsub.s32 0, %v2972
      %v2974 = vrot.slane %v2967, %v2973
      %v2975 = vlaneseq
      %v2976 = vshrl.u32 %v2975, 7
      %v2977 = vsub.s32 1, %v2976
      %v2978 = vrot.slane %v2967, %v2977
      %v2979 = vlaneseq
      %v2980 = vshrl.u32 %v2979, 7
      %v2981 = vsub.s32 2, %v2980
      %v2982 = vrot.slane %v2967, %v2981
      %v2983 = vlaneseq
      %v2984 = vshrl.u32 %v2983, 7
      %v2985 = vsub.s32 3, %v2984
      %v2986 = vrot.slane %v2967, %v2985
      %v2987 = vlaneseq
      %v2988 = vshrl.u32 %v2987, 7
      %v2989 = vsub.s32 4, %v2988
      %v2990 = vrot.slane %v2967, %v2989
      %v2991 = vlaneseq
      %v2992 = vshrl.u32 %v2991, 7
      %v2993 = vsub.s32 5, %v2992
      %v2994 = vrot.slane %v2967, %v2993
      %v2995 = vlaneseq
      %v2996 = vshrl.u32 %v2995, 7
      %v2997 = vsub.s32 6, %v2996
      %v2998 = vrot.slane %v2967, %v2997
      %v2999 = vlaneseq
      %v3000 = vshrl.u32 %v2999, 7
      %v3001 = vsub.s32 7, %v3000
      %v3002 = vrot.slane %v2967, %v3001
      %v3003 = vlaneseq
      %v3004 = vshrl.u32 %v3003, 7
      %v3005 = vsub.s32 0, %v3004
      %v3006 = vrot.slane %v2968, %v3005
      %v3007 = vlaneseq
      %v3008 = vshrl.u32 %v3007, 7
      %v3009 = vsub.s32 1, %v3008
      %v3010 = vrot.slane %v2968, %v3009
      %v3011 = vlaneseq
      %v3012 = vshrl.u32 %v3011, 7
      %v3013 = vsub.s32 2, %v3012
      %v3014 = vrot.slane %v2968, %v3013
      %v3015 = vlaneseq
      %v3016 = vshrl.u32 %v3015, 7
      %v3017 = vsub.s32 3, %v3016
      %v3018 = vrot.slane %v2968, %v3017
      %v3019 = vlaneseq
      %v3020 = vshrl.u32 %v3019, 7
      %v3021 = vsub.s32 4, %v3020
      %v3022 = vrot.slane %v2968, %v3021
      %v3023 = vlaneseq
      %v3024 = vshrl.u32 %v3023, 7
      %v3025 = vsub.s32 5, %v3024
      %v3026 = vrot.slane %v2968, %v3025
      %v3027 = vlaneseq
      %v3028 = vshrl.u32 %v3027, 7
      %v3029 = vsub.s32 6, %v3028
      %v3030 = vrot.slane %v2968, %v3029
      %v3031 = vlaneseq
      %v3032 = vshrl.u32 %v3031, 7
      %v3033 = vsub.s32 7, %v3032
      %v3034 = vrot.slane %v2968, %v3033
      %v3052 = vsel %vm655, %v2902, 0
      %3054 = vmatprep.subr.mxu0 %v2904
      %3055 = vmatpush1.msra.mxu0 %v2903
      %3056 = vmatprep.subr.mxu0 %v2920
      %3057 = vmatpush1.msra.mxu0 %v2919
      %3058 = vmatprep.subr.mxu0 %v2936
      %3059 = vmatpush1.msra.mxu0 %v2935
      %3060 = vmatprep.subr.mxu0 %v2952
      %3061 = vmatpush1.msra.mxu0 %v2951
      %3062 = vmatprep.subr.mxu0 0.0
      %3063 = vmatpush1.msra.mxu0 0.0
      %3064 = vmatprep.subr.mxu0 0.0
      %3065 = vmatpush1.msra.mxu0 0.0
      %3066 = vmatprep.subr.mxu0 0.0
      %3067 = vmatpush1.msra.mxu0 0.0
      %3068 = vmatprep.subr.mxu0 0.0
      %3069 = vmatpush1.msra.mxu0 0.0
      %3070 = vmatprep.subr.mxu0 0.0
      %3071 = vmatpush1.msra.mxu0 0.0
      %3072 = vmatprep.subr.mxu0 0.0
      %3073 = vmatpush1.msra.mxu0 0.0
      %3074 = vmatprep.subr.mxu0 0.0
      %3075 = vmatpush1.msra.mxu0 0.0
      %3076 = vmatprep.subr.mxu0 0.0
      %3077 = vmatpush1.msra.mxu0 0.0
      %3078 = vmatprep.subr.mxu0 0.0
      %3079 = vmatpush1.msra.mxu0 0.0
      %3080 = vmatprep.subr.mxu0 0.0
      %3081 = vmatpush1.msra.mxu0 0.0
      %3082 = vmatprep.subr.mxu0 0.0
      %3083 = vmatpush1.msra.mxu0 0.0
      %3084 = vmatprep.subr.mxu0 0.0
      %3085 = vmatpush1.msra.mxu0 0.0
      %3086 = vmatprep.subr.mxu0 0.0
      %3087 = vmatpush1.msra.mxu0 0.0
      %3088 = vmatprep.subr.mxu0 0.0
      %3089 = vmatpush1.msra.mxu0 0.0
      %3090 = vmatprep.subr.mxu0 0.0
      %3091 = vmatpush1.msra.mxu0 0.0
      %3092 = vmatprep.subr.mxu0 0.0
      %3093 = vmatpush1.msra.mxu0 0.0
      %3094 = vmatprep.subr.mxu0 0.0
      %3095 = vmatpush1.msra.mxu0 0.0
      %3096 = vmatprep.subr.mxu0 0.0
      %3097 = vmatpush1.msra.mxu0 0.0
      %3098 = vmatprep.subr.mxu0 0.0
      %3099 = vmatpush1.msra.mxu0 0.0
      %3100 = vmatprep.subr.mxu0 0.0
      %3101 = vmatpush1.msra.mxu0 0.0
      %3102 = vmatprep.subr.mxu0 0.0
      %3103 = vmatpush1.msra.mxu0 0.0
      %3104 = vmatprep.subr.mxu0 0.0
      %3105 = vmatpush1.msra.mxu0 0.0
      %3106 = vmatprep.subr.mxu0 0.0
      %3107 = vmatpush1.msra.mxu0 0.0
      %3108 = vmatprep.subr.mxu0 0.0
      %3109 = vmatpush1.msra.mxu0 0.0
      %3110 = vmatprep.subr.mxu0 0.0
      %3111 = vmatpush1.msra.mxu0 0.0
      %3112 = vmatprep.subr.mxu0 0.0
      %3113 = vmatpush1.msra.mxu0 0.0
      %3114 = vmatprep.subr.mxu0 0.0
      %3115 = vmatpush1.msra.mxu0 0.0
      %3116 = vmatprep.subr.mxu0 0.0
      %3117 = vmatpush1.msra.mxu0 0.0
      %3118 = vmatprep.mubr.f32.mxu0 0.0
      %3119 = vmatmul.mubr.f32.gmra.mrb[0].mxu0 %v3052
      %v3120 = vpop.f32.mrb[0].mxu0
      %v3121 = vadd.f32 %v2974, %v3120
      %v3122 = vpop.f32.mrb[0].mxu0
      %v3123 = vadd.f32 %v2978, %v3122
      %3124 = vdwg.mxu0
      %3125 = vmatprep.subr.mxu0 %v2906
      %3126 = vmatpush1.msra.mxu0 %v2905
      %3127 = vmatprep.subr.mxu0 %v2922
      %3128 = vmatpush1.msra.mxu0 %v2921
      %3129 = vmatprep.subr.mxu0 %v2938
      %3130 = vmatpush1.msra.mxu0 %v2937
      %3131 = vmatprep.subr.mxu0 %v2954
      %3132 = vmatpush1.msra.mxu0 %v2953
      %3133 = vmatprep.subr.mxu0 0.0
      %3134 = vmatpush1.msra.mxu0 0.0
      %3135 = vmatprep.subr.mxu0 0.0
      %3136 = vmatpush1.msra.mxu0 0.0
      %3137 = vmatprep.subr.mxu0 0.0
      %3138 = vmatpush1.msra.mxu0 0.0
      %3139 = vmatprep.subr.mxu0 0.0
      %3140 = vmatpush1.msra.mxu0 0.0
      %3141 = vmatprep.subr.mxu0 0.0
      %3142 = vmatpush1.msra.mxu0 0.0
      %3143 = vmatprep.subr.mxu0 0.0
      %3144 = vmatpush1.msra.mxu0 0.0
      %3145 = vmatprep.subr.mxu0 0.0
      %3146 = vmatpush1.msra.mxu0 0.0
      %3147 = vmatprep.subr.mxu0 0.0
      %3148 = vmatpush1.msra.mxu0 0.0
      %3149 = vmatprep.subr.mxu0 0.0
      %3150 = vmatpush1.msra.mxu0 0.0
      %3151 = vmatprep.subr.mxu0 0.0
      %3152 = vmatpush1.msra.mxu0 0.0
      %3153 = vmatprep.subr.mxu0 0.0
      %3154 = vmatpush1.msra.mxu0 0.0
      %3155 = vmatprep.subr.mxu0 0.0
      %3156 = vmatpush1.msra.mxu0 0.0
      %3157 = vmatprep.subr.mxu0 0.0
      %3158 = vmatpush1.msra.mxu0 0.0
      %3159 = vmatprep.subr.mxu0 0.0
      %3160 = vmatpush1.msra.mxu0 0.0
      %3161 = vmatprep.subr.mxu0 0.0
      %3162 = vmatpush1.msra.mxu0 0.0
      %3163 = vmatprep.subr.mxu0 0.0
      %3164 = vmatpush1.msra.mxu0 0.0
      %3165 = vmatprep.subr.mxu0 0.0
      %3166 = vmatpush1.msra.mxu0 0.0
      %3167 = vmatprep.subr.mxu0 0.0
      %3168 = vmatpush1.msra.mxu0 0.0
      %3169 = vmatprep.subr.mxu0 0.0
      %3170 = vmatpush1.msra.mxu0 0.0
      %3171 = vmatprep.subr.mxu0 0.0
      %3172 = vmatpush1.msra.mxu0 0.0
      %3173 = vmatprep.subr.mxu0 0.0
      %3174 = vmatpush1.msra.mxu0 0.0
      %3175 = vmatprep.subr.mxu0 0.0
      %3176 = vmatpush1.msra.mxu0 0.0
      %3177 = vmatprep.subr.mxu0 0.0
      %3178 = vmatpush1.msra.mxu0 0.0
      %3179 = vmatprep.subr.mxu0 0.0
      %3180 = vmatpush1.msra.mxu0 0.0
      %3181 = vmatprep.subr.mxu0 0.0
      %3182 = vmatpush1.msra.mxu0 0.0
      %3183 = vmatprep.subr.mxu0 0.0
      %3184 = vmatpush1.msra.mxu0 0.0
      %3185 = vmatprep.subr.mxu0 0.0
      %3186 = vmatpush1.msra.mxu0 0.0
      %3187 = vmatprep.subr.mxu0 0.0
      %3188 = vmatpush1.msra.mxu0 0.0
      %3189 = vmatprep.mubr.f32.mxu0 0.0
      %3190 = vmatmul.mubr.f32.gmra.mrb[0].mxu0 %v3052
      %v3191 = vpop.f32.mrb[0].mxu0
      %v3192 = vadd.f32 %v2982, %v3191
      %v3193 = vpop.f32.mrb[0].mxu0
      %v3194 = vadd.f32 %v2986, %v3193
      %3195 = vdwg.mxu0
      %3196 = vmatprep.subr.mxu0 %v2908
      %3197 = vmatpush1.msra.mxu0 %v2907
      %3198 = vmatprep.subr.mxu0 %v2924
      %3199 = vmatpush1.msra.mxu0 %v2923
      %3200 = vmatprep.subr.mxu0 %v2940
      %3201 = vmatpush1.msra.mxu0 %v2939
      %3202 = vmatprep.subr.mxu0 %v2956
      %3203 = vmatpush1.msra.mxu0 %v2955
      %3204 = vmatprep.subr.mxu0 0.0
      %3205 = vmatpush1.msra.mxu0 0.0
      %3206 = vmatprep.subr.mxu0 0.0
      %3207 = vmatpush1.msra.mxu0 0.0
      %3208 = vmatprep.subr.mxu0 0.0
      %3209 = vmatpush1.msra.mxu0 0.0
      %3210 = vmatprep.subr.mxu0 0.0
      %3211 = vmatpush1.msra.mxu0 0.0
      %3212 = vmatprep.subr.mxu0 0.0
      %3213 = vmatpush1.msra.mxu0 0.0
      %3214 = vmatprep.subr.mxu0 0.0
      %3215 = vmatpush1.msra.mxu0 0.0
      %3216 = vmatprep.subr.mxu0 0.0
      %3217 = vmatpush1.msra.mxu0 0.0
      %3218 = vmatprep.subr.mxu0 0.0
      %3219 = vmatpush1.msra.mxu0 0.0
      %3220 = vmatprep.subr.mxu0 0.0
      %3221 = vmatpush1.msra.mxu0 0.0
      %3222 = vmatprep.subr.mxu0 0.0
      %3223 = vmatpush1.msra.mxu0 0.0
      %3224 = vmatprep.subr.mxu0 0.0
      %3225 = vmatpush1.msra.mxu0 0.0
      %3226 = vmatprep.subr.mxu0 0.0
      %3227 = vmatpush1.msra.mxu0 0.0
      %3228 = vmatprep.subr.mxu0 0.0
      %3229 = vmatpush1.msra.mxu0 0.0
      %3230 = vmatprep.subr.mxu0 0.0
      %3231 = vmatpush1.msra.mxu0 0.0
      %3232 = vmatprep.subr.mxu0 0.0
      %3233 = vmatpush1.msra.mxu0 0.0
      %3234 = vmatprep.subr.mxu0 0.0
      %3235 = vmatpush1.msra.mxu0 0.0
      %3236 = vmatprep.subr.mxu0 0.0
      %3237 = vmatpush1.msra.mxu0 0.0
      %3238 = vmatprep.subr.mxu0 0.0
      %3239 = vmatpush1.msra.mxu0 0.0
      %3240 = vmatprep.subr.mxu0 0.0
      %3241 = vmatpush1.msra.mxu0 0.0
      %3242 = vmatprep.subr.mxu0 0.0
      %3243 = vmatpush1.msra.mxu0 0.0
      %3244 = vmatprep.subr.mxu0 0.0
      %3245 = vmatpush1.msra.mxu0 0.0
      %3246 = vmatprep.subr.mxu0 0.0
      %3247 = vmatpush1.msra.mxu0 0.0
      %3248 = vmatprep.subr.mxu0 0.0
      %3249 = vmatpush1.msra.mxu0 0.0
      %3250 = vmatprep.subr.mxu0 0.0
      %3251 = vmatpush1.msra.mxu0 0.0
      %3252 = vmatprep.subr.mxu0 0.0
      %3253 = vmatpush1.msra.mxu0 0.0
      %3254 = vmatprep.subr.mxu0 0.0
      %3255 = vmatpush1.msra.mxu0 0.0
      %3256 = vmatprep.subr.mxu0 0.0
      %3257 = vmatpush1.msra.mxu0 0.0
      %3258 = vmatprep.subr.mxu0 0.0
      %3259 = vmatpush1.msra.mxu0 0.0
      %3260 = vmatprep.mubr.f32.mxu0 0.0
      %3261 = vmatmul.mubr.f32.gmra.mrb[0].mxu0 %v3052
      %v3262 = vpop.f32.mrb[0].mxu0
      %v3263 = vadd.f32 %v2990, %v3262
      %v3264 = vpop.f32.mrb[0].mxu0
      %v3265 = vadd.f32 %v2994, %v3264
      %3266 = vdwg.mxu0
      %3267 = vmatprep.subr.mxu0 %v2910
      %3268 = vmatpush1.msra.mxu0 %v2909
      %3269 = vmatprep.subr.mxu0 %v2926
      %3270 = vmatpush1.msra.mxu0 %v2925
      %3271 = vmatprep.subr.mxu0 %v2942
      %3272 = vmatpush1.msra.mxu0 %v2941
      %3273 = vmatprep.subr.mxu0 %v2958
      %3274 = vmatpush1.msra.mxu0 %v2957
      %3275 = vmatprep.subr.mxu0 0.0
      %3276 = vmatpush1.msra.mxu0 0.0
      %3277 = vmatprep.subr.mxu0 0.0
      %3278 = vmatpush1.msra.mxu0 0.0
      %3279 = vmatprep.subr.mxu0 0.0
      %3280 = vmatpush1.msra.mxu0 0.0
      %3281 = vmatprep.subr.mxu0 0.0
      %3282 = vmatpush1.msra.mxu0 0.0
      %3283 = vmatprep.subr.mxu0 0.0
      %3284 = vmatpush1.msra.mxu0 0.0
      %3285 = vmatprep.subr.mxu0 0.0
      %3286 = vmatpush1.msra.mxu0 0.0
      %3287 = vmatprep.subr.mxu0 0.0
      %3288 = vmatpush1.msra.mxu0 0.0
      %3289 = vmatprep.subr.mxu0 0.0
      %3290 = vmatpush1.msra.mxu0 0.0
      %3291 = vmatprep.subr.mxu0 0.0
      %3292 = vmatpush1.msra.mxu0 0.0
      %3293 = vmatprep.subr.mxu0 0.0
      %3294 = vmatpush1.msra.mxu0 0.0
      %3295 = vmatprep.subr.mxu0 0.0
      %3296 = vmatpush1.msra.mxu0 0.0
      %3297 = vmatprep.subr.mxu0 0.0
      %3298 = vmatpush1.msra.mxu0 0.0
      %3299 = vmatprep.subr.mxu0 0.0
      %3300 = vmatpush1.msra.mxu0 0.0
      %3301 = vmatprep.subr.mxu0 0.0
      %3302 = vmatpush1.msra.mxu0 0.0
      %3303 = vmatprep.subr.mxu0 0.0
      %3304 = vmatpush1.msra.mxu0 0.0
      %3305 = vmatprep.subr.mxu0 0.0
      %3306 = vmatpush1.msra.mxu0 0.0
      %3307 = vmatprep.subr.mxu0 0.0
      %3308 = vmatpush1.msra.mxu0 0.0
      %3309 = vmatprep.subr.mxu0 0.0
      %3310 = vmatpush1.msra.mxu0 0.0
      %3311 = vmatprep.subr.mxu0 0.0
      %3312 = vmatpush1.msra.mxu0 0.0
      %3313 = vmatprep.subr.mxu0 0.0
      %3314 = vmatpush1.msra.mxu0 0.0
      %3315 = vmatprep.subr.mxu0 0.0
      %3316 = vmatpush1.msra.mxu0 0.0
      %3317 = vmatprep.subr.mxu0 0.0
      %3318 = vmatpush1.msra.mxu0 0.0
      %3319 = vmatprep.subr.mxu0 0.0
      %3320 = vmatpush1.msra.mxu0 0.0
      %3321 = vmatprep.subr.mxu0 0.0
      %3322 = vmatpush1.msra.mxu0 0.0
      %3323 = vmatprep.subr.mxu0 0.0
      %3324 = vmatpush1.msra.mxu0 0.0
      %3325 = vmatprep.subr.mxu0 0.0
      %3326 = vmatpush1.msra.mxu0 0.0
      %3327 = vmatprep.subr.mxu0 0.0
      %3328 = vmatpush1.msra.mxu0 0.0
      %3329 = vmatprep.subr.mxu0 0.0
      %3330 = vmatpush1.msra.mxu0 0.0
      %3331 = vmatprep.mubr.f32.mxu0 0.0
      %3332 = vmatmul.mubr.f32.gmra.mrb[0].mxu0 %v3052
      %v3333 = vpop.f32.mrb[0].mxu0
      %v3334 = vadd.f32 %v2998, %v3333
      %v3335 = vpop.f32.mrb[0].mxu0
      %v3336 = vadd.f32 %v3002, %v3335
      %3337 = vdwg.mxu0
      %3338 = vmatprep.subr.mxu0 %v2912
      %3339 = vmatpush1.msra.mxu0 %v2911
      %3340 = vmatprep.subr.mxu0 %v2928
      %3341 = vmatpush1.msra.mxu0 %v2927
      %3342 = vmatprep.subr.mxu0 %v2944
      %3343 = vmatpush1.msra.mxu0 %v2943
      %3344 = vmatprep.subr.mxu0 %v2960
      %3345 = vmatpush1.msra.mxu0 %v2959
      %3346 = vmatprep.subr.mxu0 0.0
      %3347 = vmatpush1.msra.mxu0 0.0
      %3348 = vmatprep.subr.mxu0 0.0
      %3349 = vmatpush1.msra.mxu0 0.0
      %3350 = vmatprep.subr.mxu0 0.0
      %3351 = vmatpush1.msra.mxu0 0.0
      %3352 = vmatprep.subr.mxu0 0.0
      %3353 = vmatpush1.msra.mxu0 0.0
      %3354 = vmatprep.subr.mxu0 0.0
      %3355 = vmatpush1.msra.mxu0 0.0
      %3356 = vmatprep.subr.mxu0 0.0
      %3357 = vmatpush1.msra.mxu0 0.0
      %3358 = vmatprep.subr.mxu0 0.0
      %3359 = vmatpush1.msra.mxu0 0.0
      %3360 = vmatprep.subr.mxu0 0.0
      %3361 = vmatpush1.msra.mxu0 0.0
      %3362 = vmatprep.subr.mxu0 0.0
      %3363 = vmatpush1.msra.mxu0 0.0
      %3364 = vmatprep.subr.mxu0 0.0
      %3365 = vmatpush1.msra.mxu0 0.0
      %3366 = vmatprep.subr.mxu0 0.0
      %3367 = vmatpush1.msra.mxu0 0.0
      %3368 = vmatprep.subr.mxu0 0.0
      %3369 = vmatpush1.msra.mxu0 0.0
      %3370 = vmatprep.subr.mxu0 0.0
      %3371 = vmatpush1.msra.mxu0 0.0
      %3372 = vmatprep.subr.mxu0 0.0
      %3373 = vmatpush1.msra.mxu0 0.0
      %3374 = vmatprep.subr.mxu0 0.0
      %3375 = vmatpush1.msra.mxu0 0.0
      %3376 = vmatprep.subr.mxu0 0.0
      %3377 = vmatpush1.msra.mxu0 0.0
      %3378 = vmatprep.subr.mxu0 0.0
      %3379 = vmatpush1.msra.mxu0 0.0
      %3380 = vmatprep.subr.mxu0 0.0
      %3381 = vmatpush1.msra.mxu0 0.0
      %3382 = vmatprep.subr.mxu0 0.0
      %3383 = vmatpush1.msra.mxu0 0.0
      %3384 = vmatprep.subr.mxu0 0.0
      %3385 = vmatpush1.msra.mxu0 0.0
      %3386 = vmatprep.subr.mxu0 0.0
      %3387 = vmatpush1.msra.mxu0 0.0
      %3388 = vmatprep.subr.mxu0 0.0
      %3389 = vmatpush1.msra.mxu0 0.0
      %3390 = vmatprep.subr.mxu0 0.0
      %3391 = vmatpush1.msra.mxu0 0.0
      %3392 = vmatprep.subr.mxu0 0.0
      %3393 = vmatpush1.msra.mxu0 0.0
      %3394 = vmatprep.subr.mxu0 0.0
      %3395 = vmatpush1.msra.mxu0 0.0
      %3396 = vmatprep.subr.mxu0 0.0
      %3397 = vmatpush1.msra.mxu0 0.0
      %3398 = vmatprep.subr.mxu0 0.0
      %3399 = vmatpush1.msra.mxu0 0.0
      %3400 = vmatprep.subr.mxu0 0.0
      %3401 = vmatpush1.msra.mxu0 0.0
      %3402 = vmatprep.mubr.f32.mxu0 0.0
      %3403 = vmatmul.mubr.f32.gmra.mrb[0].mxu0 %v3052
      %v3404 = vpop.f32.mrb[0].mxu0
      %v3405 = vadd.f32 %v3006, %v3404
      %v3406 = vpop.f32.mrb[0].mxu0
      %v3407 = vadd.f32 %v3010, %v3406
      %3408 = vdwg.mxu0
      %3409 = vmatprep.subr.mxu0 %v2914
      %3410 = vmatpush1.msra.mxu0 %v2913
      %3411 = vmatprep.subr.mxu0 %v2930
      %3412 = vmatpush1.msra.mxu0 %v2929
      %3413 = vmatprep.subr.mxu0 %v2946
      %3414 = vmatpush1.msra.mxu0 %v2945
      %3415 = vmatprep.subr.mxu0 %v2962
      %3416 = vmatpush1.msra.mxu0 %v2961
      %3417 = vmatprep.subr.mxu0 0.0
      %3418 = vmatpush1.msra.mxu0 0.0
      %3419 = vmatprep.subr.mxu0 0.0
      %3420 = vmatpush1.msra.mxu0 0.0
      %3421 = vmatprep.subr.mxu0 0.0
      %3422 = vmatpush1.msra.mxu0 0.0
      %3423 = vmatprep.subr.mxu0 0.0
      %3424 = vmatpush1.msra.mxu0 0.0
      %3425 = vmatprep.subr.mxu0 0.0
      %3426 = vmatpush1.msra.mxu0 0.0
      %3427 = vmatprep.subr.mxu0 0.0
      %3428 = vmatpush1.msra.mxu0 0.0
      %3429 = vmatprep.subr.mxu0 0.0
      %3430 = vmatpush1.msra.mxu0 0.0
      %3431 = vmatprep.subr.mxu0 0.0
      %3432 = vmatpush1.msra.mxu0 0.0
      %3433 = vmatprep.subr.mxu0 0.0
      %3434 = vmatpush1.msra.mxu0 0.0
      %3435 = vmatprep.subr.mxu0 0.0
      %3436 = vmatpush1.msra.mxu0 0.0
      %3437 = vmatprep.subr.mxu0 0.0
      %3438 = vmatpush1.msra.mxu0 0.0
      %3439 = vmatprep.subr.mxu0 0.0
      %3440 = vmatpush1.msra.mxu0 0.0
      %3441 = vmatprep.subr.mxu0 0.0
      %3442 = vmatpush1.msra.mxu0 0.0
      %3443 = vmatprep.subr.mxu0 0.0
      %3444 = vmatpush1.msra.mxu0 0.0
      %3445 = vmatprep.subr.mxu0 0.0
      %3446 = vmatpush1.msra.mxu0 0.0
      %3447 = vmatprep.subr.mxu0 0.0
      %3448 = vmatpush1.msra.mxu0 0.0
      %3449 = vmatprep.subr.mxu0 0.0
      %3450 = vmatpush1.msra.mxu0 0.0
      %3451 = vmatprep.subr.mxu0 0.0
      %3452 = vmatpush1.msra.mxu0 0.0
      %3453 = vmatprep.subr.mxu0 0.0
      %3454 = vmatpush1.msra.mxu0 0.0
      %3455 = vmatprep.subr.mxu0 0.0
      %3456 = vmatpush1.msra.mxu0 0.0
      %3457 = vmatprep.subr.mxu0 0.0
      %3458 = vmatpush1.msra.mxu0 0.0
      %3459 = vmatprep.subr.mxu0 0.0
      %3460 = vmatpush1.msra.mxu0 0.0
      %3461 = vmatprep.subr.mxu0 0.0
      %3462 = vmatpush1.msra.mxu0 0.0
      %3463 = vmatprep.subr.mxu0 0.0
      %3464 = vmatpush1.msra.mxu0 0.0
      %3465 = vmatprep.subr.mxu0 0.0
      %3466 = vmatpush1.msra.mxu0 0.0
      %3467 = vmatprep.subr.mxu0 0.0
      %3468 = vmatpush1.msra.mxu0 0.0
      %3469 = vmatprep.subr.mxu0 0.0
      %3470 = vmatpush1.msra.mxu0 0.0
      %3471 = vmatprep.subr.mxu0 0.0
      %3472 = vmatpush1.msra.mxu0 0.0
      %3473 = vmatprep.mubr.f32.mxu0 0.0
      %3474 = vmatmul.mubr.f32.gmra.mrb[0].mxu0 %v3052
      %v3475 = vpop.f32.mrb[0].mxu0
      %v3476 = vadd.f32 %v3014, %v3475
      %v3477 = vpop.f32.mrb[0].mxu0
      %v3478 = vadd.f32 %v3018, %v3477
      %3479 = vdwg.mxu0
      %3480 = vmatprep.subr.mxu0 %v2916
      %3481 = vmatpush1.msra.mxu0 %v2915
      %3482 = vmatprep.subr.mxu0 %v2932
      %3483 = vmatpush1.msra.mxu0 %v2931
      %3484 = vmatprep.subr.mxu0 %v2948
      %3485 = vmatpush1.msra.mxu0 %v2947
      %3486 = vmatprep.subr.mxu0 %v2964
      %3487 = vmatpush1.msra.mxu0 %v2963
      %3488 = vmatprep.subr.mxu0 0.0
      %3489 = vmatpush1.msra.mxu0 0.0
      %3490 = vmatprep.subr.mxu0 0.0
      %3491 = vmatpush1.msra.mxu0 0.0
      %3492 = vmatprep.subr.mxu0 0.0
      %3493 = vmatpush1.msra.mxu0 0.0
      %3494 = vmatprep.subr.mxu0 0.0
      %3495 = vmatpush1.msra.mxu0 0.0
      %3496 = vmatprep.subr.mxu0 0.0
      %3497 = vmatpush1.msra.mxu0 0.0
      %3498 = vmatprep.subr.mxu0 0.0
      %3499 = vmatpush1.msra.mxu0 0.0
      %3500 = vmatprep.subr.mxu0 0.0
      %3501 = vmatpush1.msra.mxu0 0.0
      %3502 = vmatprep.subr.mxu0 0.0
      %3503 = vmatpush1.msra.mxu0 0.0
      %3504 = vmatprep.subr.mxu0 0.0
      %3505 = vmatpush1.msra.mxu0 0.0
      %3506 = vmatprep.subr.mxu0 0.0
      %3507 = vmatpush1.msra.mxu0 0.0
      %3508 = vmatprep.subr.mxu0 0.0
      %3509 = vmatpush1.msra.mxu0 0.0
      %3510 = vmatprep.subr.mxu0 0.0
      %3511 = vmatpush1.msra.mxu0 0.0
      %3512 = vmatprep.subr.mxu0 0.0
      %3513 = vmatpush1.msra.mxu0 0.0
      %3514 = vmatprep.subr.mxu0 0.0
      %3515 = vmatpush1.msra.mxu0 0.0
      %3516 = vmatprep.subr.mxu0 0.0
      %3517 = vmatpush1.msra.mxu0 0.0
      %3518 = vmatprep.subr.mxu0 0.0
      %3519 = vmatpush1.msra.mxu0 0.0
      %3520 = vmatprep.subr.mxu0 0.0
      %3521 = vmatpush1.msra.mxu0 0.0
      %3522 = vmatprep.subr.mxu0 0.0
      %3523 = vmatpush1.msra.mxu0 0.0
      %3524 = vmatprep.subr.mxu0 0.0
      %3525 = vmatpush1.msra.mxu0 0.0
      %3526 = vmatprep.subr.mxu0 0.0
      %3527 = vmatpush1.msra.mxu0 0.0
      %3528 = vmatprep.subr.mxu0 0.0
      %3529 = vmatpush1.msra.mxu0 0.0
      %3530 = vmatprep.subr.mxu0 0.0
      %3531 = vmatpush1.msra.mxu0 0.0
      %3532 = vmatprep.subr.mxu0 0.0
      %3533 = vmatpush1.msra.mxu0 0.0
      %3534 = vmatprep.subr.mxu0 0.0
      %3535 = vmatpush1.msra.mxu0 0.0
      %3536 = vmatprep.subr.mxu0 0.0
      %3537 = vmatpush1.msra.mxu0 0.0
      %3538 = vmatprep.subr.mxu0 0.0
      %3539 = vmatpush1.msra.mxu0 0.0
      %3540 = vmatprep.subr.mxu0 0.0
      %3541 = vmatpush1.msra.mxu0 0.0
      %3542 = vmatprep.subr.mxu0 0.0
      %3543 = vmatpush1.msra.mxu0 0.0
      %3544 = vmatprep.mubr.f32.mxu0 0.0
      %3545 = vmatmul.mubr.f32.gmra.mrb[0].mxu0 %v3052
      %v3546 = vpop.f32.mrb[0].mxu0
      %v3547 = vadd.f32 %v3022, %v3546
      %v3548 = vpop.f32.mrb[0].mxu0
      %v3549 = vadd.f32 %v3026, %v3548
      %3550 = vdwg.mxu0
      %3551 = vmatprep.subr.mxu0 %v2918
      %3552 = vmatpush1.msra.mxu0 %v2917
      %3553 = vmatprep.subr.mxu0 %v2934
      %3554 = vmatpush1.msra.mxu0 %v2933
      %3555 = vmatprep.subr.mxu0 %v2950
      %3556 = vmatpush1.msra.mxu0 %v2949
      %3557 = vmatprep.subr.mxu0 %v2966
      %3558 = vmatpush1.msra.mxu0 %v2965
      %3559 = vmatprep.subr.mxu0 0.0
      %3560 = vmatpush1.msra.mxu0 0.0
      %3561 = vmatprep.subr.mxu0 0.0
      %3562 = vmatpush1.msra.mxu0 0.0
      %3563 = vmatprep.subr.mxu0 0.0
      %3564 = vmatpush1.msra.mxu0 0.0
      %3565 = vmatprep.subr.mxu0 0.0
      %3566 = vmatpush1.msra.mxu0 0.0
      %3567 = vmatprep.subr.mxu0 0.0
      %3568 = vmatpush1.msra.mxu0 0.0
      %3569 = vmatprep.subr.mxu0 0.0
      %3570 = vmatpush1.msra.mxu0 0.0
      %3571 = vmatprep.subr.mxu0 0.0
      %3572 = vmatpush1.msra.mxu0 0.0
      %3573 = vmatprep.subr.mxu0 0.0
      %3574 = vmatpush1.msra.mxu0 0.0
      %3575 = vmatprep.subr.mxu0 0.0
      %3576 = vmatpush1.msra.mxu0 0.0
      %3577 = vmatprep.subr.mxu0 0.0
      %3578 = vmatpush1.msra.mxu0 0.0
      %3579 = vmatprep.subr.mxu0 0.0
      %3580 = vmatpush1.msra.mxu0 0.0
      %3581 = vmatprep.subr.mxu0 0.0
      %3582 = vmatpush1.msra.mxu0 0.0
      %3583 = vmatprep.subr.mxu0 0.0
      %3584 = vmatpush1.msra.mxu0 0.0
      %3585 = vmatprep.subr.mxu0 0.0
      %3586 = vmatpush1.msra.mxu0 0.0
      %3587 = vmatprep.subr.mxu0 0.0
      %3588 = vmatpush1.msra.mxu0 0.0
      %3589 = vmatprep.subr.mxu0 0.0
      %3590 = vmatpush1.msra.mxu0 0.0
      %3591 = vmatprep.subr.mxu0 0.0
      %3592 = vmatpush1.msra.mxu0 0.0
      %3593 = vmatprep.subr.mxu0 0.0
      %3594 = vmatpush1.msra.mxu0 0.0
      %3595 = vmatprep.subr.mxu0 0.0
      %3596 = vmatpush1.msra.mxu0 0.0
      %3597 = vmatprep.subr.mxu0 0.0
      %3598 = vmatpush1.msra.mxu0 0.0
      %3599 = vmatprep.subr.mxu0 0.0
      %3600 = vmatpush1.msra.mxu0 0.0
      %3601 = vmatprep.subr.mxu0 0.0
      %3602 = vmatpush1.msra.mxu0 0.0
      %3603 = vmatprep.subr.mxu0 0.0
      %3604 = vmatpush1.msra.mxu0 0.0
      %3605 = vmatprep.subr.mxu0 0.0
      %3606 = vmatpush1.msra.mxu0 0.0
      %3607 = vmatprep.subr.mxu0 0.0
      %3608 = vmatpush1.msra.mxu0 0.0
      %3609 = vmatprep.subr.mxu0 0.0
      %3610 = vmatpush1.msra.mxu0 0.0
      %3611 = vmatprep.subr.mxu0 0.0
      %3612 = vmatpush1.msra.mxu0 0.0
      %3613 = vmatprep.subr.mxu0 0.0
      %3614 = vmatpush1.msra.mxu0 0.0
      %3615 = vmatprep.mubr.f32.mxu0 0.0
      %3616 = vmatmul.mubr.f32.gmra.mrb[0].mxu0 %v3052
      %v3617 = vpop.f32.mrb[0].mxu0
      %v3618 = vadd.f32 %v3030, %v3617
      %v3619 = vpop.f32.mrb[0].mxu0
      %v3620 = vadd.f32 %v3034, %v3619
      %3621 = vdwg.mxu0
      %v3622 = vmax.f32 %v3121, 0.0
      %v3623 = vmax.f32 %v3123, 0.0
      %v3624 = vmax.f32 %v3192, 0.0
      %v3625 = vmax.f32 %v3194, 0.0
      %v3626 = vmax.f32 %v3263, 0.0
      %v3627 = vmax.f32 %v3265, 0.0
      %v3628 = vmax.f32 %v3334, 0.0
      %v3629 = vmax.f32 %v3336, 0.0
      %v3630 = vmax.f32 %v3405, 0.0
      %v3631 = vmax.f32 %v3407, 0.0
      %v3632 = vmax.f32 %v3476, 0.0
      %v3633 = vmax.f32 %v3478, 0.0
      %v3634 = vmax.f32 %v3547, 0.0
      %v3635 = vmax.f32 %v3549, 0.0
      %v3636 = vmax.f32 %v3618, 0.0
      %v3637 = vmax.f32 %v3620, 0.0
      %v3638 = vld [vmem:[%s16] sm:$0xff]
      %v3639 = vld [vmem:[%s16 + $0x8] sm:$0xff]
      %v3640 = vld [vmem:[%s16 + $0x10] sm:$0xff]
      %v3641 = vld [vmem:[%s16 + $0x18] sm:$0xff]
      %v3642 = vld [vmem:[%s16 + $0x20] sm:$0xff]
      %v3643 = vld [vmem:[%s16 + $0x28] sm:$0xff]
      %v3644 = vld [vmem:[%s16 + $0x30] sm:$0xff]
      %v3645 = vld [vmem:[%s16 + $0x38] sm:$0xff]
      %v3646 = vld [vmem:[%s16 + $0x40] sm:$0xff]
      %v3647 = vld [vmem:[%s16 + $0x48] sm:$0xff]
      %v3648 = vld [vmem:[%s16 + $0x50] sm:$0xff]
      %v3649 = vld [vmem:[%s16 + $0x58] sm:$0xff]
      %v3650 = vld [vmem:[%s16 + $0x60] sm:$0xff]
      %v3651 = vld [vmem:[%s16 + $0x68] sm:$0xff]
      %v3652 = vld [vmem:[%s16 + $0x70] sm:$0xff]
      %v3653 = vld [vmem:[%s16 + $0x78] sm:$0xff]
      %v3654 = vld [vmem:[%s16 + $0x80] sm:$0xff]
      %v3655 = vld [vmem:[%s16 + $0x88] sm:$0xff]
      %v3656 = vld [vmem:[%s16 + $0x90] sm:$0xff]
      %v3657 = vld [vmem:[%s16 + $0x98] sm:$0xff]
      %v3658 = vld [vmem:[%s16 + $0xa0] sm:$0xff]
      %v3659 = vld [vmem:[%s16 + $0xa8] sm:$0xff]
      %v3660 = vld [vmem:[%s16 + $0xb0] sm:$0xff]
      %v3661 = vld [vmem:[%s16 + $0xb8] sm:$0xff]
      %v3662 = vld [vmem:[%s16 + $0xc0] sm:$0xff]
      %v3663 = vld [vmem:[%s16 + $0xc8] sm:$0xff]
      %v3664 = vld [vmem:[%s16 + $0xd0] sm:$0xff]
      %v3665 = vld [vmem:[%s16 + $0xd8] sm:$0xff]
      %v3666 = vld [vmem:[%s16 + $0xe0] sm:$0xff]
      %v3667 = vld [vmem:[%s16 + $0xe8] sm:$0xff]
      %v3668 = vld [vmem:[%s16 + $0xf0] sm:$0xff]
      %v3669 = vld [vmem:[%s16 + $0xf8] sm:$0xff]
      %v3670 = vld [vmem:[%s16 + $0x100] sm:$0xff]
      %v3671 = vld [vmem:[%s16 + $0x108] sm:$0xff]
      %v3672 = vld [vmem:[%s16 + $0x110] sm:$0xff]
      %v3673 = vld [vmem:[%s16 + $0x118] sm:$0xff]
      %v3674 = vld [vmem:[%s16 + $0x120] sm:$0xff]
      %v3675 = vld [vmem:[%s16 + $0x128] sm:$0xff]
      %v3676 = vld [vmem:[%s16 + $0x130] sm:$0xff]
      %v3677 = vld [vmem:[%s16 + $0x138] sm:$0xff]
      %v3678 = vld [vmem:[%s16 + $0x140] sm:$0xff]
      %v3679 = vld [vmem:[%s16 + $0x148] sm:$0xff]
      %v3680 = vld [vmem:[%s16 + $0x150] sm:$0xff]
      %v3681 = vld [vmem:[%s16 + $0x158] sm:$0xff]
      %v3682 = vld [vmem:[%s16 + $0x160] sm:$0xff]
      %v3683 = vld [vmem:[%s16 + $0x168] sm:$0xff]
      %v3684 = vld [vmem:[%s16 + $0x170] sm:$0xff]
      %v3685 = vld [vmem:[%s16 + $0x178] sm:$0xff]
      %v3686 = vld [vmem:[%s16 + $0x180] sm:$0xff]
      %v3687 = vld [vmem:[%s16 + $0x188] sm:$0xff]
      %v3688 = vld [vmem:[%s16 + $0x190] sm:$0xff]
      %v3689 = vld [vmem:[%s16 + $0x198] sm:$0xff]
      %v3690 = vld [vmem:[%s16 + $0x1a0] sm:$0xff]
      %v3691 = vld [vmem:[%s16 + $0x1a8] sm:$0xff]
      %v3692 = vld [vmem:[%s16 + $0x1b0] sm:$0xff]
      %v3693 = vld [vmem:[%s16 + $0x1b8] sm:$0xff]
      %v3694 = vld [vmem:[%s16 + $0x1c0] sm:$0xff]
      %v3695 = vld [vmem:[%s16 + $0x1c8] sm:$0xff]
      %v3696 = vld [vmem:[%s16 + $0x1d0] sm:$0xff]
      %v3697 = vld [vmem:[%s16 + $0x1d8] sm:$0xff]
      %v3698 = vld [vmem:[%s16 + $0x1e0] sm:$0xff]
      %v3699 = vld [vmem:[%s16 + $0x1e8] sm:$0xff]
      %v3700 = vld [vmem:[%s16 + $0x1f0] sm:$0xff]
      %v3701 = vld [vmem:[%s16 + $0x1f8] sm:$0xff]
      %v3702 = vld [vmem:[%s16 + $0x200] sm:$0xff]
      %v3703 = vld [vmem:[%s16 + $0x208] sm:$0xff]
      %v3704 = vld [vmem:[%s16 + $0x210] sm:$0xff]
      %v3705 = vld [vmem:[%s16 + $0x218] sm:$0xff]
      %v3706 = vld [vmem:[%s16 + $0x220] sm:$0xff]
      %v3707 = vld [vmem:[%s16 + $0x228] sm:$0xff]
      %v3708 = vld [vmem:[%s16 + $0x230] sm:$0xff]
      %v3709 = vld [vmem:[%s16 + $0x238] sm:$0xff]
      %v3710 = vld [vmem:[%s16 + $0x240] sm:$0xff]
      %v3711 = vld [vmem:[%s16 + $0x248] sm:$0xff]
      %v3712 = vld [vmem:[%s16 + $0x250] sm:$0xff]
      %v3713 = vld [vmem:[%s16 + $0x258] sm:$0xff]
      %v3714 = vld [vmem:[%s16 + $0x260] sm:$0xff]
      %v3715 = vld [vmem:[%s16 + $0x268] sm:$0xff]
      %v3716 = vld [vmem:[%s16 + $0x270] sm:$0xff]
      %v3717 = vld [vmem:[%s16 + $0x278] sm:$0xff]
      %v3718 = vld [vmem:[%s16 + $0x280] sm:$0xff]
      %v3719 = vld [vmem:[%s16 + $0x288] sm:$0xff]
      %v3720 = vld [vmem:[%s16 + $0x290] sm:$0xff]
      %v3721 = vld [vmem:[%s16 + $0x298] sm:$0xff]
      %v3722 = vld [vmem:[%s16 + $0x2a0] sm:$0xff]
      %v3723 = vld [vmem:[%s16 + $0x2a8] sm:$0xff]
      %v3724 = vld [vmem:[%s16 + $0x2b0] sm:$0xff]
      %v3725 = vld [vmem:[%s16 + $0x2b8] sm:$0xff]
      %v3726 = vld [vmem:[%s16 + $0x2c0] sm:$0xff]
      %v3727 = vld [vmem:[%s16 + $0x2c8] sm:$0xff]
      %v3728 = vld [vmem:[%s16 + $0x2d0] sm:$0xff]
      %v3729 = vld [vmem:[%s16 + $0x2d8] sm:$0xff]
      %v3730 = vld [vmem:[%s16 + $0x2e0] sm:$0xff]
      %v3731 = vld [vmem:[%s16 + $0x2e8] sm:$0xff]
      %v3732 = vld [vmem:[%s16 + $0x2f0] sm:$0xff]
      %v3733 = vld [vmem:[%s16 + $0x2f8] sm:$0xff]
      %v3734 = vld [vmem:[%s16 + $0x300] sm:$0xff]
      %v3735 = vld [vmem:[%s16 + $0x308] sm:$0xff]
      %v3736 = vld [vmem:[%s16 + $0x310] sm:$0xff]
      %v3737 = vld [vmem:[%s16 + $0x318] sm:$0xff]
      %v3738 = vld [vmem:[%s16 + $0x320] sm:$0xff]
      %v3739 = vld [vmem:[%s16 + $0x328] sm:$0xff]
      %v3740 = vld [vmem:[%s16 + $0x330] sm:$0xff]
      %v3741 = vld [vmem:[%s16 + $0x338] sm:$0xff]
      %v3742 = vld [vmem:[%s16 + $0x340] sm:$0xff]
      %v3743 = vld [vmem:[%s16 + $0x348] sm:$0xff]
      %v3744 = vld [vmem:[%s16 + $0x350] sm:$0xff]
      %v3745 = vld [vmem:[%s16 + $0x358] sm:$0xff]
      %v3746 = vld [vmem:[%s16 + $0x360] sm:$0xff]
      %v3747 = vld [vmem:[%s16 + $0x368] sm:$0xff]
      %v3748 = vld [vmem:[%s16 + $0x370] sm:$0xff]
      %v3749 = vld [vmem:[%s16 + $0x378] sm:$0xff]
      %v3750 = vld [vmem:[%s16 + $0x380] sm:$0xff]
      %v3751 = vld [vmem:[%s16 + $0x388] sm:$0xff]
      %v3752 = vld [vmem:[%s16 + $0x390] sm:$0xff]
      %v3753 = vld [vmem:[%s16 + $0x398] sm:$0xff]
      %v3754 = vld [vmem:[%s16 + $0x3a0] sm:$0xff]
      %v3755 = vld [vmem:[%s16 + $0x3a8] sm:$0xff]
      %v3756 = vld [vmem:[%s16 + $0x3b0] sm:$0xff]
      %v3757 = vld [vmem:[%s16 + $0x3b8] sm:$0xff]
      %v3758 = vld [vmem:[%s16 + $0x3c0] sm:$0xff]
      %v3759 = vld [vmem:[%s16 + $0x3c8] sm:$0xff]
      %v3760 = vld [vmem:[%s16 + $0x3d0] sm:$0xff]
      %v3761 = vld [vmem:[%s16 + $0x3d8] sm:$0xff]
      %v3762 = vld [vmem:[%s16 + $0x3e0] sm:$0xff]
      %v3763 = vld [vmem:[%s16 + $0x3e8] sm:$0xff]
      %v3764 = vld [vmem:[%s16 + $0x3f0] sm:$0xff]
      %v3765 = vld [vmem:[%s16 + $0x3f8] sm:$0xff]
      %v3766 = vld [vmem:[%s16 + $0x400] sm:$0xff]
      %v3767 = vld [vmem:[%s16 + $0x408] sm:$0xff]
      %v3768 = vld [vmem:[%s16 + $0x410] sm:$0xff]
      %v3769 = vld [vmem:[%s16 + $0x418] sm:$0xff]
      %v3770 = vld [vmem:[%s16 + $0x420] sm:$0xff]
      %v3771 = vld [vmem:[%s16 + $0x428] sm:$0xff]
      %v3772 = vld [vmem:[%s16 + $0x430] sm:$0xff]
      %v3773 = vld [vmem:[%s16 + $0x438] sm:$0xff]
      %v3774 = vld [vmem:[%s16 + $0x440] sm:$0xff]
      %v3775 = vld [vmem:[%s16 + $0x448] sm:$0xff]
      %v3776 = vld [vmem:[%s16 + $0x450] sm:$0xff]
      %v3777 = vld [vmem:[%s16 + $0x458] sm:$0xff]
      %v3778 = vld [vmem:[%s16 + $0x460] sm:$0xff]
      %v3779 = vld [vmem:[%s16 + $0x468] sm:$0xff]
      %v3780 = vld [vmem:[%s16 + $0x470] sm:$0xff]
      %v3781 = vld [vmem:[%s16 + $0x478] sm:$0xff]
      %v3782 = vld [vmem:[%s16 + $0x480] sm:$0xff]
      %v3783 = vld [vmem:[%s16 + $0x488] sm:$0xff]
      %v3784 = vld [vmem:[%s16 + $0x490] sm:$0xff]
      %v3785 = vld [vmem:[%s16 + $0x498] sm:$0xff]
      %v3786 = vld [vmem:[%s16 + $0x4a0] sm:$0xff]
      %v3787 = vld [vmem:[%s16 + $0x4a8] sm:$0xff]
      %v3788 = vld [vmem:[%s16 + $0x4b0] sm:$0xff]
      %v3789 = vld [vmem:[%s16 + $0x4b8] sm:$0xff]
      %v3790 = vld [vmem:[%s16 + $0x4c0] sm:$0xff]
      %v3791 = vld [vmem:[%s16 + $0x4c8] sm:$0xff]
      %v3792 = vld [vmem:[%s16 + $0x4d0] sm:$0xff]
      %v3793 = vld [vmem:[%s16 + $0x4d8] sm:$0xff]
      %v3794 = vld [vmem:[%s16 + $0x4e0] sm:$0xff]
      %v3795 = vld [vmem:[%s16 + $0x4e8] sm:$0xff]
      %v3796 = vld [vmem:[%s16 + $0x4f0] sm:$0xff]
      %v3797 = vld [vmem:[%s16 + $0x4f8] sm:$0xff]
      %v3798 = vld [vmem:[%s16 + $0x500] sm:$0xff]
      %v3799 = vld [vmem:[%s16 + $0x508] sm:$0xff]
      %v3800 = vld [vmem:[%s16 + $0x510] sm:$0xff]
      %v3801 = vld [vmem:[%s16 + $0x518] sm:$0xff]
      %v3802 = vld [vmem:[%s16 + $0x520] sm:$0xff]
      %v3803 = vld [vmem:[%s16 + $0x528] sm:$0xff]
      %v3804 = vld [vmem:[%s16 + $0x530] sm:$0xff]
      %v3805 = vld [vmem:[%s16 + $0x538] sm:$0xff]
      %v3806 = vld [vmem:[%s16 + $0x540] sm:$0xff]
      %v3807 = vld [vmem:[%s16 + $0x548] sm:$0xff]
      %v3808 = vld [vmem:[%s16 + $0x550] sm:$0xff]
      %v3809 = vld [vmem:[%s16 + $0x558] sm:$0xff]
      %v3810 = vld [vmem:[%s16 + $0x560] sm:$0xff]
      %v3811 = vld [vmem:[%s16 + $0x568] sm:$0xff]
      %v3812 = vld [vmem:[%s16 + $0x570] sm:$0xff]
      %v3813 = vld [vmem:[%s16 + $0x578] sm:$0xff]
      %v3814 = vld [vmem:[%s16 + $0x580] sm:$0xff]
      %v3815 = vld [vmem:[%s16 + $0x588] sm:$0xff]
      %v3816 = vld [vmem:[%s16 + $0x590] sm:$0xff]
      %v3817 = vld [vmem:[%s16 + $0x598] sm:$0xff]
      %v3818 = vld [vmem:[%s16 + $0x5a0] sm:$0xff]
      %v3819 = vld [vmem:[%s16 + $0x5a8] sm:$0xff]
      %v3820 = vld [vmem:[%s16 + $0x5b0] sm:$0xff]
      %v3821 = vld [vmem:[%s16 + $0x5b8] sm:$0xff]
      %v3822 = vld [vmem:[%s16 + $0x5c0] sm:$0xff]
      %v3823 = vld [vmem:[%s16 + $0x5c8] sm:$0xff]
      %v3824 = vld [vmem:[%s16 + $0x5d0] sm:$0xff]
      %v3825 = vld [vmem:[%s16 + $0x5d8] sm:$0xff]
      %v3826 = vld [vmem:[%s16 + $0x5e0] sm:$0xff]
      %v3827 = vld [vmem:[%s16 + $0x5e8] sm:$0xff]
      %v3828 = vld [vmem:[%s16 + $0x5f0] sm:$0xff]
      %v3829 = vld [vmem:[%s16 + $0x5f8] sm:$0xff]
      %v3830 = vld [vmem:[%s16 + $0x600] sm:$0xff]
      %v3831 = vld [vmem:[%s16 + $0x608] sm:$0xff]
      %v3832 = vld [vmem:[%s16 + $0x610] sm:$0xff]
      %v3833 = vld [vmem:[%s16 + $0x618] sm:$0xff]
      %v3834 = vld [vmem:[%s16 + $0x620] sm:$0xff]
      %v3835 = vld [vmem:[%s16 + $0x628] sm:$0xff]
      %v3836 = vld [vmem:[%s16 + $0x630] sm:$0xff]
      %v3837 = vld [vmem:[%s16 + $0x638] sm:$0xff]
      %v3838 = vld [vmem:[%s16 + $0x640] sm:$0xff]
      %v3839 = vld [vmem:[%s16 + $0x648] sm:$0xff]
      %v3840 = vld [vmem:[%s16 + $0x650] sm:$0xff]
      %v3841 = vld [vmem:[%s16 + $0x658] sm:$0xff]
      %v3842 = vld [vmem:[%s16 + $0x660] sm:$0xff]
      %v3843 = vld [vmem:[%s16 + $0x668] sm:$0xff]
      %v3844 = vld [vmem:[%s16 + $0x670] sm:$0xff]
      %v3845 = vld [vmem:[%s16 + $0x678] sm:$0xff]
      %v3846 = vld [vmem:[%s16 + $0x680] sm:$0xff]
      %v3847 = vld [vmem:[%s16 + $0x688] sm:$0xff]
      %v3848 = vld [vmem:[%s16 + $0x690] sm:$0xff]
      %v3849 = vld [vmem:[%s16 + $0x698] sm:$0xff]
      %v3850 = vld [vmem:[%s16 + $0x6a0] sm:$0xff]
      %v3851 = vld [vmem:[%s16 + $0x6a8] sm:$0xff]
      %v3852 = vld [vmem:[%s16 + $0x6b0] sm:$0xff]
      %v3853 = vld [vmem:[%s16 + $0x6b8] sm:$0xff]
      %v3854 = vld [vmem:[%s16 + $0x6c0] sm:$0xff]
      %v3855 = vld [vmem:[%s16 + $0x6c8] sm:$0xff]
      %v3856 = vld [vmem:[%s16 + $0x6d0] sm:$0xff]
      %v3857 = vld [vmem:[%s16 + $0x6d8] sm:$0xff]
      %v3858 = vld [vmem:[%s16 + $0x6e0] sm:$0xff]
      %v3859 = vld [vmem:[%s16 + $0x6e8] sm:$0xff]
      %v3860 = vld [vmem:[%s16 + $0x6f0] sm:$0xff]
      %v3861 = vld [vmem:[%s16 + $0x6f8] sm:$0xff]
      %v3862 = vld [vmem:[%s16 + $0x700] sm:$0xff]
      %v3863 = vld [vmem:[%s16 + $0x708] sm:$0xff]
      %v3864 = vld [vmem:[%s16 + $0x710] sm:$0xff]
      %v3865 = vld [vmem:[%s16 + $0x718] sm:$0xff]
      %v3866 = vld [vmem:[%s16 + $0x720] sm:$0xff]
      %v3867 = vld [vmem:[%s16 + $0x728] sm:$0xff]
      %v3868 = vld [vmem:[%s16 + $0x730] sm:$0xff]
      %v3869 = vld [vmem:[%s16 + $0x738] sm:$0xff]
      %v3870 = vld [vmem:[%s16 + $0x740] sm:$0xff]
      %v3871 = vld [vmem:[%s16 + $0x748] sm:$0xff]
      %v3872 = vld [vmem:[%s16 + $0x750] sm:$0xff]
      %v3873 = vld [vmem:[%s16 + $0x758] sm:$0xff]
      %v3874 = vld [vmem:[%s16 + $0x760] sm:$0xff]
      %v3875 = vld [vmem:[%s16 + $0x768] sm:$0xff]
      %v3876 = vld [vmem:[%s16 + $0x770] sm:$0xff]
      %v3877 = vld [vmem:[%s16 + $0x778] sm:$0xff]
      %v3878 = vld [vmem:[%s16 + $0x780] sm:$0xff]
      %v3879 = vld [vmem:[%s16 + $0x788] sm:$0xff]
      %v3880 = vld [vmem:[%s16 + $0x790] sm:$0xff]
      %v3881 = vld [vmem:[%s16 + $0x798] sm:$0xff]
      %v3882 = vld [vmem:[%s16 + $0x7a0] sm:$0xff]
      %v3883 = vld [vmem:[%s16 + $0x7a8] sm:$0xff]
      %v3884 = vld [vmem:[%s16 + $0x7b0] sm:$0xff]
      %v3885 = vld [vmem:[%s16 + $0x7b8] sm:$0xff]
      %v3886 = vld [vmem:[%s16 + $0x7c0] sm:$0xff]
      %v3887 = vld [vmem:[%s16 + $0x7c8] sm:$0xff]
      %v3888 = vld [vmem:[%s16 + $0x7d0] sm:$0xff]
      %v3889 = vld [vmem:[%s16 + $0x7d8] sm:$0xff]
      %v3890 = vld [vmem:[%s16 + $0x7e0] sm:$0xff]
      %v3891 = vld [vmem:[%s16 + $0x7e8] sm:$0xff]
      %v3892 = vld [vmem:[%s16 + $0x7f0] sm:$0xff]
      %v3893 = vld [vmem:[%s16 + $0x7f8] sm:$0xff]
      %v3894 = vld [vmem:[%s17] sm:$0x1]
      %v3896 = vlaneseq
      %v3897 = vshrl.u32 %v3896, 7
      %v3898 = vsub.s32 0, %v3897
      %v3899 = vrot.slane %v3894, %v3898
      %3901 = vmatprep.subr.mxu0 0.0
      %3902 = vmatpush1.msra.mxu0 %v3638
      %3903 = vmatprep.subr.mxu0 0.0
      %3904 = vmatpush1.msra.mxu0 %v3639
      %3905 = vmatprep.subr.mxu0 0.0
      %3906 = vmatpush1.msra.mxu0 %v3640
      %3907 = vmatprep.subr.mxu0 0.0
      %3908 = vmatpush1.msra.mxu0 %v3641
      %3909 = vmatprep.subr.mxu0 0.0
      %3910 = vmatpush1.msra.mxu0 %v3642
      %3911 = vmatprep.subr.mxu0 0.0
      %3912 = vmatpush1.msra.mxu0 %v3643
      %3913 = vmatprep.subr.mxu0 0.0
      %3914 = vmatpush1.msra.mxu0 %v3644
      %3915 = vmatprep.subr.mxu0 0.0
      %3916 = vmatpush1.msra.mxu0 %v3645
      %3917 = vmatprep.subr.mxu0 0.0
      %3918 = vmatpush1.msra.mxu0 %v3646
      %3919 = vmatprep.subr.mxu0 0.0
      %3920 = vmatpush1.msra.mxu0 %v3647
      %3921 = vmatprep.subr.mxu0 0.0
      %3922 = vmatpush1.msra.mxu0 %v3648
      %3923 = vmatprep.subr.mxu0 0.0
      %3924 = vmatpush1.msra.mxu0 %v3649
      %3925 = vmatprep.subr.mxu0 0.0
      %3926 = vmatpush1.msra.mxu0 %v3650
      %3927 = vmatprep.subr.mxu0 0.0
      %3928 = vmatpush1.msra.mxu0 %v3651
      %3929 = vmatprep.subr.mxu0 0.0
      %3930 = vmatpush1.msra.mxu0 %v3652
      %3931 = vmatprep.subr.mxu0 0.0
      %3932 = vmatpush1.msra.mxu0 %v3653
      %3933 = vmatprep.subr.mxu0 0.0
      %3934 = vmatpush1.msra.mxu0 %v3654
      %3935 = vmatprep.subr.mxu0 0.0
      %3936 = vmatpush1.msra.mxu0 %v3655
      %3937 = vmatprep.subr.mxu0 0.0
      %3938 = vmatpush1.msra.mxu0 %v3656
      %3939 = vmatprep.subr.mxu0 0.0
      %3940 = vmatpush1.msra.mxu0 %v3657
      %3941 = vmatprep.subr.mxu0 0.0
      %3942 = vmatpush1.msra.mxu0 %v3658
      %3943 = vmatprep.subr.mxu0 0.0
      %3944 = vmatpush1.msra.mxu0 %v3659
      %3945 = vmatprep.subr.mxu0 0.0
      %3946 = vmatpush1.msra.mxu0 %v3660
      %3947 = vmatprep.subr.mxu0 0.0
      %3948 = vmatpush1.msra.mxu0 %v3661
      %3949 = vmatprep.subr.mxu0 0.0
      %3950 = vmatpush1.msra.mxu0 %v3662
      %3951 = vmatprep.subr.mxu0 0.0
      %3952 = vmatpush1.msra.mxu0 %v3663
      %3953 = vmatprep.subr.mxu0 0.0
      %3954 = vmatpush1.msra.mxu0 %v3664
      %3955 = vmatprep.subr.mxu0 0.0
      %3956 = vmatpush1.msra.mxu0 %v3665
      %3957 = vmatprep.subr.mxu0 0.0
      %3958 = vmatpush1.msra.mxu0 %v3666
      %3959 = vmatprep.subr.mxu0 0.0
      %3960 = vmatpush1.msra.mxu0 %v3667
      %3961 = vmatprep.subr.mxu0 0.0
      %3962 = vmatpush1.msra.mxu0 %v3668
      %3963 = vmatprep.subr.mxu0 0.0
      %3964 = vmatpush1.msra.mxu0 %v3669
      %3965 = vmatprep.mubr.f32.mxu0 %v3623
      %3966 = vmatmul.mubr.f32.gmra.mrb[0].mxu0 %v3622
      %v3967 = vpop.f32.mrb[0].mxu0
      %v3968 = vadd.f32 %v3899, %v3967
      %v3969 = vpop.f32.mrb[0].mxu0
      %3970 = vdwg.mxu0
      %3971 = vmatprep.subr.mxu0 0.0
      %3972 = vmatpush1.msra.mxu0 %v3670
      %3973 = vmatprep.subr.mxu0 0.0
      %3974 = vmatpush1.msra.mxu0 %v3671
      %3975 = vmatprep.subr.mxu0 0.0
      %3976 = vmatpush1.msra.mxu0 %v3672
      %3977 = vmatprep.subr.mxu0 0.0
      %3978 = vmatpush1.msra.mxu0 %v3673
      %3979 = vmatprep.subr.mxu0 0.0
      %3980 = vmatpush1.msra.mxu0 %v3674
      %3981 = vmatprep.subr.mxu0 0.0
      %3982 = vmatpush1.msra.mxu0 %v3675
      %3983 = vmatprep.subr.mxu0 0.0
      %3984 = vmatpush1.msra.mxu0 %v3676
      %3985 = vmatprep.subr.mxu0 0.0
      %3986 = vmatpush1.msra.mxu0 %v3677
      %3987 = vmatprep.subr.mxu0 0.0
      %3988 = vmatpush1.msra.mxu0 %v3678
      %3989 = vmatprep.subr.mxu0 0.0
      %3990 = vmatpush1.msra.mxu0 %v3679
      %3991 = vmatprep.subr.mxu0 0.0
      %3992 = vmatpush1.msra.mxu0 %v3680
      %3993 = vmatprep.subr.mxu0 0.0
      %3994 = vmatpush1.msra.mxu0 %v3681
      %3995 = vmatprep.subr.mxu0 0.0
      %3996 = vmatpush1.msra.mxu0 %v3682
      %3997 = vmatprep.subr.mxu0 0.0
      %3998 = vmatpush1.msra.mxu0 %v3683
      %3999 = vmatprep.subr.mxu0 0.0
      %4000 = vmatpush1.msra.mxu0 %v3684
      %4001 = vmatprep.subr.mxu0 0.0
      %4002 = vmatpush1.msra.mxu0 %v3685
      %4003 = vmatprep.subr.mxu0 0.0
      %4004 = vmatpush1.msra.mxu0 %v3686
      %4005 = vmatprep.subr.mxu0 0.0
      %4006 = vmatpush1.msra.mxu0 %v3687
      %4007 = vmatprep.subr.mxu0 0.0
      %4008 = vmatpush1.msra.mxu0 %v3688
      %4009 = vmatprep.subr.mxu0 0.0
      %4010 = vmatpush1.msra.mxu0 %v3689
      %4011 = vmatprep.subr.mxu0 0.0
      %4012 = vmatpush1.msra.mxu0 %v3690
      %4013 = vmatprep.subr.mxu0 0.0
      %4014 = vmatpush1.msra.mxu0 %v3691
      %4015 = vmatprep.subr.mxu0 0.0
      %4016 = vmatpush1.msra.mxu0 %v3692
      %4017 = vmatprep.subr.mxu0 0.0
      %4018 = vmatpush1.msra.mxu0 %v3693
      %4019 = vmatprep.subr.mxu0 0.0
      %4020 = vmatpush1.msra.mxu0 %v3694
      %4021 = vmatprep.subr.mxu0 0.0
      %4022 = vmatpush1.msra.mxu0 %v3695
      %4023 = vmatprep.subr.mxu0 0.0
      %4024 = vmatpush1.msra.mxu0 %v3696
      %4025 = vmatprep.subr.mxu0 0.0
      %4026 = vmatpush1.msra.mxu0 %v3697
      %4027 = vmatprep.subr.mxu0 0.0
      %4028 = vmatpush1.msra.mxu0 %v3698
      %4029 = vmatprep.subr.mxu0 0.0
      %4030 = vmatpush1.msra.mxu0 %v3699
      %4031 = vmatprep.subr.mxu0 0.0
      %4032 = vmatpush1.msra.mxu0 %v3700
      %4033 = vmatprep.subr.mxu0 0.0
      %4034 = vmatpush1.msra.mxu0 %v3701
      %4035 = vmatprep.mubr.f32.mxu0 %v3625
      %4036 = vmatmul.mubr.f32.gmra.mrb[0].mxu0 %v3624
      %v4037 = vpop.f32.mrb[0].mxu0
      %v4038 = vadd.f32 %v3968, %v4037
      %v4039 = vpop.f32.mrb[0].mxu0
      %4040 = vdwg.mxu0
      %4041 = vmatprep.subr.mxu0 0.0
      %4042 = vmatpush1.msra.mxu0 %v3702
      %4043 = vmatprep.subr.mxu0 0.0
      %4044 = vmatpush1.msra.mxu0 %v3703
      %4045 = vmatprep.subr.mxu0 0.0
      %4046 = vmatpush1.msra.mxu0 %v3704
      %4047 = vmatprep.subr.mxu0 0.0
      %4048 = vmatpush1.msra.mxu0 %v3705
      %4049 = vmatprep.subr.mxu0 0.0
      %4050 = vmatpush1.msra.mxu0 %v3706
      %4051 = vmatprep.subr.mxu0 0.0
      %4052 = vmatpush1.msra.mxu0 %v3707
      %4053 = vmatprep.subr.mxu0 0.0
      %4054 = vmatpush1.msra.mxu0 %v3708
      %4055 = vmatprep.subr.mxu0 0.0
      %4056 = vmatpush1.msra.mxu0 %v3709
      %4057 = vmatprep.subr.mxu0 0.0
      %4058 = vmatpush1.msra.mxu0 %v3710
      %4059 = vmatprep.subr.mxu0 0.0
      %4060 = vmatpush1.msra.mxu0 %v3711
      %4061 = vmatprep.subr.mxu0 0.0
      %4062 = vmatpush1.msra.mxu0 %v3712
      %4063 = vmatprep.subr.mxu0 0.0
      %4064 = vmatpush1.msra.mxu0 %v3713
      %4065 = vmatprep.subr.mxu0 0.0
      %4066 = vmatpush1.msra.mxu0 %v3714
      %4067 = vmatprep.subr.mxu0 0.0
      %4068 = vmatpush1.msra.mxu0 %v3715
      %4069 = vmatprep.subr.mxu0 0.0
      %4070 = vmatpush1.msra.mxu0 %v3716
      %4071 = vmatprep.subr.mxu0 0.0
      %4072 = vmatpush1.msra.mxu0 %v3717
      %4073 = vmatprep.subr.mxu0 0.0
      %4074 = vmatpush1.msra.mxu0 %v3718
      %4075 = vmatprep.subr.mxu0 0.0
      %4076 = vmatpush1.msra.mxu0 %v3719
      %4077 = vmatprep.subr.mxu0 0.0
      %4078 = vmatpush1.msra.mxu0 %v3720
      %4079 = vmatprep.subr.mxu0 0.0
      %4080 = vmatpush1.msra.mxu0 %v3721
      %4081 = vmatprep.subr.mxu0 0.0
      %4082 = vmatpush1.msra.mxu0 %v3722
      %4083 = vmatprep.subr.mxu0 0.0
      %4084 = vmatpush1.msra.mxu0 %v3723
      %4085 = vmatprep.subr.mxu0 0.0
      %4086 = vmatpush1.msra.mxu0 %v3724
      %4087 = vmatprep.subr.mxu0 0.0
      %4088 = vmatpush1.msra.mxu0 %v3725
      %4089 = vmatprep.subr.mxu0 0.0
      %4090 = vmatpush1.msra.mxu0 %v3726
      %4091 = vmatprep.subr.mxu0 0.0
      %4092 = vmatpush1.msra.mxu0 %v3727
      %4093 = vmatprep.subr.mxu0 0.0
      %4094 = vmatpush1.msra.mxu0 %v3728
      %4095 = vmatprep.subr.mxu0 0.0
      %4096 = vmatpush1.msra.mxu0 %v3729
      %4097 = vmatprep.subr.mxu0 0.0
      %4098 = vmatpush1.msra.mxu0 %v3730
      %4099 = vmatprep.subr.mxu0 0.0
      %4100 = vmatpush1.msra.mxu0 %v3731
      %4101 = vmatprep.subr.mxu0 0.0
      %4102 = vmatpush1.msra.mxu0 %v3732
      %4103 = vmatprep.subr.mxu0 0.0
      %4104 = vmatpush1.msra.mxu0 %v3733
      %4105 = vmatprep.mubr.f32.mxu0 %v3627
      %4106 = vmatmul.mubr.f32.gmra.mrb[0].mxu0 %v3626
      %v4107 = vpop.f32.mrb[0].mxu0
      %v4108 = vadd.f32 %v4038, %v4107
      %v4109 = vpop.f32.mrb[0].mxu0
      %4110 = vdwg.mxu0
      %4111 = vmatprep.subr.mxu0 0.0
      %4112 = vmatpush1.msra.mxu0 %v3734
      %4113 = vmatprep.subr.mxu0 0.0
      %4114 = vmatpush1.msra.mxu0 %v3735
      %4115 = vmatprep.subr.mxu0 0.0
      %4116 = vmatpush1.msra.mxu0 %v3736
      %4117 = vmatprep.subr.mxu0 0.0
      %4118 = vmatpush1.msra.mxu0 %v3737
      %4119 = vmatprep.subr.mxu0 0.0
      %4120 = vmatpush1.msra.mxu0 %v3738
      %4121 = vmatprep.subr.mxu0 0.0
      %4122 = vmatpush1.msra.mxu0 %v3739
      %4123 = vmatprep.subr.mxu0 0.0
      %4124 = vmatpush1.msra.mxu0 %v3740
      %4125 = vmatprep.subr.mxu0 0.0
      %4126 = vmatpush1.msra.mxu0 %v3741
      %4127 = vmatprep.subr.mxu0 0.0
      %4128 = vmatpush1.msra.mxu0 %v3742
      %4129 = vmatprep.subr.mxu0 0.0
      %4130 = vmatpush1.msra.mxu0 %v3743
      %4131 = vmatprep.subr.mxu0 0.0
      %4132 = vmatpush1.msra.mxu0 %v3744
      %4133 = vmatprep.subr.mxu0 0.0
      %4134 = vmatpush1.msra.mxu0 %v3745
      %4135 = vmatprep.subr.mxu0 0.0
      %4136 = vmatpush1.msra.mxu0 %v3746
      %4137 = vmatprep.subr.mxu0 0.0
      %4138 = vmatpush1.msra.mxu0 %v3747
      %4139 = vmatprep.subr.mxu0 0.0
      %4140 = vmatpush1.msra.mxu0 %v3748
      %4141 = vmatprep.subr.mxu0 0.0
      %4142 = vmatpush1.msra.mxu0 %v3749
      %4143 = vmatprep.subr.mxu0 0.0
      %4144 = vmatpush1.msra.mxu0 %v3750
      %4145 = vmatprep.subr.mxu0 0.0
      %4146 = vmatpush1.msra.mxu0 %v3751
      %4147 = vmatprep.subr.mxu0 0.0
      %4148 = vmatpush1.msra.mxu0 %v3752
      %4149 = vmatprep.subr.mxu0 0.0
      %4150 = vmatpush1.msra.mxu0 %v3753
      %4151 = vmatprep.subr.mxu0 0.0
      %4152 = vmatpush1.msra.mxu0 %v3754
      %4153 = vmatprep.subr.mxu0 0.0
      %4154 = vmatpush1.msra.mxu0 %v3755
      %4155 = vmatprep.subr.mxu0 0.0
      %4156 = vmatpush1.msra.mxu0 %v3756
      %4157 = vmatprep.subr.mxu0 0.0
      %4158 = vmatpush1.msra.mxu0 %v3757
      %4159 = vmatprep.subr.mxu0 0.0
      %4160 = vmatpush1.msra.mxu0 %v3758
      %4161 = vmatprep.subr.mxu0 0.0
      %4162 = vmatpush1.msra.mxu0 %v3759
      %4163 = vmatprep.subr.mxu0 0.0
      %4164 = vmatpush1.msra.mxu0 %v3760
      %4165 = vmatprep.subr.mxu0 0.0
      %4166 = vmatpush1.msra.mxu0 %v3761
      %4167 = vmatprep.subr.mxu0 0.0
      %4168 = vmatpush1.msra.mxu0 %v3762
      %4169 = vmatprep.subr.mxu0 0.0
      %4170 = vmatpush1.msra.mxu0 %v3763
      %4171 = vmatprep.subr.mxu0 0.0
      %4172 = vmatpush1.msra.mxu0 %v3764
      %4173 = vmatprep.subr.mxu0 0.0
      %4174 = vmatpush1.msra.mxu0 %v3765
      %4175 = vmatprep.mubr.f32.mxu0 %v3629
      %4176 = vmatmul.mubr.f32.gmra.mrb[0].mxu0 %v3628
      %v4177 = vpop.f32.mrb[0].mxu0
      %v4178 = vadd.f32 %v4108, %v4177
      %v4179 = vpop.f32.mrb[0].mxu0
      %4180 = vdwg.mxu0
      %4181 = vmatprep.subr.mxu0 0.0
      %4182 = vmatpush1.msra.mxu0 %v3766
      %4183 = vmatprep.subr.mxu0 0.0
      %4184 = vmatpush1.msra.mxu0 %v3767
      %4185 = vmatprep.subr.mxu0 0.0
      %4186 = vmatpush1.msra.mxu0 %v3768
      %4187 = vmatprep.subr.mxu0 0.0
      %4188 = vmatpush1.msra.mxu0 %v3769
      %4189 = vmatprep.subr.mxu0 0.0
      %4190 = vmatpush1.msra.mxu0 %v3770
      %4191 = vmatprep.subr.mxu0 0.0
      %4192 = vmatpush1.msra.mxu0 %v3771
      %4193 = vmatprep.subr.mxu0 0.0
      %4194 = vmatpush1.msra.mxu0 %v3772
      %4195 = vmatprep.subr.mxu0 0.0
      %4196 = vmatpush1.msra.mxu0 %v3773
      %4197 = vmatprep.subr.mxu0 0.0
      %4198 = vmatpush1.msra.mxu0 %v3774
      %4199 = vmatprep.subr.mxu0 0.0
      %4200 = vmatpush1.msra.mxu0 %v3775
      %4201 = vmatprep.subr.mxu0 0.0
      %4202 = vmatpush1.msra.mxu0 %v3776
      %4203 = vmatprep.subr.mxu0 0.0
      %4204 = vmatpush1.msra.mxu0 %v3777
      %4205 = vmatprep.subr.mxu0 0.0
      %4206 = vmatpush1.msra.mxu0 %v3778
      %4207 = vmatprep.subr.mxu0 0.0
      %4208 = vmatpush1.msra.mxu0 %v3779
      %4209 = vmatprep.subr.mxu0 0.0
      %4210 = vmatpush1.msra.mxu0 %v3780
      %4211 = vmatprep.subr.mxu0 0.0
      %4212 = vmatpush1.msra.mxu0 %v3781
      %4213 = vmatprep.subr.mxu0 0.0
      %4214 = vmatpush1.msra.mxu0 %v3782
      %4215 = vmatprep.subr.mxu0 0.0
      %4216 = vmatpush1.msra.mxu0 %v3783
      %4217 = vmatprep.subr.mxu0 0.0
      %4218 = vmatpush1.msra.mxu0 %v3784
      %4219 = vmatprep.subr.mxu0 0.0
      %4220 = vmatpush1.msra.mxu0 %v3785
      %4221 = vmatprep.subr.mxu0 0.0
      %4222 = vmatpush1.msra.mxu0 %v3786
      %4223 = vmatprep.subr.mxu0 0.0
      %4224 = vmatpush1.msra.mxu0 %v3787
      %4225 = vmatprep.subr.mxu0 0.0
      %4226 = vmatpush1.msra.mxu0 %v3788
      %4227 = vmatprep.subr.mxu0 0.0
      %4228 = vmatpush1.msra.mxu0 %v3789
      %4229 = vmatprep.subr.mxu0 0.0
      %4230 = vmatpush1.msra.mxu0 %v3790
      %4231 = vmatprep.subr.mxu0 0.0
      %4232 = vmatpush1.msra.mxu0 %v3791
      %4233 = vmatprep.subr.mxu0 0.0
      %4234 = vmatpush1.msra.mxu0 %v3792
      %4235 = vmatprep.subr.mxu0 0.0
      %4236 = vmatpush1.msra.mxu0 %v3793
      %4237 = vmatprep.subr.mxu0 0.0
      %4238 = vmatpush1.msra.mxu0 %v3794
      %4239 = vmatprep.subr.mxu0 0.0
      %4240 = vmatpush1.msra.mxu0 %v3795
      %4241 = vmatprep.subr.mxu0 0.0
      %4242 = vmatpush1.msra.mxu0 %v3796
      %4243 = vmatprep.subr.mxu0 0.0
      %4244 = vmatpush1.msra.mxu0 %v3797
      %4245 = vmatprep.mubr.f32.mxu0 %v3631
      %4246 = vmatmul.mubr.f32.gmra.mrb[0].mxu0 %v3630
      %v4247 = vpop.f32.mrb[0].mxu0
      %v4248 = vadd.f32 %v4178, %v4247
      %v4249 = vpop.f32.mrb[0].mxu0
      %4250 = vdwg.mxu0
      %4251 = vmatprep.subr.mxu0 0.0
      %4252 = vmatpush1.msra.mxu0 %v3798
      %4253 = vmatprep.subr.mxu0 0.0
      %4254 = vmatpush1.msra.mxu0 %v3799
      %4255 = vmatprep.subr.mxu0 0.0
      %4256 = vmatpush1.msra.mxu0 %v3800
      %4257 = vmatprep.subr.mxu0 0.0
      %4258 = vmatpush1.msra.mxu0 %v3801
      %4259 = vmatprep.subr.mxu0 0.0
      %4260 = vmatpush1.msra.mxu0 %v3802
      %4261 = vmatprep.subr.mxu0 0.0
      %4262 = vmatpush1.msra.mxu0 %v3803
      %4263 = vmatprep.subr.mxu0 0.0
      %4264 = vmatpush1.msra.mxu0 %v3804
      %4265 = vmatprep.subr.mxu0 0.0
      %4266 = vmatpush1.msra.mxu0 %v3805
      %4267 = vmatprep.subr.mxu0 0.0
      %4268 = vmatpush1.msra.mxu0 %v3806
      %4269 = vmatprep.subr.mxu0 0.0
      %4270 = vmatpush1.msra.mxu0 %v3807
      %4271 = vmatprep.subr.mxu0 0.0
      %4272 = vmatpush1.msra.mxu0 %v3808
      %4273 = vmatprep.subr.mxu0 0.0
      %4274 = vmatpush1.msra.mxu0 %v3809
      %4275 = vmatprep.subr.mxu0 0.0
      %4276 = vmatpush1.msra.mxu0 %v3810
      %4277 = vmatprep.subr.mxu0 0.0
      %4278 = vmatpush1.msra.mxu0 %v3811
      %4279 = vmatprep.subr.mxu0 0.0
      %4280 = vmatpush1.msra.mxu0 %v3812
      %4281 = vmatprep.subr.mxu0 0.0
      %4282 = vmatpush1.msra.mxu0 %v3813
      %4283 = vmatprep.subr.mxu0 0.0
      %4284 = vmatpush1.msra.mxu0 %v3814
      %4285 = vmatprep.subr.mxu0 0.0
      %4286 = vmatpush1.msra.mxu0 %v3815
      %4287 = vmatprep.subr.mxu0 0.0
      %4288 = vmatpush1.msra.mxu0 %v3816
      %4289 = vmatprep.subr.mxu0 0.0
      %4290 = vmatpush1.msra.mxu0 %v3817
      %4291 = vmatprep.subr.mxu0 0.0
      %4292 = vmatpush1.msra.mxu0 %v3818
      %4293 = vmatprep.subr.mxu0 0.0
      %4294 = vmatpush1.msra.mxu0 %v3819
      %4295 = vmatprep.subr.mxu0 0.0
      %4296 = vmatpush1.msra.mxu0 %v3820
      %4297 = vmatprep.subr.mxu0 0.0
      %4298 = vmatpush1.msra.mxu0 %v3821
      %4299 = vmatprep.subr.mxu0 0.0
      %4300 = vmatpush1.msra.mxu0 %v3822
      %4301 = vmatprep.subr.mxu0 0.0
      %4302 = vmatpush1.msra.mxu0 %v3823
      %4303 = vmatprep.subr.mxu0 0.0
      %4304 = vmatpush1.msra.mxu0 %v3824
      %4305 = vmatprep.subr.mxu0 0.0
      %4306 = vmatpush1.msra.mxu0 %v3825
      %4307 = vmatprep.subr.mxu0 0.0
      %4308 = vmatpush1.msra.mxu0 %v3826
      %4309 = vmatprep.subr.mxu0 0.0
      %4310 = vmatpush1.msra.mxu0 %v3827
      %4311 = vmatprep.subr.mxu0 0.0
      %4312 = vmatpush1.msra.mxu0 %v3828
      %4313 = vmatprep.subr.mxu0 0.0
      %4314 = vmatpush1.msra.mxu0 %v3829
      %4315 = vmatprep.mubr.f32.mxu0 %v3633
      %4316 = vmatmul.mubr.f32.gmra.mrb[0].mxu0 %v3632
      %v4317 = vpop.f32.mrb[0].mxu0
      %v4318 = vadd.f32 %v4248, %v4317
      %v4319 = vpop.f32.mrb[0].mxu0
      %4320 = vdwg.mxu0
      %4321 = vmatprep.subr.mxu0 0.0
      %4322 = vmatpush1.msra.mxu0 %v3830
      %4323 = vmatprep.subr.mxu0 0.0
      %4324 = vmatpush1.msra.mxu0 %v3831
      %4325 = vmatprep.subr.mxu0 0.0
      %4326 = vmatpush1.msra.mxu0 %v3832
      %4327 = vmatprep.subr.mxu0 0.0
      %4328 = vmatpush1.msra.mxu0 %v3833
      %4329 = vmatprep.subr.mxu0 0.0
      %4330 = vmatpush1.msra.mxu0 %v3834
      %4331 = vmatprep.subr.mxu0 0.0
      %4332 = vmatpush1.msra.mxu0 %v3835
      %4333 = vmatprep.subr.mxu0 0.0
      %4334 = vmatpush1.msra.mxu0 %v3836
      %4335 = vmatprep.subr.mxu0 0.0
      %4336 = vmatpush1.msra.mxu0 %v3837
      %4337 = vmatprep.subr.mxu0 0.0
      %4338 = vmatpush1.msra.mxu0 %v3838
      %4339 = vmatprep.subr.mxu0 0.0
      %4340 = vmatpush1.msra.mxu0 %v3839
      %4341 = vmatprep.subr.mxu0 0.0
      %4342 = vmatpush1.msra.mxu0 %v3840
      %4343 = vmatprep.subr.mxu0 0.0
      %4344 = vmatpush1.msra.mxu0 %v3841
      %4345 = vmatprep.subr.mxu0 0.0
      %4346 = vmatpush1.msra.mxu0 %v3842
      %4347 = vmatprep.subr.mxu0 0.0
      %4348 = vmatpush1.msra.mxu0 %v3843
      %4349 = vmatprep.subr.mxu0 0.0
      %4350 = vmatpush1.msra.mxu0 %v3844
      %4351 = vmatprep.subr.mxu0 0.0
      %4352 = vmatpush1.msra.mxu0 %v3845
      %4353 = vmatprep.subr.mxu0 0.0
      %4354 = vmatpush1.msra.mxu0 %v3846
      %4355 = vmatprep.subr.mxu0 0.0
      %4356 = vmatpush1.msra.mxu0 %v3847
      %4357 = vmatprep.subr.mxu0 0.0
      %4358 = vmatpush1.msra.mxu0 %v3848
      %4359 = vmatprep.subr.mxu0 0.0
      %4360 = vmatpush1.msra.mxu0 %v3849
      %4361 = vmatprep.subr.mxu0 0.0
      %4362 = vmatpush1.msra.mxu0 %v3850
      %4363 = vmatprep.subr.mxu0 0.0
      %4364 = vmatpush1.msra.mxu0 %v3851
      %4365 = vmatprep.subr.mxu0 0.0
      %4366 = vmatpush1.msra.mxu0 %v3852
      %4367 = vmatprep.subr.mxu0 0.0
      %4368 = vmatpush1.msra.mxu0 %v3853
      %4369 = vmatprep.subr.mxu0 0.0
      %4370 = vmatpush1.msra.mxu0 %v3854
      %4371 = vmatprep.subr.mxu0 0.0
      %4372 = vmatpush1.msra.mxu0 %v3855
      %4373 = vmatprep.subr.mxu0 0.0
      %4374 = vmatpush1.msra.mxu0 %v3856
      %4375 = vmatprep.subr.mxu0 0.0
      %4376 = vmatpush1.msra.mxu0 %v3857
      %4377 = vmatprep.subr.mxu0 0.0
      %4378 = vmatpush1.msra.mxu0 %v3858
      %4379 = vmatprep.subr.mxu0 0.0
      %4380 = vmatpush1.msra.mxu0 %v3859
      %4381 = vmatprep.subr.mxu0 0.0
      %4382 = vmatpush1.msra.mxu0 %v3860
      %4383 = vmatprep.subr.mxu0 0.0
      %4384 = vmatpush1.msra.mxu0 %v3861
      %4385 = vmatprep.mubr.f32.mxu0 %v3635
      %4386 = vmatmul.mubr.f32.gmra.mrb[0].mxu0 %v3634
      %v4387 = vpop.f32.mrb[0].mxu0
      %v4388 = vadd.f32 %v4318, %v4387
      %v4389 = vpop.f32.mrb[0].mxu0
      %4390 = vdwg.mxu0
      %4391 = vmatprep.subr.mxu0 0.0
      %4392 = vmatpush1.msra.mxu0 %v3862
      %4393 = vmatprep.subr.mxu0 0.0
      %4394 = vmatpush1.msra.mxu0 %v3863
      %4395 = vmatprep.subr.mxu0 0.0
      %4396 = vmatpush1.msra.mxu0 %v3864
      %4397 = vmatprep.subr.mxu0 0.0
      %4398 = vmatpush1.msra.mxu0 %v3865
      %4399 = vmatprep.subr.mxu0 0.0
      %4400 = vmatpush1.msra.mxu0 %v3866
      %4401 = vmatprep.subr.mxu0 0.0
      %4402 = vmatpush1.msra.mxu0 %v3867
      %4403 = vmatprep.subr.mxu0 0.0
      %4404 = vmatpush1.msra.mxu0 %v3868
      %4405 = vmatprep.subr.mxu0 0.0
      %4406 = vmatpush1.msra.mxu0 %v3869
      %4407 = vmatprep.subr.mxu0 0.0
      %4408 = vmatpush1.msra.mxu0 %v3870
      %4409 = vmatprep.subr.mxu0 0.0
      %4410 = vmatpush1.msra.mxu0 %v3871
      %4411 = vmatprep.subr.mxu0 0.0
      %4412 = vmatpush1.msra.mxu0 %v3872
      %4413 = vmatprep.subr.mxu0 0.0
      %4414 = vmatpush1.msra.mxu0 %v3873
      %4415 = vmatprep.subr.mxu0 0.0
      %4416 = vmatpush1.msra.mxu0 %v3874
      %4417 = vmatprep.subr.mxu0 0.0
      %4418 = vmatpush1.msra.mxu0 %v3875
      %4419 = vmatprep.subr.mxu0 0.0
      %4420 = vmatpush1.msra.mxu0 %v3876
      %4421 = vmatprep.subr.mxu0 0.0
      %4422 = vmatpush1.msra.mxu0 %v3877
      %4423 = vmatprep.subr.mxu0 0.0
      %4424 = vmatpush1.msra.mxu0 %v3878
      %4425 = vmatprep.subr.mxu0 0.0
      %4426 = vmatpush1.msra.mxu0 %v3879
      %4427 = vmatprep.subr.mxu0 0.0
      %4428 = vmatpush1.msra.mxu0 %v3880
      %4429 = vmatprep.subr.mxu0 0.0
      %4430 = vmatpush1.msra.mxu0 %v3881
      %4431 = vmatprep.subr.mxu0 0.0
      %4432 = vmatpush1.msra.mxu0 %v3882
      %4433 = vmatprep.subr.mxu0 0.0
      %4434 = vmatpush1.msra.mxu0 %v3883
      %4435 = vmatprep.subr.mxu0 0.0
      %4436 = vmatpush1.msra.mxu0 %v3884
      %4437 = vmatprep.subr.mxu0 0.0
      %4438 = vmatpush1.msra.mxu0 %v3885
      %4439 = vmatprep.subr.mxu0 0.0
      %4440 = vmatpush1.msra.mxu0 %v3886
      %4441 = vmatprep.subr.mxu0 0.0
      %4442 = vmatpush1.msra.mxu0 %v3887
      %4443 = vmatprep.subr.mxu0 0.0
      %4444 = vmatpush1.msra.mxu0 %v3888
      %4445 = vmatprep.subr.mxu0 0.0
      %4446 = vmatpush1.msra.mxu0 %v3889
      %4447 = vmatprep.subr.mxu0 0.0
      %4448 = vmatpush1.msra.mxu0 %v3890
      %4449 = vmatprep.subr.mxu0 0.0
      %4450 = vmatpush1.msra.mxu0 %v3891
      %4451 = vmatprep.subr.mxu0 0.0
      %4452 = vmatpush1.msra.mxu0 %v3892
      %4453 = vmatprep.subr.mxu0 0.0
      %4454 = vmatpush1.msra.mxu0 %v3893
      %4455 = vmatprep.mubr.f32.mxu0 %v3637
      %4456 = vmatmul.mubr.f32.gmra.mrb[0].mxu0 %v3636
      %v4457 = vpop.f32.mrb[0].mxu0
      %v4458 = vadd.f32 %v4388, %v4457
      %v4459 = vpop.f32.mrb[0].mxu0
      %4460 = vdwg.mxu0
      %v4461 = vadd.f32 %v2902, %v4458
      %v4462 = vld [vmem:[%s18] sm:$0x1]
      %v4463 = vld [vmem:[%s19] sm:$0x1]
      %v4464 = vsel %vm655, %v4461, 0.0
      %4465 = vadd.xlane.f32.xlu0 %v4464
      %v4466 = vpop.xlane.xlu0 %4465
      %v4467 = vmul.f32 %v4466, %v1705
      %v4468 = vsub.f32 %v4461, %v4467
      %v4469 = vmul.f32 %v4468, %v4468
      %v4470 = vsel %vm655, %v4469, 0.0
      %4471 = vadd.xlane.f32.xlu0 %v4470
      %v4472 = vpop.xlane.xlu0 %4471
      %v4473 = vmul.f32 %v4472, %v1705
      %v4474 = vadd.f32 %v4473, 1e-05
      %v4475 = vrsqrt.pop %v4474
      %v4476 = vmul.f32 %v4468, %v4475
      %v4478 = vlaneseq
      %v4479 = vshrl.u32 %v4478, 7
      %v4480 = vsub.s32 0, %v4479
      %v4481 = vrot.slane %v4462, %v4480
      %v4483 = vmul.f32 %v4476, %v4481
      %v4485 = vlaneseq
      %v4486 = vshrl.u32 %v4485, 7
      %v4487 = vsub.s32 0, %v4486
      %v4488 = vrot.slane %v4463, %v4487
      %v4490 = vadd.f32 %v4483, %v4488
      %4491 = vst.msk [vmem:[%s641] sm:$0xff] %vm655, %v4490
      %p4492 = scmp.lt.s32.totalorder %s31, 1
      %s4493 = scalar_select %p4492, %s31, 1
      %s4494 = smul.addr %s4493, 8
      %s4495 = scalar_lea.vmem %s20, %s4494
      // Predicated region
      $region101: #{closed_call.9} parent=99 // pred_check
        %p4496 = pneg %p479
      $region102: #{closed_call.9} parent=99 // pred_check_branch
        %4498 = sbr.rel (%p4496) target = $region104
      $region103: #{closed_call.9} parent=99 // pred_region
        _
      $region104: #{closed_call.9} parent=99 // pred_fallthru
        _
    $region100: #{closed_call.9} parent=5 // pred_fallthru
      _
    %p4499 = scmp.le.s32.totalorder 2, %s26
    // Predicated region
    $region105: #{closed_call.9} parent=5 // pred_check
      %p4500 = pneg %p4499
    $region106: #{closed_call.9} parent=5 // pred_check_branch
      %4502 = sbr.rel (%p4500) target = $region108
    $region107: #{closed_call.9} parent=5 // pred_region
      %s4503 = ssub.s32 %s26, 2
      // Predicated region
      $region109: #{closed_call.9} parent=107 // pred_check
        %p4504 = pneg %p485
      $region110: #{closed_call.9} parent=107 // pred_check_branch
        %4506 = sbr.rel (%p4504) target = $region112
      $region111: #{closed_call.9} parent=107 // pred_region
        %p4507 = scmp.lt.s32.totalorder %s32, 1
        %s4508 = scalar_select %p4507, %s32, 1
        %s4509 = smul.addr %s4508, 8
        %s4510 = scalar_lea.vmem %s20, %s4509
      $region112: #{closed_call.9} parent=107 // pred_fallthru
        _
    $region108: #{closed_call.9} parent=5 // pred_fallthru
      _
  $region6: #{closed_call.9} parent=0 // loop_footer
    %s30 = sadd.s32 1, %s26
  $region7: #{closed_call.9} parent=0 // loop_footer_branch
    %25 = sbr.rel target = $region3
  $region8: #{closed_call.9} parent=0 // loop_exit
    _

</llo_original>
